<compile_context>
chip_gen: v7x
topology: tpu7x:2x2x1
jax: 0.10.0
libtpu: 0.0.40
codegen_flags: <defaults>
</compile_context>

<pallas_src>
import jax
import jax.numpy as jnp
from jax import lax
from jax.experimental import pallas as pl
from jax.experimental.pallas import tpu as pltpu

_LANE_BATCH = 128  # samples per grid step (lane dimension); multiple of 128.


# ----------------------------- fused Pallas kernel ------------------------------

def _cnn_fused_kernel(xq_ref, fcw_ref, w_ref, b_ref, fcb_ref, o_ref):
    """Whole CNN forward for a block of B samples, batch in the lane dimension.

    xq_ref : (2, 2, H2+1, W2+1, B) VMEM  parity-split padded image, batch-last
    fcw_ref: (C, H2, W2, 1)        VMEM  fc weight in PyTorch NCHW flatten order
    w_ref  : (C*9,)                SMEM  conv weights, index c*9 + ky*3 + kx
    b_ref  : (C,)                  SMEM  conv bias
    fcb_ref: (1,)                  SMEM  fc bias
    o_ref  : (1, B)                VMEM  sigmoid outputs (lane-dense store)
    """
    C, H2, W2, _ = fcw_ref.shape

    # 16 shifted unit-stride views of the parity planes, shared by all channels and all
    # pool positions: views[(s, t)][i, j, :] == xpad[2i + s, 2j + t, batch].
    views = {}
    for s in range(4):
        for t in range(4):
            views[(s, t)] = xq_ref[s % 2, t % 2,
                                   (s // 2):(s // 2) + H2,
                                   (t // 2):(t // 2) + W2, :]          # (H2, W2, B)

    zacc = None  # sum_c pooled_c * fcw_c, shape (H2, W2, B)
    for c in range(C):
        pooled = None
        for dy in range(2):            # position inside the 2x2 max-pool window
            for dx in range(2):
                acc = None
                for ky in range(3):    # 3x3 conv taps: SMEM scalar weight x full vreg
                    for kx in range(3):
                        term = w_ref[c * 9 + ky * 3 + kx] * views[(dy + ky, dx + kx)]
                        acc = term if acc is None else acc + term
                a = jnp.maximum(acc + b_ref[c], 0.0)                       # bias + ReLU
                pooled = a if pooled is None else jnp.maximum(pooled, a)   # 2x2 max-pool
        # Linear(F, 1) folded per channel: lane-broadcast multiply by fc weights.
        contrib = pooled * fcw_ref[c]                  # (H2,W2,B) * (H2,W2,1)
        zacc = contrib if zacc is None else zacc + contrib

    z = jnp.sum(zacc, axis=(0, 1)) + fcb_ref[0]        # (B,)
    o_ref[...] = (1.0 / (1.0 + jnp.exp(-z)))[None, :]  # sigmoid, lane-dense store


def _cnn_fused_call(xq, fcw, w_s, b_s, fcb, *, grid_steps, lane_batch):
    C, H2, W2, _ = fcw.shape
    Npad = xq.shape[-1]
    return pl.pallas_call(
        _cnn_fused_kernel,
        out_shape=jax.ShapeDtypeStruct((1, Npad), jnp.float32),
        grid=(grid_steps,),
        in_specs=[
            pl.BlockSpec((2, 2, H2 + 1, W2 + 1, lane_batch),
                         lambda n: (0, 0, 0, 0, n)),
            pl.BlockSpec((C, H2, W2, 1), lambda n: (0, 0, 0, 0)),
            pl.BlockSpec(memory_space=pltpu.MemorySpace.SMEM),
            pl.BlockSpec(memory_space=pltpu.MemorySpace.SMEM),
            pl.BlockSpec(memory_space=pltpu.MemorySpace.SMEM),
        ],
        out_specs=pl.BlockSpec((1, lane_batch), lambda n: (0, n)),
        compiler_params=pltpu.CompilerParams(dimension_semantics=("parallel",)),
    )(xq, fcw, w_s, b_s, fcb)


# ------------------------------ JAX wrapper (trace-time prep only) ---------------

@jax.jit
def cnn_forward_pallas(x_nchw, conv_w, conv_b, fc_w, fc_b):
    """x_nchw: (N, 1, H, W). Returns (N, 1) sigmoid outputs (PyTorch CNN.forward semantics)."""
    N, Cin, H, W = x_nchw.shape
    assert Cin == 1 and H % 2 == 0 and W % 2 == 0
    C = conv_w.shape[0]
    H2, W2 = H // 2, W // 2

    B = _LANE_BATCH
    G = -(-N // B)                    # grid steps (>=2 when N > 128, for megacore)
    Npad = G * B

    # Single trace-time reshuffle: pad (padding=1), split the 2x2 parity planes, and move
    # the batch to the minor (lane) dimension so every in-kernel access is a unit-stride
    # slice with all 128 lanes populated. The input is rewritten in HBM exactly once.
    xt = jnp.transpose(x_nchw[:, 0].astype(jnp.float32), (1, 2, 0))      # (H, W, N)
    xpt = jnp.pad(xt, ((1, 1), (1, 1), (0, Npad - N)))                   # (H+2, W+2, Npad)
    xq = jnp.stack(
        [jnp.stack([xpt[py::2, px::2, :] for px in range(2)], axis=0)
         for py in range(2)], axis=0)                                    # (2,2,H2+1,W2+1,Npad)

    # Tiny constants as flat SMEM scalars; fc weight reshaped once to NCHW flatten order
    # (c*H2*W2 + i*W2 + j) with a trailing size-1 lane dim for native lane-broadcast.
    w_s = conv_w.astype(jnp.float32).reshape(C * 9)     # tap index = c*9 + ky*3 + kx
    b_s = conv_b.astype(jnp.float32).reshape(C)
    fcw = fc_w.astype(jnp.float32).reshape(C, H2, W2, 1)
    fcb = fc_b.astype(jnp.float32).reshape(1)

    out = _cnn_fused_call(xq, fcw, w_s, b_s, fcb, grid_steps=G, lane_batch=B)  # (1, Npad)
    return out[0, :N].reshape(N, 1)


# ------------------------------ reference (plain JAX) ------------------------------

def cnn_forward_ref(x_nchw, conv_w, conv_b, fc_w, fc_b):
    y = lax.conv_general_dilated(
        x_nchw, conv_w, window_strides=(1, 1), padding="SAME",
        dimension_numbers=("NCHW", "OIHW", "NCHW"))
    y = y + conv_b[None, :, None, None]
    y = jnp.maximum(y, 0.0)
    y = lax.reduce_window(y, -jnp.inf, lax.max, (1, 1, 2, 2), (1, 1, 2, 2), "VALID")
    flat = y.reshape(y.shape[0], -1)
    z = flat @ fc_w.T + fc_b
    return 1.0 / (1.0 + jnp.exp(-z))


# ------------------------------------ main ------------------------------------

if __name__ == "__main__":
    N, H, W = 2, 16, 16
    C_OUT = 8                        # model_options['out_channels'] (kept small)
    F = C_OUT * (H // 2) * (W // 2)  # fc in_features after conv + pool

    key = jax.random.PRNGKey(0)
    k_x, k_cw, k_cb, k_fw, k_fb = jax.random.split(key, 5)

    x = jax.random.normal(k_x, (N, 1, H, W), dtype=jnp.float32)
    conv_w = jax.random.normal(k_cw, (C_OUT, 1, 3, 3), dtype=jnp.float32) * 0.2
    conv_b = jax.random.normal(k_cb, (C_OUT,), dtype=jnp.float32) * 0.1
    fc_w = jax.random.normal(k_fw, (1, F), dtype=jnp.float32) * 0.05
    fc_b = jax.random.normal(k_fb, (1,), dtype=jnp.float32) * 0.1

    out = jax.block_until_ready(cnn_forward_pallas(x, conv_w, conv_b, fc_w, fc_b))
    ref = jax.block_until_ready(cnn_forward_ref(x, conv_w, conv_b, fc_w, fc_b))

    assert out.shape == (N, 1), out.shape
    assert jnp.allclose(out, ref, atol=1e-5, rtol=1e-5), (out, ref)
    print("KERNEL_OK")
</pallas_src>

<mosaic_0001>
module attributes {stable_mosaic.version = 11 : i64} {
  func.func @_cnn_fused_kernel(%arg0: i32, %arg1: memref<2x2x9x9x128xf32, #tpu.memory_space<vmem>>, %arg2: memref<8x8x8x1xf32, #tpu.memory_space<vmem>>, %arg3: memref<72xf32, #tpu.memory_space<smem>>, %arg4: memref<8xf32, #tpu.memory_space<smem>>, %arg5: memref<1xf32, #tpu.memory_space<smem>>, %arg6: memref<1x128xf32, #tpu.memory_space<vmem>>) attributes {dimension_semantics = [#tpu.dimension_semantics<parallel>], iteration_bounds = array<i64: 1>, scalar_prefetch = 0 : i64, scratch_operands = 0 : i64, tpu.core_type = #tpu.core_type<tc>, window_params = [{transform_indices = @transform_0, window_bounds = array<i64: 2, 2, 9, 9, 128>}, {pipeline_mode = #tpu.pipeline_mode<synchronous>, transform_indices = @transform_1, window_bounds = array<i64: 8, 8, 8, 1>}, {transform_indices = @transform_2, window_bounds = array<i64: 72>}, {transform_indices = @transform_3, window_bounds = array<i64: 8>}, {transform_indices = @transform_4, window_bounds = array<i64: 1>}, {transform_indices = @transform_5, window_bounds = array<i64: 1, 128>}]} {
    %c0 = arith.constant 0 : index
    %c0_0 = arith.constant 0 : index
    %c0_1 = arith.constant 0 : index
    %c0_2 = arith.constant 0 : index
    %c0_3 = arith.constant 0 : index
    %0 = vector.load %arg1[%c0, %c0_0, %c0_1, %c0_2, %c0_3] : memref<2x2x9x9x128xf32, #tpu.memory_space<vmem>>, vector<1x1x8x8x128xf32>
    %1 = vector.shape_cast %0 : vector<1x1x8x8x128xf32> to vector<8x8x128xf32>
    %c0_4 = arith.constant 0 : index
    %c1 = arith.constant 1 : index
    %c0_5 = arith.constant 0 : index
    %c0_6 = arith.constant 0 : index
    %c0_7 = arith.constant 0 : index
    %2 = vector.load %arg1[%c0_4, %c1, %c0_5, %c0_6, %c0_7] : memref<2x2x9x9x128xf32, #tpu.memory_space<vmem>>, vector<1x1x8x8x128xf32>
    %3 = vector.shape_cast %2 : vector<1x1x8x8x128xf32> to vector<8x8x128xf32>
    %c0_8 = arith.constant 0 : index
    %c0_9 = arith.constant 0 : index
    %c0_10 = arith.constant 0 : index
    %c1_11 = arith.constant 1 : index
    %c0_12 = arith.constant 0 : index
    %4 = vector.load %arg1[%c0_8, %c0_9, %c0_10, %c1_11, %c0_12] : memref<2x2x9x9x128xf32, #tpu.memory_space<vmem>>, vector<1x1x8x8x128xf32>
    %5 = vector.shape_cast %4 : vector<1x1x8x8x128xf32> to vector<8x8x128xf32>
    %c0_13 = arith.constant 0 : index
    %c1_14 = arith.constant 1 : index
    %c0_15 = arith.constant 0 : index
    %c1_16 = arith.constant 1 : index
    %c0_17 = arith.constant 0 : index
    %6 = vector.load %arg1[%c0_13, %c1_14, %c0_15, %c1_16, %c0_17] : memref<2x2x9x9x128xf32, #tpu.memory_space<vmem>>, vector<1x1x8x8x128xf32>
    %7 = vector.shape_cast %6 : vector<1x1x8x8x128xf32> to vector<8x8x128xf32>
    %c1_18 = arith.constant 1 : index
    %c0_19 = arith.constant 0 : index
    %c0_20 = arith.constant 0 : index
    %c0_21 = arith.constant 0 : index
    %c0_22 = arith.constant 0 : index
    %8 = vector.load %arg1[%c1_18, %c0_19, %c0_20, %c0_21, %c0_22] : memref<2x2x9x9x128xf32, #tpu.memory_space<vmem>>, vector<1x1x8x8x128xf32>
    %9 = vector.shape_cast %8 : vector<1x1x8x8x128xf32> to vector<8x8x128xf32>
    %c1_23 = arith.constant 1 : index
    %c1_24 = arith.constant 1 : index
    %c0_25 = arith.constant 0 : index
    %c0_26 = arith.constant 0 : index
    %c0_27 = arith.constant 0 : index
    %10 = vector.load %arg1[%c1_23, %c1_24, %c0_25, %c0_26, %c0_27] : memref<2x2x9x9x128xf32, #tpu.memory_space<vmem>>, vector<1x1x8x8x128xf32>
    %11 = vector.shape_cast %10 : vector<1x1x8x8x128xf32> to vector<8x8x128xf32>
    %c1_28 = arith.constant 1 : index
    %c0_29 = arith.constant 0 : index
    %c0_30 = arith.constant 0 : index
    %c1_31 = arith.constant 1 : index
    %c0_32 = arith.constant 0 : index
    %12 = vector.load %arg1[%c1_28, %c0_29, %c0_30, %c1_31, %c0_32] : memref<2x2x9x9x128xf32, #tpu.memory_space<vmem>>, vector<1x1x8x8x128xf32>
    %13 = vector.shape_cast %12 : vector<1x1x8x8x128xf32> to vector<8x8x128xf32>
    %c1_33 = arith.constant 1 : index
    %c1_34 = arith.constant 1 : index
    %c0_35 = arith.constant 0 : index
    %c1_36 = arith.constant 1 : index
    %c0_37 = arith.constant 0 : index
    %14 = vector.load %arg1[%c1_33, %c1_34, %c0_35, %c1_36, %c0_37] : memref<2x2x9x9x128xf32, #tpu.memory_space<vmem>>, vector<1x1x8x8x128xf32>
    %15 = vector.shape_cast %14 : vector<1x1x8x8x128xf32> to vector<8x8x128xf32>
    %c0_38 = arith.constant 0 : index
    %c0_39 = arith.constant 0 : index
    %c1_40 = arith.constant 1 : index
    %c0_41 = arith.constant 0 : index
    %c0_42 = arith.constant 0 : index
    %16 = vector.load %arg1[%c0_38, %c0_39, %c1_40, %c0_41, %c0_42] : memref<2x2x9x9x128xf32, #tpu.memory_space<vmem>>, vector<1x1x8x8x128xf32>
    %17 = vector.shape_cast %16 : vector<1x1x8x8x128xf32> to vector<8x8x128xf32>
    %c0_43 = arith.constant 0 : index
    %c1_44 = arith.constant 1 : index
    %c1_45 = arith.constant 1 : index
    %c0_46 = arith.constant 0 : index
    %c0_47 = arith.constant 0 : index
    %18 = vector.load %arg1[%c0_43, %c1_44, %c1_45, %c0_46, %c0_47] : memref<2x2x9x9x128xf32, #tpu.memory_space<vmem>>, vector<1x1x8x8x128xf32>
    %19 = vector.shape_cast %18 : vector<1x1x8x8x128xf32> to vector<8x8x128xf32>
    %c0_48 = arith.constant 0 : index
    %c0_49 = arith.constant 0 : index
    %c1_50 = arith.constant 1 : index
    %c1_51 = arith.constant 1 : index
    %c0_52 = arith.constant 0 : index
    %20 = vector.load %arg1[%c0_48, %c0_49, %c1_50, %c1_51, %c0_52] : memref<2x2x9x9x128xf32, #tpu.memory_space<vmem>>, vector<1x1x8x8x128xf32>
    %21 = vector.shape_cast %20 : vector<1x1x8x8x128xf32> to vector<8x8x128xf32>
    %c0_53 = arith.constant 0 : index
    %c1_54 = arith.constant 1 : index
    %c1_55 = arith.constant 1 : index
    %c1_56 = arith.constant 1 : index
    %c0_57 = arith.constant 0 : index
    %22 = vector.load %arg1[%c0_53, %c1_54, %c1_55, %c1_56, %c0_57] : memref<2x2x9x9x128xf32, #tpu.memory_space<vmem>>, vector<1x1x8x8x128xf32>
    %23 = vector.shape_cast %22 : vector<1x1x8x8x128xf32> to vector<8x8x128xf32>
    %c1_58 = arith.constant 1 : index
    %c0_59 = arith.constant 0 : index
    %c1_60 = arith.constant 1 : index
    %c0_61 = arith.constant 0 : index
    %c0_62 = arith.constant 0 : index
    %24 = vector.load %arg1[%c1_58, %c0_59, %c1_60, %c0_61, %c0_62] : memref<2x2x9x9x128xf32, #tpu.memory_space<vmem>>, vector<1x1x8x8x128xf32>
    %25 = vector.shape_cast %24 : vector<1x1x8x8x128xf32> to vector<8x8x128xf32>
    %c1_63 = arith.constant 1 : index
    %c1_64 = arith.constant 1 : index
    %c1_65 = arith.constant 1 : index
    %c0_66 = arith.constant 0 : index
    %c0_67 = arith.constant 0 : index
    %26 = vector.load %arg1[%c1_63, %c1_64, %c1_65, %c0_66, %c0_67] : memref<2x2x9x9x128xf32, #tpu.memory_space<vmem>>, vector<1x1x8x8x128xf32>
    %27 = vector.shape_cast %26 : vector<1x1x8x8x128xf32> to vector<8x8x128xf32>
    %c1_68 = arith.constant 1 : index
    %c0_69 = arith.constant 0 : index
    %c1_70 = arith.constant 1 : index
    %c1_71 = arith.constant 1 : index
    %c0_72 = arith.constant 0 : index
    %28 = vector.load %arg1[%c1_68, %c0_69, %c1_70, %c1_71, %c0_72] : memref<2x2x9x9x128xf32, #tpu.memory_space<vmem>>, vector<1x1x8x8x128xf32>
    %29 = vector.shape_cast %28 : vector<1x1x8x8x128xf32> to vector<8x8x128xf32>
    %c1_73 = arith.constant 1 : index
    %c1_74 = arith.constant 1 : index
    %c1_75 = arith.constant 1 : index
    %c1_76 = arith.constant 1 : index
    %c0_77 = arith.constant 0 : index
    %30 = vector.load %arg1[%c1_73, %c1_74, %c1_75, %c1_76, %c0_77] : memref<2x2x9x9x128xf32, #tpu.memory_space<vmem>>, vector<1x1x8x8x128xf32>
    %31 = vector.shape_cast %30 : vector<1x1x8x8x128xf32> to vector<8x8x128xf32>
    %c0_78 = arith.constant 0 : index
    %32 = memref.load %arg3[%c0_78] : memref<72xf32, #tpu.memory_space<smem>>
    %33 = vector.broadcast %32 : f32 to vector<8x8x128xf32>
    %34 = arith.mulf %33, %1 : vector<8x8x128xf32>
    %c1_79 = arith.constant 1 : index
    %35 = memref.load %arg3[%c1_79] : memref<72xf32, #tpu.memory_space<smem>>
    %36 = vector.broadcast %35 : f32 to vector<8x8x128xf32>
    %37 = arith.mulf %36, %3 : vector<8x8x128xf32>
    %38 = arith.addf %34, %37 : vector<8x8x128xf32>
    %c2 = arith.constant 2 : index
    %39 = memref.load %arg3[%c2] : memref<72xf32, #tpu.memory_space<smem>>
    %40 = vector.broadcast %39 : f32 to vector<8x8x128xf32>
    %41 = arith.mulf %40, %5 : vector<8x8x128xf32>
    %42 = arith.addf %38, %41 : vector<8x8x128xf32>
    %c3 = arith.constant 3 : index
    %43 = memref.load %arg3[%c3] : memref<72xf32, #tpu.memory_space<smem>>
    %44 = vector.broadcast %43 : f32 to vector<8x8x128xf32>
    %45 = arith.mulf %44, %9 : vector<8x8x128xf32>
    %46 = arith.addf %42, %45 : vector<8x8x128xf32>
    %c4 = arith.constant 4 : index
    %47 = memref.load %arg3[%c4] : memref<72xf32, #tpu.memory_space<smem>>
    %48 = vector.broadcast %47 : f32 to vector<8x8x128xf32>
    %49 = arith.mulf %48, %11 : vector<8x8x128xf32>
    %50 = arith.addf %46, %49 : vector<8x8x128xf32>
    %c5 = arith.constant 5 : index
    %51 = memref.load %arg3[%c5] : memref<72xf32, #tpu.memory_space<smem>>
    %52 = vector.broadcast %51 : f32 to vector<8x8x128xf32>
    %53 = arith.mulf %52, %13 : vector<8x8x128xf32>
    %54 = arith.addf %50, %53 : vector<8x8x128xf32>
    %c6 = arith.constant 6 : index
    %55 = memref.load %arg3[%c6] : memref<72xf32, #tpu.memory_space<smem>>
    %56 = vector.broadcast %55 : f32 to vector<8x8x128xf32>
    %57 = arith.mulf %56, %17 : vector<8x8x128xf32>
    %58 = arith.addf %54, %57 : vector<8x8x128xf32>
    %c7 = arith.constant 7 : index
    %59 = memref.load %arg3[%c7] : memref<72xf32, #tpu.memory_space<smem>>
    %60 = vector.broadcast %59 : f32 to vector<8x8x128xf32>
    %61 = arith.mulf %60, %19 : vector<8x8x128xf32>
    %62 = arith.addf %58, %61 : vector<8x8x128xf32>
    %c8 = arith.constant 8 : index
    %63 = memref.load %arg3[%c8] : memref<72xf32, #tpu.memory_space<smem>>
    %64 = vector.broadcast %63 : f32 to vector<8x8x128xf32>
    %65 = arith.mulf %64, %21 : vector<8x8x128xf32>
    %66 = arith.addf %62, %65 : vector<8x8x128xf32>
    %c0_80 = arith.constant 0 : index
    %67 = memref.load %arg4[%c0_80] : memref<8xf32, #tpu.memory_space<smem>>
    %68 = vector.broadcast %67 : f32 to vector<8x8x128xf32>
    %69 = arith.addf %66, %68 : vector<8x8x128xf32>
    %cst = arith.constant 0.000000e+00 : f32
    %70 = vector.broadcast %cst : f32 to vector<8x8x128xf32>
    %71 = arith.maximumf %69, %70 : vector<8x8x128xf32>
    %c0_81 = arith.constant 0 : index
    %72 = memref.load %arg3[%c0_81] : memref<72xf32, #tpu.memory_space<smem>>
    %73 = vector.broadcast %72 : f32 to vector<8x8x128xf32>
    %74 = arith.mulf %73, %3 : vector<8x8x128xf32>
    %c1_82 = arith.constant 1 : index
    %75 = memref.load %arg3[%c1_82] : memref<72xf32, #tpu.memory_space<smem>>
    %76 = vector.broadcast %75 : f32 to vector<8x8x128xf32>
    %77 = arith.mulf %76, %5 : vector<8x8x128xf32>
    %78 = arith.addf %74, %77 : vector<8x8x128xf32>
    %c2_83 = arith.constant 2 : index
    %79 = memref.load %arg3[%c2_83] : memref<72xf32, #tpu.memory_space<smem>>
    %80 = vector.broadcast %79 : f32 to vector<8x8x128xf32>
    %81 = arith.mulf %80, %7 : vector<8x8x128xf32>
    %82 = arith.addf %78, %81 : vector<8x8x128xf32>
    %c3_84 = arith.constant 3 : index
    %83 = memref.load %arg3[%c3_84] : memref<72xf32, #tpu.memory_space<smem>>
    %84 = vector.broadcast %83 : f32 to vector<8x8x128xf32>
    %85 = arith.mulf %84, %11 : vector<8x8x128xf32>
    %86 = arith.addf %82, %85 : vector<8x8x128xf32>
    %c4_85 = arith.constant 4 : index
    %87 = memref.load %arg3[%c4_85] : memref<72xf32, #tpu.memory_space<smem>>
    %88 = vector.broadcast %87 : f32 to vector<8x8x128xf32>
    %89 = arith.mulf %88, %13 : vector<8x8x128xf32>
    %90 = arith.addf %86, %89 : vector<8x8x128xf32>
    %c5_86 = arith.constant 5 : index
    %91 = memref.load %arg3[%c5_86] : memref<72xf32, #tpu.memory_space<smem>>
    %92 = vector.broadcast %91 : f32 to vector<8x8x128xf32>
    %93 = arith.mulf %92, %15 : vector<8x8x128xf32>
    %94 = arith.addf %90, %93 : vector<8x8x128xf32>
    %c6_87 = arith.constant 6 : index
    %95 = memref.load %arg3[%c6_87] : memref<72xf32, #tpu.memory_space<smem>>
    %96 = vector.broadcast %95 : f32 to vector<8x8x128xf32>
    %97 = arith.mulf %96, %19 : vector<8x8x128xf32>
    %98 = arith.addf %94, %97 : vector<8x8x128xf32>
    %c7_88 = arith.constant 7 : index
    %99 = memref.load %arg3[%c7_88] : memref<72xf32, #tpu.memory_space<smem>>
    %100 = vector.broadcast %99 : f32 to vector<8x8x128xf32>
    %101 = arith.mulf %100, %21 : vector<8x8x128xf32>
    %102 = arith.addf %98, %101 : vector<8x8x128xf32>
    %c8_89 = arith.constant 8 : index
    %103 = memref.load %arg3[%c8_89] : memref<72xf32, #tpu.memory_space<smem>>
    %104 = vector.broadcast %103 : f32 to vector<8x8x128xf32>
    %105 = arith.mulf %104, %23 : vector<8x8x128xf32>
    %106 = arith.addf %102, %105 : vector<8x8x128xf32>
    %c0_90 = arith.constant 0 : index
    %107 = memref.load %arg4[%c0_90] : memref<8xf32, #tpu.memory_space<smem>>
    %108 = vector.broadcast %107 : f32 to vector<8x8x128xf32>
    %109 = arith.addf %106, %108 : vector<8x8x128xf32>
    %cst_91 = arith.constant 0.000000e+00 : f32
    %110 = vector.broadcast %cst_91 : f32 to vector<8x8x128xf32>
    %111 = arith.maximumf %109, %110 : vector<8x8x128xf32>
    %112 = arith.maximumf %71, %111 : vector<8x8x128xf32>
    %c0_92 = arith.constant 0 : index
    %113 = memref.load %arg3[%c0_92] : memref<72xf32, #tpu.memory_space<smem>>
    %114 = vector.broadcast %113 : f32 to vector<8x8x128xf32>
    %115 = arith.mulf %114, %9 : vector<8x8x128xf32>
    %c1_93 = arith.constant 1 : index
    %116 = memref.load %arg3[%c1_93] : memref<72xf32, #tpu.memory_space<smem>>
    %117 = vector.broadcast %116 : f32 to vector<8x8x128xf32>
    %118 = arith.mulf %117, %11 : vector<8x8x128xf32>
    %119 = arith.addf %115, %118 : vector<8x8x128xf32>
    %c2_94 = arith.constant 2 : index
    %120 = memref.load %arg3[%c2_94] : memref<72xf32, #tpu.memory_space<smem>>
    %121 = vector.broadcast %120 : f32 to vector<8x8x128xf32>
    %122 = arith.mulf %121, %13 : vector<8x8x128xf32>
    %123 = arith.addf %119, %122 : vector<8x8x128xf32>
    %c3_95 = arith.constant 3 : index
    %124 = memref.load %arg3[%c3_95] : memref<72xf32, #tpu.memory_space<smem>>
    %125 = vector.broadcast %124 : f32 to vector<8x8x128xf32>
    %126 = arith.mulf %125, %17 : vector<8x8x128xf32>
    %127 = arith.addf %123, %126 : vector<8x8x128xf32>
    %c4_96 = arith.constant 4 : index
    %128 = memref.load %arg3[%c4_96] : memref<72xf32, #tpu.memory_space<smem>>
    %129 = vector.broadcast %128 : f32 to vector<8x8x128xf32>
    %130 = arith.mulf %129, %19 : vector<8x8x128xf32>
    %131 = arith.addf %127, %130 : vector<8x8x128xf32>
    %c5_97 = arith.constant 5 : index
    %132 = memref.load %arg3[%c5_97] : memref<72xf32, #tpu.memory_space<smem>>
    %133 = vector.broadcast %132 : f32 to vector<8x8x128xf32>
    %134 = arith.mulf %133, %21 : vector<8x8x128xf32>
    %135 = arith.addf %131, %134 : vector<8x8x128xf32>
    %c6_98 = arith.constant 6 : index
    %136 = memref.load %arg3[%c6_98] : memref<72xf32, #tpu.memory_space<smem>>
    %137 = vector.broadcast %136 : f32 to vector<8x8x128xf32>
    %138 = arith.mulf %137, %25 : vector<8x8x128xf32>
    %139 = arith.addf %135, %138 : vector<8x8x128xf32>
    %c7_99 = arith.constant 7 : index
    %140 = memref.load %arg3[%c7_99] : memref<72xf32, #tpu.memory_space<smem>>
    %141 = vector.broadcast %140 : f32 to vector<8x8x128xf32>
    %142 = arith.mulf %141, %27 : vector<8x8x128xf32>
    %143 = arith.addf %139, %142 : vector<8x8x128xf32>
    %c8_100 = arith.constant 8 : index
    %144 = memref.load %arg3[%c8_100] : memref<72xf32, #tpu.memory_space<smem>>
    %145 = vector.broadcast %144 : f32 to vector<8x8x128xf32>
    %146 = arith.mulf %145, %29 : vector<8x8x128xf32>
    %147 = arith.addf %143, %146 : vector<8x8x128xf32>
    %c0_101 = arith.constant 0 : index
    %148 = memref.load %arg4[%c0_101] : memref<8xf32, #tpu.memory_space<smem>>
    %149 = vector.broadcast %148 : f32 to vector<8x8x128xf32>
    %150 = arith.addf %147, %149 : vector<8x8x128xf32>
    %cst_102 = arith.constant 0.000000e+00 : f32
    %151 = vector.broadcast %cst_102 : f32 to vector<8x8x128xf32>
    %152 = arith.maximumf %150, %151 : vector<8x8x128xf32>
    %153 = arith.maximumf %112, %152 : vector<8x8x128xf32>
    %c0_103 = arith.constant 0 : index
    %154 = memref.load %arg3[%c0_103] : memref<72xf32, #tpu.memory_space<smem>>
    %155 = vector.broadcast %154 : f32 to vector<8x8x128xf32>
    %156 = arith.mulf %155, %11 : vector<8x8x128xf32>
    %c1_104 = arith.constant 1 : index
    %157 = memref.load %arg3[%c1_104] : memref<72xf32, #tpu.memory_space<smem>>
    %158 = vector.broadcast %157 : f32 to vector<8x8x128xf32>
    %159 = arith.mulf %158, %13 : vector<8x8x128xf32>
    %160 = arith.addf %156, %159 : vector<8x8x128xf32>
    %c2_105 = arith.constant 2 : index
    %161 = memref.load %arg3[%c2_105] : memref<72xf32, #tpu.memory_space<smem>>
    %162 = vector.broadcast %161 : f32 to vector<8x8x128xf32>
    %163 = arith.mulf %162, %15 : vector<8x8x128xf32>
    %164 = arith.addf %160, %163 : vector<8x8x128xf32>
    %c3_106 = arith.constant 3 : index
    %165 = memref.load %arg3[%c3_106] : memref<72xf32, #tpu.memory_space<smem>>
    %166 = vector.broadcast %165 : f32 to vector<8x8x128xf32>
    %167 = arith.mulf %166, %19 : vector<8x8x128xf32>
    %168 = arith.addf %164, %167 : vector<8x8x128xf32>
    %c4_107 = arith.constant 4 : index
    %169 = memref.load %arg3[%c4_107] : memref<72xf32, #tpu.memory_space<smem>>
    %170 = vector.broadcast %169 : f32 to vector<8x8x128xf32>
    %171 = arith.mulf %170, %21 : vector<8x8x128xf32>
    %172 = arith.addf %168, %171 : vector<8x8x128xf32>
    %c5_108 = arith.constant 5 : index
    %173 = memref.load %arg3[%c5_108] : memref<72xf32, #tpu.memory_space<smem>>
    %174 = vector.broadcast %173 : f32 to vector<8x8x128xf32>
    %175 = arith.mulf %174, %23 : vector<8x8x128xf32>
    %176 = arith.addf %172, %175 : vector<8x8x128xf32>
    %c6_109 = arith.constant 6 : index
    %177 = memref.load %arg3[%c6_109] : memref<72xf32, #tpu.memory_space<smem>>
    %178 = vector.broadcast %177 : f32 to vector<8x8x128xf32>
    %179 = arith.mulf %178, %27 : vector<8x8x128xf32>
    %180 = arith.addf %176, %179 : vector<8x8x128xf32>
    %c7_110 = arith.constant 7 : index
    %181 = memref.load %arg3[%c7_110] : memref<72xf32, #tpu.memory_space<smem>>
    %182 = vector.broadcast %181 : f32 to vector<8x8x128xf32>
    %183 = arith.mulf %182, %29 : vector<8x8x128xf32>
    %184 = arith.addf %180, %183 : vector<8x8x128xf32>
    %c8_111 = arith.constant 8 : index
    %185 = memref.load %arg3[%c8_111] : memref<72xf32, #tpu.memory_space<smem>>
    %186 = vector.broadcast %185 : f32 to vector<8x8x128xf32>
    %187 = arith.mulf %186, %31 : vector<8x8x128xf32>
    %188 = arith.addf %184, %187 : vector<8x8x128xf32>
    %c0_112 = arith.constant 0 : index
    %189 = memref.load %arg4[%c0_112] : memref<8xf32, #tpu.memory_space<smem>>
    %190 = vector.broadcast %189 : f32 to vector<8x8x128xf32>
    %191 = arith.addf %188, %190 : vector<8x8x128xf32>
    %cst_113 = arith.constant 0.000000e+00 : f32
    %192 = vector.broadcast %cst_113 : f32 to vector<8x8x128xf32>
    %193 = arith.maximumf %191, %192 : vector<8x8x128xf32>
    %194 = arith.maximumf %153, %193 : vector<8x8x128xf32>
    %c0_114 = arith.constant 0 : index
    %c0_115 = arith.constant 0 : index
    %c0_116 = arith.constant 0 : index
    %c0_117 = arith.constant 0 : index
    %195 = vector.load %arg2[%c0_114, %c0_115, %c0_116, %c0_117] : memref<8x8x8x1xf32, #tpu.memory_space<vmem>>, vector<1x8x8x1xf32>
    %196 = vector.shape_cast %195 : vector<1x8x8x1xf32> to vector<8x8x1xf32>
    %197 = vector.broadcast %196 : vector<8x8x1xf32> to vector<8x8x128xf32>
    %198 = arith.mulf %194, %197 : vector<8x8x128xf32>
    %c9 = arith.constant 9 : index
    %199 = memref.load %arg3[%c9] : memref<72xf32, #tpu.memory_space<smem>>
    %200 = vector.broadcast %199 : f32 to vector<8x8x128xf32>
    %201 = arith.mulf %200, %1 : vector<8x8x128xf32>
    %c10 = arith.constant 10 : index
    %202 = memref.load %arg3[%c10] : memref<72xf32, #tpu.memory_space<smem>>
    %203 = vector.broadcast %202 : f32 to vector<8x8x128xf32>
    %204 = arith.mulf %203, %3 : vector<8x8x128xf32>
    %205 = arith.addf %201, %204 : vector<8x8x128xf32>
    %c11 = arith.constant 11 : index
    %206 = memref.load %arg3[%c11] : memref<72xf32, #tpu.memory_space<smem>>
    %207 = vector.broadcast %206 : f32 to vector<8x8x128xf32>
    %208 = arith.mulf %207, %5 : vector<8x8x128xf32>
    %209 = arith.addf %205, %208 : vector<8x8x128xf32>
    %c12 = arith.constant 12 : index
    %210 = memref.load %arg3[%c12] : memref<72xf32, #tpu.memory_space<smem>>
    %211 = vector.broadcast %210 : f32 to vector<8x8x128xf32>
    %212 = arith.mulf %211, %9 : vector<8x8x128xf32>
    %213 = arith.addf %209, %212 : vector<8x8x128xf32>
    %c13 = arith.constant 13 : index
    %214 = memref.load %arg3[%c13] : memref<72xf32, #tpu.memory_space<smem>>
    %215 = vector.broadcast %214 : f32 to vector<8x8x128xf32>
    %216 = arith.mulf %215, %11 : vector<8x8x128xf32>
    %217 = arith.addf %213, %216 : vector<8x8x128xf32>
    %c14 = arith.constant 14 : index
    %218 = memref.load %arg3[%c14] : memref<72xf32, #tpu.memory_space<smem>>
    %219 = vector.broadcast %218 : f32 to vector<8x8x128xf32>
    %220 = arith.mulf %219, %13 : vector<8x8x128xf32>
    %221 = arith.addf %217, %220 : vector<8x8x128xf32>
    %c15 = arith.constant 15 : index
    %222 = memref.load %arg3[%c15] : memref<72xf32, #tpu.memory_space<smem>>
    %223 = vector.broadcast %222 : f32 to vector<8x8x128xf32>
    %224 = arith.mulf %223, %17 : vector<8x8x128xf32>
    %225 = arith.addf %221, %224 : vector<8x8x128xf32>
    %c16 = arith.constant 16 : index
    %226 = memref.load %arg3[%c16] : memref<72xf32, #tpu.memory_space<smem>>
    %227 = vector.broadcast %226 : f32 to vector<8x8x128xf32>
    %228 = arith.mulf %227, %19 : vector<8x8x128xf32>
    %229 = arith.addf %225, %228 : vector<8x8x128xf32>
    %c17 = arith.constant 17 : index
    %230 = memref.load %arg3[%c17] : memref<72xf32, #tpu.memory_space<smem>>
    %231 = vector.broadcast %230 : f32 to vector<8x8x128xf32>
    %232 = arith.mulf %231, %21 : vector<8x8x128xf32>
    %233 = arith.addf %229, %232 : vector<8x8x128xf32>
    %c1_118 = arith.constant 1 : index
    %234 = memref.load %arg4[%c1_118] : memref<8xf32, #tpu.memory_space<smem>>
    %235 = vector.broadcast %234 : f32 to vector<8x8x128xf32>
    %236 = arith.addf %233, %235 : vector<8x8x128xf32>
    %cst_119 = arith.constant 0.000000e+00 : f32
    %237 = vector.broadcast %cst_119 : f32 to vector<8x8x128xf32>
    %238 = arith.maximumf %236, %237 : vector<8x8x128xf32>
    %c9_120 = arith.constant 9 : index
    %239 = memref.load %arg3[%c9_120] : memref<72xf32, #tpu.memory_space<smem>>
    %240 = vector.broadcast %239 : f32 to vector<8x8x128xf32>
    %241 = arith.mulf %240, %3 : vector<8x8x128xf32>
    %c10_121 = arith.constant 10 : index
    %242 = memref.load %arg3[%c10_121] : memref<72xf32, #tpu.memory_space<smem>>
    %243 = vector.broadcast %242 : f32 to vector<8x8x128xf32>
    %244 = arith.mulf %243, %5 : vector<8x8x128xf32>
    %245 = arith.addf %241, %244 : vector<8x8x128xf32>
    %c11_122 = arith.constant 11 : index
    %246 = memref.load %arg3[%c11_122] : memref<72xf32, #tpu.memory_space<smem>>
    %247 = vector.broadcast %246 : f32 to vector<8x8x128xf32>
    %248 = arith.mulf %247, %7 : vector<8x8x128xf32>
    %249 = arith.addf %245, %248 : vector<8x8x128xf32>
    %c12_123 = arith.constant 12 : index
    %250 = memref.load %arg3[%c12_123] : memref<72xf32, #tpu.memory_space<smem>>
    %251 = vector.broadcast %250 : f32 to vector<8x8x128xf32>
    %252 = arith.mulf %251, %11 : vector<8x8x128xf32>
    %253 = arith.addf %249, %252 : vector<8x8x128xf32>
    %c13_124 = arith.constant 13 : index
    %254 = memref.load %arg3[%c13_124] : memref<72xf32, #tpu.memory_space<smem>>
    %255 = vector.broadcast %254 : f32 to vector<8x8x128xf32>
    %256 = arith.mulf %255, %13 : vector<8x8x128xf32>
    %257 = arith.addf %253, %256 : vector<8x8x128xf32>
    %c14_125 = arith.constant 14 : index
    %258 = memref.load %arg3[%c14_125] : memref<72xf32, #tpu.memory_space<smem>>
    %259 = vector.broadcast %258 : f32 to vector<8x8x128xf32>
    %260 = arith.mulf %259, %15 : vector<8x8x128xf32>
    %261 = arith.addf %257, %260 : vector<8x8x128xf32>
    %c15_126 = arith.constant 15 : index
    %262 = memref.load %arg3[%c15_126] : memref<72xf32, #tpu.memory_space<smem>>
    %263 = vector.broadcast %262 : f32 to vector<8x8x128xf32>
    %264 = arith.mulf %263, %19 : vector<8x8x128xf32>
    %265 = arith.addf %261, %264 : vector<8x8x128xf32>
    %c16_127 = arith.constant 16 : index
    %266 = memref.load %arg3[%c16_127] : memref<72xf32, #tpu.memory_space<smem>>
    %267 = vector.broadcast %266 : f32 to vector<8x8x128xf32>
    %268 = arith.mulf %267, %21 : vector<8x8x128xf32>
    %269 = arith.addf %265, %268 : vector<8x8x128xf32>
    %c17_128 = arith.constant 17 : index
    %270 = memref.load %arg3[%c17_128] : memref<72xf32, #tpu.memory_space<smem>>
    %271 = vector.broadcast %270 : f32 to vector<8x8x128xf32>
    %272 = arith.mulf %271, %23 : vector<8x8x128xf32>
    %273 = arith.addf %269, %272 : vector<8x8x128xf32>
    %c1_129 = arith.constant 1 : index
    %274 = memref.load %arg4[%c1_129] : memref<8xf32, #tpu.memory_space<smem>>
    %275 = vector.broadcast %274 : f32 to vector<8x8x128xf32>
    %276 = arith.addf %273, %275 : vector<8x8x128xf32>
    %cst_130 = arith.constant 0.000000e+00 : f32
    %277 = vector.broadcast %cst_130 : f32 to vector<8x8x128xf32>
    %278 = arith.maximumf %276, %277 : vector<8x8x128xf32>
    %279 = arith.maximumf %238, %278 : vector<8x8x128xf32>
    %c9_131 = arith.constant 9 : index
    %280 = memref.load %arg3[%c9_131] : memref<72xf32, #tpu.memory_space<smem>>
    %281 = vector.broadcast %280 : f32 to vector<8x8x128xf32>
    %282 = arith.mulf %281, %9 : vector<8x8x128xf32>
    %c10_132 = arith.constant 10 : index
    %283 = memref.load %arg3[%c10_132] : memref<72xf32, #tpu.memory_space<smem>>
    %284 = vector.broadcast %283 : f32 to vector<8x8x128xf32>
    %285 = arith.mulf %284, %11 : vector<8x8x128xf32>
    %286 = arith.addf %282, %285 : vector<8x8x128xf32>
    %c11_133 = arith.constant 11 : index
    %287 = memref.load %arg3[%c11_133] : memref<72xf32, #tpu.memory_space<smem>>
    %288 = vector.broadcast %287 : f32 to vector<8x8x128xf32>
    %289 = arith.mulf %288, %13 : vector<8x8x128xf32>
    %290 = arith.addf %286, %289 : vector<8x8x128xf32>
    %c12_134 = arith.constant 12 : index
    %291 = memref.load %arg3[%c12_134] : memref<72xf32, #tpu.memory_space<smem>>
    %292 = vector.broadcast %291 : f32 to vector<8x8x128xf32>
    %293 = arith.mulf %292, %17 : vector<8x8x128xf32>
    %294 = arith.addf %290, %293 : vector<8x8x128xf32>
    %c13_135 = arith.constant 13 : index
    %295 = memref.load %arg3[%c13_135] : memref<72xf32, #tpu.memory_space<smem>>
    %296 = vector.broadcast %295 : f32 to vector<8x8x128xf32>
    %297 = arith.mulf %296, %19 : vector<8x8x128xf32>
    %298 = arith.addf %294, %297 : vector<8x8x128xf32>
    %c14_136 = arith.constant 14 : index
    %299 = memref.load %arg3[%c14_136] : memref<72xf32, #tpu.memory_space<smem>>
    %300 = vector.broadcast %299 : f32 to vector<8x8x128xf32>
    %301 = arith.mulf %300, %21 : vector<8x8x128xf32>
    %302 = arith.addf %298, %301 : vector<8x8x128xf32>
    %c15_137 = arith.constant 15 : index
    %303 = memref.load %arg3[%c15_137] : memref<72xf32, #tpu.memory_space<smem>>
    %304 = vector.broadcast %303 : f32 to vector<8x8x128xf32>
    %305 = arith.mulf %304, %25 : vector<8x8x128xf32>
    %306 = arith.addf %302, %305 : vector<8x8x128xf32>
    %c16_138 = arith.constant 16 : index
    %307 = memref.load %arg3[%c16_138] : memref<72xf32, #tpu.memory_space<smem>>
    %308 = vector.broadcast %307 : f32 to vector<8x8x128xf32>
    %309 = arith.mulf %308, %27 : vector<8x8x128xf32>
    %310 = arith.addf %306, %309 : vector<8x8x128xf32>
    %c17_139 = arith.constant 17 : index
    %311 = memref.load %arg3[%c17_139] : memref<72xf32, #tpu.memory_space<smem>>
    %312 = vector.broadcast %311 : f32 to vector<8x8x128xf32>
    %313 = arith.mulf %312, %29 : vector<8x8x128xf32>
    %314 = arith.addf %310, %313 : vector<8x8x128xf32>
    %c1_140 = arith.constant 1 : index
    %315 = memref.load %arg4[%c1_140] : memref<8xf32, #tpu.memory_space<smem>>
    %316 = vector.broadcast %315 : f32 to vector<8x8x128xf32>
    %317 = arith.addf %314, %316 : vector<8x8x128xf32>
    %cst_141 = arith.constant 0.000000e+00 : f32
    %318 = vector.broadcast %cst_141 : f32 to vector<8x8x128xf32>
    %319 = arith.maximumf %317, %318 : vector<8x8x128xf32>
    %320 = arith.maximumf %279, %319 : vector<8x8x128xf32>
    %c9_142 = arith.constant 9 : index
    %321 = memref.load %arg3[%c9_142] : memref<72xf32, #tpu.memory_space<smem>>
    %322 = vector.broadcast %321 : f32 to vector<8x8x128xf32>
    %323 = arith.mulf %322, %11 : vector<8x8x128xf32>
    %c10_143 = arith.constant 10 : index
    %324 = memref.load %arg3[%c10_143] : memref<72xf32, #tpu.memory_space<smem>>
    %325 = vector.broadcast %324 : f32 to vector<8x8x128xf32>
    %326 = arith.mulf %325, %13 : vector<8x8x128xf32>
    %327 = arith.addf %323, %326 : vector<8x8x128xf32>
    %c11_144 = arith.constant 11 : index
    %328 = memref.load %arg3[%c11_144] : memref<72xf32, #tpu.memory_space<smem>>
    %329 = vector.broadcast %328 : f32 to vector<8x8x128xf32>
    %330 = arith.mulf %329, %15 : vector<8x8x128xf32>
    %331 = arith.addf %327, %330 : vector<8x8x128xf32>
    %c12_145 = arith.constant 12 : index
    %332 = memref.load %arg3[%c12_145] : memref<72xf32, #tpu.memory_space<smem>>
    %333 = vector.broadcast %332 : f32 to vector<8x8x128xf32>
    %334 = arith.mulf %333, %19 : vector<8x8x128xf32>
    %335 = arith.addf %331, %334 : vector<8x8x128xf32>
    %c13_146 = arith.constant 13 : index
    %336 = memref.load %arg3[%c13_146] : memref<72xf32, #tpu.memory_space<smem>>
    %337 = vector.broadcast %336 : f32 to vector<8x8x128xf32>
    %338 = arith.mulf %337, %21 : vector<8x8x128xf32>
    %339 = arith.addf %335, %338 : vector<8x8x128xf32>
    %c14_147 = arith.constant 14 : index
    %340 = memref.load %arg3[%c14_147] : memref<72xf32, #tpu.memory_space<smem>>
    %341 = vector.broadcast %340 : f32 to vector<8x8x128xf32>
    %342 = arith.mulf %341, %23 : vector<8x8x128xf32>
    %343 = arith.addf %339, %342 : vector<8x8x128xf32>
    %c15_148 = arith.constant 15 : index
    %344 = memref.load %arg3[%c15_148] : memref<72xf32, #tpu.memory_space<smem>>
    %345 = vector.broadcast %344 : f32 to vector<8x8x128xf32>
    %346 = arith.mulf %345, %27 : vector<8x8x128xf32>
    %347 = arith.addf %343, %346 : vector<8x8x128xf32>
    %c16_149 = arith.constant 16 : index
    %348 = memref.load %arg3[%c16_149] : memref<72xf32, #tpu.memory_space<smem>>
    %349 = vector.broadcast %348 : f32 to vector<8x8x128xf32>
    %350 = arith.mulf %349, %29 : vector<8x8x128xf32>
    %351 = arith.addf %347, %350 : vector<8x8x128xf32>
    %c17_150 = arith.constant 17 : index
    %352 = memref.load %arg3[%c17_150] : memref<72xf32, #tpu.memory_space<smem>>
    %353 = vector.broadcast %352 : f32 to vector<8x8x128xf32>
    %354 = arith.mulf %353, %31 : vector<8x8x128xf32>
    %355 = arith.addf %351, %354 : vector<8x8x128xf32>
    %c1_151 = arith.constant 1 : index
    %356 = memref.load %arg4[%c1_151] : memref<8xf32, #tpu.memory_space<smem>>
    %357 = vector.broadcast %356 : f32 to vector<8x8x128xf32>
    %358 = arith.addf %355, %357 : vector<8x8x128xf32>
    %cst_152 = arith.constant 0.000000e+00 : f32
    %359 = vector.broadcast %cst_152 : f32 to vector<8x8x128xf32>
    %360 = arith.maximumf %358, %359 : vector<8x8x128xf32>
    %361 = arith.maximumf %320, %360 : vector<8x8x128xf32>
    %c1_153 = arith.constant 1 : index
    %c0_154 = arith.constant 0 : index
    %c0_155 = arith.constant 0 : index
    %c0_156 = arith.constant 0 : index
    %362 = vector.load %arg2[%c1_153, %c0_154, %c0_155, %c0_156] : memref<8x8x8x1xf32, #tpu.memory_space<vmem>>, vector<1x8x8x1xf32>
    %363 = vector.shape_cast %362 : vector<1x8x8x1xf32> to vector<8x8x1xf32>
    %364 = vector.broadcast %363 : vector<8x8x1xf32> to vector<8x8x128xf32>
    %365 = arith.mulf %361, %364 : vector<8x8x128xf32>
    %366 = arith.addf %198, %365 : vector<8x8x128xf32>
    %c18 = arith.constant 18 : index
    %367 = memref.load %arg3[%c18] : memref<72xf32, #tpu.memory_space<smem>>
    %368 = vector.broadcast %367 : f32 to vector<8x8x128xf32>
    %369 = arith.mulf %368, %1 : vector<8x8x128xf32>
    %c19 = arith.constant 19 : index
    %370 = memref.load %arg3[%c19] : memref<72xf32, #tpu.memory_space<smem>>
    %371 = vector.broadcast %370 : f32 to vector<8x8x128xf32>
    %372 = arith.mulf %371, %3 : vector<8x8x128xf32>
    %373 = arith.addf %369, %372 : vector<8x8x128xf32>
    %c20 = arith.constant 20 : index
    %374 = memref.load %arg3[%c20] : memref<72xf32, #tpu.memory_space<smem>>
    %375 = vector.broadcast %374 : f32 to vector<8x8x128xf32>
    %376 = arith.mulf %375, %5 : vector<8x8x128xf32>
    %377 = arith.addf %373, %376 : vector<8x8x128xf32>
    %c21 = arith.constant 21 : index
    %378 = memref.load %arg3[%c21] : memref<72xf32, #tpu.memory_space<smem>>
    %379 = vector.broadcast %378 : f32 to vector<8x8x128xf32>
    %380 = arith.mulf %379, %9 : vector<8x8x128xf32>
    %381 = arith.addf %377, %380 : vector<8x8x128xf32>
    %c22 = arith.constant 22 : index
    %382 = memref.load %arg3[%c22] : memref<72xf32, #tpu.memory_space<smem>>
    %383 = vector.broadcast %382 : f32 to vector<8x8x128xf32>
    %384 = arith.mulf %383, %11 : vector<8x8x128xf32>
    %385 = arith.addf %381, %384 : vector<8x8x128xf32>
    %c23 = arith.constant 23 : index
    %386 = memref.load %arg3[%c23] : memref<72xf32, #tpu.memory_space<smem>>
    %387 = vector.broadcast %386 : f32 to vector<8x8x128xf32>
    %388 = arith.mulf %387, %13 : vector<8x8x128xf32>
    %389 = arith.addf %385, %388 : vector<8x8x128xf32>
    %c24 = arith.constant 24 : index
    %390 = memref.load %arg3[%c24] : memref<72xf32, #tpu.memory_space<smem>>
    %391 = vector.broadcast %390 : f32 to vector<8x8x128xf32>
    %392 = arith.mulf %391, %17 : vector<8x8x128xf32>
    %393 = arith.addf %389, %392 : vector<8x8x128xf32>
    %c25 = arith.constant 25 : index
    %394 = memref.load %arg3[%c25] : memref<72xf32, #tpu.memory_space<smem>>
    %395 = vector.broadcast %394 : f32 to vector<8x8x128xf32>
    %396 = arith.mulf %395, %19 : vector<8x8x128xf32>
    %397 = arith.addf %393, %396 : vector<8x8x128xf32>
    %c26 = arith.constant 26 : index
    %398 = memref.load %arg3[%c26] : memref<72xf32, #tpu.memory_space<smem>>
    %399 = vector.broadcast %398 : f32 to vector<8x8x128xf32>
    %400 = arith.mulf %399, %21 : vector<8x8x128xf32>
    %401 = arith.addf %397, %400 : vector<8x8x128xf32>
    %c2_157 = arith.constant 2 : index
    %402 = memref.load %arg4[%c2_157] : memref<8xf32, #tpu.memory_space<smem>>
    %403 = vector.broadcast %402 : f32 to vector<8x8x128xf32>
    %404 = arith.addf %401, %403 : vector<8x8x128xf32>
    %cst_158 = arith.constant 0.000000e+00 : f32
    %405 = vector.broadcast %cst_158 : f32 to vector<8x8x128xf32>
    %406 = arith.maximumf %404, %405 : vector<8x8x128xf32>
    %c18_159 = arith.constant 18 : index
    %407 = memref.load %arg3[%c18_159] : memref<72xf32, #tpu.memory_space<smem>>
    %408 = vector.broadcast %407 : f32 to vector<8x8x128xf32>
    %409 = arith.mulf %408, %3 : vector<8x8x128xf32>
    %c19_160 = arith.constant 19 : index
    %410 = memref.load %arg3[%c19_160] : memref<72xf32, #tpu.memory_space<smem>>
    %411 = vector.broadcast %410 : f32 to vector<8x8x128xf32>
    %412 = arith.mulf %411, %5 : vector<8x8x128xf32>
    %413 = arith.addf %409, %412 : vector<8x8x128xf32>
    %c20_161 = arith.constant 20 : index
    %414 = memref.load %arg3[%c20_161] : memref<72xf32, #tpu.memory_space<smem>>
    %415 = vector.broadcast %414 : f32 to vector<8x8x128xf32>
    %416 = arith.mulf %415, %7 : vector<8x8x128xf32>
    %417 = arith.addf %413, %416 : vector<8x8x128xf32>
    %c21_162 = arith.constant 21 : index
    %418 = memref.load %arg3[%c21_162] : memref<72xf32, #tpu.memory_space<smem>>
    %419 = vector.broadcast %418 : f32 to vector<8x8x128xf32>
    %420 = arith.mulf %419, %11 : vector<8x8x128xf32>
    %421 = arith.addf %417, %420 : vector<8x8x128xf32>
    %c22_163 = arith.constant 22 : index
    %422 = memref.load %arg3[%c22_163] : memref<72xf32, #tpu.memory_space<smem>>
    %423 = vector.broadcast %422 : f32 to vector<8x8x128xf32>
    %424 = arith.mulf %423, %13 : vector<8x8x128xf32>
    %425 = arith.addf %421, %424 : vector<8x8x128xf32>
    %c23_164 = arith.constant 23 : index
    %426 = memref.load %arg3[%c23_164] : memref<72xf32, #tpu.memory_space<smem>>
    %427 = vector.broadcast %426 : f32 to vector<8x8x128xf32>
    %428 = arith.mulf %427, %15 : vector<8x8x128xf32>
    %429 = arith.addf %425, %428 : vector<8x8x128xf32>
    %c24_165 = arith.constant 24 : index
    %430 = memref.load %arg3[%c24_165] : memref<72xf32, #tpu.memory_space<smem>>
    %431 = vector.broadcast %430 : f32 to vector<8x8x128xf32>
    %432 = arith.mulf %431, %19 : vector<8x8x128xf32>
    %433 = arith.addf %429, %432 : vector<8x8x128xf32>
    %c25_166 = arith.constant 25 : index
    %434 = memref.load %arg3[%c25_166] : memref<72xf32, #tpu.memory_space<smem>>
    %435 = vector.broadcast %434 : f32 to vector<8x8x128xf32>
    %436 = arith.mulf %435, %21 : vector<8x8x128xf32>
    %437 = arith.addf %433, %436 : vector<8x8x128xf32>
    %c26_167 = arith.constant 26 : index
    %438 = memref.load %arg3[%c26_167] : memref<72xf32, #tpu.memory_space<smem>>
    %439 = vector.broadcast %438 : f32 to vector<8x8x128xf32>
    %440 = arith.mulf %439, %23 : vector<8x8x128xf32>
    %441 = arith.addf %437, %440 : vector<8x8x128xf32>
    %c2_168 = arith.constant 2 : index
    %442 = memref.load %arg4[%c2_168] : memref<8xf32, #tpu.memory_space<smem>>
    %443 = vector.broadcast %442 : f32 to vector<8x8x128xf32>
    %444 = arith.addf %441, %443 : vector<8x8x128xf32>
    %cst_169 = arith.constant 0.000000e+00 : f32
    %445 = vector.broadcast %cst_169 : f32 to vector<8x8x128xf32>
    %446 = arith.maximumf %444, %445 : vector<8x8x128xf32>
    %447 = arith.maximumf %406, %446 : vector<8x8x128xf32>
    %c18_170 = arith.constant 18 : index
    %448 = memref.load %arg3[%c18_170] : memref<72xf32, #tpu.memory_space<smem>>
    %449 = vector.broadcast %448 : f32 to vector<8x8x128xf32>
    %450 = arith.mulf %449, %9 : vector<8x8x128xf32>
    %c19_171 = arith.constant 19 : index
    %451 = memref.load %arg3[%c19_171] : memref<72xf32, #tpu.memory_space<smem>>
    %452 = vector.broadcast %451 : f32 to vector<8x8x128xf32>
    %453 = arith.mulf %452, %11 : vector<8x8x128xf32>
    %454 = arith.addf %450, %453 : vector<8x8x128xf32>
    %c20_172 = arith.constant 20 : index
    %455 = memref.load %arg3[%c20_172] : memref<72xf32, #tpu.memory_space<smem>>
    %456 = vector.broadcast %455 : f32 to vector<8x8x128xf32>
    %457 = arith.mulf %456, %13 : vector<8x8x128xf32>
    %458 = arith.addf %454, %457 : vector<8x8x128xf32>
    %c21_173 = arith.constant 21 : index
    %459 = memref.load %arg3[%c21_173] : memref<72xf32, #tpu.memory_space<smem>>
    %460 = vector.broadcast %459 : f32 to vector<8x8x128xf32>
    %461 = arith.mulf %460, %17 : vector<8x8x128xf32>
    %462 = arith.addf %458, %461 : vector<8x8x128xf32>
    %c22_174 = arith.constant 22 : index
    %463 = memref.load %arg3[%c22_174] : memref<72xf32, #tpu.memory_space<smem>>
    %464 = vector.broadcast %463 : f32 to vector<8x8x128xf32>
    %465 = arith.mulf %464, %19 : vector<8x8x128xf32>
    %466 = arith.addf %462, %465 : vector<8x8x128xf32>
    %c23_175 = arith.constant 23 : index
    %467 = memref.load %arg3[%c23_175] : memref<72xf32, #tpu.memory_space<smem>>
    %468 = vector.broadcast %467 : f32 to vector<8x8x128xf32>
    %469 = arith.mulf %468, %21 : vector<8x8x128xf32>
    %470 = arith.addf %466, %469 : vector<8x8x128xf32>
    %c24_176 = arith.constant 24 : index
    %471 = memref.load %arg3[%c24_176] : memref<72xf32, #tpu.memory_space<smem>>
    %472 = vector.broadcast %471 : f32 to vector<8x8x128xf32>
    %473 = arith.mulf %472, %25 : vector<8x8x128xf32>
    %474 = arith.addf %470, %473 : vector<8x8x128xf32>
    %c25_177 = arith.constant 25 : index
    %475 = memref.load %arg3[%c25_177] : memref<72xf32, #tpu.memory_space<smem>>
    %476 = vector.broadcast %475 : f32 to vector<8x8x128xf32>
    %477 = arith.mulf %476, %27 : vector<8x8x128xf32>
    %478 = arith.addf %474, %477 : vector<8x8x128xf32>
    %c26_178 = arith.constant 26 : index
    %479 = memref.load %arg3[%c26_178] : memref<72xf32, #tpu.memory_space<smem>>
    %480 = vector.broadcast %479 : f32 to vector<8x8x128xf32>
    %481 = arith.mulf %480, %29 : vector<8x8x128xf32>
    %482 = arith.addf %478, %481 : vector<8x8x128xf32>
    %c2_179 = arith.constant 2 : index
    %483 = memref.load %arg4[%c2_179] : memref<8xf32, #tpu.memory_space<smem>>
    %484 = vector.broadcast %483 : f32 to vector<8x8x128xf32>
    %485 = arith.addf %482, %484 : vector<8x8x128xf32>
    %cst_180 = arith.constant 0.000000e+00 : f32
    %486 = vector.broadcast %cst_180 : f32 to vector<8x8x128xf32>
    %487 = arith.maximumf %485, %486 : vector<8x8x128xf32>
    %488 = arith.maximumf %447, %487 : vector<8x8x128xf32>
    %c18_181 = arith.constant 18 : index
    %489 = memref.load %arg3[%c18_181] : memref<72xf32, #tpu.memory_space<smem>>
    %490 = vector.broadcast %489 : f32 to vector<8x8x128xf32>
    %491 = arith.mulf %490, %11 : vector<8x8x128xf32>
    %c19_182 = arith.constant 19 : index
    %492 = memref.load %arg3[%c19_182] : memref<72xf32, #tpu.memory_space<smem>>
    %493 = vector.broadcast %492 : f32 to vector<8x8x128xf32>
    %494 = arith.mulf %493, %13 : vector<8x8x128xf32>
    %495 = arith.addf %491, %494 : vector<8x8x128xf32>
    %c20_183 = arith.constant 20 : index
    %496 = memref.load %arg3[%c20_183] : memref<72xf32, #tpu.memory_space<smem>>
    %497 = vector.broadcast %496 : f32 to vector<8x8x128xf32>
    %498 = arith.mulf %497, %15 : vector<8x8x128xf32>
    %499 = arith.addf %495, %498 : vector<8x8x128xf32>
    %c21_184 = arith.constant 21 : index
    %500 = memref.load %arg3[%c21_184] : memref<72xf32, #tpu.memory_space<smem>>
    %501 = vector.broadcast %500 : f32 to vector<8x8x128xf32>
    %502 = arith.mulf %501, %19 : vector<8x8x128xf32>
    %503 = arith.addf %499, %502 : vector<8x8x128xf32>
    %c22_185 = arith.constant 22 : index
    %504 = memref.load %arg3[%c22_185] : memref<72xf32, #tpu.memory_space<smem>>
    %505 = vector.broadcast %504 : f32 to vector<8x8x128xf32>
    %506 = arith.mulf %505, %21 : vector<8x8x128xf32>
    %507 = arith.addf %503, %506 : vector<8x8x128xf32>
    %c23_186 = arith.constant 23 : index
    %508 = memref.load %arg3[%c23_186] : memref<72xf32, #tpu.memory_space<smem>>
    %509 = vector.broadcast %508 : f32 to vector<8x8x128xf32>
    %510 = arith.mulf %509, %23 : vector<8x8x128xf32>
    %511 = arith.addf %507, %510 : vector<8x8x128xf32>
    %c24_187 = arith.constant 24 : index
    %512 = memref.load %arg3[%c24_187] : memref<72xf32, #tpu.memory_space<smem>>
    %513 = vector.broadcast %512 : f32 to vector<8x8x128xf32>
    %514 = arith.mulf %513, %27 : vector<8x8x128xf32>
    %515 = arith.addf %511, %514 : vector<8x8x128xf32>
    %c25_188 = arith.constant 25 : index
    %516 = memref.load %arg3[%c25_188] : memref<72xf32, #tpu.memory_space<smem>>
    %517 = vector.broadcast %516 : f32 to vector<8x8x128xf32>
    %518 = arith.mulf %517, %29 : vector<8x8x128xf32>
    %519 = arith.addf %515, %518 : vector<8x8x128xf32>
    %c26_189 = arith.constant 26 : index
    %520 = memref.load %arg3[%c26_189] : memref<72xf32, #tpu.memory_space<smem>>
    %521 = vector.broadcast %520 : f32 to vector<8x8x128xf32>
    %522 = arith.mulf %521, %31 : vector<8x8x128xf32>
    %523 = arith.addf %519, %522 : vector<8x8x128xf32>
    %c2_190 = arith.constant 2 : index
    %524 = memref.load %arg4[%c2_190] : memref<8xf32, #tpu.memory_space<smem>>
    %525 = vector.broadcast %524 : f32 to vector<8x8x128xf32>
    %526 = arith.addf %523, %525 : vector<8x8x128xf32>
    %cst_191 = arith.constant 0.000000e+00 : f32
    %527 = vector.broadcast %cst_191 : f32 to vector<8x8x128xf32>
    %528 = arith.maximumf %526, %527 : vector<8x8x128xf32>
    %529 = arith.maximumf %488, %528 : vector<8x8x128xf32>
    %c2_192 = arith.constant 2 : index
    %c0_193 = arith.constant 0 : index
    %c0_194 = arith.constant 0 : index
    %c0_195 = arith.constant 0 : index
    %530 = vector.load %arg2[%c2_192, %c0_193, %c0_194, %c0_195] : memref<8x8x8x1xf32, #tpu.memory_space<vmem>>, vector<1x8x8x1xf32>
    %531 = vector.shape_cast %530 : vector<1x8x8x1xf32> to vector<8x8x1xf32>
    %532 = vector.broadcast %531 : vector<8x8x1xf32> to vector<8x8x128xf32>
    %533 = arith.mulf %529, %532 : vector<8x8x128xf32>
    %534 = arith.addf %366, %533 : vector<8x8x128xf32>
    %c27 = arith.constant 27 : index
    %535 = memref.load %arg3[%c27] : memref<72xf32, #tpu.memory_space<smem>>
    %536 = vector.broadcast %535 : f32 to vector<8x8x128xf32>
    %537 = arith.mulf %536, %1 : vector<8x8x128xf32>
    %c28 = arith.constant 28 : index
    %538 = memref.load %arg3[%c28] : memref<72xf32, #tpu.memory_space<smem>>
    %539 = vector.broadcast %538 : f32 to vector<8x8x128xf32>
    %540 = arith.mulf %539, %3 : vector<8x8x128xf32>
    %541 = arith.addf %537, %540 : vector<8x8x128xf32>
    %c29 = arith.constant 29 : index
    %542 = memref.load %arg3[%c29] : memref<72xf32, #tpu.memory_space<smem>>
    %543 = vector.broadcast %542 : f32 to vector<8x8x128xf32>
    %544 = arith.mulf %543, %5 : vector<8x8x128xf32>
    %545 = arith.addf %541, %544 : vector<8x8x128xf32>
    %c30 = arith.constant 30 : index
    %546 = memref.load %arg3[%c30] : memref<72xf32, #tpu.memory_space<smem>>
    %547 = vector.broadcast %546 : f32 to vector<8x8x128xf32>
    %548 = arith.mulf %547, %9 : vector<8x8x128xf32>
    %549 = arith.addf %545, %548 : vector<8x8x128xf32>
    %c31 = arith.constant 31 : index
    %550 = memref.load %arg3[%c31] : memref<72xf32, #tpu.memory_space<smem>>
    %551 = vector.broadcast %550 : f32 to vector<8x8x128xf32>
    %552 = arith.mulf %551, %11 : vector<8x8x128xf32>
    %553 = arith.addf %549, %552 : vector<8x8x128xf32>
    %c32 = arith.constant 32 : index
    %554 = memref.load %arg3[%c32] : memref<72xf32, #tpu.memory_space<smem>>
    %555 = vector.broadcast %554 : f32 to vector<8x8x128xf32>
    %556 = arith.mulf %555, %13 : vector<8x8x128xf32>
    %557 = arith.addf %553, %556 : vector<8x8x128xf32>
    %c33 = arith.constant 33 : index
    %558 = memref.load %arg3[%c33] : memref<72xf32, #tpu.memory_space<smem>>
    %559 = vector.broadcast %558 : f32 to vector<8x8x128xf32>
    %560 = arith.mulf %559, %17 : vector<8x8x128xf32>
    %561 = arith.addf %557, %560 : vector<8x8x128xf32>
    %c34 = arith.constant 34 : index
    %562 = memref.load %arg3[%c34] : memref<72xf32, #tpu.memory_space<smem>>
    %563 = vector.broadcast %562 : f32 to vector<8x8x128xf32>
    %564 = arith.mulf %563, %19 : vector<8x8x128xf32>
    %565 = arith.addf %561, %564 : vector<8x8x128xf32>
    %c35 = arith.constant 35 : index
    %566 = memref.load %arg3[%c35] : memref<72xf32, #tpu.memory_space<smem>>
    %567 = vector.broadcast %566 : f32 to vector<8x8x128xf32>
    %568 = arith.mulf %567, %21 : vector<8x8x128xf32>
    %569 = arith.addf %565, %568 : vector<8x8x128xf32>
    %c3_196 = arith.constant 3 : index
    %570 = memref.load %arg4[%c3_196] : memref<8xf32, #tpu.memory_space<smem>>
    %571 = vector.broadcast %570 : f32 to vector<8x8x128xf32>
    %572 = arith.addf %569, %571 : vector<8x8x128xf32>
    %cst_197 = arith.constant 0.000000e+00 : f32
    %573 = vector.broadcast %cst_197 : f32 to vector<8x8x128xf32>
    %574 = arith.maximumf %572, %573 : vector<8x8x128xf32>
    %c27_198 = arith.constant 27 : index
    %575 = memref.load %arg3[%c27_198] : memref<72xf32, #tpu.memory_space<smem>>
    %576 = vector.broadcast %575 : f32 to vector<8x8x128xf32>
    %577 = arith.mulf %576, %3 : vector<8x8x128xf32>
    %c28_199 = arith.constant 28 : index
    %578 = memref.load %arg3[%c28_199] : memref<72xf32, #tpu.memory_space<smem>>
    %579 = vector.broadcast %578 : f32 to vector<8x8x128xf32>
    %580 = arith.mulf %579, %5 : vector<8x8x128xf32>
    %581 = arith.addf %577, %580 : vector<8x8x128xf32>
    %c29_200 = arith.constant 29 : index
    %582 = memref.load %arg3[%c29_200] : memref<72xf32, #tpu.memory_space<smem>>
    %583 = vector.broadcast %582 : f32 to vector<8x8x128xf32>
    %584 = arith.mulf %583, %7 : vector<8x8x128xf32>
    %585 = arith.addf %581, %584 : vector<8x8x128xf32>
    %c30_201 = arith.constant 30 : index
    %586 = memref.load %arg3[%c30_201] : memref<72xf32, #tpu.memory_space<smem>>
    %587 = vector.broadcast %586 : f32 to vector<8x8x128xf32>
    %588 = arith.mulf %587, %11 : vector<8x8x128xf32>
    %589 = arith.addf %585, %588 : vector<8x8x128xf32>
    %c31_202 = arith.constant 31 : index
    %590 = memref.load %arg3[%c31_202] : memref<72xf32, #tpu.memory_space<smem>>
    %591 = vector.broadcast %590 : f32 to vector<8x8x128xf32>
    %592 = arith.mulf %591, %13 : vector<8x8x128xf32>
    %593 = arith.addf %589, %592 : vector<8x8x128xf32>
    %c32_203 = arith.constant 32 : index
    %594 = memref.load %arg3[%c32_203] : memref<72xf32, #tpu.memory_space<smem>>
    %595 = vector.broadcast %594 : f32 to vector<8x8x128xf32>
    %596 = arith.mulf %595, %15 : vector<8x8x128xf32>
    %597 = arith.addf %593, %596 : vector<8x8x128xf32>
    %c33_204 = arith.constant 33 : index
    %598 = memref.load %arg3[%c33_204] : memref<72xf32, #tpu.memory_space<smem>>
    %599 = vector.broadcast %598 : f32 to vector<8x8x128xf32>
    %600 = arith.mulf %599, %19 : vector<8x8x128xf32>
    %601 = arith.addf %597, %600 : vector<8x8x128xf32>
    %c34_205 = arith.constant 34 : index
    %602 = memref.load %arg3[%c34_205] : memref<72xf32, #tpu.memory_space<smem>>
    %603 = vector.broadcast %602 : f32 to vector<8x8x128xf32>
    %604 = arith.mulf %603, %21 : vector<8x8x128xf32>
    %605 = arith.addf %601, %604 : vector<8x8x128xf32>
    %c35_206 = arith.constant 35 : index
    %606 = memref.load %arg3[%c35_206] : memref<72xf32, #tpu.memory_space<smem>>
    %607 = vector.broadcast %606 : f32 to vector<8x8x128xf32>
    %608 = arith.mulf %607, %23 : vector<8x8x128xf32>
    %609 = arith.addf %605, %608 : vector<8x8x128xf32>
    %c3_207 = arith.constant 3 : index
    %610 = memref.load %arg4[%c3_207] : memref<8xf32, #tpu.memory_space<smem>>
    %611 = vector.broadcast %610 : f32 to vector<8x8x128xf32>
    %612 = arith.addf %609, %611 : vector<8x8x128xf32>
    %cst_208 = arith.constant 0.000000e+00 : f32
    %613 = vector.broadcast %cst_208 : f32 to vector<8x8x128xf32>
    %614 = arith.maximumf %612, %613 : vector<8x8x128xf32>
    %615 = arith.maximumf %574, %614 : vector<8x8x128xf32>
    %c27_209 = arith.constant 27 : index
    %616 = memref.load %arg3[%c27_209] : memref<72xf32, #tpu.memory_space<smem>>
    %617 = vector.broadcast %616 : f32 to vector<8x8x128xf32>
    %618 = arith.mulf %617, %9 : vector<8x8x128xf32>
    %c28_210 = arith.constant 28 : index
    %619 = memref.load %arg3[%c28_210] : memref<72xf32, #tpu.memory_space<smem>>
    %620 = vector.broadcast %619 : f32 to vector<8x8x128xf32>
    %621 = arith.mulf %620, %11 : vector<8x8x128xf32>
    %622 = arith.addf %618, %621 : vector<8x8x128xf32>
    %c29_211 = arith.constant 29 : index
    %623 = memref.load %arg3[%c29_211] : memref<72xf32, #tpu.memory_space<smem>>
    %624 = vector.broadcast %623 : f32 to vector<8x8x128xf32>
    %625 = arith.mulf %624, %13 : vector<8x8x128xf32>
    %626 = arith.addf %622, %625 : vector<8x8x128xf32>
    %c30_212 = arith.constant 30 : index
    %627 = memref.load %arg3[%c30_212] : memref<72xf32, #tpu.memory_space<smem>>
    %628 = vector.broadcast %627 : f32 to vector<8x8x128xf32>
    %629 = arith.mulf %628, %17 : vector<8x8x128xf32>
    %630 = arith.addf %626, %629 : vector<8x8x128xf32>
    %c31_213 = arith.constant 31 : index
    %631 = memref.load %arg3[%c31_213] : memref<72xf32, #tpu.memory_space<smem>>
    %632 = vector.broadcast %631 : f32 to vector<8x8x128xf32>
    %633 = arith.mulf %632, %19 : vector<8x8x128xf32>
    %634 = arith.addf %630, %633 : vector<8x8x128xf32>
    %c32_214 = arith.constant 32 : index
    %635 = memref.load %arg3[%c32_214] : memref<72xf32, #tpu.memory_space<smem>>
    %636 = vector.broadcast %635 : f32 to vector<8x8x128xf32>
    %637 = arith.mulf %636, %21 : vector<8x8x128xf32>
    %638 = arith.addf %634, %637 : vector<8x8x128xf32>
    %c33_215 = arith.constant 33 : index
    %639 = memref.load %arg3[%c33_215] : memref<72xf32, #tpu.memory_space<smem>>
    %640 = vector.broadcast %639 : f32 to vector<8x8x128xf32>
    %641 = arith.mulf %640, %25 : vector<8x8x128xf32>
    %642 = arith.addf %638, %641 : vector<8x8x128xf32>
    %c34_216 = arith.constant 34 : index
    %643 = memref.load %arg3[%c34_216] : memref<72xf32, #tpu.memory_space<smem>>
    %644 = vector.broadcast %643 : f32 to vector<8x8x128xf32>
    %645 = arith.mulf %644, %27 : vector<8x8x128xf32>
    %646 = arith.addf %642, %645 : vector<8x8x128xf32>
    %c35_217 = arith.constant 35 : index
    %647 = memref.load %arg3[%c35_217] : memref<72xf32, #tpu.memory_space<smem>>
    %648 = vector.broadcast %647 : f32 to vector<8x8x128xf32>
    %649 = arith.mulf %648, %29 : vector<8x8x128xf32>
    %650 = arith.addf %646, %649 : vector<8x8x128xf32>
    %c3_218 = arith.constant 3 : index
    %651 = memref.load %arg4[%c3_218] : memref<8xf32, #tpu.memory_space<smem>>
    %652 = vector.broadcast %651 : f32 to vector<8x8x128xf32>
    %653 = arith.addf %650, %652 : vector<8x8x128xf32>
    %cst_219 = arith.constant 0.000000e+00 : f32
    %654 = vector.broadcast %cst_219 : f32 to vector<8x8x128xf32>
    %655 = arith.maximumf %653, %654 : vector<8x8x128xf32>
    %656 = arith.maximumf %615, %655 : vector<8x8x128xf32>
    %c27_220 = arith.constant 27 : index
    %657 = memref.load %arg3[%c27_220] : memref<72xf32, #tpu.memory_space<smem>>
    %658 = vector.broadcast %657 : f32 to vector<8x8x128xf32>
    %659 = arith.mulf %658, %11 : vector<8x8x128xf32>
    %c28_221 = arith.constant 28 : index
    %660 = memref.load %arg3[%c28_221] : memref<72xf32, #tpu.memory_space<smem>>
    %661 = vector.broadcast %660 : f32 to vector<8x8x128xf32>
    %662 = arith.mulf %661, %13 : vector<8x8x128xf32>
    %663 = arith.addf %659, %662 : vector<8x8x128xf32>
    %c29_222 = arith.constant 29 : index
    %664 = memref.load %arg3[%c29_222] : memref<72xf32, #tpu.memory_space<smem>>
    %665 = vector.broadcast %664 : f32 to vector<8x8x128xf32>
    %666 = arith.mulf %665, %15 : vector<8x8x128xf32>
    %667 = arith.addf %663, %666 : vector<8x8x128xf32>
    %c30_223 = arith.constant 30 : index
    %668 = memref.load %arg3[%c30_223] : memref<72xf32, #tpu.memory_space<smem>>
    %669 = vector.broadcast %668 : f32 to vector<8x8x128xf32>
    %670 = arith.mulf %669, %19 : vector<8x8x128xf32>
    %671 = arith.addf %667, %670 : vector<8x8x128xf32>
    %c31_224 = arith.constant 31 : index
    %672 = memref.load %arg3[%c31_224] : memref<72xf32, #tpu.memory_space<smem>>
    %673 = vector.broadcast %672 : f32 to vector<8x8x128xf32>
    %674 = arith.mulf %673, %21 : vector<8x8x128xf32>
    %675 = arith.addf %671, %674 : vector<8x8x128xf32>
    %c32_225 = arith.constant 32 : index
    %676 = memref.load %arg3[%c32_225] : memref<72xf32, #tpu.memory_space<smem>>
    %677 = vector.broadcast %676 : f32 to vector<8x8x128xf32>
    %678 = arith.mulf %677, %23 : vector<8x8x128xf32>
    %679 = arith.addf %675, %678 : vector<8x8x128xf32>
    %c33_226 = arith.constant 33 : index
    %680 = memref.load %arg3[%c33_226] : memref<72xf32, #tpu.memory_space<smem>>
    %681 = vector.broadcast %680 : f32 to vector<8x8x128xf32>
    %682 = arith.mulf %681, %27 : vector<8x8x128xf32>
    %683 = arith.addf %679, %682 : vector<8x8x128xf32>
    %c34_227 = arith.constant 34 : index
    %684 = memref.load %arg3[%c34_227] : memref<72xf32, #tpu.memory_space<smem>>
    %685 = vector.broadcast %684 : f32 to vector<8x8x128xf32>
    %686 = arith.mulf %685, %29 : vector<8x8x128xf32>
    %687 = arith.addf %683, %686 : vector<8x8x128xf32>
    %c35_228 = arith.constant 35 : index
    %688 = memref.load %arg3[%c35_228] : memref<72xf32, #tpu.memory_space<smem>>
    %689 = vector.broadcast %688 : f32 to vector<8x8x128xf32>
    %690 = arith.mulf %689, %31 : vector<8x8x128xf32>
    %691 = arith.addf %687, %690 : vector<8x8x128xf32>
    %c3_229 = arith.constant 3 : index
    %692 = memref.load %arg4[%c3_229] : memref<8xf32, #tpu.memory_space<smem>>
    %693 = vector.broadcast %692 : f32 to vector<8x8x128xf32>
    %694 = arith.addf %691, %693 : vector<8x8x128xf32>
    %cst_230 = arith.constant 0.000000e+00 : f32
    %695 = vector.broadcast %cst_230 : f32 to vector<8x8x128xf32>
    %696 = arith.maximumf %694, %695 : vector<8x8x128xf32>
    %697 = arith.maximumf %656, %696 : vector<8x8x128xf32>
    %c3_231 = arith.constant 3 : index
    %c0_232 = arith.constant 0 : index
    %c0_233 = arith.constant 0 : index
    %c0_234 = arith.constant 0 : index
    %698 = vector.load %arg2[%c3_231, %c0_232, %c0_233, %c0_234] : memref<8x8x8x1xf32, #tpu.memory_space<vmem>>, vector<1x8x8x1xf32>
    %699 = vector.shape_cast %698 : vector<1x8x8x1xf32> to vector<8x8x1xf32>
    %700 = vector.broadcast %699 : vector<8x8x1xf32> to vector<8x8x128xf32>
    %701 = arith.mulf %697, %700 : vector<8x8x128xf32>
    %702 = arith.addf %534, %701 : vector<8x8x128xf32>
    %c36 = arith.constant 36 : index
    %703 = memref.load %arg3[%c36] : memref<72xf32, #tpu.memory_space<smem>>
    %704 = vector.broadcast %703 : f32 to vector<8x8x128xf32>
    %705 = arith.mulf %704, %1 : vector<8x8x128xf32>
    %c37 = arith.constant 37 : index
    %706 = memref.load %arg3[%c37] : memref<72xf32, #tpu.memory_space<smem>>
    %707 = vector.broadcast %706 : f32 to vector<8x8x128xf32>
    %708 = arith.mulf %707, %3 : vector<8x8x128xf32>
    %709 = arith.addf %705, %708 : vector<8x8x128xf32>
    %c38 = arith.constant 38 : index
    %710 = memref.load %arg3[%c38] : memref<72xf32, #tpu.memory_space<smem>>
    %711 = vector.broadcast %710 : f32 to vector<8x8x128xf32>
    %712 = arith.mulf %711, %5 : vector<8x8x128xf32>
    %713 = arith.addf %709, %712 : vector<8x8x128xf32>
    %c39 = arith.constant 39 : index
    %714 = memref.load %arg3[%c39] : memref<72xf32, #tpu.memory_space<smem>>
    %715 = vector.broadcast %714 : f32 to vector<8x8x128xf32>
    %716 = arith.mulf %715, %9 : vector<8x8x128xf32>
    %717 = arith.addf %713, %716 : vector<8x8x128xf32>
    %c40 = arith.constant 40 : index
    %718 = memref.load %arg3[%c40] : memref<72xf32, #tpu.memory_space<smem>>
    %719 = vector.broadcast %718 : f32 to vector<8x8x128xf32>
    %720 = arith.mulf %719, %11 : vector<8x8x128xf32>
    %721 = arith.addf %717, %720 : vector<8x8x128xf32>
    %c41 = arith.constant 41 : index
    %722 = memref.load %arg3[%c41] : memref<72xf32, #tpu.memory_space<smem>>
    %723 = vector.broadcast %722 : f32 to vector<8x8x128xf32>
    %724 = arith.mulf %723, %13 : vector<8x8x128xf32>
    %725 = arith.addf %721, %724 : vector<8x8x128xf32>
    %c42 = arith.constant 42 : index
    %726 = memref.load %arg3[%c42] : memref<72xf32, #tpu.memory_space<smem>>
    %727 = vector.broadcast %726 : f32 to vector<8x8x128xf32>
    %728 = arith.mulf %727, %17 : vector<8x8x128xf32>
    %729 = arith.addf %725, %728 : vector<8x8x128xf32>
    %c43 = arith.constant 43 : index
    %730 = memref.load %arg3[%c43] : memref<72xf32, #tpu.memory_space<smem>>
    %731 = vector.broadcast %730 : f32 to vector<8x8x128xf32>
    %732 = arith.mulf %731, %19 : vector<8x8x128xf32>
    %733 = arith.addf %729, %732 : vector<8x8x128xf32>
    %c44 = arith.constant 44 : index
    %734 = memref.load %arg3[%c44] : memref<72xf32, #tpu.memory_space<smem>>
    %735 = vector.broadcast %734 : f32 to vector<8x8x128xf32>
    %736 = arith.mulf %735, %21 : vector<8x8x128xf32>
    %737 = arith.addf %733, %736 : vector<8x8x128xf32>
    %c4_235 = arith.constant 4 : index
    %738 = memref.load %arg4[%c4_235] : memref<8xf32, #tpu.memory_space<smem>>
    %739 = vector.broadcast %738 : f32 to vector<8x8x128xf32>
    %740 = arith.addf %737, %739 : vector<8x8x128xf32>
    %cst_236 = arith.constant 0.000000e+00 : f32
    %741 = vector.broadcast %cst_236 : f32 to vector<8x8x128xf32>
    %742 = arith.maximumf %740, %741 : vector<8x8x128xf32>
    %c36_237 = arith.constant 36 : index
    %743 = memref.load %arg3[%c36_237] : memref<72xf32, #tpu.memory_space<smem>>
    %744 = vector.broadcast %743 : f32 to vector<8x8x128xf32>
    %745 = arith.mulf %744, %3 : vector<8x8x128xf32>
    %c37_238 = arith.constant 37 : index
    %746 = memref.load %arg3[%c37_238] : memref<72xf32, #tpu.memory_space<smem>>
    %747 = vector.broadcast %746 : f32 to vector<8x8x128xf32>
    %748 = arith.mulf %747, %5 : vector<8x8x128xf32>
    %749 = arith.addf %745, %748 : vector<8x8x128xf32>
    %c38_239 = arith.constant 38 : index
    %750 = memref.load %arg3[%c38_239] : memref<72xf32, #tpu.memory_space<smem>>
    %751 = vector.broadcast %750 : f32 to vector<8x8x128xf32>
    %752 = arith.mulf %751, %7 : vector<8x8x128xf32>
    %753 = arith.addf %749, %752 : vector<8x8x128xf32>
    %c39_240 = arith.constant 39 : index
    %754 = memref.load %arg3[%c39_240] : memref<72xf32, #tpu.memory_space<smem>>
    %755 = vector.broadcast %754 : f32 to vector<8x8x128xf32>
    %756 = arith.mulf %755, %11 : vector<8x8x128xf32>
    %757 = arith.addf %753, %756 : vector<8x8x128xf32>
    %c40_241 = arith.constant 40 : index
    %758 = memref.load %arg3[%c40_241] : memref<72xf32, #tpu.memory_space<smem>>
    %759 = vector.broadcast %758 : f32 to vector<8x8x128xf32>
    %760 = arith.mulf %759, %13 : vector<8x8x128xf32>
    %761 = arith.addf %757, %760 : vector<8x8x128xf32>
    %c41_242 = arith.constant 41 : index
    %762 = memref.load %arg3[%c41_242] : memref<72xf32, #tpu.memory_space<smem>>
    %763 = vector.broadcast %762 : f32 to vector<8x8x128xf32>
    %764 = arith.mulf %763, %15 : vector<8x8x128xf32>
    %765 = arith.addf %761, %764 : vector<8x8x128xf32>
    %c42_243 = arith.constant 42 : index
    %766 = memref.load %arg3[%c42_243] : memref<72xf32, #tpu.memory_space<smem>>
    %767 = vector.broadcast %766 : f32 to vector<8x8x128xf32>
    %768 = arith.mulf %767, %19 : vector<8x8x128xf32>
    %769 = arith.addf %765, %768 : vector<8x8x128xf32>
    %c43_244 = arith.constant 43 : index
    %770 = memref.load %arg3[%c43_244] : memref<72xf32, #tpu.memory_space<smem>>
    %771 = vector.broadcast %770 : f32 to vector<8x8x128xf32>
    %772 = arith.mulf %771, %21 : vector<8x8x128xf32>
    %773 = arith.addf %769, %772 : vector<8x8x128xf32>
    %c44_245 = arith.constant 44 : index
    %774 = memref.load %arg3[%c44_245] : memref<72xf32, #tpu.memory_space<smem>>
    %775 = vector.broadcast %774 : f32 to vector<8x8x128xf32>
    %776 = arith.mulf %775, %23 : vector<8x8x128xf32>
    %777 = arith.addf %773, %776 : vector<8x8x128xf32>
    %c4_246 = arith.constant 4 : index
    %778 = memref.load %arg4[%c4_246] : memref<8xf32, #tpu.memory_space<smem>>
    %779 = vector.broadcast %778 : f32 to vector<8x8x128xf32>
    %780 = arith.addf %777, %779 : vector<8x8x128xf32>
    %cst_247 = arith.constant 0.000000e+00 : f32
    %781 = vector.broadcast %cst_247 : f32 to vector<8x8x128xf32>
    %782 = arith.maximumf %780, %781 : vector<8x8x128xf32>
    %783 = arith.maximumf %742, %782 : vector<8x8x128xf32>
    %c36_248 = arith.constant 36 : index
    %784 = memref.load %arg3[%c36_248] : memref<72xf32, #tpu.memory_space<smem>>
    %785 = vector.broadcast %784 : f32 to vector<8x8x128xf32>
    %786 = arith.mulf %785, %9 : vector<8x8x128xf32>
    %c37_249 = arith.constant 37 : index
    %787 = memref.load %arg3[%c37_249] : memref<72xf32, #tpu.memory_space<smem>>
    %788 = vector.broadcast %787 : f32 to vector<8x8x128xf32>
    %789 = arith.mulf %788, %11 : vector<8x8x128xf32>
    %790 = arith.addf %786, %789 : vector<8x8x128xf32>
    %c38_250 = arith.constant 38 : index
    %791 = memref.load %arg3[%c38_250] : memref<72xf32, #tpu.memory_space<smem>>
    %792 = vector.broadcast %791 : f32 to vector<8x8x128xf32>
    %793 = arith.mulf %792, %13 : vector<8x8x128xf32>
    %794 = arith.addf %790, %793 : vector<8x8x128xf32>
    %c39_251 = arith.constant 39 : index
    %795 = memref.load %arg3[%c39_251] : memref<72xf32, #tpu.memory_space<smem>>
    %796 = vector.broadcast %795 : f32 to vector<8x8x128xf32>
    %797 = arith.mulf %796, %17 : vector<8x8x128xf32>
    %798 = arith.addf %794, %797 : vector<8x8x128xf32>
    %c40_252 = arith.constant 40 : index
    %799 = memref.load %arg3[%c40_252] : memref<72xf32, #tpu.memory_space<smem>>
    %800 = vector.broadcast %799 : f32 to vector<8x8x128xf32>
    %801 = arith.mulf %800, %19 : vector<8x8x128xf32>
    %802 = arith.addf %798, %801 : vector<8x8x128xf32>
    %c41_253 = arith.constant 41 : index
    %803 = memref.load %arg3[%c41_253] : memref<72xf32, #tpu.memory_space<smem>>
    %804 = vector.broadcast %803 : f32 to vector<8x8x128xf32>
    %805 = arith.mulf %804, %21 : vector<8x8x128xf32>
    %806 = arith.addf %802, %805 : vector<8x8x128xf32>
    %c42_254 = arith.constant 42 : index
    %807 = memref.load %arg3[%c42_254] : memref<72xf32, #tpu.memory_space<smem>>
    %808 = vector.broadcast %807 : f32 to vector<8x8x128xf32>
    %809 = arith.mulf %808, %25 : vector<8x8x128xf32>
    %810 = arith.addf %806, %809 : vector<8x8x128xf32>
    %c43_255 = arith.constant 43 : index
    %811 = memref.load %arg3[%c43_255] : memref<72xf32, #tpu.memory_space<smem>>
    %812 = vector.broadcast %811 : f32 to vector<8x8x128xf32>
    %813 = arith.mulf %812, %27 : vector<8x8x128xf32>
    %814 = arith.addf %810, %813 : vector<8x8x128xf32>
    %c44_256 = arith.constant 44 : index
    %815 = memref.load %arg3[%c44_256] : memref<72xf32, #tpu.memory_space<smem>>
    %816 = vector.broadcast %815 : f32 to vector<8x8x128xf32>
    %817 = arith.mulf %816, %29 : vector<8x8x128xf32>
    %818 = arith.addf %814, %817 : vector<8x8x128xf32>
    %c4_257 = arith.constant 4 : index
    %819 = memref.load %arg4[%c4_257] : memref<8xf32, #tpu.memory_space<smem>>
    %820 = vector.broadcast %819 : f32 to vector<8x8x128xf32>
    %821 = arith.addf %818, %820 : vector<8x8x128xf32>
    %cst_258 = arith.constant 0.000000e+00 : f32
    %822 = vector.broadcast %cst_258 : f32 to vector<8x8x128xf32>
    %823 = arith.maximumf %821, %822 : vector<8x8x128xf32>
    %824 = arith.maximumf %783, %823 : vector<8x8x128xf32>
    %c36_259 = arith.constant 36 : index
    %825 = memref.load %arg3[%c36_259] : memref<72xf32, #tpu.memory_space<smem>>
    %826 = vector.broadcast %825 : f32 to vector<8x8x128xf32>
    %827 = arith.mulf %826, %11 : vector<8x8x128xf32>
    %c37_260 = arith.constant 37 : index
    %828 = memref.load %arg3[%c37_260] : memref<72xf32, #tpu.memory_space<smem>>
    %829 = vector.broadcast %828 : f32 to vector<8x8x128xf32>
    %830 = arith.mulf %829, %13 : vector<8x8x128xf32>
    %831 = arith.addf %827, %830 : vector<8x8x128xf32>
    %c38_261 = arith.constant 38 : index
    %832 = memref.load %arg3[%c38_261] : memref<72xf32, #tpu.memory_space<smem>>
    %833 = vector.broadcast %832 : f32 to vector<8x8x128xf32>
    %834 = arith.mulf %833, %15 : vector<8x8x128xf32>
    %835 = arith.addf %831, %834 : vector<8x8x128xf32>
    %c39_262 = arith.constant 39 : index
    %836 = memref.load %arg3[%c39_262] : memref<72xf32, #tpu.memory_space<smem>>
    %837 = vector.broadcast %836 : f32 to vector<8x8x128xf32>
    %838 = arith.mulf %837, %19 : vector<8x8x128xf32>
    %839 = arith.addf %835, %838 : vector<8x8x128xf32>
    %c40_263 = arith.constant 40 : index
    %840 = memref.load %arg3[%c40_263] : memref<72xf32, #tpu.memory_space<smem>>
    %841 = vector.broadcast %840 : f32 to vector<8x8x128xf32>
    %842 = arith.mulf %841, %21 : vector<8x8x128xf32>
    %843 = arith.addf %839, %842 : vector<8x8x128xf32>
    %c41_264 = arith.constant 41 : index
    %844 = memref.load %arg3[%c41_264] : memref<72xf32, #tpu.memory_space<smem>>
    %845 = vector.broadcast %844 : f32 to vector<8x8x128xf32>
    %846 = arith.mulf %845, %23 : vector<8x8x128xf32>
    %847 = arith.addf %843, %846 : vector<8x8x128xf32>
    %c42_265 = arith.constant 42 : index
    %848 = memref.load %arg3[%c42_265] : memref<72xf32, #tpu.memory_space<smem>>
    %849 = vector.broadcast %848 : f32 to vector<8x8x128xf32>
    %850 = arith.mulf %849, %27 : vector<8x8x128xf32>
    %851 = arith.addf %847, %850 : vector<8x8x128xf32>
    %c43_266 = arith.constant 43 : index
    %852 = memref.load %arg3[%c43_266] : memref<72xf32, #tpu.memory_space<smem>>
    %853 = vector.broadcast %852 : f32 to vector<8x8x128xf32>
    %854 = arith.mulf %853, %29 : vector<8x8x128xf32>
    %855 = arith.addf %851, %854 : vector<8x8x128xf32>
    %c44_267 = arith.constant 44 : index
    %856 = memref.load %arg3[%c44_267] : memref<72xf32, #tpu.memory_space<smem>>
    %857 = vector.broadcast %856 : f32 to vector<8x8x128xf32>
    %858 = arith.mulf %857, %31 : vector<8x8x128xf32>
    %859 = arith.addf %855, %858 : vector<8x8x128xf32>
    %c4_268 = arith.constant 4 : index
    %860 = memref.load %arg4[%c4_268] : memref<8xf32, #tpu.memory_space<smem>>
    %861 = vector.broadcast %860 : f32 to vector<8x8x128xf32>
    %862 = arith.addf %859, %861 : vector<8x8x128xf32>
    %cst_269 = arith.constant 0.000000e+00 : f32
    %863 = vector.broadcast %cst_269 : f32 to vector<8x8x128xf32>
    %864 = arith.maximumf %862, %863 : vector<8x8x128xf32>
    %865 = arith.maximumf %824, %864 : vector<8x8x128xf32>
    %c4_270 = arith.constant 4 : index
    %c0_271 = arith.constant 0 : index
    %c0_272 = arith.constant 0 : index
    %c0_273 = arith.constant 0 : index
    %866 = vector.load %arg2[%c4_270, %c0_271, %c0_272, %c0_273] : memref<8x8x8x1xf32, #tpu.memory_space<vmem>>, vector<1x8x8x1xf32>
    %867 = vector.shape_cast %866 : vector<1x8x8x1xf32> to vector<8x8x1xf32>
    %868 = vector.broadcast %867 : vector<8x8x1xf32> to vector<8x8x128xf32>
    %869 = arith.mulf %865, %868 : vector<8x8x128xf32>
    %870 = arith.addf %702, %869 : vector<8x8x128xf32>
    %c45 = arith.constant 45 : index
    %871 = memref.load %arg3[%c45] : memref<72xf32, #tpu.memory_space<smem>>
    %872 = vector.broadcast %871 : f32 to vector<8x8x128xf32>
    %873 = arith.mulf %872, %1 : vector<8x8x128xf32>
    %c46 = arith.constant 46 : index
    %874 = memref.load %arg3[%c46] : memref<72xf32, #tpu.memory_space<smem>>
    %875 = vector.broadcast %874 : f32 to vector<8x8x128xf32>
    %876 = arith.mulf %875, %3 : vector<8x8x128xf32>
    %877 = arith.addf %873, %876 : vector<8x8x128xf32>
    %c47 = arith.constant 47 : index
    %878 = memref.load %arg3[%c47] : memref<72xf32, #tpu.memory_space<smem>>
    %879 = vector.broadcast %878 : f32 to vector<8x8x128xf32>
    %880 = arith.mulf %879, %5 : vector<8x8x128xf32>
    %881 = arith.addf %877, %880 : vector<8x8x128xf32>
    %c48 = arith.constant 48 : index
    %882 = memref.load %arg3[%c48] : memref<72xf32, #tpu.memory_space<smem>>
    %883 = vector.broadcast %882 : f32 to vector<8x8x128xf32>
    %884 = arith.mulf %883, %9 : vector<8x8x128xf32>
    %885 = arith.addf %881, %884 : vector<8x8x128xf32>
    %c49 = arith.constant 49 : index
    %886 = memref.load %arg3[%c49] : memref<72xf32, #tpu.memory_space<smem>>
    %887 = vector.broadcast %886 : f32 to vector<8x8x128xf32>
    %888 = arith.mulf %887, %11 : vector<8x8x128xf32>
    %889 = arith.addf %885, %888 : vector<8x8x128xf32>
    %c50 = arith.constant 50 : index
    %890 = memref.load %arg3[%c50] : memref<72xf32, #tpu.memory_space<smem>>
    %891 = vector.broadcast %890 : f32 to vector<8x8x128xf32>
    %892 = arith.mulf %891, %13 : vector<8x8x128xf32>
    %893 = arith.addf %889, %892 : vector<8x8x128xf32>
    %c51 = arith.constant 51 : index
    %894 = memref.load %arg3[%c51] : memref<72xf32, #tpu.memory_space<smem>>
    %895 = vector.broadcast %894 : f32 to vector<8x8x128xf32>
    %896 = arith.mulf %895, %17 : vector<8x8x128xf32>
    %897 = arith.addf %893, %896 : vector<8x8x128xf32>
    %c52 = arith.constant 52 : index
    %898 = memref.load %arg3[%c52] : memref<72xf32, #tpu.memory_space<smem>>
    %899 = vector.broadcast %898 : f32 to vector<8x8x128xf32>
    %900 = arith.mulf %899, %19 : vector<8x8x128xf32>
    %901 = arith.addf %897, %900 : vector<8x8x128xf32>
    %c53 = arith.constant 53 : index
    %902 = memref.load %arg3[%c53] : memref<72xf32, #tpu.memory_space<smem>>
    %903 = vector.broadcast %902 : f32 to vector<8x8x128xf32>
    %904 = arith.mulf %903, %21 : vector<8x8x128xf32>
    %905 = arith.addf %901, %904 : vector<8x8x128xf32>
    %c5_274 = arith.constant 5 : index
    %906 = memref.load %arg4[%c5_274] : memref<8xf32, #tpu.memory_space<smem>>
    %907 = vector.broadcast %906 : f32 to vector<8x8x128xf32>
    %908 = arith.addf %905, %907 : vector<8x8x128xf32>
    %cst_275 = arith.constant 0.000000e+00 : f32
    %909 = vector.broadcast %cst_275 : f32 to vector<8x8x128xf32>
    %910 = arith.maximumf %908, %909 : vector<8x8x128xf32>
    %c45_276 = arith.constant 45 : index
    %911 = memref.load %arg3[%c45_276] : memref<72xf32, #tpu.memory_space<smem>>
    %912 = vector.broadcast %911 : f32 to vector<8x8x128xf32>
    %913 = arith.mulf %912, %3 : vector<8x8x128xf32>
    %c46_277 = arith.constant 46 : index
    %914 = memref.load %arg3[%c46_277] : memref<72xf32, #tpu.memory_space<smem>>
    %915 = vector.broadcast %914 : f32 to vector<8x8x128xf32>
    %916 = arith.mulf %915, %5 : vector<8x8x128xf32>
    %917 = arith.addf %913, %916 : vector<8x8x128xf32>
    %c47_278 = arith.constant 47 : index
    %918 = memref.load %arg3[%c47_278] : memref<72xf32, #tpu.memory_space<smem>>
    %919 = vector.broadcast %918 : f32 to vector<8x8x128xf32>
    %920 = arith.mulf %919, %7 : vector<8x8x128xf32>
    %921 = arith.addf %917, %920 : vector<8x8x128xf32>
    %c48_279 = arith.constant 48 : index
    %922 = memref.load %arg3[%c48_279] : memref<72xf32, #tpu.memory_space<smem>>
    %923 = vector.broadcast %922 : f32 to vector<8x8x128xf32>
    %924 = arith.mulf %923, %11 : vector<8x8x128xf32>
    %925 = arith.addf %921, %924 : vector<8x8x128xf32>
    %c49_280 = arith.constant 49 : index
    %926 = memref.load %arg3[%c49_280] : memref<72xf32, #tpu.memory_space<smem>>
    %927 = vector.broadcast %926 : f32 to vector<8x8x128xf32>
    %928 = arith.mulf %927, %13 : vector<8x8x128xf32>
    %929 = arith.addf %925, %928 : vector<8x8x128xf32>
    %c50_281 = arith.constant 50 : index
    %930 = memref.load %arg3[%c50_281] : memref<72xf32, #tpu.memory_space<smem>>
    %931 = vector.broadcast %930 : f32 to vector<8x8x128xf32>
    %932 = arith.mulf %931, %15 : vector<8x8x128xf32>
    %933 = arith.addf %929, %932 : vector<8x8x128xf32>
    %c51_282 = arith.constant 51 : index
    %934 = memref.load %arg3[%c51_282] : memref<72xf32, #tpu.memory_space<smem>>
    %935 = vector.broadcast %934 : f32 to vector<8x8x128xf32>
    %936 = arith.mulf %935, %19 : vector<8x8x128xf32>
    %937 = arith.addf %933, %936 : vector<8x8x128xf32>
    %c52_283 = arith.constant 52 : index
    %938 = memref.load %arg3[%c52_283] : memref<72xf32, #tpu.memory_space<smem>>
    %939 = vector.broadcast %938 : f32 to vector<8x8x128xf32>
    %940 = arith.mulf %939, %21 : vector<8x8x128xf32>
    %941 = arith.addf %937, %940 : vector<8x8x128xf32>
    %c53_284 = arith.constant 53 : index
    %942 = memref.load %arg3[%c53_284] : memref<72xf32, #tpu.memory_space<smem>>
    %943 = vector.broadcast %942 : f32 to vector<8x8x128xf32>
    %944 = arith.mulf %943, %23 : vector<8x8x128xf32>
    %945 = arith.addf %941, %944 : vector<8x8x128xf32>
    %c5_285 = arith.constant 5 : index
    %946 = memref.load %arg4[%c5_285] : memref<8xf32, #tpu.memory_space<smem>>
    %947 = vector.broadcast %946 : f32 to vector<8x8x128xf32>
    %948 = arith.addf %945, %947 : vector<8x8x128xf32>
    %cst_286 = arith.constant 0.000000e+00 : f32
    %949 = vector.broadcast %cst_286 : f32 to vector<8x8x128xf32>
    %950 = arith.maximumf %948, %949 : vector<8x8x128xf32>
    %951 = arith.maximumf %910, %950 : vector<8x8x128xf32>
    %c45_287 = arith.constant 45 : index
    %952 = memref.load %arg3[%c45_287] : memref<72xf32, #tpu.memory_space<smem>>
    %953 = vector.broadcast %952 : f32 to vector<8x8x128xf32>
    %954 = arith.mulf %953, %9 : vector<8x8x128xf32>
    %c46_288 = arith.constant 46 : index
    %955 = memref.load %arg3[%c46_288] : memref<72xf32, #tpu.memory_space<smem>>
    %956 = vector.broadcast %955 : f32 to vector<8x8x128xf32>
    %957 = arith.mulf %956, %11 : vector<8x8x128xf32>
    %958 = arith.addf %954, %957 : vector<8x8x128xf32>
    %c47_289 = arith.constant 47 : index
    %959 = memref.load %arg3[%c47_289] : memref<72xf32, #tpu.memory_space<smem>>
    %960 = vector.broadcast %959 : f32 to vector<8x8x128xf32>
    %961 = arith.mulf %960, %13 : vector<8x8x128xf32>
    %962 = arith.addf %958, %961 : vector<8x8x128xf32>
    %c48_290 = arith.constant 48 : index
    %963 = memref.load %arg3[%c48_290] : memref<72xf32, #tpu.memory_space<smem>>
    %964 = vector.broadcast %963 : f32 to vector<8x8x128xf32>
    %965 = arith.mulf %964, %17 : vector<8x8x128xf32>
    %966 = arith.addf %962, %965 : vector<8x8x128xf32>
    %c49_291 = arith.constant 49 : index
    %967 = memref.load %arg3[%c49_291] : memref<72xf32, #tpu.memory_space<smem>>
    %968 = vector.broadcast %967 : f32 to vector<8x8x128xf32>
    %969 = arith.mulf %968, %19 : vector<8x8x128xf32>
    %970 = arith.addf %966, %969 : vector<8x8x128xf32>
    %c50_292 = arith.constant 50 : index
    %971 = memref.load %arg3[%c50_292] : memref<72xf32, #tpu.memory_space<smem>>
    %972 = vector.broadcast %971 : f32 to vector<8x8x128xf32>
    %973 = arith.mulf %972, %21 : vector<8x8x128xf32>
    %974 = arith.addf %970, %973 : vector<8x8x128xf32>
    %c51_293 = arith.constant 51 : index
    %975 = memref.load %arg3[%c51_293] : memref<72xf32, #tpu.memory_space<smem>>
    %976 = vector.broadcast %975 : f32 to vector<8x8x128xf32>
    %977 = arith.mulf %976, %25 : vector<8x8x128xf32>
    %978 = arith.addf %974, %977 : vector<8x8x128xf32>
    %c52_294 = arith.constant 52 : index
    %979 = memref.load %arg3[%c52_294] : memref<72xf32, #tpu.memory_space<smem>>
    %980 = vector.broadcast %979 : f32 to vector<8x8x128xf32>
    %981 = arith.mulf %980, %27 : vector<8x8x128xf32>
    %982 = arith.addf %978, %981 : vector<8x8x128xf32>
    %c53_295 = arith.constant 53 : index
    %983 = memref.load %arg3[%c53_295] : memref<72xf32, #tpu.memory_space<smem>>
    %984 = vector.broadcast %983 : f32 to vector<8x8x128xf32>
    %985 = arith.mulf %984, %29 : vector<8x8x128xf32>
    %986 = arith.addf %982, %985 : vector<8x8x128xf32>
    %c5_296 = arith.constant 5 : index
    %987 = memref.load %arg4[%c5_296] : memref<8xf32, #tpu.memory_space<smem>>
    %988 = vector.broadcast %987 : f32 to vector<8x8x128xf32>
    %989 = arith.addf %986, %988 : vector<8x8x128xf32>
    %cst_297 = arith.constant 0.000000e+00 : f32
    %990 = vector.broadcast %cst_297 : f32 to vector<8x8x128xf32>
    %991 = arith.maximumf %989, %990 : vector<8x8x128xf32>
    %992 = arith.maximumf %951, %991 : vector<8x8x128xf32>
    %c45_298 = arith.constant 45 : index
    %993 = memref.load %arg3[%c45_298] : memref<72xf32, #tpu.memory_space<smem>>
    %994 = vector.broadcast %993 : f32 to vector<8x8x128xf32>
    %995 = arith.mulf %994, %11 : vector<8x8x128xf32>
    %c46_299 = arith.constant 46 : index
    %996 = memref.load %arg3[%c46_299] : memref<72xf32, #tpu.memory_space<smem>>
    %997 = vector.broadcast %996 : f32 to vector<8x8x128xf32>
    %998 = arith.mulf %997, %13 : vector<8x8x128xf32>
    %999 = arith.addf %995, %998 : vector<8x8x128xf32>
    %c47_300 = arith.constant 47 : index
    %1000 = memref.load %arg3[%c47_300] : memref<72xf32, #tpu.memory_space<smem>>
    %1001 = vector.broadcast %1000 : f32 to vector<8x8x128xf32>
    %1002 = arith.mulf %1001, %15 : vector<8x8x128xf32>
    %1003 = arith.addf %999, %1002 : vector<8x8x128xf32>
    %c48_301 = arith.constant 48 : index
    %1004 = memref.load %arg3[%c48_301] : memref<72xf32, #tpu.memory_space<smem>>
    %1005 = vector.broadcast %1004 : f32 to vector<8x8x128xf32>
    %1006 = arith.mulf %1005, %19 : vector<8x8x128xf32>
    %1007 = arith.addf %1003, %1006 : vector<8x8x128xf32>
    %c49_302 = arith.constant 49 : index
    %1008 = memref.load %arg3[%c49_302] : memref<72xf32, #tpu.memory_space<smem>>
    %1009 = vector.broadcast %1008 : f32 to vector<8x8x128xf32>
    %1010 = arith.mulf %1009, %21 : vector<8x8x128xf32>
    %1011 = arith.addf %1007, %1010 : vector<8x8x128xf32>
    %c50_303 = arith.constant 50 : index
    %1012 = memref.load %arg3[%c50_303] : memref<72xf32, #tpu.memory_space<smem>>
    %1013 = vector.broadcast %1012 : f32 to vector<8x8x128xf32>
    %1014 = arith.mulf %1013, %23 : vector<8x8x128xf32>
    %1015 = arith.addf %1011, %1014 : vector<8x8x128xf32>
    %c51_304 = arith.constant 51 : index
    %1016 = memref.load %arg3[%c51_304] : memref<72xf32, #tpu.memory_space<smem>>
    %1017 = vector.broadcast %1016 : f32 to vector<8x8x128xf32>
    %1018 = arith.mulf %1017, %27 : vector<8x8x128xf32>
    %1019 = arith.addf %1015, %1018 : vector<8x8x128xf32>
    %c52_305 = arith.constant 52 : index
    %1020 = memref.load %arg3[%c52_305] : memref<72xf32, #tpu.memory_space<smem>>
    %1021 = vector.broadcast %1020 : f32 to vector<8x8x128xf32>
    %1022 = arith.mulf %1021, %29 : vector<8x8x128xf32>
    %1023 = arith.addf %1019, %1022 : vector<8x8x128xf32>
    %c53_306 = arith.constant 53 : index
    %1024 = memref.load %arg3[%c53_306] : memref<72xf32, #tpu.memory_space<smem>>
    %1025 = vector.broadcast %1024 : f32 to vector<8x8x128xf32>
    %1026 = arith.mulf %1025, %31 : vector<8x8x128xf32>
    %1027 = arith.addf %1023, %1026 : vector<8x8x128xf32>
    %c5_307 = arith.constant 5 : index
    %1028 = memref.load %arg4[%c5_307] : memref<8xf32, #tpu.memory_space<smem>>
    %1029 = vector.broadcast %1028 : f32 to vector<8x8x128xf32>
    %1030 = arith.addf %1027, %1029 : vector<8x8x128xf32>
    %cst_308 = arith.constant 0.000000e+00 : f32
    %1031 = vector.broadcast %cst_308 : f32 to vector<8x8x128xf32>
    %1032 = arith.maximumf %1030, %1031 : vector<8x8x128xf32>
    %1033 = arith.maximumf %992, %1032 : vector<8x8x128xf32>
    %c5_309 = arith.constant 5 : index
    %c0_310 = arith.constant 0 : index
    %c0_311 = arith.constant 0 : index
    %c0_312 = arith.constant 0 : index
    %1034 = vector.load %arg2[%c5_309, %c0_310, %c0_311, %c0_312] : memref<8x8x8x1xf32, #tpu.memory_space<vmem>>, vector<1x8x8x1xf32>
    %1035 = vector.shape_cast %1034 : vector<1x8x8x1xf32> to vector<8x8x1xf32>
    %1036 = vector.broadcast %1035 : vector<8x8x1xf32> to vector<8x8x128xf32>
    %1037 = arith.mulf %1033, %1036 : vector<8x8x128xf32>
    %1038 = arith.addf %870, %1037 : vector<8x8x128xf32>
    %c54 = arith.constant 54 : index
    %1039 = memref.load %arg3[%c54] : memref<72xf32, #tpu.memory_space<smem>>
    %1040 = vector.broadcast %1039 : f32 to vector<8x8x128xf32>
    %1041 = arith.mulf %1040, %1 : vector<8x8x128xf32>
    %c55 = arith.constant 55 : index
    %1042 = memref.load %arg3[%c55] : memref<72xf32, #tpu.memory_space<smem>>
    %1043 = vector.broadcast %1042 : f32 to vector<8x8x128xf32>
    %1044 = arith.mulf %1043, %3 : vector<8x8x128xf32>
    %1045 = arith.addf %1041, %1044 : vector<8x8x128xf32>
    %c56 = arith.constant 56 : index
    %1046 = memref.load %arg3[%c56] : memref<72xf32, #tpu.memory_space<smem>>
    %1047 = vector.broadcast %1046 : f32 to vector<8x8x128xf32>
    %1048 = arith.mulf %1047, %5 : vector<8x8x128xf32>
    %1049 = arith.addf %1045, %1048 : vector<8x8x128xf32>
    %c57 = arith.constant 57 : index
    %1050 = memref.load %arg3[%c57] : memref<72xf32, #tpu.memory_space<smem>>
    %1051 = vector.broadcast %1050 : f32 to vector<8x8x128xf32>
    %1052 = arith.mulf %1051, %9 : vector<8x8x128xf32>
    %1053 = arith.addf %1049, %1052 : vector<8x8x128xf32>
    %c58 = arith.constant 58 : index
    %1054 = memref.load %arg3[%c58] : memref<72xf32, #tpu.memory_space<smem>>
    %1055 = vector.broadcast %1054 : f32 to vector<8x8x128xf32>
    %1056 = arith.mulf %1055, %11 : vector<8x8x128xf32>
    %1057 = arith.addf %1053, %1056 : vector<8x8x128xf32>
    %c59 = arith.constant 59 : index
    %1058 = memref.load %arg3[%c59] : memref<72xf32, #tpu.memory_space<smem>>
    %1059 = vector.broadcast %1058 : f32 to vector<8x8x128xf32>
    %1060 = arith.mulf %1059, %13 : vector<8x8x128xf32>
    %1061 = arith.addf %1057, %1060 : vector<8x8x128xf32>
    %c60 = arith.constant 60 : index
    %1062 = memref.load %arg3[%c60] : memref<72xf32, #tpu.memory_space<smem>>
    %1063 = vector.broadcast %1062 : f32 to vector<8x8x128xf32>
    %1064 = arith.mulf %1063, %17 : vector<8x8x128xf32>
    %1065 = arith.addf %1061, %1064 : vector<8x8x128xf32>
    %c61 = arith.constant 61 : index
    %1066 = memref.load %arg3[%c61] : memref<72xf32, #tpu.memory_space<smem>>
    %1067 = vector.broadcast %1066 : f32 to vector<8x8x128xf32>
    %1068 = arith.mulf %1067, %19 : vector<8x8x128xf32>
    %1069 = arith.addf %1065, %1068 : vector<8x8x128xf32>
    %c62 = arith.constant 62 : index
    %1070 = memref.load %arg3[%c62] : memref<72xf32, #tpu.memory_space<smem>>
    %1071 = vector.broadcast %1070 : f32 to vector<8x8x128xf32>
    %1072 = arith.mulf %1071, %21 : vector<8x8x128xf32>
    %1073 = arith.addf %1069, %1072 : vector<8x8x128xf32>
    %c6_313 = arith.constant 6 : index
    %1074 = memref.load %arg4[%c6_313] : memref<8xf32, #tpu.memory_space<smem>>
    %1075 = vector.broadcast %1074 : f32 to vector<8x8x128xf32>
    %1076 = arith.addf %1073, %1075 : vector<8x8x128xf32>
    %cst_314 = arith.constant 0.000000e+00 : f32
    %1077 = vector.broadcast %cst_314 : f32 to vector<8x8x128xf32>
    %1078 = arith.maximumf %1076, %1077 : vector<8x8x128xf32>
    %c54_315 = arith.constant 54 : index
    %1079 = memref.load %arg3[%c54_315] : memref<72xf32, #tpu.memory_space<smem>>
    %1080 = vector.broadcast %1079 : f32 to vector<8x8x128xf32>
    %1081 = arith.mulf %1080, %3 : vector<8x8x128xf32>
    %c55_316 = arith.constant 55 : index
    %1082 = memref.load %arg3[%c55_316] : memref<72xf32, #tpu.memory_space<smem>>
    %1083 = vector.broadcast %1082 : f32 to vector<8x8x128xf32>
    %1084 = arith.mulf %1083, %5 : vector<8x8x128xf32>
    %1085 = arith.addf %1081, %1084 : vector<8x8x128xf32>
    %c56_317 = arith.constant 56 : index
    %1086 = memref.load %arg3[%c56_317] : memref<72xf32, #tpu.memory_space<smem>>
    %1087 = vector.broadcast %1086 : f32 to vector<8x8x128xf32>
    %1088 = arith.mulf %1087, %7 : vector<8x8x128xf32>
    %1089 = arith.addf %1085, %1088 : vector<8x8x128xf32>
    %c57_318 = arith.constant 57 : index
    %1090 = memref.load %arg3[%c57_318] : memref<72xf32, #tpu.memory_space<smem>>
    %1091 = vector.broadcast %1090 : f32 to vector<8x8x128xf32>
    %1092 = arith.mulf %1091, %11 : vector<8x8x128xf32>
    %1093 = arith.addf %1089, %1092 : vector<8x8x128xf32>
    %c58_319 = arith.constant 58 : index
    %1094 = memref.load %arg3[%c58_319] : memref<72xf32, #tpu.memory_space<smem>>
    %1095 = vector.broadcast %1094 : f32 to vector<8x8x128xf32>
    %1096 = arith.mulf %1095, %13 : vector<8x8x128xf32>
    %1097 = arith.addf %1093, %1096 : vector<8x8x128xf32>
    %c59_320 = arith.constant 59 : index
    %1098 = memref.load %arg3[%c59_320] : memref<72xf32, #tpu.memory_space<smem>>
    %1099 = vector.broadcast %1098 : f32 to vector<8x8x128xf32>
    %1100 = arith.mulf %1099, %15 : vector<8x8x128xf32>
    %1101 = arith.addf %1097, %1100 : vector<8x8x128xf32>
    %c60_321 = arith.constant 60 : index
    %1102 = memref.load %arg3[%c60_321] : memref<72xf32, #tpu.memory_space<smem>>
    %1103 = vector.broadcast %1102 : f32 to vector<8x8x128xf32>
    %1104 = arith.mulf %1103, %19 : vector<8x8x128xf32>
    %1105 = arith.addf %1101, %1104 : vector<8x8x128xf32>
    %c61_322 = arith.constant 61 : index
    %1106 = memref.load %arg3[%c61_322] : memref<72xf32, #tpu.memory_space<smem>>
    %1107 = vector.broadcast %1106 : f32 to vector<8x8x128xf32>
    %1108 = arith.mulf %1107, %21 : vector<8x8x128xf32>
    %1109 = arith.addf %1105, %1108 : vector<8x8x128xf32>
    %c62_323 = arith.constant 62 : index
    %1110 = memref.load %arg3[%c62_323] : memref<72xf32, #tpu.memory_space<smem>>
    %1111 = vector.broadcast %1110 : f32 to vector<8x8x128xf32>
    %1112 = arith.mulf %1111, %23 : vector<8x8x128xf32>
    %1113 = arith.addf %1109, %1112 : vector<8x8x128xf32>
    %c6_324 = arith.constant 6 : index
    %1114 = memref.load %arg4[%c6_324] : memref<8xf32, #tpu.memory_space<smem>>
    %1115 = vector.broadcast %1114 : f32 to vector<8x8x128xf32>
    %1116 = arith.addf %1113, %1115 : vector<8x8x128xf32>
    %cst_325 = arith.constant 0.000000e+00 : f32
    %1117 = vector.broadcast %cst_325 : f32 to vector<8x8x128xf32>
    %1118 = arith.maximumf %1116, %1117 : vector<8x8x128xf32>
    %1119 = arith.maximumf %1078, %1118 : vector<8x8x128xf32>
    %c54_326 = arith.constant 54 : index
    %1120 = memref.load %arg3[%c54_326] : memref<72xf32, #tpu.memory_space<smem>>
    %1121 = vector.broadcast %1120 : f32 to vector<8x8x128xf32>
    %1122 = arith.mulf %1121, %9 : vector<8x8x128xf32>
    %c55_327 = arith.constant 55 : index
    %1123 = memref.load %arg3[%c55_327] : memref<72xf32, #tpu.memory_space<smem>>
    %1124 = vector.broadcast %1123 : f32 to vector<8x8x128xf32>
    %1125 = arith.mulf %1124, %11 : vector<8x8x128xf32>
    %1126 = arith.addf %1122, %1125 : vector<8x8x128xf32>
    %c56_328 = arith.constant 56 : index
    %1127 = memref.load %arg3[%c56_328] : memref<72xf32, #tpu.memory_space<smem>>
    %1128 = vector.broadcast %1127 : f32 to vector<8x8x128xf32>
    %1129 = arith.mulf %1128, %13 : vector<8x8x128xf32>
    %1130 = arith.addf %1126, %1129 : vector<8x8x128xf32>
    %c57_329 = arith.constant 57 : index
    %1131 = memref.load %arg3[%c57_329] : memref<72xf32, #tpu.memory_space<smem>>
    %1132 = vector.broadcast %1131 : f32 to vector<8x8x128xf32>
    %1133 = arith.mulf %1132, %17 : vector<8x8x128xf32>
    %1134 = arith.addf %1130, %1133 : vector<8x8x128xf32>
    %c58_330 = arith.constant 58 : index
    %1135 = memref.load %arg3[%c58_330] : memref<72xf32, #tpu.memory_space<smem>>
    %1136 = vector.broadcast %1135 : f32 to vector<8x8x128xf32>
    %1137 = arith.mulf %1136, %19 : vector<8x8x128xf32>
    %1138 = arith.addf %1134, %1137 : vector<8x8x128xf32>
    %c59_331 = arith.constant 59 : index
    %1139 = memref.load %arg3[%c59_331] : memref<72xf32, #tpu.memory_space<smem>>
    %1140 = vector.broadcast %1139 : f32 to vector<8x8x128xf32>
    %1141 = arith.mulf %1140, %21 : vector<8x8x128xf32>
    %1142 = arith.addf %1138, %1141 : vector<8x8x128xf32>
    %c60_332 = arith.constant 60 : index
    %1143 = memref.load %arg3[%c60_332] : memref<72xf32, #tpu.memory_space<smem>>
    %1144 = vector.broadcast %1143 : f32 to vector<8x8x128xf32>
    %1145 = arith.mulf %1144, %25 : vector<8x8x128xf32>
    %1146 = arith.addf %1142, %1145 : vector<8x8x128xf32>
    %c61_333 = arith.constant 61 : index
    %1147 = memref.load %arg3[%c61_333] : memref<72xf32, #tpu.memory_space<smem>>
    %1148 = vector.broadcast %1147 : f32 to vector<8x8x128xf32>
    %1149 = arith.mulf %1148, %27 : vector<8x8x128xf32>
    %1150 = arith.addf %1146, %1149 : vector<8x8x128xf32>
    %c62_334 = arith.constant 62 : index
    %1151 = memref.load %arg3[%c62_334] : memref<72xf32, #tpu.memory_space<smem>>
    %1152 = vector.broadcast %1151 : f32 to vector<8x8x128xf32>
    %1153 = arith.mulf %1152, %29 : vector<8x8x128xf32>
    %1154 = arith.addf %1150, %1153 : vector<8x8x128xf32>
    %c6_335 = arith.constant 6 : index
    %1155 = memref.load %arg4[%c6_335] : memref<8xf32, #tpu.memory_space<smem>>
    %1156 = vector.broadcast %1155 : f32 to vector<8x8x128xf32>
    %1157 = arith.addf %1154, %1156 : vector<8x8x128xf32>
    %cst_336 = arith.constant 0.000000e+00 : f32
    %1158 = vector.broadcast %cst_336 : f32 to vector<8x8x128xf32>
    %1159 = arith.maximumf %1157, %1158 : vector<8x8x128xf32>
    %1160 = arith.maximumf %1119, %1159 : vector<8x8x128xf32>
    %c54_337 = arith.constant 54 : index
    %1161 = memref.load %arg3[%c54_337] : memref<72xf32, #tpu.memory_space<smem>>
    %1162 = vector.broadcast %1161 : f32 to vector<8x8x128xf32>
    %1163 = arith.mulf %1162, %11 : vector<8x8x128xf32>
    %c55_338 = arith.constant 55 : index
    %1164 = memref.load %arg3[%c55_338] : memref<72xf32, #tpu.memory_space<smem>>
    %1165 = vector.broadcast %1164 : f32 to vector<8x8x128xf32>
    %1166 = arith.mulf %1165, %13 : vector<8x8x128xf32>
    %1167 = arith.addf %1163, %1166 : vector<8x8x128xf32>
    %c56_339 = arith.constant 56 : index
    %1168 = memref.load %arg3[%c56_339] : memref<72xf32, #tpu.memory_space<smem>>
    %1169 = vector.broadcast %1168 : f32 to vector<8x8x128xf32>
    %1170 = arith.mulf %1169, %15 : vector<8x8x128xf32>
    %1171 = arith.addf %1167, %1170 : vector<8x8x128xf32>
    %c57_340 = arith.constant 57 : index
    %1172 = memref.load %arg3[%c57_340] : memref<72xf32, #tpu.memory_space<smem>>
    %1173 = vector.broadcast %1172 : f32 to vector<8x8x128xf32>
    %1174 = arith.mulf %1173, %19 : vector<8x8x128xf32>
    %1175 = arith.addf %1171, %1174 : vector<8x8x128xf32>
    %c58_341 = arith.constant 58 : index
    %1176 = memref.load %arg3[%c58_341] : memref<72xf32, #tpu.memory_space<smem>>
    %1177 = vector.broadcast %1176 : f32 to vector<8x8x128xf32>
    %1178 = arith.mulf %1177, %21 : vector<8x8x128xf32>
    %1179 = arith.addf %1175, %1178 : vector<8x8x128xf32>
    %c59_342 = arith.constant 59 : index
    %1180 = memref.load %arg3[%c59_342] : memref<72xf32, #tpu.memory_space<smem>>
    %1181 = vector.broadcast %1180 : f32 to vector<8x8x128xf32>
    %1182 = arith.mulf %1181, %23 : vector<8x8x128xf32>
    %1183 = arith.addf %1179, %1182 : vector<8x8x128xf32>
    %c60_343 = arith.constant 60 : index
    %1184 = memref.load %arg3[%c60_343] : memref<72xf32, #tpu.memory_space<smem>>
    %1185 = vector.broadcast %1184 : f32 to vector<8x8x128xf32>
    %1186 = arith.mulf %1185, %27 : vector<8x8x128xf32>
    %1187 = arith.addf %1183, %1186 : vector<8x8x128xf32>
    %c61_344 = arith.constant 61 : index
    %1188 = memref.load %arg3[%c61_344] : memref<72xf32, #tpu.memory_space<smem>>
    %1189 = vector.broadcast %1188 : f32 to vector<8x8x128xf32>
    %1190 = arith.mulf %1189, %29 : vector<8x8x128xf32>
    %1191 = arith.addf %1187, %1190 : vector<8x8x128xf32>
    %c62_345 = arith.constant 62 : index
    %1192 = memref.load %arg3[%c62_345] : memref<72xf32, #tpu.memory_space<smem>>
    %1193 = vector.broadcast %1192 : f32 to vector<8x8x128xf32>
    %1194 = arith.mulf %1193, %31 : vector<8x8x128xf32>
    %1195 = arith.addf %1191, %1194 : vector<8x8x128xf32>
    %c6_346 = arith.constant 6 : index
    %1196 = memref.load %arg4[%c6_346] : memref<8xf32, #tpu.memory_space<smem>>
    %1197 = vector.broadcast %1196 : f32 to vector<8x8x128xf32>
    %1198 = arith.addf %1195, %1197 : vector<8x8x128xf32>
    %cst_347 = arith.constant 0.000000e+00 : f32
    %1199 = vector.broadcast %cst_347 : f32 to vector<8x8x128xf32>
    %1200 = arith.maximumf %1198, %1199 : vector<8x8x128xf32>
    %1201 = arith.maximumf %1160, %1200 : vector<8x8x128xf32>
    %c6_348 = arith.constant 6 : index
    %c0_349 = arith.constant 0 : index
    %c0_350 = arith.constant 0 : index
    %c0_351 = arith.constant 0 : index
    %1202 = vector.load %arg2[%c6_348, %c0_349, %c0_350, %c0_351] : memref<8x8x8x1xf32, #tpu.memory_space<vmem>>, vector<1x8x8x1xf32>
    %1203 = vector.shape_cast %1202 : vector<1x8x8x1xf32> to vector<8x8x1xf32>
    %1204 = vector.broadcast %1203 : vector<8x8x1xf32> to vector<8x8x128xf32>
    %1205 = arith.mulf %1201, %1204 : vector<8x8x128xf32>
    %1206 = arith.addf %1038, %1205 : vector<8x8x128xf32>
    %c63 = arith.constant 63 : index
    %1207 = memref.load %arg3[%c63] : memref<72xf32, #tpu.memory_space<smem>>
    %1208 = vector.broadcast %1207 : f32 to vector<8x8x128xf32>
    %1209 = arith.mulf %1208, %1 : vector<8x8x128xf32>
    %c64 = arith.constant 64 : index
    %1210 = memref.load %arg3[%c64] : memref<72xf32, #tpu.memory_space<smem>>
    %1211 = vector.broadcast %1210 : f32 to vector<8x8x128xf32>
    %1212 = arith.mulf %1211, %3 : vector<8x8x128xf32>
    %1213 = arith.addf %1209, %1212 : vector<8x8x128xf32>
    %c65 = arith.constant 65 : index
    %1214 = memref.load %arg3[%c65] : memref<72xf32, #tpu.memory_space<smem>>
    %1215 = vector.broadcast %1214 : f32 to vector<8x8x128xf32>
    %1216 = arith.mulf %1215, %5 : vector<8x8x128xf32>
    %1217 = arith.addf %1213, %1216 : vector<8x8x128xf32>
    %c66 = arith.constant 66 : index
    %1218 = memref.load %arg3[%c66] : memref<72xf32, #tpu.memory_space<smem>>
    %1219 = vector.broadcast %1218 : f32 to vector<8x8x128xf32>
    %1220 = arith.mulf %1219, %9 : vector<8x8x128xf32>
    %1221 = arith.addf %1217, %1220 : vector<8x8x128xf32>
    %c67 = arith.constant 67 : index
    %1222 = memref.load %arg3[%c67] : memref<72xf32, #tpu.memory_space<smem>>
    %1223 = vector.broadcast %1222 : f32 to vector<8x8x128xf32>
    %1224 = arith.mulf %1223, %11 : vector<8x8x128xf32>
    %1225 = arith.addf %1221, %1224 : vector<8x8x128xf32>
    %c68 = arith.constant 68 : index
    %1226 = memref.load %arg3[%c68] : memref<72xf32, #tpu.memory_space<smem>>
    %1227 = vector.broadcast %1226 : f32 to vector<8x8x128xf32>
    %1228 = arith.mulf %1227, %13 : vector<8x8x128xf32>
    %1229 = arith.addf %1225, %1228 : vector<8x8x128xf32>
    %c69 = arith.constant 69 : index
    %1230 = memref.load %arg3[%c69] : memref<72xf32, #tpu.memory_space<smem>>
    %1231 = vector.broadcast %1230 : f32 to vector<8x8x128xf32>
    %1232 = arith.mulf %1231, %17 : vector<8x8x128xf32>
    %1233 = arith.addf %1229, %1232 : vector<8x8x128xf32>
    %c70 = arith.constant 70 : index
    %1234 = memref.load %arg3[%c70] : memref<72xf32, #tpu.memory_space<smem>>
    %1235 = vector.broadcast %1234 : f32 to vector<8x8x128xf32>
    %1236 = arith.mulf %1235, %19 : vector<8x8x128xf32>
    %1237 = arith.addf %1233, %1236 : vector<8x8x128xf32>
    %c71 = arith.constant 71 : index
    %1238 = memref.load %arg3[%c71] : memref<72xf32, #tpu.memory_space<smem>>
    %1239 = vector.broadcast %1238 : f32 to vector<8x8x128xf32>
    %1240 = arith.mulf %1239, %21 : vector<8x8x128xf32>
    %1241 = arith.addf %1237, %1240 : vector<8x8x128xf32>
    %c7_352 = arith.constant 7 : index
    %1242 = memref.load %arg4[%c7_352] : memref<8xf32, #tpu.memory_space<smem>>
    %1243 = vector.broadcast %1242 : f32 to vector<8x8x128xf32>
    %1244 = arith.addf %1241, %1243 : vector<8x8x128xf32>
    %cst_353 = arith.constant 0.000000e+00 : f32
    %1245 = vector.broadcast %cst_353 : f32 to vector<8x8x128xf32>
    %1246 = arith.maximumf %1244, %1245 : vector<8x8x128xf32>
    %c63_354 = arith.constant 63 : index
    %1247 = memref.load %arg3[%c63_354] : memref<72xf32, #tpu.memory_space<smem>>
    %1248 = vector.broadcast %1247 : f32 to vector<8x8x128xf32>
    %1249 = arith.mulf %1248, %3 : vector<8x8x128xf32>
    %c64_355 = arith.constant 64 : index
    %1250 = memref.load %arg3[%c64_355] : memref<72xf32, #tpu.memory_space<smem>>
    %1251 = vector.broadcast %1250 : f32 to vector<8x8x128xf32>
    %1252 = arith.mulf %1251, %5 : vector<8x8x128xf32>
    %1253 = arith.addf %1249, %1252 : vector<8x8x128xf32>
    %c65_356 = arith.constant 65 : index
    %1254 = memref.load %arg3[%c65_356] : memref<72xf32, #tpu.memory_space<smem>>
    %1255 = vector.broadcast %1254 : f32 to vector<8x8x128xf32>
    %1256 = arith.mulf %1255, %7 : vector<8x8x128xf32>
    %1257 = arith.addf %1253, %1256 : vector<8x8x128xf32>
    %c66_357 = arith.constant 66 : index
    %1258 = memref.load %arg3[%c66_357] : memref<72xf32, #tpu.memory_space<smem>>
    %1259 = vector.broadcast %1258 : f32 to vector<8x8x128xf32>
    %1260 = arith.mulf %1259, %11 : vector<8x8x128xf32>
    %1261 = arith.addf %1257, %1260 : vector<8x8x128xf32>
    %c67_358 = arith.constant 67 : index
    %1262 = memref.load %arg3[%c67_358] : memref<72xf32, #tpu.memory_space<smem>>
    %1263 = vector.broadcast %1262 : f32 to vector<8x8x128xf32>
    %1264 = arith.mulf %1263, %13 : vector<8x8x128xf32>
    %1265 = arith.addf %1261, %1264 : vector<8x8x128xf32>
    %c68_359 = arith.constant 68 : index
    %1266 = memref.load %arg3[%c68_359] : memref<72xf32, #tpu.memory_space<smem>>
    %1267 = vector.broadcast %1266 : f32 to vector<8x8x128xf32>
    %1268 = arith.mulf %1267, %15 : vector<8x8x128xf32>
    %1269 = arith.addf %1265, %1268 : vector<8x8x128xf32>
    %c69_360 = arith.constant 69 : index
    %1270 = memref.load %arg3[%c69_360] : memref<72xf32, #tpu.memory_space<smem>>
    %1271 = vector.broadcast %1270 : f32 to vector<8x8x128xf32>
    %1272 = arith.mulf %1271, %19 : vector<8x8x128xf32>
    %1273 = arith.addf %1269, %1272 : vector<8x8x128xf32>
    %c70_361 = arith.constant 70 : index
    %1274 = memref.load %arg3[%c70_361] : memref<72xf32, #tpu.memory_space<smem>>
    %1275 = vector.broadcast %1274 : f32 to vector<8x8x128xf32>
    %1276 = arith.mulf %1275, %21 : vector<8x8x128xf32>
    %1277 = arith.addf %1273, %1276 : vector<8x8x128xf32>
    %c71_362 = arith.constant 71 : index
    %1278 = memref.load %arg3[%c71_362] : memref<72xf32, #tpu.memory_space<smem>>
    %1279 = vector.broadcast %1278 : f32 to vector<8x8x128xf32>
    %1280 = arith.mulf %1279, %23 : vector<8x8x128xf32>
    %1281 = arith.addf %1277, %1280 : vector<8x8x128xf32>
    %c7_363 = arith.constant 7 : index
    %1282 = memref.load %arg4[%c7_363] : memref<8xf32, #tpu.memory_space<smem>>
    %1283 = vector.broadcast %1282 : f32 to vector<8x8x128xf32>
    %1284 = arith.addf %1281, %1283 : vector<8x8x128xf32>
    %cst_364 = arith.constant 0.000000e+00 : f32
    %1285 = vector.broadcast %cst_364 : f32 to vector<8x8x128xf32>
    %1286 = arith.maximumf %1284, %1285 : vector<8x8x128xf32>
    %1287 = arith.maximumf %1246, %1286 : vector<8x8x128xf32>
    %c63_365 = arith.constant 63 : index
    %1288 = memref.load %arg3[%c63_365] : memref<72xf32, #tpu.memory_space<smem>>
    %1289 = vector.broadcast %1288 : f32 to vector<8x8x128xf32>
    %1290 = arith.mulf %1289, %9 : vector<8x8x128xf32>
    %c64_366 = arith.constant 64 : index
    %1291 = memref.load %arg3[%c64_366] : memref<72xf32, #tpu.memory_space<smem>>
    %1292 = vector.broadcast %1291 : f32 to vector<8x8x128xf32>
    %1293 = arith.mulf %1292, %11 : vector<8x8x128xf32>
    %1294 = arith.addf %1290, %1293 : vector<8x8x128xf32>
    %c65_367 = arith.constant 65 : index
    %1295 = memref.load %arg3[%c65_367] : memref<72xf32, #tpu.memory_space<smem>>
    %1296 = vector.broadcast %1295 : f32 to vector<8x8x128xf32>
    %1297 = arith.mulf %1296, %13 : vector<8x8x128xf32>
    %1298 = arith.addf %1294, %1297 : vector<8x8x128xf32>
    %c66_368 = arith.constant 66 : index
    %1299 = memref.load %arg3[%c66_368] : memref<72xf32, #tpu.memory_space<smem>>
    %1300 = vector.broadcast %1299 : f32 to vector<8x8x128xf32>
    %1301 = arith.mulf %1300, %17 : vector<8x8x128xf32>
    %1302 = arith.addf %1298, %1301 : vector<8x8x128xf32>
    %c67_369 = arith.constant 67 : index
    %1303 = memref.load %arg3[%c67_369] : memref<72xf32, #tpu.memory_space<smem>>
    %1304 = vector.broadcast %1303 : f32 to vector<8x8x128xf32>
    %1305 = arith.mulf %1304, %19 : vector<8x8x128xf32>
    %1306 = arith.addf %1302, %1305 : vector<8x8x128xf32>
    %c68_370 = arith.constant 68 : index
    %1307 = memref.load %arg3[%c68_370] : memref<72xf32, #tpu.memory_space<smem>>
    %1308 = vector.broadcast %1307 : f32 to vector<8x8x128xf32>
    %1309 = arith.mulf %1308, %21 : vector<8x8x128xf32>
    %1310 = arith.addf %1306, %1309 : vector<8x8x128xf32>
    %c69_371 = arith.constant 69 : index
    %1311 = memref.load %arg3[%c69_371] : memref<72xf32, #tpu.memory_space<smem>>
    %1312 = vector.broadcast %1311 : f32 to vector<8x8x128xf32>
    %1313 = arith.mulf %1312, %25 : vector<8x8x128xf32>
    %1314 = arith.addf %1310, %1313 : vector<8x8x128xf32>
    %c70_372 = arith.constant 70 : index
    %1315 = memref.load %arg3[%c70_372] : memref<72xf32, #tpu.memory_space<smem>>
    %1316 = vector.broadcast %1315 : f32 to vector<8x8x128xf32>
    %1317 = arith.mulf %1316, %27 : vector<8x8x128xf32>
    %1318 = arith.addf %1314, %1317 : vector<8x8x128xf32>
    %c71_373 = arith.constant 71 : index
    %1319 = memref.load %arg3[%c71_373] : memref<72xf32, #tpu.memory_space<smem>>
    %1320 = vector.broadcast %1319 : f32 to vector<8x8x128xf32>
    %1321 = arith.mulf %1320, %29 : vector<8x8x128xf32>
    %1322 = arith.addf %1318, %1321 : vector<8x8x128xf32>
    %c7_374 = arith.constant 7 : index
    %1323 = memref.load %arg4[%c7_374] : memref<8xf32, #tpu.memory_space<smem>>
    %1324 = vector.broadcast %1323 : f32 to vector<8x8x128xf32>
    %1325 = arith.addf %1322, %1324 : vector<8x8x128xf32>
    %cst_375 = arith.constant 0.000000e+00 : f32
    %1326 = vector.broadcast %cst_375 : f32 to vector<8x8x128xf32>
    %1327 = arith.maximumf %1325, %1326 : vector<8x8x128xf32>
    %1328 = arith.maximumf %1287, %1327 : vector<8x8x128xf32>
    %c63_376 = arith.constant 63 : index
    %1329 = memref.load %arg3[%c63_376] : memref<72xf32, #tpu.memory_space<smem>>
    %1330 = vector.broadcast %1329 : f32 to vector<8x8x128xf32>
    %1331 = arith.mulf %1330, %11 : vector<8x8x128xf32>
    %c64_377 = arith.constant 64 : index
    %1332 = memref.load %arg3[%c64_377] : memref<72xf32, #tpu.memory_space<smem>>
    %1333 = vector.broadcast %1332 : f32 to vector<8x8x128xf32>
    %1334 = arith.mulf %1333, %13 : vector<8x8x128xf32>
    %1335 = arith.addf %1331, %1334 : vector<8x8x128xf32>
    %c65_378 = arith.constant 65 : index
    %1336 = memref.load %arg3[%c65_378] : memref<72xf32, #tpu.memory_space<smem>>
    %1337 = vector.broadcast %1336 : f32 to vector<8x8x128xf32>
    %1338 = arith.mulf %1337, %15 : vector<8x8x128xf32>
    %1339 = arith.addf %1335, %1338 : vector<8x8x128xf32>
    %c66_379 = arith.constant 66 : index
    %1340 = memref.load %arg3[%c66_379] : memref<72xf32, #tpu.memory_space<smem>>
    %1341 = vector.broadcast %1340 : f32 to vector<8x8x128xf32>
    %1342 = arith.mulf %1341, %19 : vector<8x8x128xf32>
    %1343 = arith.addf %1339, %1342 : vector<8x8x128xf32>
    %c67_380 = arith.constant 67 : index
    %1344 = memref.load %arg3[%c67_380] : memref<72xf32, #tpu.memory_space<smem>>
    %1345 = vector.broadcast %1344 : f32 to vector<8x8x128xf32>
    %1346 = arith.mulf %1345, %21 : vector<8x8x128xf32>
    %1347 = arith.addf %1343, %1346 : vector<8x8x128xf32>
    %c68_381 = arith.constant 68 : index
    %1348 = memref.load %arg3[%c68_381] : memref<72xf32, #tpu.memory_space<smem>>
    %1349 = vector.broadcast %1348 : f32 to vector<8x8x128xf32>
    %1350 = arith.mulf %1349, %23 : vector<8x8x128xf32>
    %1351 = arith.addf %1347, %1350 : vector<8x8x128xf32>
    %c69_382 = arith.constant 69 : index
    %1352 = memref.load %arg3[%c69_382] : memref<72xf32, #tpu.memory_space<smem>>
    %1353 = vector.broadcast %1352 : f32 to vector<8x8x128xf32>
    %1354 = arith.mulf %1353, %27 : vector<8x8x128xf32>
    %1355 = arith.addf %1351, %1354 : vector<8x8x128xf32>
    %c70_383 = arith.constant 70 : index
    %1356 = memref.load %arg3[%c70_383] : memref<72xf32, #tpu.memory_space<smem>>
    %1357 = vector.broadcast %1356 : f32 to vector<8x8x128xf32>
    %1358 = arith.mulf %1357, %29 : vector<8x8x128xf32>
    %1359 = arith.addf %1355, %1358 : vector<8x8x128xf32>
    %c71_384 = arith.constant 71 : index
    %1360 = memref.load %arg3[%c71_384] : memref<72xf32, #tpu.memory_space<smem>>
    %1361 = vector.broadcast %1360 : f32 to vector<8x8x128xf32>
    %1362 = arith.mulf %1361, %31 : vector<8x8x128xf32>
    %1363 = arith.addf %1359, %1362 : vector<8x8x128xf32>
    %c7_385 = arith.constant 7 : index
    %1364 = memref.load %arg4[%c7_385] : memref<8xf32, #tpu.memory_space<smem>>
    %1365 = vector.broadcast %1364 : f32 to vector<8x8x128xf32>
    %1366 = arith.addf %1363, %1365 : vector<8x8x128xf32>
    %cst_386 = arith.constant 0.000000e+00 : f32
    %1367 = vector.broadcast %cst_386 : f32 to vector<8x8x128xf32>
    %1368 = arith.maximumf %1366, %1367 : vector<8x8x128xf32>
    %1369 = arith.maximumf %1328, %1368 : vector<8x8x128xf32>
    %c7_387 = arith.constant 7 : index
    %c0_388 = arith.constant 0 : index
    %c0_389 = arith.constant 0 : index
    %c0_390 = arith.constant 0 : index
    %1370 = vector.load %arg2[%c7_387, %c0_388, %c0_389, %c0_390] : memref<8x8x8x1xf32, #tpu.memory_space<vmem>>, vector<1x8x8x1xf32>
    %1371 = vector.shape_cast %1370 : vector<1x8x8x1xf32> to vector<8x8x1xf32>
    %1372 = vector.broadcast %1371 : vector<8x8x1xf32> to vector<8x8x128xf32>
    %1373 = arith.mulf %1369, %1372 : vector<8x8x128xf32>
    %1374 = arith.addf %1206, %1373 : vector<8x8x128xf32>
    %cst_391 = arith.constant dense<0.000000e+00> : vector<128xf32>
    %1375 = vector.multi_reduction <add>, %1374, %cst_391 [0, 1] : vector<8x8x128xf32> to vector<128xf32>
    %c0_392 = arith.constant 0 : index
    %1376 = memref.load %arg5[%c0_392] : memref<1xf32, #tpu.memory_space<smem>>
    %1377 = vector.broadcast %1376 : f32 to vector<128xf32>
    %1378 = arith.addf %1375, %1377 : vector<128xf32>
    %cst_393 = arith.constant 0.000000e+00 : f32
    %1379 = vector.broadcast %cst_393 : f32 to vector<128xf32>
    %1380 = arith.subf %1379, %1378 : vector<128xf32>
    %1381 = math.exp %1380 : vector<128xf32>
    %cst_394 = arith.constant 1.000000e+00 : f32
    %1382 = vector.broadcast %cst_394 : f32 to vector<128xf32>
    %1383 = arith.addf %1382, %1381 : vector<128xf32>
    %cst_395 = arith.constant 1.000000e+00 : f32
    %1384 = vector.broadcast %cst_395 : f32 to vector<128xf32>
    %1385 = arith.divf %1384, %1383 : vector<128xf32>
    %1386 = vector.shape_cast %1385 : vector<128xf32> to vector<1x128xf32>
    %c0_396 = arith.constant 0 : index
    %c0_397 = arith.constant 0 : index
    %1387 = vector.load %arg6[%c0_396, %c0_397] : memref<1x128xf32, #tpu.memory_space<vmem>>, vector<1x128xf32>
    tpu.vector_store %arg6[%c0_396, %c0_397], %1386 {strides = array<i32>} : memref<1x128xf32, #tpu.memory_space<vmem>>, vector<1x128xf32>,
    return
  }
  func.func @transform_0(%arg0: i32) -> (i32, i32, i32, i32, i32) {
    %c0_i32 = arith.constant 0 : i32
    %c0_i32_0 = arith.constant 0 : i32
    %c0_i32_1 = arith.constant 0 : i32
    %c0_i32_2 = arith.constant 0 : i32
    %c0_i32_3 = arith.constant 0 : i32
    return %c0_i32, %c0_i32_0, %c0_i32_1, %c0_i32_2, %arg0 : i32, i32, i32, i32, i32
  }
  func.func @transform_1(%arg0: i32) -> (i32, i32, i32, i32) {
    %c0_i32 = arith.constant 0 : i32
    %c0_i32_0 = arith.constant 0 : i32
    %c0_i32_1 = arith.constant 0 : i32
    %c0_i32_2 = arith.constant 0 : i32
    %c0_i32_3 = arith.constant 0 : i32
    return %c0_i32, %c0_i32_0, %c0_i32_1, %c0_i32_2 : i32, i32, i32, i32
  }
  func.func @transform_2(%arg0: i32) -> i32 {
    %c0_i32 = arith.constant 0 : i32
    %c0_i32_0 = arith.constant 0 : i32
    return %c0_i32 : i32
  }
  func.func @transform_3(%arg0: i32) -> i32 {
    %c0_i32 = arith.constant 0 : i32
    %c0_i32_0 = arith.constant 0 : i32
    return %c0_i32 : i32
  }
  func.func @transform_4(%arg0: i32) -> i32 {
    %c0_i32 = arith.constant 0 : i32
    %c0_i32_0 = arith.constant 0 : i32
    return %c0_i32 : i32
  }
  func.func @transform_5(%arg0: i32) -> (i32, i32) {
    %c0_i32 = arith.constant 0 : i32
    %c0_i32_0 = arith.constant 0 : i32
    return %c0_i32, %arg0 : i32, i32
  }
}

</mosaic_0001>

<llo_original>
// kernel: cnn_forward_pallas.1
$region0: #{cnn_forward_pallas.1}
  #allocation0 [shape = 'u32[]', space=smem, size = 0x4, offset = 0x4, fixed_abs, tag = 'smem constant byte address 0x4 - core index']
  #allocation1 [shape = 'u32[144,128]{1,0:T(1,128)}', space=vmem, size = 0x12000, scoped, tag = 'internal scratch']
  #allocation2 [shape = 'f32[1]{0:T(128)S(6)}', space=smem, size = 0x200, scoped, tag = 'scoped memory for cnn_forward_pallas.1']
  %s0 = inlined_call_operand.vmem [shape: f32[2,2,9,9,128], index: 0, kind: input, shape index: {}]
  %s1 = inlined_call_operand.vmem [shape: f32[8,8,8,1], index: 1, kind: input, shape index: {}]
  %s2 = inlined_call_operand.vmem [shape: f32[72], index: 2, kind: input, shape index: {}]
  %s3 = inlined_call_operand.vmem [shape: f32[8], index: 3, kind: input, shape index: {}]
  %s4 = inlined_call_operand.<no memory space> [shape: f32[1], index: 4, kind: input, shape index: {}]
  %s5 = inlined_call_operand.vmem [shape: f32[1,128], index: 5, kind: output, shape index: {}]
  %s6 = sld [smem:[#allocation0]]
  $region38: #{cnn_forward_pallas.1} parent=0
    _
  %s8 = ssub.s32 1, %s6
  %s9 = scalar_select 0, %s8, %s6
  %10 = sst [smem:[#allocation2]] %s4
  $region1: #{cnn_forward_pallas.1} parent=0
    #allocation3 [shape = 'u8[512]{0}', space=smem, size = 0x200, scoped, tag = 'input window, operand 2, single buffered']
    #allocation4 [shape = 's32[1]{0}', space=sflag, size = 0x4, scoped, tag = 'scoped memory for cnn_forward_pallas.1']
    #allocation5 [shape = 'u8[512]{0}', space=smem, size = 0x200, scoped, tag = 'input window, operand 3, single buffered']
    #allocation6 [shape = 's32[1]{0}', space=sflag, size = 0x4, scoped, tag = 'scoped memory for cnn_forward_pallas.1']
    %11 = vsyncpa [#allocation4], 0
    %12 = vsyncpa [#allocation6], 0
    // Predicated region
    $region2: #{cnn_forward_pallas.1} parent=1 // pred_check
      _
    $region3: #{cnn_forward_pallas.1} parent=1 // pred_check_branch
      %14 = sbr.rel (0) target = $region5
    $region4: #{cnn_forward_pallas.1} parent=1 // pred_region
      _
    $region5: #{cnn_forward_pallas.1} parent=1 // pred_fallthru
      _
    // Predicated region
    $region6: #{cnn_forward_pallas.1} parent=1 // pred_check
      _
    $region7: #{cnn_forward_pallas.1} parent=1 // pred_check_branch
      %16 = sbr.rel (0) target = $region9
    $region8: #{cnn_forward_pallas.1} parent=1 // pred_region
      _
    $region9: #{cnn_forward_pallas.1} parent=1 // pred_fallthru
      _
    // Predicated region
    $region10: #{cnn_forward_pallas.1} parent=1 // pred_check
      _
    $region11: #{cnn_forward_pallas.1} parent=1 // pred_check_branch
      %18 = sbr.rel (0) target = $region13
    $region12: #{cnn_forward_pallas.1} parent=1 // pred_region
      %s20 = ssub.s32 16, 16
      %21 = vsyncadd [#allocation4], %s20
      %s23 = sshll.u32 %s2, 4
      %s24 = int_to_ptr.vmem [resolvable:$true] %s23
      %26 = dma.vmem_to_smem %s24, 16, [#allocation3], [#allocation4]
    $region13: #{cnn_forward_pallas.1} parent=1 // pred_fallthru
      _
    // Predicated region
    $region14: #{cnn_forward_pallas.1} parent=1 // pred_check
      _
    $region15: #{cnn_forward_pallas.1} parent=1 // pred_check_branch
      %28 = sbr.rel (0) target = $region17
    $region16: #{cnn_forward_pallas.1} parent=1 // pred_region
      %s30 = ssub.s32 16, 16
      %31 = vsyncadd [#allocation6], %s30
      %s33 = sshll.u32 %s3, 4
      %s34 = int_to_ptr.vmem [resolvable:$true] %s33
      %36 = dma.vmem_to_smem %s34, 16, [#allocation5], [#allocation6]
    $region17: #{cnn_forward_pallas.1} parent=1 // pred_fallthru
      _
    // Predicated region
    $region18: #{cnn_forward_pallas.1} parent=1 // pred_check
      _
    $region19: #{cnn_forward_pallas.1} parent=1 // pred_check_branch
      %38 = sbr.rel (0) target = $region21
    $region20: #{cnn_forward_pallas.1} parent=1 // pred_region
      _
    $region21: #{cnn_forward_pallas.1} parent=1 // pred_fallthru
      _
    // Predicated region
    $region22: #{cnn_forward_pallas.1} parent=1 // pred_check
      _
    $region23: #{cnn_forward_pallas.1} parent=1 // pred_check_branch
      %40 = sbr.rel (0) target = $region25
    $region24: #{cnn_forward_pallas.1} parent=1 // pred_region
      %41 = dma.done [#allocation4], 16
    $region25: #{cnn_forward_pallas.1} parent=1 // pred_fallthru
      _
    // Predicated region
    $region26: #{cnn_forward_pallas.1} parent=1 // pred_check
      _
    $region27: #{cnn_forward_pallas.1} parent=1 // pred_check_branch
      %43 = sbr.rel (0) target = $region29
    $region28: #{cnn_forward_pallas.1} parent=1 // pred_region
      %44 = dma.done [#allocation6], 16
    $region29: #{cnn_forward_pallas.1} parent=1 // pred_fallthru
      _
    %45 = sfence
    %v46 = vld [vmem:[%s0] sm:$0xff]
    %v47 = vld [vmem:[%s0 + $0x10] sm:$0xff]
    %v48 = vld [vmem:[%s0 + $0x20] sm:$0xff]
    %v49 = vld [vmem:[%s0 + $0x30] sm:$0xff]
    %v50 = vld [vmem:[%s0 + $0x40] sm:$0xff]
    %v51 = vld [vmem:[%s0 + $0x50] sm:$0xff]
    %v52 = vld [vmem:[%s0 + $0x60] sm:$0xff]
    %v53 = vld [vmem:[%s0 + $0x70] sm:$0xff]
    %s54 = scalar_lea.vmem %s0, 144
    %v55 = vld [vmem:[%s54] sm:$0xff]
    %v56 = vld [vmem:[%s54 + $0x10] sm:$0xff]
    %v57 = vld [vmem:[%s54 + $0x20] sm:$0xff]
    %v58 = vld [vmem:[%s54 + $0x30] sm:$0xff]
    %v59 = vld [vmem:[%s54 + $0x40] sm:$0xff]
    %v60 = vld [vmem:[%s54 + $0x50] sm:$0xff]
    %v61 = vld [vmem:[%s54 + $0x60] sm:$0xff]
    %v62 = vld [vmem:[%s54 + $0x70] sm:$0xff]
    %v63 = vld [vmem:[%s0 + $0x1] sm:$0xff]
    %v64 = vld [vmem:[%s0 + $0x11] sm:$0xff]
    %v65 = vld [vmem:[%s0 + $0x21] sm:$0xff]
    %v66 = vld [vmem:[%s0 + $0x31] sm:$0xff]
    %v67 = vld [vmem:[%s0 + $0x41] sm:$0xff]
    %v68 = vld [vmem:[%s0 + $0x51] sm:$0xff]
    %v69 = vld [vmem:[%s0 + $0x61] sm:$0xff]
    %v70 = vld [vmem:[%s0 + $0x71] sm:$0xff]
    %v71 = vld [vmem:[%s54 + $0x1] sm:$0xff]
    %v72 = vld [vmem:[%s54 + $0x11] sm:$0xff]
    %v73 = vld [vmem:[%s54 + $0x21] sm:$0xff]
    %v74 = vld [vmem:[%s54 + $0x31] sm:$0xff]
    %v75 = vld [vmem:[%s54 + $0x41] sm:$0xff]
    %v76 = vld [vmem:[%s54 + $0x51] sm:$0xff]
    %v77 = vld [vmem:[%s54 + $0x61] sm:$0xff]
    %v78 = vld [vmem:[%s54 + $0x71] sm:$0xff]
    %s79 = scalar_lea.vmem %s0, 288
    %v80 = vld [vmem:[%s79] sm:$0xff]
    %v81 = vld [vmem:[%s79 + $0x10] sm:$0xff]
    %v82 = vld [vmem:[%s79 + $0x20] sm:$0xff]
    %v83 = vld [vmem:[%s79 + $0x30] sm:$0xff]
    %v84 = vld [vmem:[%s79 + $0x40] sm:$0xff]
    %v85 = vld [vmem:[%s79 + $0x50] sm:$0xff]
    %v86 = vld [vmem:[%s79 + $0x60] sm:$0xff]
    %v87 = vld [vmem:[%s79 + $0x70] sm:$0xff]
    %s88 = scalar_lea.vmem %s0, 432
    %v89 = vld [vmem:[%s88] sm:$0xff]
    %v90 = vld [vmem:[%s88 + $0x10] sm:$0xff]
    %v91 = vld [vmem:[%s88 + $0x20] sm:$0xff]
    %v92 = vld [vmem:[%s88 + $0x30] sm:$0xff]
    %v93 = vld [vmem:[%s88 + $0x40] sm:$0xff]
    %v94 = vld [vmem:[%s88 + $0x50] sm:$0xff]
    %v95 = vld [vmem:[%s88 + $0x60] sm:$0xff]
    %v96 = vld [vmem:[%s88 + $0x70] sm:$0xff]
    %v97 = vld [vmem:[%s79 + $0x1] sm:$0xff]
    %v98 = vld [vmem:[%s79 + $0x11] sm:$0xff]
    %v99 = vld [vmem:[%s79 + $0x21] sm:$0xff]
    %v100 = vld [vmem:[%s79 + $0x31] sm:$0xff]
    %v101 = vld [vmem:[%s79 + $0x41] sm:$0xff]
    %v102 = vld [vmem:[%s79 + $0x51] sm:$0xff]
    %v103 = vld [vmem:[%s79 + $0x61] sm:$0xff]
    %v104 = vld [vmem:[%s79 + $0x71] sm:$0xff]
    %v105 = vld [vmem:[%s88 + $0x1] sm:$0xff]
    %v106 = vld [vmem:[%s88 + $0x11] sm:$0xff]
    %v107 = vld [vmem:[%s88 + $0x21] sm:$0xff]
    %v108 = vld [vmem:[%s88 + $0x31] sm:$0xff]
    %v109 = vld [vmem:[%s88 + $0x41] sm:$0xff]
    %v110 = vld [vmem:[%s88 + $0x51] sm:$0xff]
    %v111 = vld [vmem:[%s88 + $0x61] sm:$0xff]
    %v112 = vld [vmem:[%s88 + $0x71] sm:$0xff]
    %s113 = scalar_lea.vmem %s0, 16
    %v114 = vld [vmem:[%s113] sm:$0xff]
    %v115 = vld [vmem:[%s113 + $0x10] sm:$0xff]
    %v116 = vld [vmem:[%s113 + $0x20] sm:$0xff]
    %v117 = vld [vmem:[%s113 + $0x30] sm:$0xff]
    %v118 = vld [vmem:[%s113 + $0x40] sm:$0xff]
    %v119 = vld [vmem:[%s113 + $0x50] sm:$0xff]
    %v120 = vld [vmem:[%s113 + $0x60] sm:$0xff]
    %v121 = vld [vmem:[%s113 + $0x70] sm:$0xff]
    %s122 = scalar_lea.vmem %s0, 160
    %v123 = vld [vmem:[%s122] sm:$0xff]
    %v124 = vld [vmem:[%s122 + $0x10] sm:$0xff]
    %v125 = vld [vmem:[%s122 + $0x20] sm:$0xff]
    %v126 = vld [vmem:[%s122 + $0x30] sm:$0xff]
    %v127 = vld [vmem:[%s122 + $0x40] sm:$0xff]
    %v128 = vld [vmem:[%s122 + $0x50] sm:$0xff]
    %v129 = vld [vmem:[%s122 + $0x60] sm:$0xff]
    %v130 = vld [vmem:[%s122 + $0x70] sm:$0xff]
    %v131 = vld [vmem:[%s113 + $0x1] sm:$0xff]
    %v132 = vld [vmem:[%s113 + $0x11] sm:$0xff]
    %v133 = vld [vmem:[%s113 + $0x21] sm:$0xff]
    %v134 = vld [vmem:[%s113 + $0x31] sm:$0xff]
    %v135 = vld [vmem:[%s113 + $0x41] sm:$0xff]
    %v136 = vld [vmem:[%s113 + $0x51] sm:$0xff]
    %v137 = vld [vmem:[%s113 + $0x61] sm:$0xff]
    %v138 = vld [vmem:[%s113 + $0x71] sm:$0xff]
    %v139 = vld [vmem:[%s122 + $0x1] sm:$0xff]
    %v140 = vld [vmem:[%s122 + $0x11] sm:$0xff]
    %v141 = vld [vmem:[%s122 + $0x21] sm:$0xff]
    %v142 = vld [vmem:[%s122 + $0x31] sm:$0xff]
    %v143 = vld [vmem:[%s122 + $0x41] sm:$0xff]
    %v144 = vld [vmem:[%s122 + $0x51] sm:$0xff]
    %v145 = vld [vmem:[%s122 + $0x61] sm:$0xff]
    %v146 = vld [vmem:[%s122 + $0x71] sm:$0xff]
    %s147 = scalar_lea.vmem %s0, 304
    %v148 = vld [vmem:[%s147] sm:$0xff]
    %v149 = vld [vmem:[%s147 + $0x10] sm:$0xff]
    %v150 = vld [vmem:[%s147 + $0x20] sm:$0xff]
    %v151 = vld [vmem:[%s147 + $0x30] sm:$0xff]
    %v152 = vld [vmem:[%s147 + $0x40] sm:$0xff]
    %v153 = vld [vmem:[%s147 + $0x50] sm:$0xff]
    %v154 = vld [vmem:[%s147 + $0x60] sm:$0xff]
    %v155 = vld [vmem:[%s147 + $0x70] sm:$0xff]
    %s156 = scalar_lea.vmem %s0, 448
    %v157 = vld [vmem:[%s156] sm:$0xff]
    %v158 = vld [vmem:[%s156 + $0x10] sm:$0xff]
    %v159 = vld [vmem:[%s156 + $0x20] sm:$0xff]
    %v160 = vld [vmem:[%s156 + $0x30] sm:$0xff]
    %v161 = vld [vmem:[%s156 + $0x40] sm:$0xff]
    %v162 = vld [vmem:[%s156 + $0x50] sm:$0xff]
    %v163 = vld [vmem:[%s156 + $0x60] sm:$0xff]
    %v164 = vld [vmem:[%s156 + $0x70] sm:$0xff]
    %v165 = vld [vmem:[%s147 + $0x1] sm:$0xff]
    %v166 = vld [vmem:[%s147 + $0x11] sm:$0xff]
    %v167 = vld [vmem:[%s147 + $0x21] sm:$0xff]
    %v168 = vld [vmem:[%s147 + $0x31] sm:$0xff]
    %v169 = vld [vmem:[%s147 + $0x41] sm:$0xff]
    %v170 = vld [vmem:[%s147 + $0x51] sm:$0xff]
    %v171 = vld [vmem:[%s147 + $0x61] sm:$0xff]
    %v172 = vld [vmem:[%s147 + $0x71] sm:$0xff]
    %v173 = vld [vmem:[%s156 + $0x1] sm:$0xff]
    %v174 = vld [vmem:[%s156 + $0x11] sm:$0xff]
    %v175 = vld [vmem:[%s156 + $0x21] sm:$0xff]
    %v176 = vld [vmem:[%s156 + $0x31] sm:$0xff]
    %v177 = vld [vmem:[%s156 + $0x41] sm:$0xff]
    %v178 = vld [vmem:[%s156 + $0x51] sm:$0xff]
    %v179 = vld [vmem:[%s156 + $0x61] sm:$0xff]
    %v180 = vld [vmem:[%s156 + $0x71] sm:$0xff]
    %s181 = sld [smem:[#allocation3]]
    %v182 = vstv %s181
    %v183 = vmul.f32 %v182, %v46
    %v184 = vmul.f32 %v182, %v47
    %v185 = vmul.f32 %v182, %v48
    %v186 = vmul.f32 %v182, %v49
    %v187 = vmul.f32 %v182, %v50
    %v188 = vmul.f32 %v182, %v51
    %v189 = vmul.f32 %v182, %v52
    %v190 = vmul.f32 %v182, %v53
    %s191 = sld [smem:[#allocation3 + $0x1]]
    %v192 = vstv %s191
    %v193 = vmul.f32 %v192, %v55
    %v194 = vmul.f32 %v192, %v56
    %v195 = vmul.f32 %v192, %v57
    %v196 = vmul.f32 %v192, %v58
    %v197 = vmul.f32 %v192, %v59
    %v198 = vmul.f32 %v192, %v60
    %v199 = vmul.f32 %v192, %v61
    %v200 = vmul.f32 %v192, %v62
    %v201 = vadd.f32 %v183, %v193
    %v202 = vadd.f32 %v184, %v194
    %v203 = vadd.f32 %v185, %v195
    %v204 = vadd.f32 %v186, %v196
    %v205 = vadd.f32 %v187, %v197
    %v206 = vadd.f32 %v188, %v198
    %v207 = vadd.f32 %v189, %v199
    %v208 = vadd.f32 %v190, %v200
    %s209 = sld [smem:[#allocation3 + $0x2]]
    %v210 = vstv %s209
    %v211 = vmul.f32 %v210, %v63
    %v212 = vmul.f32 %v210, %v64
    %v213 = vmul.f32 %v210, %v65
    %v214 = vmul.f32 %v210, %v66
    %v215 = vmul.f32 %v210, %v67
    %v216 = vmul.f32 %v210, %v68
    %v217 = vmul.f32 %v210, %v69
    %v218 = vmul.f32 %v210, %v70
    %v219 = vadd.f32 %v201, %v211
    %v220 = vadd.f32 %v202, %v212
    %v221 = vadd.f32 %v203, %v213
    %v222 = vadd.f32 %v204, %v214
    %v223 = vadd.f32 %v205, %v215
    %v224 = vadd.f32 %v206, %v216
    %v225 = vadd.f32 %v207, %v217
    %v226 = vadd.f32 %v208, %v218
    %s227 = sld [smem:[#allocation3 + $0x3]]
    %v228 = vstv %s227
    %v229 = vmul.f32 %v228, %v80
    %v230 = vmul.f32 %v228, %v81
    %v231 = vmul.f32 %v228, %v82
    %v232 = vmul.f32 %v228, %v83
    %v233 = vmul.f32 %v228, %v84
    %v234 = vmul.f32 %v228, %v85
    %v235 = vmul.f32 %v228, %v86
    %v236 = vmul.f32 %v228, %v87
    %v237 = vadd.f32 %v219, %v229
    %v238 = vadd.f32 %v220, %v230
    %v239 = vadd.f32 %v221, %v231
    %v240 = vadd.f32 %v222, %v232
    %v241 = vadd.f32 %v223, %v233
    %v242 = vadd.f32 %v224, %v234
    %v243 = vadd.f32 %v225, %v235
    %v244 = vadd.f32 %v226, %v236
    %s245 = sld [smem:[#allocation3 + $0x4]]
    %v246 = vstv %s245
    %v247 = vmul.f32 %v246, %v89
    %v248 = vmul.f32 %v246, %v90
    %v249 = vmul.f32 %v246, %v91
    %v250 = vmul.f32 %v246, %v92
    %v251 = vmul.f32 %v246, %v93
    %v252 = vmul.f32 %v246, %v94
    %v253 = vmul.f32 %v246, %v95
    %v254 = vmul.f32 %v246, %v96
    %v255 = vadd.f32 %v237, %v247
    %v256 = vadd.f32 %v238, %v248
    %v257 = vadd.f32 %v239, %v249
    %v258 = vadd.f32 %v240, %v250
    %v259 = vadd.f32 %v241, %v251
    %v260 = vadd.f32 %v242, %v252
    %v261 = vadd.f32 %v243, %v253
    %v262 = vadd.f32 %v244, %v254
    %s263 = sld [smem:[#allocation3 + $0x5]]
    %v264 = vstv %s263
    %v265 = vmul.f32 %v264, %v97
    %v266 = vmul.f32 %v264, %v98
    %v267 = vmul.f32 %v264, %v99
    %v268 = vmul.f32 %v264, %v100
    %v269 = vmul.f32 %v264, %v101
    %v270 = vmul.f32 %v264, %v102
    %v271 = vmul.f32 %v264, %v103
    %v272 = vmul.f32 %v264, %v104
    %v273 = vadd.f32 %v255, %v265
    %v274 = vadd.f32 %v256, %v266
    %v275 = vadd.f32 %v257, %v267
    %v276 = vadd.f32 %v258, %v268
    %v277 = vadd.f32 %v259, %v269
    %v278 = vadd.f32 %v260, %v270
    %v279 = vadd.f32 %v261, %v271
    %v280 = vadd.f32 %v262, %v272
    %s281 = sld [smem:[#allocation3 + $0x6]]
    %v282 = vstv %s281
    %v283 = vmul.f32 %v282, %v114
    %v284 = vmul.f32 %v282, %v115
    %v285 = vmul.f32 %v282, %v116
    %v286 = vmul.f32 %v282, %v117
    %v287 = vmul.f32 %v282, %v118
    %v288 = vmul.f32 %v282, %v119
    %v289 = vmul.f32 %v282, %v120
    %v290 = vmul.f32 %v282, %v121
    %v291 = vadd.f32 %v273, %v283
    %v292 = vadd.f32 %v274, %v284
    %v293 = vadd.f32 %v275, %v285
    %v294 = vadd.f32 %v276, %v286
    %v295 = vadd.f32 %v277, %v287
    %v296 = vadd.f32 %v278, %v288
    %v297 = vadd.f32 %v279, %v289
    %v298 = vadd.f32 %v280, %v290
    %s299 = sld [smem:[#allocation3 + $0x7]]
    %v300 = vstv %s299
    %v301 = vmul.f32 %v300, %v123
    %v302 = vmul.f32 %v300, %v124
    %v303 = vmul.f32 %v300, %v125
    %v304 = vmul.f32 %v300, %v126
    %v305 = vmul.f32 %v300, %v127
    %v306 = vmul.f32 %v300, %v128
    %v307 = vmul.f32 %v300, %v129
    %v308 = vmul.f32 %v300, %v130
    %v309 = vadd.f32 %v291, %v301
    %v310 = vadd.f32 %v292, %v302
    %v311 = vadd.f32 %v293, %v303
    %v312 = vadd.f32 %v294, %v304
    %v313 = vadd.f32 %v295, %v305
    %v314 = vadd.f32 %v296, %v306
    %v315 = vadd.f32 %v297, %v307
    %v316 = vadd.f32 %v298, %v308
    %s317 = sld [smem:[#allocation3 + $0x8]]
    %v318 = vstv %s317
    %v319 = vmul.f32 %v318, %v131
    %v320 = vmul.f32 %v318, %v132
    %v321 = vmul.f32 %v318, %v133
    %v322 = vmul.f32 %v318, %v134
    %v323 = vmul.f32 %v318, %v135
    %v324 = vmul.f32 %v318, %v136
    %v325 = vmul.f32 %v318, %v137
    %v326 = vmul.f32 %v318, %v138
    %v327 = vadd.f32 %v309, %v319
    %v328 = vadd.f32 %v310, %v320
    %v329 = vadd.f32 %v311, %v321
    %v330 = vadd.f32 %v312, %v322
    %v331 = vadd.f32 %v313, %v323
    %v332 = vadd.f32 %v314, %v324
    %v333 = vadd.f32 %v315, %v325
    %v334 = vadd.f32 %v316, %v326
    %s335 = sld [smem:[#allocation5]]
    %v336 = vstv %s335
    %v337 = vadd.f32 %v327, %v336
    %v338 = vadd.f32 %v328, %v336
    %v339 = vadd.f32 %v329, %v336
    %v340 = vadd.f32 %v330, %v336
    %v341 = vadd.f32 %v331, %v336
    %v342 = vadd.f32 %v332, %v336
    %v343 = vadd.f32 %v333, %v336
    %v344 = vadd.f32 %v334, %v336
    %v345 = vmax.f32 %v337, 0.0
    %v346 = vmax.f32 %v338, 0.0
    %v347 = vmax.f32 %v339, 0.0
    %v348 = vmax.f32 %v340, 0.0
    %v349 = vmax.f32 %v341, 0.0
    %v350 = vmax.f32 %v342, 0.0
    %v351 = vmax.f32 %v343, 0.0
    %v352 = vmax.f32 %v344, 0.0
    %v353 = vmul.f32 %v182, %v55
    %v354 = vmul.f32 %v182, %v56
    %v355 = vmul.f32 %v182, %v57
    %v356 = vmul.f32 %v182, %v58
    %v357 = vmul.f32 %v182, %v59
    %v358 = vmul.f32 %v182, %v60
    %v359 = vmul.f32 %v182, %v61
    %v360 = vmul.f32 %v182, %v62
    %v361 = vmul.f32 %v192, %v63
    %v362 = vmul.f32 %v192, %v64
    %v363 = vmul.f32 %v192, %v65
    %v364 = vmul.f32 %v192, %v66
    %v365 = vmul.f32 %v192, %v67
    %v366 = vmul.f32 %v192, %v68
    %v367 = vmul.f32 %v192, %v69
    %v368 = vmul.f32 %v192, %v70
    %v369 = vadd.f32 %v353, %v361
    %v370 = vadd.f32 %v354, %v362
    %v371 = vadd.f32 %v355, %v363
    %v372 = vadd.f32 %v356, %v364
    %v373 = vadd.f32 %v357, %v365
    %v374 = vadd.f32 %v358, %v366
    %v375 = vadd.f32 %v359, %v367
    %v376 = vadd.f32 %v360, %v368
    %v377 = vmul.f32 %v210, %v71
    %v378 = vmul.f32 %v210, %v72
    %v379 = vmul.f32 %v210, %v73
    %v380 = vmul.f32 %v210, %v74
    %v381 = vmul.f32 %v210, %v75
    %v382 = vmul.f32 %v210, %v76
    %v383 = vmul.f32 %v210, %v77
    %v384 = vmul.f32 %v210, %v78
    %v385 = vadd.f32 %v369, %v377
    %v386 = vadd.f32 %v370, %v378
    %v387 = vadd.f32 %v371, %v379
    %v388 = vadd.f32 %v372, %v380
    %v389 = vadd.f32 %v373, %v381
    %v390 = vadd.f32 %v374, %v382
    %v391 = vadd.f32 %v375, %v383
    %v392 = vadd.f32 %v376, %v384
    %v393 = vmul.f32 %v228, %v89
    %v394 = vmul.f32 %v228, %v90
    %v395 = vmul.f32 %v228, %v91
    %v396 = vmul.f32 %v228, %v92
    %v397 = vmul.f32 %v228, %v93
    %v398 = vmul.f32 %v228, %v94
    %v399 = vmul.f32 %v228, %v95
    %v400 = vmul.f32 %v228, %v96
    %v401 = vadd.f32 %v385, %v393
    %v402 = vadd.f32 %v386, %v394
    %v403 = vadd.f32 %v387, %v395
    %v404 = vadd.f32 %v388, %v396
    %v405 = vadd.f32 %v389, %v397
    %v406 = vadd.f32 %v390, %v398
    %v407 = vadd.f32 %v391, %v399
    %v408 = vadd.f32 %v392, %v400
    %v409 = vmul.f32 %v246, %v97
    %v410 = vmul.f32 %v246, %v98
    %v411 = vmul.f32 %v246, %v99
    %v412 = vmul.f32 %v246, %v100
    %v413 = vmul.f32 %v246, %v101
    %v414 = vmul.f32 %v246, %v102
    %v415 = vmul.f32 %v246, %v103
    %v416 = vmul.f32 %v246, %v104
    %v417 = vadd.f32 %v401, %v409
    %v418 = vadd.f32 %v402, %v410
    %v419 = vadd.f32 %v403, %v411
    %v420 = vadd.f32 %v404, %v412
    %v421 = vadd.f32 %v405, %v413
    %v422 = vadd.f32 %v406, %v414
    %v423 = vadd.f32 %v407, %v415
    %v424 = vadd.f32 %v408, %v416
    %v425 = vmul.f32 %v264, %v105
    %v426 = vmul.f32 %v264, %v106
    %v427 = vmul.f32 %v264, %v107
    %v428 = vmul.f32 %v264, %v108
    %v429 = vmul.f32 %v264, %v109
    %v430 = vmul.f32 %v264, %v110
    %v431 = vmul.f32 %v264, %v111
    %v432 = vmul.f32 %v264, %v112
    %v433 = vadd.f32 %v417, %v425
    %v434 = vadd.f32 %v418, %v426
    %v435 = vadd.f32 %v419, %v427
    %v436 = vadd.f32 %v420, %v428
    %v437 = vadd.f32 %v421, %v429
    %v438 = vadd.f32 %v422, %v430
    %v439 = vadd.f32 %v423, %v431
    %v440 = vadd.f32 %v424, %v432
    %v441 = vmul.f32 %v282, %v123
    %v442 = vmul.f32 %v282, %v124
    %v443 = vmul.f32 %v282, %v125
    %v444 = vmul.f32 %v282, %v126
    %v445 = vmul.f32 %v282, %v127
    %v446 = vmul.f32 %v282, %v128
    %v447 = vmul.f32 %v282, %v129
    %v448 = vmul.f32 %v282, %v130
    %v449 = vadd.f32 %v433, %v441
    %v450 = vadd.f32 %v434, %v442
    %v451 = vadd.f32 %v435, %v443
    %v452 = vadd.f32 %v436, %v444
    %v453 = vadd.f32 %v437, %v445
    %v454 = vadd.f32 %v438, %v446
    %v455 = vadd.f32 %v439, %v447
    %v456 = vadd.f32 %v440, %v448
    %v457 = vmul.f32 %v300, %v131
    %v458 = vmul.f32 %v300, %v132
    %v459 = vmul.f32 %v300, %v133
    %v460 = vmul.f32 %v300, %v134
    %v461 = vmul.f32 %v300, %v135
    %v462 = vmul.f32 %v300, %v136
    %v463 = vmul.f32 %v300, %v137
    %v464 = vmul.f32 %v300, %v138
    %v465 = vadd.f32 %v449, %v457
    %v466 = vadd.f32 %v450, %v458
    %v467 = vadd.f32 %v451, %v459
    %v468 = vadd.f32 %v452, %v460
    %v469 = vadd.f32 %v453, %v461
    %v470 = vadd.f32 %v454, %v462
    %v471 = vadd.f32 %v455, %v463
    %v472 = vadd.f32 %v456, %v464
    %v473 = vmul.f32 %v318, %v139
    %v474 = vmul.f32 %v318, %v140
    %v475 = vmul.f32 %v318, %v141
    %v476 = vmul.f32 %v318, %v142
    %v477 = vmul.f32 %v318, %v143
    %v478 = vmul.f32 %v318, %v144
    %v479 = vmul.f32 %v318, %v145
    %v480 = vmul.f32 %v318, %v146
    %v481 = vadd.f32 %v465, %v473
    %v482 = vadd.f32 %v466, %v474
    %v483 = vadd.f32 %v467, %v475
    %v484 = vadd.f32 %v468, %v476
    %v485 = vadd.f32 %v469, %v477
    %v486 = vadd.f32 %v470, %v478
    %v487 = vadd.f32 %v471, %v479
    %v488 = vadd.f32 %v472, %v480
    %v489 = vadd.f32 %v481, %v336
    %v490 = vadd.f32 %v482, %v336
    %v491 = vadd.f32 %v483, %v336
    %v492 = vadd.f32 %v484, %v336
    %v493 = vadd.f32 %v485, %v336
    %v494 = vadd.f32 %v486, %v336
    %v495 = vadd.f32 %v487, %v336
    %v496 = vadd.f32 %v488, %v336
    %v497 = vmax.f32 %v489, 0.0
    %v498 = vmax.f32 %v490, 0.0
    %v499 = vmax.f32 %v491, 0.0
    %v500 = vmax.f32 %v492, 0.0
    %v501 = vmax.f32 %v493, 0.0
    %v502 = vmax.f32 %v494, 0.0
    %v503 = vmax.f32 %v495, 0.0
    %v504 = vmax.f32 %v496, 0.0
    %v505 = vmax.f32 %v345, %v497
    %v506 = vmax.f32 %v346, %v498
    %v507 = vmax.f32 %v347, %v499
    %v508 = vmax.f32 %v348, %v500
    %v509 = vmax.f32 %v349, %v501
    %v510 = vmax.f32 %v350, %v502
    %v511 = vmax.f32 %v351, %v503
    %v512 = vmax.f32 %v352, %v504
    %v513 = vmul.f32 %v182, %v80
    %v514 = vmul.f32 %v182, %v81
    %v515 = vmul.f32 %v182, %v82
    %v516 = vmul.f32 %v182, %v83
    %v517 = vmul.f32 %v182, %v84
    %v518 = vmul.f32 %v182, %v85
    %v519 = vmul.f32 %v182, %v86
    %v520 = vmul.f32 %v182, %v87
    %v521 = vmul.f32 %v192, %v89
    %v522 = vmul.f32 %v192, %v90
    %v523 = vmul.f32 %v192, %v91
    %v524 = vmul.f32 %v192, %v92
    %v525 = vmul.f32 %v192, %v93
    %v526 = vmul.f32 %v192, %v94
    %v527 = vmul.f32 %v192, %v95
    %v528 = vmul.f32 %v192, %v96
    %v529 = vadd.f32 %v513, %v521
    %v530 = vadd.f32 %v514, %v522
    %v531 = vadd.f32 %v515, %v523
    %v532 = vadd.f32 %v516, %v524
    %v533 = vadd.f32 %v517, %v525
    %v534 = vadd.f32 %v518, %v526
    %v535 = vadd.f32 %v519, %v527
    %v536 = vadd.f32 %v520, %v528
    %v537 = vmul.f32 %v210, %v97
    %v538 = vmul.f32 %v210, %v98
    %v539 = vmul.f32 %v210, %v99
    %v540 = vmul.f32 %v210, %v100
    %v541 = vmul.f32 %v210, %v101
    %v542 = vmul.f32 %v210, %v102
    %v543 = vmul.f32 %v210, %v103
    %v544 = vmul.f32 %v210, %v104
    %v545 = vadd.f32 %v529, %v537
    %v546 = vadd.f32 %v530, %v538
    %v547 = vadd.f32 %v531, %v539
    %v548 = vadd.f32 %v532, %v540
    %v549 = vadd.f32 %v533, %v541
    %v550 = vadd.f32 %v534, %v542
    %v551 = vadd.f32 %v535, %v543
    %v552 = vadd.f32 %v536, %v544
    %v553 = vmul.f32 %v228, %v114
    %v554 = vmul.f32 %v228, %v115
    %v555 = vmul.f32 %v228, %v116
    %v556 = vmul.f32 %v228, %v117
    %v557 = vmul.f32 %v228, %v118
    %v558 = vmul.f32 %v228, %v119
    %v559 = vmul.f32 %v228, %v120
    %v560 = vmul.f32 %v228, %v121
    %v561 = vadd.f32 %v545, %v553
    %v562 = vadd.f32 %v546, %v554
    %v563 = vadd.f32 %v547, %v555
    %v564 = vadd.f32 %v548, %v556
    %v565 = vadd.f32 %v549, %v557
    %v566 = vadd.f32 %v550, %v558
    %v567 = vadd.f32 %v551, %v559
    %v568 = vadd.f32 %v552, %v560
    %v569 = vmul.f32 %v246, %v123
    %v570 = vmul.f32 %v246, %v124
    %v571 = vmul.f32 %v246, %v125
    %v572 = vmul.f32 %v246, %v126
    %v573 = vmul.f32 %v246, %v127
    %v574 = vmul.f32 %v246, %v128
    %v575 = vmul.f32 %v246, %v129
    %v576 = vmul.f32 %v246, %v130
    %v577 = vadd.f32 %v561, %v569
    %v578 = vadd.f32 %v562, %v570
    %v579 = vadd.f32 %v563, %v571
    %v580 = vadd.f32 %v564, %v572
    %v581 = vadd.f32 %v565, %v573
    %v582 = vadd.f32 %v566, %v574
    %v583 = vadd.f32 %v567, %v575
    %v584 = vadd.f32 %v568, %v576
    %v585 = vmul.f32 %v264, %v131
    %v586 = vmul.f32 %v264, %v132
    %v587 = vmul.f32 %v264, %v133
    %v588 = vmul.f32 %v264, %v134
    %v589 = vmul.f32 %v264, %v135
    %v590 = vmul.f32 %v264, %v136
    %v591 = vmul.f32 %v264, %v137
    %v592 = vmul.f32 %v264, %v138
    %v593 = vadd.f32 %v577, %v585
    %v594 = vadd.f32 %v578, %v586
    %v595 = vadd.f32 %v579, %v587
    %v596 = vadd.f32 %v580, %v588
    %v597 = vadd.f32 %v581, %v589
    %v598 = vadd.f32 %v582, %v590
    %v599 = vadd.f32 %v583, %v591
    %v600 = vadd.f32 %v584, %v592
    %v601 = vmul.f32 %v282, %v148
    %v602 = vmul.f32 %v282, %v149
    %v603 = vmul.f32 %v282, %v150
    %v604 = vmul.f32 %v282, %v151
    %v605 = vmul.f32 %v282, %v152
    %v606 = vmul.f32 %v282, %v153
    %v607 = vmul.f32 %v282, %v154
    %v608 = vmul.f32 %v282, %v155
    %v609 = vadd.f32 %v593, %v601
    %v610 = vadd.f32 %v594, %v602
    %v611 = vadd.f32 %v595, %v603
    %v612 = vadd.f32 %v596, %v604
    %v613 = vadd.f32 %v597, %v605
    %v614 = vadd.f32 %v598, %v606
    %v615 = vadd.f32 %v599, %v607
    %v616 = vadd.f32 %v600, %v608
    %v617 = vmul.f32 %v300, %v157
    %v618 = vmul.f32 %v300, %v158
    %v619 = vmul.f32 %v300, %v159
    %v620 = vmul.f32 %v300, %v160
    %v621 = vmul.f32 %v300, %v161
    %v622 = vmul.f32 %v300, %v162
    %v623 = vmul.f32 %v300, %v163
    %v624 = vmul.f32 %v300, %v164
    %v625 = vadd.f32 %v609, %v617
    %v626 = vadd.f32 %v610, %v618
    %v627 = vadd.f32 %v611, %v619
    %v628 = vadd.f32 %v612, %v620
    %v629 = vadd.f32 %v613, %v621
    %v630 = vadd.f32 %v614, %v622
    %v631 = vadd.f32 %v615, %v623
    %v632 = vadd.f32 %v616, %v624
    %v633 = vmul.f32 %v318, %v165
    %v634 = vmul.f32 %v318, %v166
    %v635 = vmul.f32 %v318, %v167
    %v636 = vmul.f32 %v318, %v168
    %v637 = vmul.f32 %v318, %v169
    %v638 = vmul.f32 %v318, %v170
    %v639 = vmul.f32 %v318, %v171
    %v640 = vmul.f32 %v318, %v172
    %v641 = vadd.f32 %v625, %v633
    %v642 = vadd.f32 %v626, %v634
    %v643 = vadd.f32 %v627, %v635
    %v644 = vadd.f32 %v628, %v636
    %v645 = vadd.f32 %v629, %v637
    %v646 = vadd.f32 %v630, %v638
    %v647 = vadd.f32 %v631, %v639
    %v648 = vadd.f32 %v632, %v640
    %v649 = vadd.f32 %v641, %v336
    %v650 = vadd.f32 %v642, %v336
    %v651 = vadd.f32 %v643, %v336
    %v652 = vadd.f32 %v644, %v336
    %v653 = vadd.f32 %v645, %v336
    %v654 = vadd.f32 %v646, %v336
    %v655 = vadd.f32 %v647, %v336
    %v656 = vadd.f32 %v648, %v336
    %v657 = vmax.f32 %v649, 0.0
    %v658 = vmax.f32 %v650, 0.0
    %v659 = vmax.f32 %v651, 0.0
    %v660 = vmax.f32 %v652, 0.0
    %v661 = vmax.f32 %v653, 0.0
    %v662 = vmax.f32 %v654, 0.0
    %v663 = vmax.f32 %v655, 0.0
    %v664 = vmax.f32 %v656, 0.0
    %v665 = vmax.f32 %v505, %v657
    %v666 = vmax.f32 %v506, %v658
    %v667 = vmax.f32 %v507, %v659
    %v668 = vmax.f32 %v508, %v660
    %v669 = vmax.f32 %v509, %v661
    %v670 = vmax.f32 %v510, %v662
    %v671 = vmax.f32 %v511, %v663
    %v672 = vmax.f32 %v512, %v664
    %v673 = vmul.f32 %v182, %v89
    %v674 = vmul.f32 %v182, %v90
    %v675 = vmul.f32 %v182, %v91
    %v676 = vmul.f32 %v182, %v92
    %v677 = vmul.f32 %v182, %v93
    %v678 = vmul.f32 %v182, %v94
    %v679 = vmul.f32 %v182, %v95
    %v680 = vmul.f32 %v182, %v96
    %v681 = vmul.f32 %v192, %v97
    %v682 = vmul.f32 %v192, %v98
    %v683 = vmul.f32 %v192, %v99
    %v684 = vmul.f32 %v192, %v100
    %v685 = vmul.f32 %v192, %v101
    %v686 = vmul.f32 %v192, %v102
    %v687 = vmul.f32 %v192, %v103
    %v688 = vmul.f32 %v192, %v104
    %v689 = vadd.f32 %v673, %v681
    %v690 = vadd.f32 %v674, %v682
    %v691 = vadd.f32 %v675, %v683
    %v692 = vadd.f32 %v676, %v684
    %v693 = vadd.f32 %v677, %v685
    %v694 = vadd.f32 %v678, %v686
    %v695 = vadd.f32 %v679, %v687
    %v696 = vadd.f32 %v680, %v688
    %v697 = vmul.f32 %v210, %v105
    %v698 = vmul.f32 %v210, %v106
    %v699 = vmul.f32 %v210, %v107
    %v700 = vmul.f32 %v210, %v108
    %v701 = vmul.f32 %v210, %v109
    %v702 = vmul.f32 %v210, %v110
    %v703 = vmul.f32 %v210, %v111
    %v704 = vmul.f32 %v210, %v112
    %v705 = vadd.f32 %v689, %v697
    %v706 = vadd.f32 %v690, %v698
    %v707 = vadd.f32 %v691, %v699
    %v708 = vadd.f32 %v692, %v700
    %v709 = vadd.f32 %v693, %v701
    %v710 = vadd.f32 %v694, %v702
    %v711 = vadd.f32 %v695, %v703
    %v712 = vadd.f32 %v696, %v704
    %v713 = vmul.f32 %v228, %v123
    %v714 = vmul.f32 %v228, %v124
    %v715 = vmul.f32 %v228, %v125
    %v716 = vmul.f32 %v228, %v126
    %v717 = vmul.f32 %v228, %v127
    %v718 = vmul.f32 %v228, %v128
    %v719 = vmul.f32 %v228, %v129
    %v720 = vmul.f32 %v228, %v130
    %v721 = vadd.f32 %v705, %v713
    %v722 = vadd.f32 %v706, %v714
    %v723 = vadd.f32 %v707, %v715
    %v724 = vadd.f32 %v708, %v716
    %v725 = vadd.f32 %v709, %v717
    %v726 = vadd.f32 %v710, %v718
    %v727 = vadd.f32 %v711, %v719
    %v728 = vadd.f32 %v712, %v720
    %v729 = vmul.f32 %v246, %v131
    %v730 = vmul.f32 %v246, %v132
    %v731 = vmul.f32 %v246, %v133
    %v732 = vmul.f32 %v246, %v134
    %v733 = vmul.f32 %v246, %v135
    %v734 = vmul.f32 %v246, %v136
    %v735 = vmul.f32 %v246, %v137
    %v736 = vmul.f32 %v246, %v138
    %v737 = vadd.f32 %v721, %v729
    %v738 = vadd.f32 %v722, %v730
    %v739 = vadd.f32 %v723, %v731
    %v740 = vadd.f32 %v724, %v732
    %v741 = vadd.f32 %v725, %v733
    %v742 = vadd.f32 %v726, %v734
    %v743 = vadd.f32 %v727, %v735
    %v744 = vadd.f32 %v728, %v736
    %v745 = vmul.f32 %v264, %v139
    %v746 = vmul.f32 %v264, %v140
    %v747 = vmul.f32 %v264, %v141
    %v748 = vmul.f32 %v264, %v142
    %v749 = vmul.f32 %v264, %v143
    %v750 = vmul.f32 %v264, %v144
    %v751 = vmul.f32 %v264, %v145
    %v752 = vmul.f32 %v264, %v146
    %v753 = vadd.f32 %v737, %v745
    %v754 = vadd.f32 %v738, %v746
    %v755 = vadd.f32 %v739, %v747
    %v756 = vadd.f32 %v740, %v748
    %v757 = vadd.f32 %v741, %v749
    %v758 = vadd.f32 %v742, %v750
    %v759 = vadd.f32 %v743, %v751
    %v760 = vadd.f32 %v744, %v752
    %v761 = vmul.f32 %v282, %v157
    %v762 = vmul.f32 %v282, %v158
    %v763 = vmul.f32 %v282, %v159
    %v764 = vmul.f32 %v282, %v160
    %v765 = vmul.f32 %v282, %v161
    %v766 = vmul.f32 %v282, %v162
    %v767 = vmul.f32 %v282, %v163
    %v768 = vmul.f32 %v282, %v164
    %v769 = vadd.f32 %v753, %v761
    %v770 = vadd.f32 %v754, %v762
    %v771 = vadd.f32 %v755, %v763
    %v772 = vadd.f32 %v756, %v764
    %v773 = vadd.f32 %v757, %v765
    %v774 = vadd.f32 %v758, %v766
    %v775 = vadd.f32 %v759, %v767
    %v776 = vadd.f32 %v760, %v768
    %v777 = vmul.f32 %v300, %v165
    %v778 = vmul.f32 %v300, %v166
    %v779 = vmul.f32 %v300, %v167
    %v780 = vmul.f32 %v300, %v168
    %v781 = vmul.f32 %v300, %v169
    %v782 = vmul.f32 %v300, %v170
    %v783 = vmul.f32 %v300, %v171
    %v784 = vmul.f32 %v300, %v172
    %v785 = vadd.f32 %v769, %v777
    %v786 = vadd.f32 %v770, %v778
    %v787 = vadd.f32 %v771, %v779
    %v788 = vadd.f32 %v772, %v780
    %v789 = vadd.f32 %v773, %v781
    %v790 = vadd.f32 %v774, %v782
    %v791 = vadd.f32 %v775, %v783
    %v792 = vadd.f32 %v776, %v784
    %v793 = vmul.f32 %v318, %v173
    %v794 = vmul.f32 %v318, %v174
    %v795 = vmul.f32 %v318, %v175
    %v796 = vmul.f32 %v318, %v176
    %v797 = vmul.f32 %v318, %v177
    %v798 = vmul.f32 %v318, %v178
    %v799 = vmul.f32 %v318, %v179
    %v800 = vmul.f32 %v318, %v180
    %v801 = vadd.f32 %v785, %v793
    %v802 = vadd.f32 %v786, %v794
    %v803 = vadd.f32 %v787, %v795
    %v804 = vadd.f32 %v788, %v796
    %v805 = vadd.f32 %v789, %v797
    %v806 = vadd.f32 %v790, %v798
    %v807 = vadd.f32 %v791, %v799
    %v808 = vadd.f32 %v792, %v800
    %v809 = vadd.f32 %v801, %v336
    %v810 = vadd.f32 %v802, %v336
    %v811 = vadd.f32 %v803, %v336
    %v812 = vadd.f32 %v804, %v336
    %v813 = vadd.f32 %v805, %v336
    %v814 = vadd.f32 %v806, %v336
    %v815 = vadd.f32 %v807, %v336
    %v816 = vadd.f32 %v808, %v336
    %v817 = vmax.f32 %v809, 0.0
    %v818 = vmax.f32 %v810, 0.0
    %v819 = vmax.f32 %v811, 0.0
    %v820 = vmax.f32 %v812, 0.0
    %v821 = vmax.f32 %v813, 0.0
    %v822 = vmax.f32 %v814, 0.0
    %v823 = vmax.f32 %v815, 0.0
    %v824 = vmax.f32 %v816, 0.0
    %v825 = vmax.f32 %v665, %v817
    %v826 = vmax.f32 %v666, %v818
    %v827 = vmax.f32 %v667, %v819
    %v828 = vmax.f32 %v668, %v820
    %v829 = vmax.f32 %v669, %v821
    %v830 = vmax.f32 %v670, %v822
    %v831 = vmax.f32 %v671, %v823
    %v832 = vmax.f32 %v672, %v824
    %v833 = vld [vmem:[%s1] sm:$0xff]
    %v834 = vld [vmem:[%s1 + $0x8] sm:$0xff]
    %v835 = vld [vmem:[%s1 + $0x10] sm:$0xff]
    %v836 = vld [vmem:[%s1 + $0x18] sm:$0xff]
    %v837 = vld [vmem:[%s1 + $0x20] sm:$0xff]
    %v838 = vld [vmem:[%s1 + $0x28] sm:$0xff]
    %v839 = vld [vmem:[%s1 + $0x30] sm:$0xff]
    %v840 = vld [vmem:[%s1 + $0x38] sm:$0xff]
    %842 = vset.pattern.permute.xlu0 0
    %843 = vperm.xlu0 %842, %v833
    %v844 = vpop.permute.xlu0 %843
    %847 = vset.pattern.permute.xlu0 0
    %848 = vperm.xlu0 %847, %v834
    %v849 = vpop.permute.xlu0 %848
    %852 = vset.pattern.permute.xlu0 0
    %853 = vperm.xlu0 %852, %v835
    %v854 = vpop.permute.xlu0 %853
    %857 = vset.pattern.permute.xlu0 0
    %858 = vperm.xlu0 %857, %v836
    %v859 = vpop.permute.xlu0 %858
    %862 = vset.pattern.permute.xlu0 0
    %863 = vperm.xlu0 %862, %v837
    %v864 = vpop.permute.xlu0 %863
    %867 = vset.pattern.permute.xlu0 0
    %868 = vperm.xlu0 %867, %v838
    %v869 = vpop.permute.xlu0 %868
    %872 = vset.pattern.permute.xlu0 0
    %873 = vperm.xlu0 %872, %v839
    %v874 = vpop.permute.xlu0 %873
    %877 = vset.pattern.permute.xlu0 0
    %878 = vperm.xlu0 %877, %v840
    %v879 = vpop.permute.xlu0 %878
    %v881 = vmul.f32 %v825, %v844
    %v882 = vmul.f32 %v826, %v849
    %v883 = vmul.f32 %v827, %v854
    %v884 = vmul.f32 %v828, %v859
    %v885 = vmul.f32 %v829, %v864
    %v886 = vmul.f32 %v830, %v869
    %v887 = vmul.f32 %v831, %v874
    %v888 = vmul.f32 %v832, %v879
    %s889 = sld [smem:[#allocation3 + $0x9]]
    %v890 = vstv %s889
    %v891 = vmul.f32 %v890, %v46
    %v892 = vmul.f32 %v890, %v47
    %v893 = vmul.f32 %v890, %v48
    %v894 = vmul.f32 %v890, %v49
    %v895 = vmul.f32 %v890, %v50
    %v896 = vmul.f32 %v890, %v51
    %v897 = vmul.f32 %v890, %v52
    %v898 = vmul.f32 %v890, %v53
    %s899 = sld [smem:[#allocation3 + $0xa]]
    %v900 = vstv %s899
    %v901 = vmul.f32 %v900, %v55
    %v902 = vmul.f32 %v900, %v56
    %v903 = vmul.f32 %v900, %v57
    %v904 = vmul.f32 %v900, %v58
    %v905 = vmul.f32 %v900, %v59
    %v906 = vmul.f32 %v900, %v60
    %v907 = vmul.f32 %v900, %v61
    %v908 = vmul.f32 %v900, %v62
    %v909 = vadd.f32 %v891, %v901
    %v910 = vadd.f32 %v892, %v902
    %v911 = vadd.f32 %v893, %v903
    %v912 = vadd.f32 %v894, %v904
    %v913 = vadd.f32 %v895, %v905
    %v914 = vadd.f32 %v896, %v906
    %v915 = vadd.f32 %v897, %v907
    %v916 = vadd.f32 %v898, %v908
    %s917 = sld [smem:[#allocation3 + $0xb]]
    %v918 = vstv %s917
    %v919 = vmul.f32 %v918, %v63
    %v920 = vmul.f32 %v918, %v64
    %v921 = vmul.f32 %v918, %v65
    %v922 = vmul.f32 %v918, %v66
    %v923 = vmul.f32 %v918, %v67
    %v924 = vmul.f32 %v918, %v68
    %v925 = vmul.f32 %v918, %v69
    %v926 = vmul.f32 %v918, %v70
    %v927 = vadd.f32 %v909, %v919
    %v928 = vadd.f32 %v910, %v920
    %v929 = vadd.f32 %v911, %v921
    %v930 = vadd.f32 %v912, %v922
    %v931 = vadd.f32 %v913, %v923
    %v932 = vadd.f32 %v914, %v924
    %v933 = vadd.f32 %v915, %v925
    %v934 = vadd.f32 %v916, %v926
    %s935 = sld [smem:[#allocation3 + $0xc]]
    %v936 = vstv %s935
    %v937 = vmul.f32 %v936, %v80
    %v938 = vmul.f32 %v936, %v81
    %v939 = vmul.f32 %v936, %v82
    %v940 = vmul.f32 %v936, %v83
    %v941 = vmul.f32 %v936, %v84
    %v942 = vmul.f32 %v936, %v85
    %v943 = vmul.f32 %v936, %v86
    %v944 = vmul.f32 %v936, %v87
    %v945 = vadd.f32 %v927, %v937
    %v946 = vadd.f32 %v928, %v938
    %v947 = vadd.f32 %v929, %v939
    %v948 = vadd.f32 %v930, %v940
    %v949 = vadd.f32 %v931, %v941
    %v950 = vadd.f32 %v932, %v942
    %v951 = vadd.f32 %v933, %v943
    %v952 = vadd.f32 %v934, %v944
    %s953 = sld [smem:[#allocation3 + $0xd]]
    %v954 = vstv %s953
    %v955 = vmul.f32 %v954, %v89
    %v956 = vmul.f32 %v954, %v90
    %v957 = vmul.f32 %v954, %v91
    %v958 = vmul.f32 %v954, %v92
    %v959 = vmul.f32 %v954, %v93
    %v960 = vmul.f32 %v954, %v94
    %v961 = vmul.f32 %v954, %v95
    %v962 = vmul.f32 %v954, %v96
    %v963 = vadd.f32 %v945, %v955
    %v964 = vadd.f32 %v946, %v956
    %v965 = vadd.f32 %v947, %v957
    %v966 = vadd.f32 %v948, %v958
    %v967 = vadd.f32 %v949, %v959
    %v968 = vadd.f32 %v950, %v960
    %v969 = vadd.f32 %v951, %v961
    %v970 = vadd.f32 %v952, %v962
    %s971 = sld [smem:[#allocation3 + $0xe]]
    %v972 = vstv %s971
    %v973 = vmul.f32 %v972, %v97
    %v974 = vmul.f32 %v972, %v98
    %v975 = vmul.f32 %v972, %v99
    %v976 = vmul.f32 %v972, %v100
    %v977 = vmul.f32 %v972, %v101
    %v978 = vmul.f32 %v972, %v102
    %v979 = vmul.f32 %v972, %v103
    %v980 = vmul.f32 %v972, %v104
    %v981 = vadd.f32 %v963, %v973
    %v982 = vadd.f32 %v964, %v974
    %v983 = vadd.f32 %v965, %v975
    %v984 = vadd.f32 %v966, %v976
    %v985 = vadd.f32 %v967, %v977
    %v986 = vadd.f32 %v968, %v978
    %v987 = vadd.f32 %v969, %v979
    %v988 = vadd.f32 %v970, %v980
    %s989 = sld [smem:[#allocation3 + $0xf]]
    %v990 = vstv %s989
    %v991 = vmul.f32 %v990, %v114
    %v992 = vmul.f32 %v990, %v115
    %v993 = vmul.f32 %v990, %v116
    %v994 = vmul.f32 %v990, %v117
    %v995 = vmul.f32 %v990, %v118
    %v996 = vmul.f32 %v990, %v119
    %v997 = vmul.f32 %v990, %v120
    %v998 = vmul.f32 %v990, %v121
    %v999 = vadd.f32 %v981, %v991
    %v1000 = vadd.f32 %v982, %v992
    %v1001 = vadd.f32 %v983, %v993
    %v1002 = vadd.f32 %v984, %v994
    %v1003 = vadd.f32 %v985, %v995
    %v1004 = vadd.f32 %v986, %v996
    %v1005 = vadd.f32 %v987, %v997
    %v1006 = vadd.f32 %v988, %v998
    %s1007 = sld [smem:[#allocation3 + $0x10]]
    %v1008 = vstv %s1007
    %v1009 = vmul.f32 %v1008, %v123
    %v1010 = vmul.f32 %v1008, %v124
    %v1011 = vmul.f32 %v1008, %v125
    %v1012 = vmul.f32 %v1008, %v126
    %v1013 = vmul.f32 %v1008, %v127
    %v1014 = vmul.f32 %v1008, %v128
    %v1015 = vmul.f32 %v1008, %v129
    %v1016 = vmul.f32 %v1008, %v130
    %v1017 = vadd.f32 %v999, %v1009
    %v1018 = vadd.f32 %v1000, %v1010
    %v1019 = vadd.f32 %v1001, %v1011
    %v1020 = vadd.f32 %v1002, %v1012
    %v1021 = vadd.f32 %v1003, %v1013
    %v1022 = vadd.f32 %v1004, %v1014
    %v1023 = vadd.f32 %v1005, %v1015
    %v1024 = vadd.f32 %v1006, %v1016
    %s1025 = sld [smem:[#allocation3 + $0x11]]
    %v1026 = vstv %s1025
    %v1027 = vmul.f32 %v1026, %v131
    %v1028 = vmul.f32 %v1026, %v132
    %v1029 = vmul.f32 %v1026, %v133
    %v1030 = vmul.f32 %v1026, %v134
    %v1031 = vmul.f32 %v1026, %v135
    %v1032 = vmul.f32 %v1026, %v136
    %v1033 = vmul.f32 %v1026, %v137
    %v1034 = vmul.f32 %v1026, %v138
    %v1035 = vadd.f32 %v1017, %v1027
    %v1036 = vadd.f32 %v1018, %v1028
    %v1037 = vadd.f32 %v1019, %v1029
    %v1038 = vadd.f32 %v1020, %v1030
    %v1039 = vadd.f32 %v1021, %v1031
    %v1040 = vadd.f32 %v1022, %v1032
    %v1041 = vadd.f32 %v1023, %v1033
    %v1042 = vadd.f32 %v1024, %v1034
    %s1043 = sld [smem:[#allocation5 + $0x1]]
    %v1044 = vstv %s1043
    %v1045 = vadd.f32 %v1035, %v1044
    %v1046 = vadd.f32 %v1036, %v1044
    %v1047 = vadd.f32 %v1037, %v1044
    %v1048 = vadd.f32 %v1038, %v1044
    %v1049 = vadd.f32 %v1039, %v1044
    %v1050 = vadd.f32 %v1040, %v1044
    %v1051 = vadd.f32 %v1041, %v1044
    %v1052 = vadd.f32 %v1042, %v1044
    %v1053 = vmax.f32 %v1045, 0.0
    %v1054 = vmax.f32 %v1046, 0.0
    %v1055 = vmax.f32 %v1047, 0.0
    %v1056 = vmax.f32 %v1048, 0.0
    %v1057 = vmax.f32 %v1049, 0.0
    %v1058 = vmax.f32 %v1050, 0.0
    %v1059 = vmax.f32 %v1051, 0.0
    %v1060 = vmax.f32 %v1052, 0.0
    %v1061 = vmul.f32 %v890, %v55
    %v1062 = vmul.f32 %v890, %v56
    %v1063 = vmul.f32 %v890, %v57
    %v1064 = vmul.f32 %v890, %v58
    %v1065 = vmul.f32 %v890, %v59
    %v1066 = vmul.f32 %v890, %v60
    %v1067 = vmul.f32 %v890, %v61
    %v1068 = vmul.f32 %v890, %v62
    %v1069 = vmul.f32 %v900, %v63
    %v1070 = vmul.f32 %v900, %v64
    %v1071 = vmul.f32 %v900, %v65
    %v1072 = vmul.f32 %v900, %v66
    %v1073 = vmul.f32 %v900, %v67
    %v1074 = vmul.f32 %v900, %v68
    %v1075 = vmul.f32 %v900, %v69
    %v1076 = vmul.f32 %v900, %v70
    %v1077 = vadd.f32 %v1061, %v1069
    %v1078 = vadd.f32 %v1062, %v1070
    %v1079 = vadd.f32 %v1063, %v1071
    %v1080 = vadd.f32 %v1064, %v1072
    %v1081 = vadd.f32 %v1065, %v1073
    %v1082 = vadd.f32 %v1066, %v1074
    %v1083 = vadd.f32 %v1067, %v1075
    %v1084 = vadd.f32 %v1068, %v1076
    %v1085 = vmul.f32 %v918, %v71
    %v1086 = vmul.f32 %v918, %v72
    %v1087 = vmul.f32 %v918, %v73
    %v1088 = vmul.f32 %v918, %v74
    %v1089 = vmul.f32 %v918, %v75
    %v1090 = vmul.f32 %v918, %v76
    %v1091 = vmul.f32 %v918, %v77
    %v1092 = vmul.f32 %v918, %v78
    %v1093 = vadd.f32 %v1077, %v1085
    %v1094 = vadd.f32 %v1078, %v1086
    %v1095 = vadd.f32 %v1079, %v1087
    %v1096 = vadd.f32 %v1080, %v1088
    %v1097 = vadd.f32 %v1081, %v1089
    %v1098 = vadd.f32 %v1082, %v1090
    %v1099 = vadd.f32 %v1083, %v1091
    %v1100 = vadd.f32 %v1084, %v1092
    %v1101 = vmul.f32 %v936, %v89
    %v1102 = vmul.f32 %v936, %v90
    %v1103 = vmul.f32 %v936, %v91
    %v1104 = vmul.f32 %v936, %v92
    %v1105 = vmul.f32 %v936, %v93
    %v1106 = vmul.f32 %v936, %v94
    %v1107 = vmul.f32 %v936, %v95
    %v1108 = vmul.f32 %v936, %v96
    %v1109 = vadd.f32 %v1093, %v1101
    %v1110 = vadd.f32 %v1094, %v1102
    %v1111 = vadd.f32 %v1095, %v1103
    %v1112 = vadd.f32 %v1096, %v1104
    %v1113 = vadd.f32 %v1097, %v1105
    %v1114 = vadd.f32 %v1098, %v1106
    %v1115 = vadd.f32 %v1099, %v1107
    %v1116 = vadd.f32 %v1100, %v1108
    %v1117 = vmul.f32 %v954, %v97
    %v1118 = vmul.f32 %v954, %v98
    %v1119 = vmul.f32 %v954, %v99
    %v1120 = vmul.f32 %v954, %v100
    %v1121 = vmul.f32 %v954, %v101
    %v1122 = vmul.f32 %v954, %v102
    %v1123 = vmul.f32 %v954, %v103
    %v1124 = vmul.f32 %v954, %v104
    %v1125 = vadd.f32 %v1109, %v1117
    %v1126 = vadd.f32 %v1110, %v1118
    %v1127 = vadd.f32 %v1111, %v1119
    %v1128 = vadd.f32 %v1112, %v1120
    %v1129 = vadd.f32 %v1113, %v1121
    %v1130 = vadd.f32 %v1114, %v1122
    %v1131 = vadd.f32 %v1115, %v1123
    %v1132 = vadd.f32 %v1116, %v1124
    %v1133 = vmul.f32 %v972, %v105
    %v1134 = vmul.f32 %v972, %v106
    %v1135 = vmul.f32 %v972, %v107
    %v1136 = vmul.f32 %v972, %v108
    %v1137 = vmul.f32 %v972, %v109
    %v1138 = vmul.f32 %v972, %v110
    %v1139 = vmul.f32 %v972, %v111
    %v1140 = vmul.f32 %v972, %v112
    %v1141 = vadd.f32 %v1125, %v1133
    %v1142 = vadd.f32 %v1126, %v1134
    %v1143 = vadd.f32 %v1127, %v1135
    %v1144 = vadd.f32 %v1128, %v1136
    %v1145 = vadd.f32 %v1129, %v1137
    %v1146 = vadd.f32 %v1130, %v1138
    %v1147 = vadd.f32 %v1131, %v1139
    %v1148 = vadd.f32 %v1132, %v1140
    %v1149 = vmul.f32 %v990, %v123
    %v1150 = vmul.f32 %v990, %v124
    %v1151 = vmul.f32 %v990, %v125
    %v1152 = vmul.f32 %v990, %v126
    %v1153 = vmul.f32 %v990, %v127
    %v1154 = vmul.f32 %v990, %v128
    %v1155 = vmul.f32 %v990, %v129
    %v1156 = vmul.f32 %v990, %v130
    %v1157 = vadd.f32 %v1141, %v1149
    %v1158 = vadd.f32 %v1142, %v1150
    %v1159 = vadd.f32 %v1143, %v1151
    %v1160 = vadd.f32 %v1144, %v1152
    %v1161 = vadd.f32 %v1145, %v1153
    %v1162 = vadd.f32 %v1146, %v1154
    %v1163 = vadd.f32 %v1147, %v1155
    %v1164 = vadd.f32 %v1148, %v1156
    %v1165 = vmul.f32 %v1008, %v131
    %v1166 = vmul.f32 %v1008, %v132
    %v1167 = vmul.f32 %v1008, %v133
    %v1168 = vmul.f32 %v1008, %v134
    %v1169 = vmul.f32 %v1008, %v135
    %v1170 = vmul.f32 %v1008, %v136
    %v1171 = vmul.f32 %v1008, %v137
    %v1172 = vmul.f32 %v1008, %v138
    %v1173 = vadd.f32 %v1157, %v1165
    %v1174 = vadd.f32 %v1158, %v1166
    %v1175 = vadd.f32 %v1159, %v1167
    %v1176 = vadd.f32 %v1160, %v1168
    %v1177 = vadd.f32 %v1161, %v1169
    %v1178 = vadd.f32 %v1162, %v1170
    %v1179 = vadd.f32 %v1163, %v1171
    %v1180 = vadd.f32 %v1164, %v1172
    %v1181 = vmul.f32 %v1026, %v139
    %v1182 = vmul.f32 %v1026, %v140
    %v1183 = vmul.f32 %v1026, %v141
    %v1184 = vmul.f32 %v1026, %v142
    %v1185 = vmul.f32 %v1026, %v143
    %v1186 = vmul.f32 %v1026, %v144
    %v1187 = vmul.f32 %v1026, %v145
    %v1188 = vmul.f32 %v1026, %v146
    %v1189 = vadd.f32 %v1173, %v1181
    %v1190 = vadd.f32 %v1174, %v1182
    %v1191 = vadd.f32 %v1175, %v1183
    %v1192 = vadd.f32 %v1176, %v1184
    %v1193 = vadd.f32 %v1177, %v1185
    %v1194 = vadd.f32 %v1178, %v1186
    %v1195 = vadd.f32 %v1179, %v1187
    %v1196 = vadd.f32 %v1180, %v1188
    %v1197 = vadd.f32 %v1189, %v1044
    %v1198 = vadd.f32 %v1190, %v1044
    %v1199 = vadd.f32 %v1191, %v1044
    %v1200 = vadd.f32 %v1192, %v1044
    %v1201 = vadd.f32 %v1193, %v1044
    %v1202 = vadd.f32 %v1194, %v1044
    %v1203 = vadd.f32 %v1195, %v1044
    %v1204 = vadd.f32 %v1196, %v1044
    %v1205 = vmax.f32 %v1197, 0.0
    %v1206 = vmax.f32 %v1198, 0.0
    %v1207 = vmax.f32 %v1199, 0.0
    %v1208 = vmax.f32 %v1200, 0.0
    %v1209 = vmax.f32 %v1201, 0.0
    %v1210 = vmax.f32 %v1202, 0.0
    %v1211 = vmax.f32 %v1203, 0.0
    %v1212 = vmax.f32 %v1204, 0.0
    %v1213 = vmax.f32 %v1053, %v1205
    %v1214 = vmax.f32 %v1054, %v1206
    %v1215 = vmax.f32 %v1055, %v1207
    %v1216 = vmax.f32 %v1056, %v1208
    %v1217 = vmax.f32 %v1057, %v1209
    %v1218 = vmax.f32 %v1058, %v1210
    %v1219 = vmax.f32 %v1059, %v1211
    %v1220 = vmax.f32 %v1060, %v1212
    %v1221 = vmul.f32 %v890, %v80
    %v1222 = vmul.f32 %v890, %v81
    %v1223 = vmul.f32 %v890, %v82
    %v1224 = vmul.f32 %v890, %v83
    %v1225 = vmul.f32 %v890, %v84
    %v1226 = vmul.f32 %v890, %v85
    %v1227 = vmul.f32 %v890, %v86
    %v1228 = vmul.f32 %v890, %v87
    %v1229 = vmul.f32 %v900, %v89
    %v1230 = vmul.f32 %v900, %v90
    %v1231 = vmul.f32 %v900, %v91
    %v1232 = vmul.f32 %v900, %v92
    %v1233 = vmul.f32 %v900, %v93
    %v1234 = vmul.f32 %v900, %v94
    %v1235 = vmul.f32 %v900, %v95
    %v1236 = vmul.f32 %v900, %v96
    %v1237 = vadd.f32 %v1221, %v1229
    %v1238 = vadd.f32 %v1222, %v1230
    %v1239 = vadd.f32 %v1223, %v1231
    %v1240 = vadd.f32 %v1224, %v1232
    %v1241 = vadd.f32 %v1225, %v1233
    %v1242 = vadd.f32 %v1226, %v1234
    %v1243 = vadd.f32 %v1227, %v1235
    %v1244 = vadd.f32 %v1228, %v1236
    %v1245 = vmul.f32 %v918, %v97
    %v1246 = vmul.f32 %v918, %v98
    %v1247 = vmul.f32 %v918, %v99
    %v1248 = vmul.f32 %v918, %v100
    %v1249 = vmul.f32 %v918, %v101
    %v1250 = vmul.f32 %v918, %v102
    %v1251 = vmul.f32 %v918, %v103
    %v1252 = vmul.f32 %v918, %v104
    %v1253 = vadd.f32 %v1237, %v1245
    %v1254 = vadd.f32 %v1238, %v1246
    %v1255 = vadd.f32 %v1239, %v1247
    %v1256 = vadd.f32 %v1240, %v1248
    %v1257 = vadd.f32 %v1241, %v1249
    %v1258 = vadd.f32 %v1242, %v1250
    %v1259 = vadd.f32 %v1243, %v1251
    %v1260 = vadd.f32 %v1244, %v1252
    %v1261 = vmul.f32 %v936, %v114
    %v1262 = vmul.f32 %v936, %v115
    %v1263 = vmul.f32 %v936, %v116
    %v1264 = vmul.f32 %v936, %v117
    %v1265 = vmul.f32 %v936, %v118
    %v1266 = vmul.f32 %v936, %v119
    %v1267 = vmul.f32 %v936, %v120
    %v1268 = vmul.f32 %v936, %v121
    %v1269 = vadd.f32 %v1253, %v1261
    %v1270 = vadd.f32 %v1254, %v1262
    %v1271 = vadd.f32 %v1255, %v1263
    %v1272 = vadd.f32 %v1256, %v1264
    %v1273 = vadd.f32 %v1257, %v1265
    %v1274 = vadd.f32 %v1258, %v1266
    %v1275 = vadd.f32 %v1259, %v1267
    %v1276 = vadd.f32 %v1260, %v1268
    %v1277 = vmul.f32 %v954, %v123
    %v1278 = vmul.f32 %v954, %v124
    %v1279 = vmul.f32 %v954, %v125
    %v1280 = vmul.f32 %v954, %v126
    %v1281 = vmul.f32 %v954, %v127
    %v1282 = vmul.f32 %v954, %v128
    %v1283 = vmul.f32 %v954, %v129
    %v1284 = vmul.f32 %v954, %v130
    %v1285 = vadd.f32 %v1269, %v1277
    %v1286 = vadd.f32 %v1270, %v1278
    %v1287 = vadd.f32 %v1271, %v1279
    %v1288 = vadd.f32 %v1272, %v1280
    %v1289 = vadd.f32 %v1273, %v1281
    %v1290 = vadd.f32 %v1274, %v1282
    %v1291 = vadd.f32 %v1275, %v1283
    %v1292 = vadd.f32 %v1276, %v1284
    %v1293 = vmul.f32 %v972, %v131
    %v1294 = vmul.f32 %v972, %v132
    %v1295 = vmul.f32 %v972, %v133
    %v1296 = vmul.f32 %v972, %v134
    %v1297 = vmul.f32 %v972, %v135
    %v1298 = vmul.f32 %v972, %v136
    %v1299 = vmul.f32 %v972, %v137
    %v1300 = vmul.f32 %v972, %v138
    %v1301 = vadd.f32 %v1285, %v1293
    %v1302 = vadd.f32 %v1286, %v1294
    %v1303 = vadd.f32 %v1287, %v1295
    %v1304 = vadd.f32 %v1288, %v1296
    %v1305 = vadd.f32 %v1289, %v1297
    %v1306 = vadd.f32 %v1290, %v1298
    %v1307 = vadd.f32 %v1291, %v1299
    %v1308 = vadd.f32 %v1292, %v1300
    %v1309 = vmul.f32 %v990, %v148
    %v1310 = vmul.f32 %v990, %v149
    %v1311 = vmul.f32 %v990, %v150
    %v1312 = vmul.f32 %v990, %v151
    %v1313 = vmul.f32 %v990, %v152
    %v1314 = vmul.f32 %v990, %v153
    %v1315 = vmul.f32 %v990, %v154
    %v1316 = vmul.f32 %v990, %v155
    %v1317 = vadd.f32 %v1301, %v1309
    %v1318 = vadd.f32 %v1302, %v1310
    %v1319 = vadd.f32 %v1303, %v1311
    %v1320 = vadd.f32 %v1304, %v1312
    %v1321 = vadd.f32 %v1305, %v1313
    %v1322 = vadd.f32 %v1306, %v1314
    %v1323 = vadd.f32 %v1307, %v1315
    %v1324 = vadd.f32 %v1308, %v1316
    %v1325 = vmul.f32 %v1008, %v157
    %v1326 = vmul.f32 %v1008, %v158
    %v1327 = vmul.f32 %v1008, %v159
    %v1328 = vmul.f32 %v1008, %v160
    %v1329 = vmul.f32 %v1008, %v161
    %v1330 = vmul.f32 %v1008, %v162
    %v1331 = vmul.f32 %v1008, %v163
    %v1332 = vmul.f32 %v1008, %v164
    %v1333 = vadd.f32 %v1317, %v1325
    %v1334 = vadd.f32 %v1318, %v1326
    %v1335 = vadd.f32 %v1319, %v1327
    %v1336 = vadd.f32 %v1320, %v1328
    %v1337 = vadd.f32 %v1321, %v1329
    %v1338 = vadd.f32 %v1322, %v1330
    %v1339 = vadd.f32 %v1323, %v1331
    %v1340 = vadd.f32 %v1324, %v1332
    %v1341 = vmul.f32 %v1026, %v165
    %v1342 = vmul.f32 %v1026, %v166
    %v1343 = vmul.f32 %v1026, %v167
    %v1344 = vmul.f32 %v1026, %v168
    %v1345 = vmul.f32 %v1026, %v169
    %v1346 = vmul.f32 %v1026, %v170
    %v1347 = vmul.f32 %v1026, %v171
    %v1348 = vmul.f32 %v1026, %v172
    %v1349 = vadd.f32 %v1333, %v1341
    %v1350 = vadd.f32 %v1334, %v1342
    %v1351 = vadd.f32 %v1335, %v1343
    %v1352 = vadd.f32 %v1336, %v1344
    %v1353 = vadd.f32 %v1337, %v1345
    %v1354 = vadd.f32 %v1338, %v1346
    %v1355 = vadd.f32 %v1339, %v1347
    %v1356 = vadd.f32 %v1340, %v1348
    %v1357 = vadd.f32 %v1349, %v1044
    %v1358 = vadd.f32 %v1350, %v1044
    %v1359 = vadd.f32 %v1351, %v1044
    %v1360 = vadd.f32 %v1352, %v1044
    %v1361 = vadd.f32 %v1353, %v1044
    %v1362 = vadd.f32 %v1354, %v1044
    %v1363 = vadd.f32 %v1355, %v1044
    %v1364 = vadd.f32 %v1356, %v1044
    %v1365 = vmax.f32 %v1357, 0.0
    %v1366 = vmax.f32 %v1358, 0.0
    %v1367 = vmax.f32 %v1359, 0.0
    %v1368 = vmax.f32 %v1360, 0.0
    %v1369 = vmax.f32 %v1361, 0.0
    %v1370 = vmax.f32 %v1362, 0.0
    %v1371 = vmax.f32 %v1363, 0.0
    %v1372 = vmax.f32 %v1364, 0.0
    %v1373 = vmax.f32 %v1213, %v1365
    %v1374 = vmax.f32 %v1214, %v1366
    %v1375 = vmax.f32 %v1215, %v1367
    %v1376 = vmax.f32 %v1216, %v1368
    %v1377 = vmax.f32 %v1217, %v1369
    %v1378 = vmax.f32 %v1218, %v1370
    %v1379 = vmax.f32 %v1219, %v1371
    %v1380 = vmax.f32 %v1220, %v1372
    %v1381 = vmul.f32 %v890, %v89
    %v1382 = vmul.f32 %v890, %v90
    %v1383 = vmul.f32 %v890, %v91
    %v1384 = vmul.f32 %v890, %v92
    %v1385 = vmul.f32 %v890, %v93
    %v1386 = vmul.f32 %v890, %v94
    %v1387 = vmul.f32 %v890, %v95
    %v1388 = vmul.f32 %v890, %v96
    %v1389 = vmul.f32 %v900, %v97
    %v1390 = vmul.f32 %v900, %v98
    %v1391 = vmul.f32 %v900, %v99
    %v1392 = vmul.f32 %v900, %v100
    %v1393 = vmul.f32 %v900, %v101
    %v1394 = vmul.f32 %v900, %v102
    %v1395 = vmul.f32 %v900, %v103
    %v1396 = vmul.f32 %v900, %v104
    %v1397 = vadd.f32 %v1381, %v1389
    %v1398 = vadd.f32 %v1382, %v1390
    %v1399 = vadd.f32 %v1383, %v1391
    %v1400 = vadd.f32 %v1384, %v1392
    %v1401 = vadd.f32 %v1385, %v1393
    %v1402 = vadd.f32 %v1386, %v1394
    %v1403 = vadd.f32 %v1387, %v1395
    %v1404 = vadd.f32 %v1388, %v1396
    %v1405 = vmul.f32 %v918, %v105
    %v1406 = vmul.f32 %v918, %v106
    %v1407 = vmul.f32 %v918, %v107
    %v1408 = vmul.f32 %v918, %v108
    %v1409 = vmul.f32 %v918, %v109
    %v1410 = vmul.f32 %v918, %v110
    %v1411 = vmul.f32 %v918, %v111
    %v1412 = vmul.f32 %v918, %v112
    %v1413 = vadd.f32 %v1397, %v1405
    %v1414 = vadd.f32 %v1398, %v1406
    %v1415 = vadd.f32 %v1399, %v1407
    %v1416 = vadd.f32 %v1400, %v1408
    %v1417 = vadd.f32 %v1401, %v1409
    %v1418 = vadd.f32 %v1402, %v1410
    %v1419 = vadd.f32 %v1403, %v1411
    %v1420 = vadd.f32 %v1404, %v1412
    %v1421 = vmul.f32 %v936, %v123
    %v1422 = vmul.f32 %v936, %v124
    %v1423 = vmul.f32 %v936, %v125
    %v1424 = vmul.f32 %v936, %v126
    %v1425 = vmul.f32 %v936, %v127
    %v1426 = vmul.f32 %v936, %v128
    %v1427 = vmul.f32 %v936, %v129
    %v1428 = vmul.f32 %v936, %v130
    %v1429 = vadd.f32 %v1413, %v1421
    %v1430 = vadd.f32 %v1414, %v1422
    %v1431 = vadd.f32 %v1415, %v1423
    %v1432 = vadd.f32 %v1416, %v1424
    %v1433 = vadd.f32 %v1417, %v1425
    %v1434 = vadd.f32 %v1418, %v1426
    %v1435 = vadd.f32 %v1419, %v1427
    %v1436 = vadd.f32 %v1420, %v1428
    %v1437 = vmul.f32 %v954, %v131
    %v1438 = vmul.f32 %v954, %v132
    %v1439 = vmul.f32 %v954, %v133
    %v1440 = vmul.f32 %v954, %v134
    %v1441 = vmul.f32 %v954, %v135
    %v1442 = vmul.f32 %v954, %v136
    %v1443 = vmul.f32 %v954, %v137
    %v1444 = vmul.f32 %v954, %v138
    %v1445 = vadd.f32 %v1429, %v1437
    %v1446 = vadd.f32 %v1430, %v1438
    %v1447 = vadd.f32 %v1431, %v1439
    %v1448 = vadd.f32 %v1432, %v1440
    %v1449 = vadd.f32 %v1433, %v1441
    %v1450 = vadd.f32 %v1434, %v1442
    %v1451 = vadd.f32 %v1435, %v1443
    %v1452 = vadd.f32 %v1436, %v1444
    %v1453 = vmul.f32 %v972, %v139
    %v1454 = vmul.f32 %v972, %v140
    %v1455 = vmul.f32 %v972, %v141
    %v1456 = vmul.f32 %v972, %v142
    %v1457 = vmul.f32 %v972, %v143
    %v1458 = vmul.f32 %v972, %v144
    %v1459 = vmul.f32 %v972, %v145
    %v1460 = vmul.f32 %v972, %v146
    %v1461 = vadd.f32 %v1445, %v1453
    %v1462 = vadd.f32 %v1446, %v1454
    %v1463 = vadd.f32 %v1447, %v1455
    %v1464 = vadd.f32 %v1448, %v1456
    %v1465 = vadd.f32 %v1449, %v1457
    %v1466 = vadd.f32 %v1450, %v1458
    %v1467 = vadd.f32 %v1451, %v1459
    %v1468 = vadd.f32 %v1452, %v1460
    %v1469 = vmul.f32 %v990, %v157
    %v1470 = vmul.f32 %v990, %v158
    %v1471 = vmul.f32 %v990, %v159
    %v1472 = vmul.f32 %v990, %v160
    %v1473 = vmul.f32 %v990, %v161
    %v1474 = vmul.f32 %v990, %v162
    %v1475 = vmul.f32 %v990, %v163
    %v1476 = vmul.f32 %v990, %v164
    %v1477 = vadd.f32 %v1461, %v1469
    %v1478 = vadd.f32 %v1462, %v1470
    %v1479 = vadd.f32 %v1463, %v1471
    %v1480 = vadd.f32 %v1464, %v1472
    %v1481 = vadd.f32 %v1465, %v1473
    %v1482 = vadd.f32 %v1466, %v1474
    %v1483 = vadd.f32 %v1467, %v1475
    %v1484 = vadd.f32 %v1468, %v1476
    %v1485 = vmul.f32 %v1008, %v165
    %v1486 = vmul.f32 %v1008, %v166
    %v1487 = vmul.f32 %v1008, %v167
    %v1488 = vmul.f32 %v1008, %v168
    %v1489 = vmul.f32 %v1008, %v169
    %v1490 = vmul.f32 %v1008, %v170
    %v1491 = vmul.f32 %v1008, %v171
    %v1492 = vmul.f32 %v1008, %v172
    %v1493 = vadd.f32 %v1477, %v1485
    %v1494 = vadd.f32 %v1478, %v1486
    %v1495 = vadd.f32 %v1479, %v1487
    %v1496 = vadd.f32 %v1480, %v1488
    %v1497 = vadd.f32 %v1481, %v1489
    %v1498 = vadd.f32 %v1482, %v1490
    %v1499 = vadd.f32 %v1483, %v1491
    %v1500 = vadd.f32 %v1484, %v1492
    %v1501 = vmul.f32 %v1026, %v173
    %v1502 = vmul.f32 %v1026, %v174
    %v1503 = vmul.f32 %v1026, %v175
    %v1504 = vmul.f32 %v1026, %v176
    %v1505 = vmul.f32 %v1026, %v177
    %v1506 = vmul.f32 %v1026, %v178
    %v1507 = vmul.f32 %v1026, %v179
    %v1508 = vmul.f32 %v1026, %v180
    %v1509 = vadd.f32 %v1493, %v1501
    %v1510 = vadd.f32 %v1494, %v1502
    %v1511 = vadd.f32 %v1495, %v1503
    %v1512 = vadd.f32 %v1496, %v1504
    %v1513 = vadd.f32 %v1497, %v1505
    %v1514 = vadd.f32 %v1498, %v1506
    %v1515 = vadd.f32 %v1499, %v1507
    %v1516 = vadd.f32 %v1500, %v1508
    %v1517 = vadd.f32 %v1509, %v1044
    %v1518 = vadd.f32 %v1510, %v1044
    %v1519 = vadd.f32 %v1511, %v1044
    %v1520 = vadd.f32 %v1512, %v1044
    %v1521 = vadd.f32 %v1513, %v1044
    %v1522 = vadd.f32 %v1514, %v1044
    %v1523 = vadd.f32 %v1515, %v1044
    %v1524 = vadd.f32 %v1516, %v1044
    %v1525 = vmax.f32 %v1517, 0.0
    %v1526 = vmax.f32 %v1518, 0.0
    %v1527 = vmax.f32 %v1519, 0.0
    %v1528 = vmax.f32 %v1520, 0.0
    %v1529 = vmax.f32 %v1521, 0.0
    %v1530 = vmax.f32 %v1522, 0.0
    %v1531 = vmax.f32 %v1523, 0.0
    %v1532 = vmax.f32 %v1524, 0.0
    %v1533 = vmax.f32 %v1373, %v1525
    %v1534 = vmax.f32 %v1374, %v1526
    %v1535 = vmax.f32 %v1375, %v1527
    %v1536 = vmax.f32 %v1376, %v1528
    %v1537 = vmax.f32 %v1377, %v1529
    %v1538 = vmax.f32 %v1378, %v1530
    %v1539 = vmax.f32 %v1379, %v1531
    %v1540 = vmax.f32 %v1380, %v1532
    %s1541 = scalar_lea.vmem %s1, 64
    %v1542 = vld [vmem:[%s1541] sm:$0xff]
    %v1543 = vld [vmem:[%s1541 + $0x8] sm:$0xff]
    %v1544 = vld [vmem:[%s1541 + $0x10] sm:$0xff]
    %v1545 = vld [vmem:[%s1541 + $0x18] sm:$0xff]
    %v1546 = vld [vmem:[%s1541 + $0x20] sm:$0xff]
    %v1547 = vld [vmem:[%s1541 + $0x28] sm:$0xff]
    %v1548 = vld [vmem:[%s1541 + $0x30] sm:$0xff]
    %v1549 = vld [vmem:[%s1541 + $0x38] sm:$0xff]
    %1551 = vset.pattern.permute.xlu0 0
    %1552 = vperm.xlu0 %1551, %v1542
    %v1553 = vpop.permute.xlu0 %1552
    %1556 = vset.pattern.permute.xlu0 0
    %1557 = vperm.xlu0 %1556, %v1543
    %v1558 = vpop.permute.xlu0 %1557
    %1561 = vset.pattern.permute.xlu0 0
    %1562 = vperm.xlu0 %1561, %v1544
    %v1563 = vpop.permute.xlu0 %1562
    %1566 = vset.pattern.permute.xlu0 0
    %1567 = vperm.xlu0 %1566, %v1545
    %v1568 = vpop.permute.xlu0 %1567
    %1571 = vset.pattern.permute.xlu0 0
    %1572 = vperm.xlu0 %1571, %v1546
    %v1573 = vpop.permute.xlu0 %1572
    %1576 = vset.pattern.permute.xlu0 0
    %1577 = vperm.xlu0 %1576, %v1547
    %v1578 = vpop.permute.xlu0 %1577
    %1581 = vset.pattern.permute.xlu0 0
    %1582 = vperm.xlu0 %1581, %v1548
    %v1583 = vpop.permute.xlu0 %1582
    %1586 = vset.pattern.permute.xlu0 0
    %1587 = vperm.xlu0 %1586, %v1549
    %v1588 = vpop.permute.xlu0 %1587
    %v1590 = vmul.f32 %v1533, %v1553
    %v1591 = vmul.f32 %v1534, %v1558
    %v1592 = vmul.f32 %v1535, %v1563
    %v1593 = vmul.f32 %v1536, %v1568
    %v1594 = vmul.f32 %v1537, %v1573
    %v1595 = vmul.f32 %v1538, %v1578
    %v1596 = vmul.f32 %v1539, %v1583
    %v1597 = vmul.f32 %v1540, %v1588
    %v1598 = vadd.f32 %v881, %v1590
    %v1599 = vadd.f32 %v882, %v1591
    %v1600 = vadd.f32 %v883, %v1592
    %v1601 = vadd.f32 %v884, %v1593
    %v1602 = vadd.f32 %v885, %v1594
    %v1603 = vadd.f32 %v886, %v1595
    %v1604 = vadd.f32 %v887, %v1596
    %v1605 = vadd.f32 %v888, %v1597
    %s1606 = sld [smem:[#allocation3 + $0x12]]
    %v1607 = vstv %s1606
    %v1608 = vmul.f32 %v1607, %v46
    %v1609 = vmul.f32 %v1607, %v47
    %v1610 = vmul.f32 %v1607, %v48
    %v1611 = vmul.f32 %v1607, %v49
    %v1612 = vmul.f32 %v1607, %v50
    %v1613 = vmul.f32 %v1607, %v51
    %v1614 = vmul.f32 %v1607, %v52
    %v1615 = vmul.f32 %v1607, %v53
    %s1616 = sld [smem:[#allocation3 + $0x13]]
    %v1617 = vstv %s1616
    %v1618 = vmul.f32 %v1617, %v55
    %v1619 = vmul.f32 %v1617, %v56
    %v1620 = vmul.f32 %v1617, %v57
    %v1621 = vmul.f32 %v1617, %v58
    %v1622 = vmul.f32 %v1617, %v59
    %v1623 = vmul.f32 %v1617, %v60
    %v1624 = vmul.f32 %v1617, %v61
    %v1625 = vmul.f32 %v1617, %v62
    %v1626 = vadd.f32 %v1608, %v1618
    %v1627 = vadd.f32 %v1609, %v1619
    %v1628 = vadd.f32 %v1610, %v1620
    %v1629 = vadd.f32 %v1611, %v1621
    %v1630 = vadd.f32 %v1612, %v1622
    %v1631 = vadd.f32 %v1613, %v1623
    %v1632 = vadd.f32 %v1614, %v1624
    %v1633 = vadd.f32 %v1615, %v1625
    %s1634 = sld [smem:[#allocation3 + $0x14]]
    %v1635 = vstv %s1634
    %v1636 = vmul.f32 %v1635, %v63
    %v1637 = vmul.f32 %v1635, %v64
    %v1638 = vmul.f32 %v1635, %v65
    %v1639 = vmul.f32 %v1635, %v66
    %v1640 = vmul.f32 %v1635, %v67
    %v1641 = vmul.f32 %v1635, %v68
    %v1642 = vmul.f32 %v1635, %v69
    %v1643 = vmul.f32 %v1635, %v70
    %v1644 = vadd.f32 %v1626, %v1636
    %v1645 = vadd.f32 %v1627, %v1637
    %v1646 = vadd.f32 %v1628, %v1638
    %v1647 = vadd.f32 %v1629, %v1639
    %v1648 = vadd.f32 %v1630, %v1640
    %v1649 = vadd.f32 %v1631, %v1641
    %v1650 = vadd.f32 %v1632, %v1642
    %v1651 = vadd.f32 %v1633, %v1643
    %s1652 = sld [smem:[#allocation3 + $0x15]]
    %v1653 = vstv %s1652
    %v1654 = vmul.f32 %v1653, %v80
    %v1655 = vmul.f32 %v1653, %v81
    %v1656 = vmul.f32 %v1653, %v82
    %v1657 = vmul.f32 %v1653, %v83
    %v1658 = vmul.f32 %v1653, %v84
    %v1659 = vmul.f32 %v1653, %v85
    %v1660 = vmul.f32 %v1653, %v86
    %v1661 = vmul.f32 %v1653, %v87
    %v1662 = vadd.f32 %v1644, %v1654
    %v1663 = vadd.f32 %v1645, %v1655
    %v1664 = vadd.f32 %v1646, %v1656
    %v1665 = vadd.f32 %v1647, %v1657
    %v1666 = vadd.f32 %v1648, %v1658
    %v1667 = vadd.f32 %v1649, %v1659
    %v1668 = vadd.f32 %v1650, %v1660
    %v1669 = vadd.f32 %v1651, %v1661
    %s1670 = sld [smem:[#allocation3 + $0x16]]
    %v1671 = vstv %s1670
    %v1672 = vmul.f32 %v1671, %v89
    %v1673 = vmul.f32 %v1671, %v90
    %v1674 = vmul.f32 %v1671, %v91
    %v1675 = vmul.f32 %v1671, %v92
    %v1676 = vmul.f32 %v1671, %v93
    %v1677 = vmul.f32 %v1671, %v94
    %v1678 = vmul.f32 %v1671, %v95
    %v1679 = vmul.f32 %v1671, %v96
    %v1680 = vadd.f32 %v1662, %v1672
    %v1681 = vadd.f32 %v1663, %v1673
    %v1682 = vadd.f32 %v1664, %v1674
    %v1683 = vadd.f32 %v1665, %v1675
    %v1684 = vadd.f32 %v1666, %v1676
    %v1685 = vadd.f32 %v1667, %v1677
    %v1686 = vadd.f32 %v1668, %v1678
    %v1687 = vadd.f32 %v1669, %v1679
    %s1688 = sld [smem:[#allocation3 + $0x17]]
    %v1689 = vstv %s1688
    %v1690 = vmul.f32 %v1689, %v97
    %v1691 = vmul.f32 %v1689, %v98
    %v1692 = vmul.f32 %v1689, %v99
    %v1693 = vmul.f32 %v1689, %v100
    %v1694 = vmul.f32 %v1689, %v101
    %v1695 = vmul.f32 %v1689, %v102
    %v1696 = vmul.f32 %v1689, %v103
    %v1697 = vmul.f32 %v1689, %v104
    %v1698 = vadd.f32 %v1680, %v1690
    %v1699 = vadd.f32 %v1681, %v1691
    %v1700 = vadd.f32 %v1682, %v1692
    %v1701 = vadd.f32 %v1683, %v1693
    %v1702 = vadd.f32 %v1684, %v1694
    %v1703 = vadd.f32 %v1685, %v1695
    %v1704 = vadd.f32 %v1686, %v1696
    %v1705 = vadd.f32 %v1687, %v1697
    %s1706 = sld [smem:[#allocation3 + $0x18]]
    %v1707 = vstv %s1706
    %v1708 = vmul.f32 %v1707, %v114
    %v1709 = vmul.f32 %v1707, %v115
    %v1710 = vmul.f32 %v1707, %v116
    %v1711 = vmul.f32 %v1707, %v117
    %v1712 = vmul.f32 %v1707, %v118
    %v1713 = vmul.f32 %v1707, %v119
    %v1714 = vmul.f32 %v1707, %v120
    %v1715 = vmul.f32 %v1707, %v121
    %v1716 = vadd.f32 %v1698, %v1708
    %v1717 = vadd.f32 %v1699, %v1709
    %v1718 = vadd.f32 %v1700, %v1710
    %v1719 = vadd.f32 %v1701, %v1711
    %v1720 = vadd.f32 %v1702, %v1712
    %v1721 = vadd.f32 %v1703, %v1713
    %v1722 = vadd.f32 %v1704, %v1714
    %v1723 = vadd.f32 %v1705, %v1715
    %s1724 = sld [smem:[#allocation3 + $0x19]]
    %v1725 = vstv %s1724
    %v1726 = vmul.f32 %v1725, %v123
    %v1727 = vmul.f32 %v1725, %v124
    %v1728 = vmul.f32 %v1725, %v125
    %v1729 = vmul.f32 %v1725, %v126
    %v1730 = vmul.f32 %v1725, %v127
    %v1731 = vmul.f32 %v1725, %v128
    %v1732 = vmul.f32 %v1725, %v129
    %v1733 = vmul.f32 %v1725, %v130
    %v1734 = vadd.f32 %v1716, %v1726
    %v1735 = vadd.f32 %v1717, %v1727
    %v1736 = vadd.f32 %v1718, %v1728
    %v1737 = vadd.f32 %v1719, %v1729
    %v1738 = vadd.f32 %v1720, %v1730
    %v1739 = vadd.f32 %v1721, %v1731
    %v1740 = vadd.f32 %v1722, %v1732
    %v1741 = vadd.f32 %v1723, %v1733
    %s1742 = sld [smem:[#allocation3 + $0x1a]]
    %v1743 = vstv %s1742
    %v1744 = vmul.f32 %v1743, %v131
    %v1745 = vmul.f32 %v1743, %v132
    %v1746 = vmul.f32 %v1743, %v133
    %v1747 = vmul.f32 %v1743, %v134
    %v1748 = vmul.f32 %v1743, %v135
    %v1749 = vmul.f32 %v1743, %v136
    %v1750 = vmul.f32 %v1743, %v137
    %v1751 = vmul.f32 %v1743, %v138
    %v1752 = vadd.f32 %v1734, %v1744
    %v1753 = vadd.f32 %v1735, %v1745
    %v1754 = vadd.f32 %v1736, %v1746
    %v1755 = vadd.f32 %v1737, %v1747
    %v1756 = vadd.f32 %v1738, %v1748
    %v1757 = vadd.f32 %v1739, %v1749
    %v1758 = vadd.f32 %v1740, %v1750
    %v1759 = vadd.f32 %v1741, %v1751
    %s1760 = sld [smem:[#allocation5 + $0x2]]
    %v1761 = vstv %s1760
    %v1762 = vadd.f32 %v1752, %v1761
    %v1763 = vadd.f32 %v1753, %v1761
    %v1764 = vadd.f32 %v1754, %v1761
    %v1765 = vadd.f32 %v1755, %v1761
    %v1766 = vadd.f32 %v1756, %v1761
    %v1767 = vadd.f32 %v1757, %v1761
    %v1768 = vadd.f32 %v1758, %v1761
    %v1769 = vadd.f32 %v1759, %v1761
    %v1770 = vmax.f32 %v1762, 0.0
    %v1771 = vmax.f32 %v1763, 0.0
    %v1772 = vmax.f32 %v1764, 0.0
    %v1773 = vmax.f32 %v1765, 0.0
    %v1774 = vmax.f32 %v1766, 0.0
    %v1775 = vmax.f32 %v1767, 0.0
    %v1776 = vmax.f32 %v1768, 0.0
    %v1777 = vmax.f32 %v1769, 0.0
    %v1778 = vmul.f32 %v1607, %v55
    %v1779 = vmul.f32 %v1607, %v56
    %v1780 = vmul.f32 %v1607, %v57
    %v1781 = vmul.f32 %v1607, %v58
    %v1782 = vmul.f32 %v1607, %v59
    %v1783 = vmul.f32 %v1607, %v60
    %v1784 = vmul.f32 %v1607, %v61
    %v1785 = vmul.f32 %v1607, %v62
    %v1786 = vmul.f32 %v1617, %v63
    %v1787 = vmul.f32 %v1617, %v64
    %v1788 = vmul.f32 %v1617, %v65
    %v1789 = vmul.f32 %v1617, %v66
    %v1790 = vmul.f32 %v1617, %v67
    %v1791 = vmul.f32 %v1617, %v68
    %v1792 = vmul.f32 %v1617, %v69
    %v1793 = vmul.f32 %v1617, %v70
    %v1794 = vadd.f32 %v1778, %v1786
    %v1795 = vadd.f32 %v1779, %v1787
    %v1796 = vadd.f32 %v1780, %v1788
    %v1797 = vadd.f32 %v1781, %v1789
    %v1798 = vadd.f32 %v1782, %v1790
    %v1799 = vadd.f32 %v1783, %v1791
    %v1800 = vadd.f32 %v1784, %v1792
    %v1801 = vadd.f32 %v1785, %v1793
    %v1802 = vmul.f32 %v1635, %v71
    %v1803 = vmul.f32 %v1635, %v72
    %v1804 = vmul.f32 %v1635, %v73
    %v1805 = vmul.f32 %v1635, %v74
    %v1806 = vmul.f32 %v1635, %v75
    %v1807 = vmul.f32 %v1635, %v76
    %v1808 = vmul.f32 %v1635, %v77
    %v1809 = vmul.f32 %v1635, %v78
    %v1810 = vadd.f32 %v1794, %v1802
    %v1811 = vadd.f32 %v1795, %v1803
    %v1812 = vadd.f32 %v1796, %v1804
    %v1813 = vadd.f32 %v1797, %v1805
    %v1814 = vadd.f32 %v1798, %v1806
    %v1815 = vadd.f32 %v1799, %v1807
    %v1816 = vadd.f32 %v1800, %v1808
    %v1817 = vadd.f32 %v1801, %v1809
    %v1818 = vmul.f32 %v1653, %v89
    %v1819 = vmul.f32 %v1653, %v90
    %v1820 = vmul.f32 %v1653, %v91
    %v1821 = vmul.f32 %v1653, %v92
    %v1822 = vmul.f32 %v1653, %v93
    %v1823 = vmul.f32 %v1653, %v94
    %v1824 = vmul.f32 %v1653, %v95
    %v1825 = vmul.f32 %v1653, %v96
    %v1826 = vadd.f32 %v1810, %v1818
    %v1827 = vadd.f32 %v1811, %v1819
    %v1828 = vadd.f32 %v1812, %v1820
    %v1829 = vadd.f32 %v1813, %v1821
    %v1830 = vadd.f32 %v1814, %v1822
    %v1831 = vadd.f32 %v1815, %v1823
    %v1832 = vadd.f32 %v1816, %v1824
    %v1833 = vadd.f32 %v1817, %v1825
    %v1834 = vmul.f32 %v1671, %v97
    %v1835 = vmul.f32 %v1671, %v98
    %v1836 = vmul.f32 %v1671, %v99
    %v1837 = vmul.f32 %v1671, %v100
    %v1838 = vmul.f32 %v1671, %v101
    %v1839 = vmul.f32 %v1671, %v102
    %v1840 = vmul.f32 %v1671, %v103
    %v1841 = vmul.f32 %v1671, %v104
    %v1842 = vadd.f32 %v1826, %v1834
    %v1843 = vadd.f32 %v1827, %v1835
    %v1844 = vadd.f32 %v1828, %v1836
    %v1845 = vadd.f32 %v1829, %v1837
    %v1846 = vadd.f32 %v1830, %v1838
    %v1847 = vadd.f32 %v1831, %v1839
    %v1848 = vadd.f32 %v1832, %v1840
    %v1849 = vadd.f32 %v1833, %v1841
    %v1850 = vmul.f32 %v1689, %v105
    %v1851 = vmul.f32 %v1689, %v106
    %v1852 = vmul.f32 %v1689, %v107
    %v1853 = vmul.f32 %v1689, %v108
    %v1854 = vmul.f32 %v1689, %v109
    %v1855 = vmul.f32 %v1689, %v110
    %v1856 = vmul.f32 %v1689, %v111
    %v1857 = vmul.f32 %v1689, %v112
    %v1858 = vadd.f32 %v1842, %v1850
    %v1859 = vadd.f32 %v1843, %v1851
    %v1860 = vadd.f32 %v1844, %v1852
    %v1861 = vadd.f32 %v1845, %v1853
    %v1862 = vadd.f32 %v1846, %v1854
    %v1863 = vadd.f32 %v1847, %v1855
    %v1864 = vadd.f32 %v1848, %v1856
    %v1865 = vadd.f32 %v1849, %v1857
    %v1866 = vmul.f32 %v1707, %v123
    %v1867 = vmul.f32 %v1707, %v124
    %v1868 = vmul.f32 %v1707, %v125
    %v1869 = vmul.f32 %v1707, %v126
    %v1870 = vmul.f32 %v1707, %v127
    %v1871 = vmul.f32 %v1707, %v128
    %v1872 = vmul.f32 %v1707, %v129
    %v1873 = vmul.f32 %v1707, %v130
    %v1874 = vadd.f32 %v1858, %v1866
    %v1875 = vadd.f32 %v1859, %v1867
    %v1876 = vadd.f32 %v1860, %v1868
    %v1877 = vadd.f32 %v1861, %v1869
    %v1878 = vadd.f32 %v1862, %v1870
    %v1879 = vadd.f32 %v1863, %v1871
    %v1880 = vadd.f32 %v1864, %v1872
    %v1881 = vadd.f32 %v1865, %v1873
    %v1882 = vmul.f32 %v1725, %v131
    %v1883 = vmul.f32 %v1725, %v132
    %v1884 = vmul.f32 %v1725, %v133
    %v1885 = vmul.f32 %v1725, %v134
    %v1886 = vmul.f32 %v1725, %v135
    %v1887 = vmul.f32 %v1725, %v136
    %v1888 = vmul.f32 %v1725, %v137
    %v1889 = vmul.f32 %v1725, %v138
    %v1890 = vadd.f32 %v1874, %v1882
    %v1891 = vadd.f32 %v1875, %v1883
    %v1892 = vadd.f32 %v1876, %v1884
    %v1893 = vadd.f32 %v1877, %v1885
    %v1894 = vadd.f32 %v1878, %v1886
    %v1895 = vadd.f32 %v1879, %v1887
    %v1896 = vadd.f32 %v1880, %v1888
    %v1897 = vadd.f32 %v1881, %v1889
    %v1898 = vmul.f32 %v1743, %v139
    %v1899 = vmul.f32 %v1743, %v140
    %v1900 = vmul.f32 %v1743, %v141
    %v1901 = vmul.f32 %v1743, %v142
    %v1902 = vmul.f32 %v1743, %v143
    %v1903 = vmul.f32 %v1743, %v144
    %v1904 = vmul.f32 %v1743, %v145
    %v1905 = vmul.f32 %v1743, %v146
    %v1906 = vadd.f32 %v1890, %v1898
    %v1907 = vadd.f32 %v1891, %v1899
    %v1908 = vadd.f32 %v1892, %v1900
    %v1909 = vadd.f32 %v1893, %v1901
    %v1910 = vadd.f32 %v1894, %v1902
    %v1911 = vadd.f32 %v1895, %v1903
    %v1912 = vadd.f32 %v1896, %v1904
    %v1913 = vadd.f32 %v1897, %v1905
    %v1914 = vadd.f32 %v1906, %v1761
    %v1915 = vadd.f32 %v1907, %v1761
    %v1916 = vadd.f32 %v1908, %v1761
    %v1917 = vadd.f32 %v1909, %v1761
    %v1918 = vadd.f32 %v1910, %v1761
    %v1919 = vadd.f32 %v1911, %v1761
    %v1920 = vadd.f32 %v1912, %v1761
    %v1921 = vadd.f32 %v1913, %v1761
    %v1922 = vmax.f32 %v1914, 0.0
    %v1923 = vmax.f32 %v1915, 0.0
    %v1924 = vmax.f32 %v1916, 0.0
    %v1925 = vmax.f32 %v1917, 0.0
    %v1926 = vmax.f32 %v1918, 0.0
    %v1927 = vmax.f32 %v1919, 0.0
    %v1928 = vmax.f32 %v1920, 0.0
    %v1929 = vmax.f32 %v1921, 0.0
    %v1930 = vmax.f32 %v1770, %v1922
    %v1931 = vmax.f32 %v1771, %v1923
    %v1932 = vmax.f32 %v1772, %v1924
    %v1933 = vmax.f32 %v1773, %v1925
    %v1934 = vmax.f32 %v1774, %v1926
    %v1935 = vmax.f32 %v1775, %v1927
    %v1936 = vmax.f32 %v1776, %v1928
    %v1937 = vmax.f32 %v1777, %v1929
    %v1938 = vmul.f32 %v1607, %v80
    %v1939 = vmul.f32 %v1607, %v81
    %v1940 = vmul.f32 %v1607, %v82
    %v1941 = vmul.f32 %v1607, %v83
    %v1942 = vmul.f32 %v1607, %v84
    %v1943 = vmul.f32 %v1607, %v85
    %v1944 = vmul.f32 %v1607, %v86
    %v1945 = vmul.f32 %v1607, %v87
    %v1946 = vmul.f32 %v1617, %v89
    %v1947 = vmul.f32 %v1617, %v90
    %v1948 = vmul.f32 %v1617, %v91
    %v1949 = vmul.f32 %v1617, %v92
    %v1950 = vmul.f32 %v1617, %v93
    %v1951 = vmul.f32 %v1617, %v94
    %v1952 = vmul.f32 %v1617, %v95
    %v1953 = vmul.f32 %v1617, %v96
    %v1954 = vadd.f32 %v1938, %v1946
    %v1955 = vadd.f32 %v1939, %v1947
    %v1956 = vadd.f32 %v1940, %v1948
    %v1957 = vadd.f32 %v1941, %v1949
    %v1958 = vadd.f32 %v1942, %v1950
    %v1959 = vadd.f32 %v1943, %v1951
    %v1960 = vadd.f32 %v1944, %v1952
    %v1961 = vadd.f32 %v1945, %v1953
    %v1962 = vmul.f32 %v1635, %v97
    %v1963 = vmul.f32 %v1635, %v98
    %v1964 = vmul.f32 %v1635, %v99
    %v1965 = vmul.f32 %v1635, %v100
    %v1966 = vmul.f32 %v1635, %v101
    %v1967 = vmul.f32 %v1635, %v102
    %v1968 = vmul.f32 %v1635, %v103
    %v1969 = vmul.f32 %v1635, %v104
    %v1970 = vadd.f32 %v1954, %v1962
    %v1971 = vadd.f32 %v1955, %v1963
    %v1972 = vadd.f32 %v1956, %v1964
    %v1973 = vadd.f32 %v1957, %v1965
    %v1974 = vadd.f32 %v1958, %v1966
    %v1975 = vadd.f32 %v1959, %v1967
    %v1976 = vadd.f32 %v1960, %v1968
    %v1977 = vadd.f32 %v1961, %v1969
    %v1978 = vmul.f32 %v1653, %v114
    %v1979 = vmul.f32 %v1653, %v115
    %v1980 = vmul.f32 %v1653, %v116
    %v1981 = vmul.f32 %v1653, %v117
    %v1982 = vmul.f32 %v1653, %v118
    %v1983 = vmul.f32 %v1653, %v119
    %v1984 = vmul.f32 %v1653, %v120
    %v1985 = vmul.f32 %v1653, %v121
    %v1986 = vadd.f32 %v1970, %v1978
    %v1987 = vadd.f32 %v1971, %v1979
    %v1988 = vadd.f32 %v1972, %v1980
    %v1989 = vadd.f32 %v1973, %v1981
    %v1990 = vadd.f32 %v1974, %v1982
    %v1991 = vadd.f32 %v1975, %v1983
    %v1992 = vadd.f32 %v1976, %v1984
    %v1993 = vadd.f32 %v1977, %v1985
    %v1994 = vmul.f32 %v1671, %v123
    %v1995 = vmul.f32 %v1671, %v124
    %v1996 = vmul.f32 %v1671, %v125
    %v1997 = vmul.f32 %v1671, %v126
    %v1998 = vmul.f32 %v1671, %v127
    %v1999 = vmul.f32 %v1671, %v128
    %v2000 = vmul.f32 %v1671, %v129
    %v2001 = vmul.f32 %v1671, %v130
    %v2002 = vadd.f32 %v1986, %v1994
    %v2003 = vadd.f32 %v1987, %v1995
    %v2004 = vadd.f32 %v1988, %v1996
    %v2005 = vadd.f32 %v1989, %v1997
    %v2006 = vadd.f32 %v1990, %v1998
    %v2007 = vadd.f32 %v1991, %v1999
    %v2008 = vadd.f32 %v1992, %v2000
    %v2009 = vadd.f32 %v1993, %v2001
    %v2010 = vmul.f32 %v1689, %v131
    %v2011 = vmul.f32 %v1689, %v132
    %v2012 = vmul.f32 %v1689, %v133
    %v2013 = vmul.f32 %v1689, %v134
    %v2014 = vmul.f32 %v1689, %v135
    %v2015 = vmul.f32 %v1689, %v136
    %v2016 = vmul.f32 %v1689, %v137
    %v2017 = vmul.f32 %v1689, %v138
    %v2018 = vadd.f32 %v2002, %v2010
    %v2019 = vadd.f32 %v2003, %v2011
    %v2020 = vadd.f32 %v2004, %v2012
    %v2021 = vadd.f32 %v2005, %v2013
    %v2022 = vadd.f32 %v2006, %v2014
    %v2023 = vadd.f32 %v2007, %v2015
    %v2024 = vadd.f32 %v2008, %v2016
    %v2025 = vadd.f32 %v2009, %v2017
    %v2026 = vmul.f32 %v1707, %v148
    %v2027 = vmul.f32 %v1707, %v149
    %v2028 = vmul.f32 %v1707, %v150
    %v2029 = vmul.f32 %v1707, %v151
    %v2030 = vmul.f32 %v1707, %v152
    %v2031 = vmul.f32 %v1707, %v153
    %v2032 = vmul.f32 %v1707, %v154
    %v2033 = vmul.f32 %v1707, %v155
    %v2034 = vadd.f32 %v2018, %v2026
    %v2035 = vadd.f32 %v2019, %v2027
    %v2036 = vadd.f32 %v2020, %v2028
    %v2037 = vadd.f32 %v2021, %v2029
    %v2038 = vadd.f32 %v2022, %v2030
    %v2039 = vadd.f32 %v2023, %v2031
    %v2040 = vadd.f32 %v2024, %v2032
    %v2041 = vadd.f32 %v2025, %v2033
    %v2042 = vmul.f32 %v1725, %v157
    %v2043 = vmul.f32 %v1725, %v158
    %v2044 = vmul.f32 %v1725, %v159
    %v2045 = vmul.f32 %v1725, %v160
    %v2046 = vmul.f32 %v1725, %v161
    %v2047 = vmul.f32 %v1725, %v162
    %v2048 = vmul.f32 %v1725, %v163
    %v2049 = vmul.f32 %v1725, %v164
    %v2050 = vadd.f32 %v2034, %v2042
    %v2051 = vadd.f32 %v2035, %v2043
    %v2052 = vadd.f32 %v2036, %v2044
    %v2053 = vadd.f32 %v2037, %v2045
    %v2054 = vadd.f32 %v2038, %v2046
    %v2055 = vadd.f32 %v2039, %v2047
    %v2056 = vadd.f32 %v2040, %v2048
    %v2057 = vadd.f32 %v2041, %v2049
    %v2058 = vmul.f32 %v1743, %v165
    %v2059 = vmul.f32 %v1743, %v166
    %v2060 = vmul.f32 %v1743, %v167
    %v2061 = vmul.f32 %v1743, %v168
    %v2062 = vmul.f32 %v1743, %v169
    %v2063 = vmul.f32 %v1743, %v170
    %v2064 = vmul.f32 %v1743, %v171
    %v2065 = vmul.f32 %v1743, %v172
    %v2066 = vadd.f32 %v2050, %v2058
    %v2067 = vadd.f32 %v2051, %v2059
    %v2068 = vadd.f32 %v2052, %v2060
    %v2069 = vadd.f32 %v2053, %v2061
    %v2070 = vadd.f32 %v2054, %v2062
    %v2071 = vadd.f32 %v2055, %v2063
    %v2072 = vadd.f32 %v2056, %v2064
    %v2073 = vadd.f32 %v2057, %v2065
    %v2074 = vadd.f32 %v2066, %v1761
    %v2075 = vadd.f32 %v2067, %v1761
    %v2076 = vadd.f32 %v2068, %v1761
    %v2077 = vadd.f32 %v2069, %v1761
    %v2078 = vadd.f32 %v2070, %v1761
    %v2079 = vadd.f32 %v2071, %v1761
    %v2080 = vadd.f32 %v2072, %v1761
    %v2081 = vadd.f32 %v2073, %v1761
    %v2082 = vmax.f32 %v2074, 0.0
    %v2083 = vmax.f32 %v2075, 0.0
    %v2084 = vmax.f32 %v2076, 0.0
    %v2085 = vmax.f32 %v2077, 0.0
    %v2086 = vmax.f32 %v2078, 0.0
    %v2087 = vmax.f32 %v2079, 0.0
    %v2088 = vmax.f32 %v2080, 0.0
    %v2089 = vmax.f32 %v2081, 0.0
    %v2090 = vmax.f32 %v1930, %v2082
    %v2091 = vmax.f32 %v1931, %v2083
    %v2092 = vmax.f32 %v1932, %v2084
    %v2093 = vmax.f32 %v1933, %v2085
    %v2094 = vmax.f32 %v1934, %v2086
    %v2095 = vmax.f32 %v1935, %v2087
    %v2096 = vmax.f32 %v1936, %v2088
    %v2097 = vmax.f32 %v1937, %v2089
    %v2098 = vmul.f32 %v1607, %v89
    %v2099 = vmul.f32 %v1607, %v90
    %v2100 = vmul.f32 %v1607, %v91
    %v2101 = vmul.f32 %v1607, %v92
    %v2102 = vmul.f32 %v1607, %v93
    %v2103 = vmul.f32 %v1607, %v94
    %v2104 = vmul.f32 %v1607, %v95
    %v2105 = vmul.f32 %v1607, %v96
    %v2106 = vmul.f32 %v1617, %v97
    %v2107 = vmul.f32 %v1617, %v98
    %v2108 = vmul.f32 %v1617, %v99
    %v2109 = vmul.f32 %v1617, %v100
    %v2110 = vmul.f32 %v1617, %v101
    %v2111 = vmul.f32 %v1617, %v102
    %v2112 = vmul.f32 %v1617, %v103
    %v2113 = vmul.f32 %v1617, %v104
    %v2114 = vadd.f32 %v2098, %v2106
    %v2115 = vadd.f32 %v2099, %v2107
    %v2116 = vadd.f32 %v2100, %v2108
    %v2117 = vadd.f32 %v2101, %v2109
    %v2118 = vadd.f32 %v2102, %v2110
    %v2119 = vadd.f32 %v2103, %v2111
    %v2120 = vadd.f32 %v2104, %v2112
    %v2121 = vadd.f32 %v2105, %v2113
    %v2122 = vmul.f32 %v1635, %v105
    %v2123 = vmul.f32 %v1635, %v106
    %v2124 = vmul.f32 %v1635, %v107
    %v2125 = vmul.f32 %v1635, %v108
    %v2126 = vmul.f32 %v1635, %v109
    %v2127 = vmul.f32 %v1635, %v110
    %v2128 = vmul.f32 %v1635, %v111
    %v2129 = vmul.f32 %v1635, %v112
    %v2130 = vadd.f32 %v2114, %v2122
    %v2131 = vadd.f32 %v2115, %v2123
    %v2132 = vadd.f32 %v2116, %v2124
    %v2133 = vadd.f32 %v2117, %v2125
    %v2134 = vadd.f32 %v2118, %v2126
    %v2135 = vadd.f32 %v2119, %v2127
    %v2136 = vadd.f32 %v2120, %v2128
    %v2137 = vadd.f32 %v2121, %v2129
    %v2138 = vmul.f32 %v1653, %v123
    %v2139 = vmul.f32 %v1653, %v124
    %v2140 = vmul.f32 %v1653, %v125
    %v2141 = vmul.f32 %v1653, %v126
    %v2142 = vmul.f32 %v1653, %v127
    %v2143 = vmul.f32 %v1653, %v128
    %v2144 = vmul.f32 %v1653, %v129
    %v2145 = vmul.f32 %v1653, %v130
    %v2146 = vadd.f32 %v2130, %v2138
    %v2147 = vadd.f32 %v2131, %v2139
    %v2148 = vadd.f32 %v2132, %v2140
    %v2149 = vadd.f32 %v2133, %v2141
    %v2150 = vadd.f32 %v2134, %v2142
    %v2151 = vadd.f32 %v2135, %v2143
    %v2152 = vadd.f32 %v2136, %v2144
    %v2153 = vadd.f32 %v2137, %v2145
    %v2154 = vmul.f32 %v1671, %v131
    %v2155 = vmul.f32 %v1671, %v132
    %v2156 = vmul.f32 %v1671, %v133
    %v2157 = vmul.f32 %v1671, %v134
    %v2158 = vmul.f32 %v1671, %v135
    %v2159 = vmul.f32 %v1671, %v136
    %v2160 = vmul.f32 %v1671, %v137
    %v2161 = vmul.f32 %v1671, %v138
    %v2162 = vadd.f32 %v2146, %v2154
    %v2163 = vadd.f32 %v2147, %v2155
    %v2164 = vadd.f32 %v2148, %v2156
    %v2165 = vadd.f32 %v2149, %v2157
    %v2166 = vadd.f32 %v2150, %v2158
    %v2167 = vadd.f32 %v2151, %v2159
    %v2168 = vadd.f32 %v2152, %v2160
    %v2169 = vadd.f32 %v2153, %v2161
    %v2170 = vmul.f32 %v1689, %v139
    %v2171 = vmul.f32 %v1689, %v140
    %v2172 = vmul.f32 %v1689, %v141
    %v2173 = vmul.f32 %v1689, %v142
    %v2174 = vmul.f32 %v1689, %v143
    %v2175 = vmul.f32 %v1689, %v144
    %v2176 = vmul.f32 %v1689, %v145
    %v2177 = vmul.f32 %v1689, %v146
    %v2178 = vadd.f32 %v2162, %v2170
    %v2179 = vadd.f32 %v2163, %v2171
    %v2180 = vadd.f32 %v2164, %v2172
    %v2181 = vadd.f32 %v2165, %v2173
    %v2182 = vadd.f32 %v2166, %v2174
    %v2183 = vadd.f32 %v2167, %v2175
    %v2184 = vadd.f32 %v2168, %v2176
    %v2185 = vadd.f32 %v2169, %v2177
    %v2186 = vmul.f32 %v1707, %v157
    %v2187 = vmul.f32 %v1707, %v158
    %v2188 = vmul.f32 %v1707, %v159
    %v2189 = vmul.f32 %v1707, %v160
    %v2190 = vmul.f32 %v1707, %v161
    %v2191 = vmul.f32 %v1707, %v162
    %v2192 = vmul.f32 %v1707, %v163
    %v2193 = vmul.f32 %v1707, %v164
    %v2194 = vadd.f32 %v2178, %v2186
    %v2195 = vadd.f32 %v2179, %v2187
    %v2196 = vadd.f32 %v2180, %v2188
    %v2197 = vadd.f32 %v2181, %v2189
    %v2198 = vadd.f32 %v2182, %v2190
    %v2199 = vadd.f32 %v2183, %v2191
    %v2200 = vadd.f32 %v2184, %v2192
    %v2201 = vadd.f32 %v2185, %v2193
    %v2202 = vmul.f32 %v1725, %v165
    %v2203 = vmul.f32 %v1725, %v166
    %v2204 = vmul.f32 %v1725, %v167
    %v2205 = vmul.f32 %v1725, %v168
    %v2206 = vmul.f32 %v1725, %v169
    %v2207 = vmul.f32 %v1725, %v170
    %v2208 = vmul.f32 %v1725, %v171
    %v2209 = vmul.f32 %v1725, %v172
    %v2210 = vadd.f32 %v2194, %v2202
    %v2211 = vadd.f32 %v2195, %v2203
    %v2212 = vadd.f32 %v2196, %v2204
    %v2213 = vadd.f32 %v2197, %v2205
    %v2214 = vadd.f32 %v2198, %v2206
    %v2215 = vadd.f32 %v2199, %v2207
    %v2216 = vadd.f32 %v2200, %v2208
    %v2217 = vadd.f32 %v2201, %v2209
    %v2218 = vmul.f32 %v1743, %v173
    %v2219 = vmul.f32 %v1743, %v174
    %v2220 = vmul.f32 %v1743, %v175
    %v2221 = vmul.f32 %v1743, %v176
    %v2222 = vmul.f32 %v1743, %v177
    %v2223 = vmul.f32 %v1743, %v178
    %v2224 = vmul.f32 %v1743, %v179
    %v2225 = vmul.f32 %v1743, %v180
    %v2226 = vadd.f32 %v2210, %v2218
    %v2227 = vadd.f32 %v2211, %v2219
    %v2228 = vadd.f32 %v2212, %v2220
    %v2229 = vadd.f32 %v2213, %v2221
    %v2230 = vadd.f32 %v2214, %v2222
    %v2231 = vadd.f32 %v2215, %v2223
    %v2232 = vadd.f32 %v2216, %v2224
    %v2233 = vadd.f32 %v2217, %v2225
    %v2234 = vadd.f32 %v2226, %v1761
    %v2235 = vadd.f32 %v2227, %v1761
    %v2236 = vadd.f32 %v2228, %v1761
    %v2237 = vadd.f32 %v2229, %v1761
    %v2238 = vadd.f32 %v2230, %v1761
    %v2239 = vadd.f32 %v2231, %v1761
    %v2240 = vadd.f32 %v2232, %v1761
    %v2241 = vadd.f32 %v2233, %v1761
    %v2242 = vmax.f32 %v2234, 0.0
    %v2243 = vmax.f32 %v2235, 0.0
    %v2244 = vmax.f32 %v2236, 0.0
    %v2245 = vmax.f32 %v2237, 0.0
    %v2246 = vmax.f32 %v2238, 0.0
    %v2247 = vmax.f32 %v2239, 0.0
    %v2248 = vmax.f32 %v2240, 0.0
    %v2249 = vmax.f32 %v2241, 0.0
    %v2250 = vmax.f32 %v2090, %v2242
    %v2251 = vmax.f32 %v2091, %v2243
    %v2252 = vmax.f32 %v2092, %v2244
    %v2253 = vmax.f32 %v2093, %v2245
    %v2254 = vmax.f32 %v2094, %v2246
    %v2255 = vmax.f32 %v2095, %v2247
    %v2256 = vmax.f32 %v2096, %v2248
    %v2257 = vmax.f32 %v2097, %v2249
    %s2258 = scalar_lea.vmem %s1, 128
    %v2259 = vld [vmem:[%s2258] sm:$0xff]
    %v2260 = vld [vmem:[%s2258 + $0x8] sm:$0xff]
    %v2261 = vld [vmem:[%s2258 + $0x10] sm:$0xff]
    %v2262 = vld [vmem:[%s2258 + $0x18] sm:$0xff]
    %v2263 = vld [vmem:[%s2258 + $0x20] sm:$0xff]
    %v2264 = vld [vmem:[%s2258 + $0x28] sm:$0xff]
    %v2265 = vld [vmem:[%s2258 + $0x30] sm:$0xff]
    %v2266 = vld [vmem:[%s2258 + $0x38] sm:$0xff]
    %2268 = vset.pattern.permute.xlu0 0
    %2269 = vperm.xlu0 %2268, %v2259
    %v2270 = vpop.permute.xlu0 %2269
    %2273 = vset.pattern.permute.xlu0 0
    %2274 = vperm.xlu0 %2273, %v2260
    %v2275 = vpop.permute.xlu0 %2274
    %2278 = vset.pattern.permute.xlu0 0
    %2279 = vperm.xlu0 %2278, %v2261
    %v2280 = vpop.permute.xlu0 %2279
    %2283 = vset.pattern.permute.xlu0 0
    %2284 = vperm.xlu0 %2283, %v2262
    %v2285 = vpop.permute.xlu0 %2284
    %2288 = vset.pattern.permute.xlu0 0
    %2289 = vperm.xlu0 %2288, %v2263
    %v2290 = vpop.permute.xlu0 %2289
    %2293 = vset.pattern.permute.xlu0 0
    %2294 = vperm.xlu0 %2293, %v2264
    %v2295 = vpop.permute.xlu0 %2294
    %2298 = vset.pattern.permute.xlu0 0
    %2299 = vperm.xlu0 %2298, %v2265
    %v2300 = vpop.permute.xlu0 %2299
    %2303 = vset.pattern.permute.xlu0 0
    %2304 = vperm.xlu0 %2303, %v2266
    %v2305 = vpop.permute.xlu0 %2304
    %v2307 = vmul.f32 %v2250, %v2270
    %v2308 = vmul.f32 %v2251, %v2275
    %v2309 = vmul.f32 %v2252, %v2280
    %v2310 = vmul.f32 %v2253, %v2285
    %v2311 = vmul.f32 %v2254, %v2290
    %v2312 = vmul.f32 %v2255, %v2295
    %v2313 = vmul.f32 %v2256, %v2300
    %v2314 = vmul.f32 %v2257, %v2305
    %v2315 = vadd.f32 %v1598, %v2307
    %v2316 = vadd.f32 %v1599, %v2308
    %v2317 = vadd.f32 %v1600, %v2309
    %v2318 = vadd.f32 %v1601, %v2310
    %v2319 = vadd.f32 %v1602, %v2311
    %v2320 = vadd.f32 %v1603, %v2312
    %v2321 = vadd.f32 %v1604, %v2313
    %v2322 = vadd.f32 %v1605, %v2314
    %s2323 = sld [smem:[#allocation3 + $0x1b]]
    %v2324 = vstv %s2323
    %v2325 = vmul.f32 %v2324, %v46
    %v2326 = vmul.f32 %v2324, %v47
    %v2327 = vmul.f32 %v2324, %v48
    %v2328 = vmul.f32 %v2324, %v49
    %v2329 = vmul.f32 %v2324, %v50
    %v2330 = vmul.f32 %v2324, %v51
    %v2331 = vmul.f32 %v2324, %v52
    %v2332 = vmul.f32 %v2324, %v53
    %s2333 = sld [smem:[#allocation3 + $0x1c]]
    %v2334 = vstv %s2333
    %v2335 = vmul.f32 %v2334, %v55
    %v2336 = vmul.f32 %v2334, %v56
    %v2337 = vmul.f32 %v2334, %v57
    %v2338 = vmul.f32 %v2334, %v58
    %v2339 = vmul.f32 %v2334, %v59
    %v2340 = vmul.f32 %v2334, %v60
    %v2341 = vmul.f32 %v2334, %v61
    %v2342 = vmul.f32 %v2334, %v62
    %v2343 = vadd.f32 %v2325, %v2335
    %v2344 = vadd.f32 %v2326, %v2336
    %v2345 = vadd.f32 %v2327, %v2337
    %v2346 = vadd.f32 %v2328, %v2338
    %v2347 = vadd.f32 %v2329, %v2339
    %v2348 = vadd.f32 %v2330, %v2340
    %v2349 = vadd.f32 %v2331, %v2341
    %v2350 = vadd.f32 %v2332, %v2342
    %s2351 = sld [smem:[#allocation3 + $0x1d]]
    %v2352 = vstv %s2351
    %v2353 = vmul.f32 %v2352, %v63
    %v2354 = vmul.f32 %v2352, %v64
    %v2355 = vmul.f32 %v2352, %v65
    %v2356 = vmul.f32 %v2352, %v66
    %v2357 = vmul.f32 %v2352, %v67
    %v2358 = vmul.f32 %v2352, %v68
    %v2359 = vmul.f32 %v2352, %v69
    %v2360 = vmul.f32 %v2352, %v70
    %v2361 = vadd.f32 %v2343, %v2353
    %v2362 = vadd.f32 %v2344, %v2354
    %v2363 = vadd.f32 %v2345, %v2355
    %v2364 = vadd.f32 %v2346, %v2356
    %v2365 = vadd.f32 %v2347, %v2357
    %v2366 = vadd.f32 %v2348, %v2358
    %v2367 = vadd.f32 %v2349, %v2359
    %v2368 = vadd.f32 %v2350, %v2360
    %s2369 = sld [smem:[#allocation3 + $0x1e]]
    %v2370 = vstv %s2369
    %v2371 = vmul.f32 %v2370, %v80
    %v2372 = vmul.f32 %v2370, %v81
    %v2373 = vmul.f32 %v2370, %v82
    %v2374 = vmul.f32 %v2370, %v83
    %v2375 = vmul.f32 %v2370, %v84
    %v2376 = vmul.f32 %v2370, %v85
    %v2377 = vmul.f32 %v2370, %v86
    %v2378 = vmul.f32 %v2370, %v87
    %v2379 = vadd.f32 %v2361, %v2371
    %v2380 = vadd.f32 %v2362, %v2372
    %v2381 = vadd.f32 %v2363, %v2373
    %v2382 = vadd.f32 %v2364, %v2374
    %v2383 = vadd.f32 %v2365, %v2375
    %v2384 = vadd.f32 %v2366, %v2376
    %v2385 = vadd.f32 %v2367, %v2377
    %v2386 = vadd.f32 %v2368, %v2378
    %s2387 = sld [smem:[#allocation3 + $0x1f]]
    %v2388 = vstv %s2387
    %v2389 = vmul.f32 %v2388, %v89
    %v2390 = vmul.f32 %v2388, %v90
    %v2391 = vmul.f32 %v2388, %v91
    %v2392 = vmul.f32 %v2388, %v92
    %v2393 = vmul.f32 %v2388, %v93
    %v2394 = vmul.f32 %v2388, %v94
    %v2395 = vmul.f32 %v2388, %v95
    %v2396 = vmul.f32 %v2388, %v96
    %v2397 = vadd.f32 %v2379, %v2389
    %v2398 = vadd.f32 %v2380, %v2390
    %v2399 = vadd.f32 %v2381, %v2391
    %v2400 = vadd.f32 %v2382, %v2392
    %v2401 = vadd.f32 %v2383, %v2393
    %v2402 = vadd.f32 %v2384, %v2394
    %v2403 = vadd.f32 %v2385, %v2395
    %v2404 = vadd.f32 %v2386, %v2396
    %s2405 = sld [smem:[#allocation3 + $0x20]]
    %v2406 = vstv %s2405
    %v2407 = vmul.f32 %v2406, %v97
    %v2408 = vmul.f32 %v2406, %v98
    %v2409 = vmul.f32 %v2406, %v99
    %v2410 = vmul.f32 %v2406, %v100
    %v2411 = vmul.f32 %v2406, %v101
    %v2412 = vmul.f32 %v2406, %v102
    %v2413 = vmul.f32 %v2406, %v103
    %v2414 = vmul.f32 %v2406, %v104
    %v2415 = vadd.f32 %v2397, %v2407
    %v2416 = vadd.f32 %v2398, %v2408
    %v2417 = vadd.f32 %v2399, %v2409
    %v2418 = vadd.f32 %v2400, %v2410
    %v2419 = vadd.f32 %v2401, %v2411
    %v2420 = vadd.f32 %v2402, %v2412
    %v2421 = vadd.f32 %v2403, %v2413
    %v2422 = vadd.f32 %v2404, %v2414
    %s2423 = sld [smem:[#allocation3 + $0x21]]
    %v2424 = vstv %s2423
    %v2425 = vmul.f32 %v2424, %v114
    %v2426 = vmul.f32 %v2424, %v115
    %v2427 = vmul.f32 %v2424, %v116
    %v2428 = vmul.f32 %v2424, %v117
    %v2429 = vmul.f32 %v2424, %v118
    %v2430 = vmul.f32 %v2424, %v119
    %v2431 = vmul.f32 %v2424, %v120
    %v2432 = vmul.f32 %v2424, %v121
    %v2433 = vadd.f32 %v2415, %v2425
    %v2434 = vadd.f32 %v2416, %v2426
    %v2435 = vadd.f32 %v2417, %v2427
    %v2436 = vadd.f32 %v2418, %v2428
    %v2437 = vadd.f32 %v2419, %v2429
    %v2438 = vadd.f32 %v2420, %v2430
    %v2439 = vadd.f32 %v2421, %v2431
    %v2440 = vadd.f32 %v2422, %v2432
    %s2441 = sld [smem:[#allocation3 + $0x22]]
    %v2442 = vstv %s2441
    %v2443 = vmul.f32 %v2442, %v123
    %v2444 = vmul.f32 %v2442, %v124
    %v2445 = vmul.f32 %v2442, %v125
    %v2446 = vmul.f32 %v2442, %v126
    %v2447 = vmul.f32 %v2442, %v127
    %v2448 = vmul.f32 %v2442, %v128
    %v2449 = vmul.f32 %v2442, %v129
    %v2450 = vmul.f32 %v2442, %v130
    %v2451 = vadd.f32 %v2433, %v2443
    %v2452 = vadd.f32 %v2434, %v2444
    %v2453 = vadd.f32 %v2435, %v2445
    %v2454 = vadd.f32 %v2436, %v2446
    %v2455 = vadd.f32 %v2437, %v2447
    %v2456 = vadd.f32 %v2438, %v2448
    %v2457 = vadd.f32 %v2439, %v2449
    %v2458 = vadd.f32 %v2440, %v2450
    %s2459 = sld [smem:[#allocation3 + $0x23]]
    %v2460 = vstv %s2459
    %v2461 = vmul.f32 %v2460, %v131
    %v2462 = vmul.f32 %v2460, %v132
    %v2463 = vmul.f32 %v2460, %v133
    %v2464 = vmul.f32 %v2460, %v134
    %v2465 = vmul.f32 %v2460, %v135
    %v2466 = vmul.f32 %v2460, %v136
    %v2467 = vmul.f32 %v2460, %v137
    %v2468 = vmul.f32 %v2460, %v138
    %v2469 = vadd.f32 %v2451, %v2461
    %v2470 = vadd.f32 %v2452, %v2462
    %v2471 = vadd.f32 %v2453, %v2463
    %v2472 = vadd.f32 %v2454, %v2464
    %v2473 = vadd.f32 %v2455, %v2465
    %v2474 = vadd.f32 %v2456, %v2466
    %v2475 = vadd.f32 %v2457, %v2467
    %v2476 = vadd.f32 %v2458, %v2468
    %s2477 = sld [smem:[#allocation5 + $0x3]]
    %v2478 = vstv %s2477
    %v2479 = vadd.f32 %v2469, %v2478
    %v2480 = vadd.f32 %v2470, %v2478
    %v2481 = vadd.f32 %v2471, %v2478
    %v2482 = vadd.f32 %v2472, %v2478
    %v2483 = vadd.f32 %v2473, %v2478
    %v2484 = vadd.f32 %v2474, %v2478
    %v2485 = vadd.f32 %v2475, %v2478
    %v2486 = vadd.f32 %v2476, %v2478
    %v2487 = vmax.f32 %v2479, 0.0
    %v2488 = vmax.f32 %v2480, 0.0
    %v2489 = vmax.f32 %v2481, 0.0
    %v2490 = vmax.f32 %v2482, 0.0
    %v2491 = vmax.f32 %v2483, 0.0
    %v2492 = vmax.f32 %v2484, 0.0
    %v2493 = vmax.f32 %v2485, 0.0
    %v2494 = vmax.f32 %v2486, 0.0
    %v2495 = vmul.f32 %v2324, %v55
    %v2496 = vmul.f32 %v2324, %v56
    %v2497 = vmul.f32 %v2324, %v57
    %v2498 = vmul.f32 %v2324, %v58
    %v2499 = vmul.f32 %v2324, %v59
    %v2500 = vmul.f32 %v2324, %v60
    %v2501 = vmul.f32 %v2324, %v61
    %v2502 = vmul.f32 %v2324, %v62
    %v2503 = vmul.f32 %v2334, %v63
    %v2504 = vmul.f32 %v2334, %v64
    %v2505 = vmul.f32 %v2334, %v65
    %v2506 = vmul.f32 %v2334, %v66
    %v2507 = vmul.f32 %v2334, %v67
    %v2508 = vmul.f32 %v2334, %v68
    %v2509 = vmul.f32 %v2334, %v69
    %v2510 = vmul.f32 %v2334, %v70
    %v2511 = vadd.f32 %v2495, %v2503
    %v2512 = vadd.f32 %v2496, %v2504
    %v2513 = vadd.f32 %v2497, %v2505
    %v2514 = vadd.f32 %v2498, %v2506
    %v2515 = vadd.f32 %v2499, %v2507
    %v2516 = vadd.f32 %v2500, %v2508
    %v2517 = vadd.f32 %v2501, %v2509
    %v2518 = vadd.f32 %v2502, %v2510
    %v2519 = vmul.f32 %v2352, %v71
    %v2520 = vmul.f32 %v2352, %v72
    %v2521 = vmul.f32 %v2352, %v73
    %v2522 = vmul.f32 %v2352, %v74
    %v2523 = vmul.f32 %v2352, %v75
    %v2524 = vmul.f32 %v2352, %v76
    %v2525 = vmul.f32 %v2352, %v77
    %v2526 = vmul.f32 %v2352, %v78
    %v2527 = vadd.f32 %v2511, %v2519
    %v2528 = vadd.f32 %v2512, %v2520
    %v2529 = vadd.f32 %v2513, %v2521
    %v2530 = vadd.f32 %v2514, %v2522
    %v2531 = vadd.f32 %v2515, %v2523
    %v2532 = vadd.f32 %v2516, %v2524
    %v2533 = vadd.f32 %v2517, %v2525
    %v2534 = vadd.f32 %v2518, %v2526
    %v2535 = vmul.f32 %v2370, %v89
    %v2536 = vmul.f32 %v2370, %v90
    %v2537 = vmul.f32 %v2370, %v91
    %v2538 = vmul.f32 %v2370, %v92
    %v2539 = vmul.f32 %v2370, %v93
    %v2540 = vmul.f32 %v2370, %v94
    %v2541 = vmul.f32 %v2370, %v95
    %v2542 = vmul.f32 %v2370, %v96
    %v2543 = vadd.f32 %v2527, %v2535
    %v2544 = vadd.f32 %v2528, %v2536
    %v2545 = vadd.f32 %v2529, %v2537
    %v2546 = vadd.f32 %v2530, %v2538
    %v2547 = vadd.f32 %v2531, %v2539
    %v2548 = vadd.f32 %v2532, %v2540
    %v2549 = vadd.f32 %v2533, %v2541
    %v2550 = vadd.f32 %v2534, %v2542
    %v2551 = vmul.f32 %v2388, %v97
    %v2552 = vmul.f32 %v2388, %v98
    %v2553 = vmul.f32 %v2388, %v99
    %v2554 = vmul.f32 %v2388, %v100
    %v2555 = vmul.f32 %v2388, %v101
    %v2556 = vmul.f32 %v2388, %v102
    %v2557 = vmul.f32 %v2388, %v103
    %v2558 = vmul.f32 %v2388, %v104
    %v2559 = vadd.f32 %v2543, %v2551
    %v2560 = vadd.f32 %v2544, %v2552
    %v2561 = vadd.f32 %v2545, %v2553
    %v2562 = vadd.f32 %v2546, %v2554
    %v2563 = vadd.f32 %v2547, %v2555
    %v2564 = vadd.f32 %v2548, %v2556
    %v2565 = vadd.f32 %v2549, %v2557
    %v2566 = vadd.f32 %v2550, %v2558
    %v2567 = vmul.f32 %v2406, %v105
    %v2568 = vmul.f32 %v2406, %v106
    %v2569 = vmul.f32 %v2406, %v107
    %v2570 = vmul.f32 %v2406, %v108
    %v2571 = vmul.f32 %v2406, %v109
    %v2572 = vmul.f32 %v2406, %v110
    %v2573 = vmul.f32 %v2406, %v111
    %v2574 = vmul.f32 %v2406, %v112
    %v2575 = vadd.f32 %v2559, %v2567
    %v2576 = vadd.f32 %v2560, %v2568
    %v2577 = vadd.f32 %v2561, %v2569
    %v2578 = vadd.f32 %v2562, %v2570
    %v2579 = vadd.f32 %v2563, %v2571
    %v2580 = vadd.f32 %v2564, %v2572
    %v2581 = vadd.f32 %v2565, %v2573
    %v2582 = vadd.f32 %v2566, %v2574
    %v2583 = vmul.f32 %v2424, %v123
    %v2584 = vmul.f32 %v2424, %v124
    %v2585 = vmul.f32 %v2424, %v125
    %v2586 = vmul.f32 %v2424, %v126
    %v2587 = vmul.f32 %v2424, %v127
    %v2588 = vmul.f32 %v2424, %v128
    %v2589 = vmul.f32 %v2424, %v129
    %v2590 = vmul.f32 %v2424, %v130
    %v2591 = vadd.f32 %v2575, %v2583
    %v2592 = vadd.f32 %v2576, %v2584
    %v2593 = vadd.f32 %v2577, %v2585
    %v2594 = vadd.f32 %v2578, %v2586
    %v2595 = vadd.f32 %v2579, %v2587
    %v2596 = vadd.f32 %v2580, %v2588
    %v2597 = vadd.f32 %v2581, %v2589
    %v2598 = vadd.f32 %v2582, %v2590
    %v2599 = vmul.f32 %v2442, %v131
    %v2600 = vmul.f32 %v2442, %v132
    %v2601 = vmul.f32 %v2442, %v133
    %v2602 = vmul.f32 %v2442, %v134
    %v2603 = vmul.f32 %v2442, %v135
    %v2604 = vmul.f32 %v2442, %v136
    %v2605 = vmul.f32 %v2442, %v137
    %v2606 = vmul.f32 %v2442, %v138
    %v2607 = vadd.f32 %v2591, %v2599
    %v2608 = vadd.f32 %v2592, %v2600
    %v2609 = vadd.f32 %v2593, %v2601
    %v2610 = vadd.f32 %v2594, %v2602
    %v2611 = vadd.f32 %v2595, %v2603
    %v2612 = vadd.f32 %v2596, %v2604
    %v2613 = vadd.f32 %v2597, %v2605
    %v2614 = vadd.f32 %v2598, %v2606
    %v2615 = vmul.f32 %v2460, %v139
    %v2616 = vmul.f32 %v2460, %v140
    %v2617 = vmul.f32 %v2460, %v141
    %v2618 = vmul.f32 %v2460, %v142
    %v2619 = vmul.f32 %v2460, %v143
    %v2620 = vmul.f32 %v2460, %v144
    %v2621 = vmul.f32 %v2460, %v145
    %v2622 = vmul.f32 %v2460, %v146
    %v2623 = vadd.f32 %v2607, %v2615
    %v2624 = vadd.f32 %v2608, %v2616
    %v2625 = vadd.f32 %v2609, %v2617
    %v2626 = vadd.f32 %v2610, %v2618
    %v2627 = vadd.f32 %v2611, %v2619
    %v2628 = vadd.f32 %v2612, %v2620
    %v2629 = vadd.f32 %v2613, %v2621
    %v2630 = vadd.f32 %v2614, %v2622
    %v2631 = vadd.f32 %v2623, %v2478
    %v2632 = vadd.f32 %v2624, %v2478
    %v2633 = vadd.f32 %v2625, %v2478
    %v2634 = vadd.f32 %v2626, %v2478
    %v2635 = vadd.f32 %v2627, %v2478
    %v2636 = vadd.f32 %v2628, %v2478
    %v2637 = vadd.f32 %v2629, %v2478
    %v2638 = vadd.f32 %v2630, %v2478
    %v2639 = vmax.f32 %v2631, 0.0
    %v2640 = vmax.f32 %v2632, 0.0
    %v2641 = vmax.f32 %v2633, 0.0
    %v2642 = vmax.f32 %v2634, 0.0
    %v2643 = vmax.f32 %v2635, 0.0
    %v2644 = vmax.f32 %v2636, 0.0
    %v2645 = vmax.f32 %v2637, 0.0
    %v2646 = vmax.f32 %v2638, 0.0
    %v2647 = vmax.f32 %v2487, %v2639
    %v2648 = vmax.f32 %v2488, %v2640
    %v2649 = vmax.f32 %v2489, %v2641
    %v2650 = vmax.f32 %v2490, %v2642
    %v2651 = vmax.f32 %v2491, %v2643
    %v2652 = vmax.f32 %v2492, %v2644
    %v2653 = vmax.f32 %v2493, %v2645
    %v2654 = vmax.f32 %v2494, %v2646
    %v2655 = vmul.f32 %v2324, %v80
    %v2656 = vmul.f32 %v2324, %v81
    %v2657 = vmul.f32 %v2324, %v82
    %v2658 = vmul.f32 %v2324, %v83
    %v2659 = vmul.f32 %v2324, %v84
    %v2660 = vmul.f32 %v2324, %v85
    %v2661 = vmul.f32 %v2324, %v86
    %v2662 = vmul.f32 %v2324, %v87
    %v2663 = vmul.f32 %v2334, %v89
    %v2664 = vmul.f32 %v2334, %v90
    %v2665 = vmul.f32 %v2334, %v91
    %v2666 = vmul.f32 %v2334, %v92
    %v2667 = vmul.f32 %v2334, %v93
    %v2668 = vmul.f32 %v2334, %v94
    %v2669 = vmul.f32 %v2334, %v95
    %v2670 = vmul.f32 %v2334, %v96
    %v2671 = vadd.f32 %v2655, %v2663
    %v2672 = vadd.f32 %v2656, %v2664
    %v2673 = vadd.f32 %v2657, %v2665
    %v2674 = vadd.f32 %v2658, %v2666
    %v2675 = vadd.f32 %v2659, %v2667
    %v2676 = vadd.f32 %v2660, %v2668
    %v2677 = vadd.f32 %v2661, %v2669
    %v2678 = vadd.f32 %v2662, %v2670
    %v2679 = vmul.f32 %v2352, %v97
    %v2680 = vmul.f32 %v2352, %v98
    %v2681 = vmul.f32 %v2352, %v99
    %v2682 = vmul.f32 %v2352, %v100
    %v2683 = vmul.f32 %v2352, %v101
    %v2684 = vmul.f32 %v2352, %v102
    %v2685 = vmul.f32 %v2352, %v103
    %v2686 = vmul.f32 %v2352, %v104
    %v2687 = vadd.f32 %v2671, %v2679
    %v2688 = vadd.f32 %v2672, %v2680
    %v2689 = vadd.f32 %v2673, %v2681
    %v2690 = vadd.f32 %v2674, %v2682
    %v2691 = vadd.f32 %v2675, %v2683
    %v2692 = vadd.f32 %v2676, %v2684
    %v2693 = vadd.f32 %v2677, %v2685
    %v2694 = vadd.f32 %v2678, %v2686
    %v2695 = vmul.f32 %v2370, %v114
    %v2696 = vmul.f32 %v2370, %v115
    %v2697 = vmul.f32 %v2370, %v116
    %v2698 = vmul.f32 %v2370, %v117
    %v2699 = vmul.f32 %v2370, %v118
    %v2700 = vmul.f32 %v2370, %v119
    %v2701 = vmul.f32 %v2370, %v120
    %v2702 = vmul.f32 %v2370, %v121
    %v2703 = vadd.f32 %v2687, %v2695
    %v2704 = vadd.f32 %v2688, %v2696
    %v2705 = vadd.f32 %v2689, %v2697
    %v2706 = vadd.f32 %v2690, %v2698
    %v2707 = vadd.f32 %v2691, %v2699
    %v2708 = vadd.f32 %v2692, %v2700
    %v2709 = vadd.f32 %v2693, %v2701
    %v2710 = vadd.f32 %v2694, %v2702
    %v2711 = vmul.f32 %v2388, %v123
    %v2712 = vmul.f32 %v2388, %v124
    %v2713 = vmul.f32 %v2388, %v125
    %v2714 = vmul.f32 %v2388, %v126
    %v2715 = vmul.f32 %v2388, %v127
    %v2716 = vmul.f32 %v2388, %v128
    %v2717 = vmul.f32 %v2388, %v129
    %v2718 = vmul.f32 %v2388, %v130
    %v2719 = vadd.f32 %v2703, %v2711
    %v2720 = vadd.f32 %v2704, %v2712
    %v2721 = vadd.f32 %v2705, %v2713
    %v2722 = vadd.f32 %v2706, %v2714
    %v2723 = vadd.f32 %v2707, %v2715
    %v2724 = vadd.f32 %v2708, %v2716
    %v2725 = vadd.f32 %v2709, %v2717
    %v2726 = vadd.f32 %v2710, %v2718
    %v2727 = vmul.f32 %v2406, %v131
    %v2728 = vmul.f32 %v2406, %v132
    %v2729 = vmul.f32 %v2406, %v133
    %v2730 = vmul.f32 %v2406, %v134
    %v2731 = vmul.f32 %v2406, %v135
    %v2732 = vmul.f32 %v2406, %v136
    %v2733 = vmul.f32 %v2406, %v137
    %v2734 = vmul.f32 %v2406, %v138
    %v2735 = vadd.f32 %v2719, %v2727
    %v2736 = vadd.f32 %v2720, %v2728
    %v2737 = vadd.f32 %v2721, %v2729
    %v2738 = vadd.f32 %v2722, %v2730
    %v2739 = vadd.f32 %v2723, %v2731
    %v2740 = vadd.f32 %v2724, %v2732
    %v2741 = vadd.f32 %v2725, %v2733
    %v2742 = vadd.f32 %v2726, %v2734
    %v2743 = vmul.f32 %v2424, %v148
    %v2744 = vmul.f32 %v2424, %v149
    %v2745 = vmul.f32 %v2424, %v150
    %v2746 = vmul.f32 %v2424, %v151
    %v2747 = vmul.f32 %v2424, %v152
    %v2748 = vmul.f32 %v2424, %v153
    %v2749 = vmul.f32 %v2424, %v154
    %v2750 = vmul.f32 %v2424, %v155
    %v2751 = vadd.f32 %v2735, %v2743
    %v2752 = vadd.f32 %v2736, %v2744
    %v2753 = vadd.f32 %v2737, %v2745
    %v2754 = vadd.f32 %v2738, %v2746
    %v2755 = vadd.f32 %v2739, %v2747
    %v2756 = vadd.f32 %v2740, %v2748
    %v2757 = vadd.f32 %v2741, %v2749
    %v2758 = vadd.f32 %v2742, %v2750
    %v2759 = vmul.f32 %v2442, %v157
    %v2760 = vmul.f32 %v2442, %v158
    %v2761 = vmul.f32 %v2442, %v159
    %v2762 = vmul.f32 %v2442, %v160
    %v2763 = vmul.f32 %v2442, %v161
    %v2764 = vmul.f32 %v2442, %v162
    %v2765 = vmul.f32 %v2442, %v163
    %v2766 = vmul.f32 %v2442, %v164
    %v2767 = vadd.f32 %v2751, %v2759
    %v2768 = vadd.f32 %v2752, %v2760
    %v2769 = vadd.f32 %v2753, %v2761
    %v2770 = vadd.f32 %v2754, %v2762
    %v2771 = vadd.f32 %v2755, %v2763
    %v2772 = vadd.f32 %v2756, %v2764
    %v2773 = vadd.f32 %v2757, %v2765
    %v2774 = vadd.f32 %v2758, %v2766
    %v2775 = vmul.f32 %v2460, %v165
    %v2776 = vmul.f32 %v2460, %v166
    %v2777 = vmul.f32 %v2460, %v167
    %v2778 = vmul.f32 %v2460, %v168
    %v2779 = vmul.f32 %v2460, %v169
    %v2780 = vmul.f32 %v2460, %v170
    %v2781 = vmul.f32 %v2460, %v171
    %v2782 = vmul.f32 %v2460, %v172
    %v2783 = vadd.f32 %v2767, %v2775
    %v2784 = vadd.f32 %v2768, %v2776
    %v2785 = vadd.f32 %v2769, %v2777
    %v2786 = vadd.f32 %v2770, %v2778
    %v2787 = vadd.f32 %v2771, %v2779
    %v2788 = vadd.f32 %v2772, %v2780
    %v2789 = vadd.f32 %v2773, %v2781
    %v2790 = vadd.f32 %v2774, %v2782
    %v2791 = vadd.f32 %v2783, %v2478
    %v2792 = vadd.f32 %v2784, %v2478
    %v2793 = vadd.f32 %v2785, %v2478
    %v2794 = vadd.f32 %v2786, %v2478
    %v2795 = vadd.f32 %v2787, %v2478
    %v2796 = vadd.f32 %v2788, %v2478
    %v2797 = vadd.f32 %v2789, %v2478
    %v2798 = vadd.f32 %v2790, %v2478
    %v2799 = vmax.f32 %v2791, 0.0
    %v2800 = vmax.f32 %v2792, 0.0
    %v2801 = vmax.f32 %v2793, 0.0
    %v2802 = vmax.f32 %v2794, 0.0
    %v2803 = vmax.f32 %v2795, 0.0
    %v2804 = vmax.f32 %v2796, 0.0
    %v2805 = vmax.f32 %v2797, 0.0
    %v2806 = vmax.f32 %v2798, 0.0
    %v2807 = vmax.f32 %v2647, %v2799
    %v2808 = vmax.f32 %v2648, %v2800
    %v2809 = vmax.f32 %v2649, %v2801
    %v2810 = vmax.f32 %v2650, %v2802
    %v2811 = vmax.f32 %v2651, %v2803
    %v2812 = vmax.f32 %v2652, %v2804
    %v2813 = vmax.f32 %v2653, %v2805
    %v2814 = vmax.f32 %v2654, %v2806
    %v2815 = vmul.f32 %v2324, %v89
    %v2816 = vmul.f32 %v2324, %v90
    %v2817 = vmul.f32 %v2324, %v91
    %v2818 = vmul.f32 %v2324, %v92
    %v2819 = vmul.f32 %v2324, %v93
    %v2820 = vmul.f32 %v2324, %v94
    %v2821 = vmul.f32 %v2324, %v95
    %v2822 = vmul.f32 %v2324, %v96
    %v2823 = vmul.f32 %v2334, %v97
    %v2824 = vmul.f32 %v2334, %v98
    %v2825 = vmul.f32 %v2334, %v99
    %v2826 = vmul.f32 %v2334, %v100
    %v2827 = vmul.f32 %v2334, %v101
    %v2828 = vmul.f32 %v2334, %v102
    %v2829 = vmul.f32 %v2334, %v103
    %v2830 = vmul.f32 %v2334, %v104
    %v2831 = vadd.f32 %v2815, %v2823
    %v2832 = vadd.f32 %v2816, %v2824
    %v2833 = vadd.f32 %v2817, %v2825
    %v2834 = vadd.f32 %v2818, %v2826
    %v2835 = vadd.f32 %v2819, %v2827
    %v2836 = vadd.f32 %v2820, %v2828
    %v2837 = vadd.f32 %v2821, %v2829
    %v2838 = vadd.f32 %v2822, %v2830
    %v2839 = vmul.f32 %v2352, %v105
    %v2840 = vmul.f32 %v2352, %v106
    %v2841 = vmul.f32 %v2352, %v107
    %v2842 = vmul.f32 %v2352, %v108
    %v2843 = vmul.f32 %v2352, %v109
    %v2844 = vmul.f32 %v2352, %v110
    %v2845 = vmul.f32 %v2352, %v111
    %v2846 = vmul.f32 %v2352, %v112
    %v2847 = vadd.f32 %v2831, %v2839
    %v2848 = vadd.f32 %v2832, %v2840
    %v2849 = vadd.f32 %v2833, %v2841
    %v2850 = vadd.f32 %v2834, %v2842
    %v2851 = vadd.f32 %v2835, %v2843
    %v2852 = vadd.f32 %v2836, %v2844
    %v2853 = vadd.f32 %v2837, %v2845
    %v2854 = vadd.f32 %v2838, %v2846
    %v2855 = vmul.f32 %v2370, %v123
    %v2856 = vmul.f32 %v2370, %v124
    %v2857 = vmul.f32 %v2370, %v125
    %v2858 = vmul.f32 %v2370, %v126
    %v2859 = vmul.f32 %v2370, %v127
    %v2860 = vmul.f32 %v2370, %v128
    %v2861 = vmul.f32 %v2370, %v129
    %v2862 = vmul.f32 %v2370, %v130
    %v2863 = vadd.f32 %v2847, %v2855
    %v2864 = vadd.f32 %v2848, %v2856
    %v2865 = vadd.f32 %v2849, %v2857
    %v2866 = vadd.f32 %v2850, %v2858
    %v2867 = vadd.f32 %v2851, %v2859
    %v2868 = vadd.f32 %v2852, %v2860
    %v2869 = vadd.f32 %v2853, %v2861
    %v2870 = vadd.f32 %v2854, %v2862
    %v2871 = vmul.f32 %v2388, %v131
    %v2872 = vmul.f32 %v2388, %v132
    %v2873 = vmul.f32 %v2388, %v133
    %v2874 = vmul.f32 %v2388, %v134
    %v2875 = vmul.f32 %v2388, %v135
    %v2876 = vmul.f32 %v2388, %v136
    %v2877 = vmul.f32 %v2388, %v137
    %v2878 = vmul.f32 %v2388, %v138
    %v2879 = vadd.f32 %v2863, %v2871
    %v2880 = vadd.f32 %v2864, %v2872
    %v2881 = vadd.f32 %v2865, %v2873
    %v2882 = vadd.f32 %v2866, %v2874
    %v2883 = vadd.f32 %v2867, %v2875
    %v2884 = vadd.f32 %v2868, %v2876
    %v2885 = vadd.f32 %v2869, %v2877
    %v2886 = vadd.f32 %v2870, %v2878
    %v2887 = vmul.f32 %v2406, %v139
    %v2888 = vmul.f32 %v2406, %v140
    %v2889 = vmul.f32 %v2406, %v141
    %v2890 = vmul.f32 %v2406, %v142
    %v2891 = vmul.f32 %v2406, %v143
    %v2892 = vmul.f32 %v2406, %v144
    %v2893 = vmul.f32 %v2406, %v145
    %v2894 = vmul.f32 %v2406, %v146
    %v2895 = vadd.f32 %v2879, %v2887
    %v2896 = vadd.f32 %v2880, %v2888
    %v2897 = vadd.f32 %v2881, %v2889
    %v2898 = vadd.f32 %v2882, %v2890
    %v2899 = vadd.f32 %v2883, %v2891
    %v2900 = vadd.f32 %v2884, %v2892
    %v2901 = vadd.f32 %v2885, %v2893
    %v2902 = vadd.f32 %v2886, %v2894
    %v2903 = vmul.f32 %v2424, %v157
    %v2904 = vmul.f32 %v2424, %v158
    %v2905 = vmul.f32 %v2424, %v159
    %v2906 = vmul.f32 %v2424, %v160
    %v2907 = vmul.f32 %v2424, %v161
    %v2908 = vmul.f32 %v2424, %v162
    %v2909 = vmul.f32 %v2424, %v163
    %v2910 = vmul.f32 %v2424, %v164
    %v2911 = vadd.f32 %v2895, %v2903
    %v2912 = vadd.f32 %v2896, %v2904
    %v2913 = vadd.f32 %v2897, %v2905
    %v2914 = vadd.f32 %v2898, %v2906
    %v2915 = vadd.f32 %v2899, %v2907
    %v2916 = vadd.f32 %v2900, %v2908
    %v2917 = vadd.f32 %v2901, %v2909
    %v2918 = vadd.f32 %v2902, %v2910
    %v2919 = vmul.f32 %v2442, %v165
    %v2920 = vmul.f32 %v2442, %v166
    %v2921 = vmul.f32 %v2442, %v167
    %v2922 = vmul.f32 %v2442, %v168
    %v2923 = vmul.f32 %v2442, %v169
    %v2924 = vmul.f32 %v2442, %v170
    %v2925 = vmul.f32 %v2442, %v171
    %v2926 = vmul.f32 %v2442, %v172
    %v2927 = vadd.f32 %v2911, %v2919
    %v2928 = vadd.f32 %v2912, %v2920
    %v2929 = vadd.f32 %v2913, %v2921
    %v2930 = vadd.f32 %v2914, %v2922
    %v2931 = vadd.f32 %v2915, %v2923
    %v2932 = vadd.f32 %v2916, %v2924
    %v2933 = vadd.f32 %v2917, %v2925
    %v2934 = vadd.f32 %v2918, %v2926
    %v2935 = vmul.f32 %v2460, %v173
    %v2936 = vmul.f32 %v2460, %v174
    %v2937 = vmul.f32 %v2460, %v175
    %v2938 = vmul.f32 %v2460, %v176
    %v2939 = vmul.f32 %v2460, %v177
    %v2940 = vmul.f32 %v2460, %v178
    %v2941 = vmul.f32 %v2460, %v179
    %v2942 = vmul.f32 %v2460, %v180
    %v2943 = vadd.f32 %v2927, %v2935
    %v2944 = vadd.f32 %v2928, %v2936
    %v2945 = vadd.f32 %v2929, %v2937
    %v2946 = vadd.f32 %v2930, %v2938
    %v2947 = vadd.f32 %v2931, %v2939
    %v2948 = vadd.f32 %v2932, %v2940
    %v2949 = vadd.f32 %v2933, %v2941
    %v2950 = vadd.f32 %v2934, %v2942
    %v2951 = vadd.f32 %v2943, %v2478
    %v2952 = vadd.f32 %v2944, %v2478
    %v2953 = vadd.f32 %v2945, %v2478
    %v2954 = vadd.f32 %v2946, %v2478
    %v2955 = vadd.f32 %v2947, %v2478
    %v2956 = vadd.f32 %v2948, %v2478
    %v2957 = vadd.f32 %v2949, %v2478
    %v2958 = vadd.f32 %v2950, %v2478
    %v2959 = vmax.f32 %v2951, 0.0
    %v2960 = vmax.f32 %v2952, 0.0
    %v2961 = vmax.f32 %v2953, 0.0
    %v2962 = vmax.f32 %v2954, 0.0
    %v2963 = vmax.f32 %v2955, 0.0
    %v2964 = vmax.f32 %v2956, 0.0
    %v2965 = vmax.f32 %v2957, 0.0
    %v2966 = vmax.f32 %v2958, 0.0
    %v2967 = vmax.f32 %v2807, %v2959
    %v2968 = vmax.f32 %v2808, %v2960
    %v2969 = vmax.f32 %v2809, %v2961
    %v2970 = vmax.f32 %v2810, %v2962
    %v2971 = vmax.f32 %v2811, %v2963
    %v2972 = vmax.f32 %v2812, %v2964
    %v2973 = vmax.f32 %v2813, %v2965
    %v2974 = vmax.f32 %v2814, %v2966
    %s2975 = scalar_lea.vmem %s1, 192
    %v2976 = vld [vmem:[%s2975] sm:$0xff]
    %v2977 = vld [vmem:[%s2975 + $0x8] sm:$0xff]
    %v2978 = vld [vmem:[%s2975 + $0x10] sm:$0xff]
    %v2979 = vld [vmem:[%s2975 + $0x18] sm:$0xff]
    %v2980 = vld [vmem:[%s2975 + $0x20] sm:$0xff]
    %v2981 = vld [vmem:[%s2975 + $0x28] sm:$0xff]
    %v2982 = vld [vmem:[%s2975 + $0x30] sm:$0xff]
    %v2983 = vld [vmem:[%s2975 + $0x38] sm:$0xff]
    %2985 = vset.pattern.permute.xlu0 0
    %2986 = vperm.xlu0 %2985, %v2976
    %v2987 = vpop.permute.xlu0 %2986
    %2990 = vset.pattern.permute.xlu0 0
    %2991 = vperm.xlu0 %2990, %v2977
    %v2992 = vpop.permute.xlu0 %2991
    %2995 = vset.pattern.permute.xlu0 0
    %2996 = vperm.xlu0 %2995, %v2978
    %v2997 = vpop.permute.xlu0 %2996
    %3000 = vset.pattern.permute.xlu0 0
    %3001 = vperm.xlu0 %3000, %v2979
    %v3002 = vpop.permute.xlu0 %3001
    %3005 = vset.pattern.permute.xlu0 0
    %3006 = vperm.xlu0 %3005, %v2980
    %v3007 = vpop.permute.xlu0 %3006
    %3010 = vset.pattern.permute.xlu0 0
    %3011 = vperm.xlu0 %3010, %v2981
    %v3012 = vpop.permute.xlu0 %3011
    %3015 = vset.pattern.permute.xlu0 0
    %3016 = vperm.xlu0 %3015, %v2982
    %v3017 = vpop.permute.xlu0 %3016
    %3020 = vset.pattern.permute.xlu0 0
    %3021 = vperm.xlu0 %3020, %v2983
    %v3022 = vpop.permute.xlu0 %3021
    %v3024 = vmul.f32 %v2967, %v2987
    %v3025 = vmul.f32 %v2968, %v2992
    %v3026 = vmul.f32 %v2969, %v2997
    %v3027 = vmul.f32 %v2970, %v3002
    %v3028 = vmul.f32 %v2971, %v3007
    %v3029 = vmul.f32 %v2972, %v3012
    %v3030 = vmul.f32 %v2973, %v3017
    %v3031 = vmul.f32 %v2974, %v3022
    %v3032 = vadd.f32 %v2315, %v3024
    %v3033 = vadd.f32 %v2316, %v3025
    %v3034 = vadd.f32 %v2317, %v3026
    %v3035 = vadd.f32 %v2318, %v3027
    %v3036 = vadd.f32 %v2319, %v3028
    %v3037 = vadd.f32 %v2320, %v3029
    %v3038 = vadd.f32 %v2321, %v3030
    %v3039 = vadd.f32 %v2322, %v3031
    %s3040 = sld [smem:[#allocation3 + $0x24]]
    %v3041 = vstv %s3040
    %v3042 = vmul.f32 %v3041, %v46
    %v3043 = vmul.f32 %v3041, %v47
    %v3044 = vmul.f32 %v3041, %v48
    %v3045 = vmul.f32 %v3041, %v49
    %v3046 = vmul.f32 %v3041, %v50
    %v3047 = vmul.f32 %v3041, %v51
    %v3048 = vmul.f32 %v3041, %v52
    %v3049 = vmul.f32 %v3041, %v53
    %s3050 = sld [smem:[#allocation3 + $0x25]]
    %v3051 = vstv %s3050
    %v3052 = vmul.f32 %v3051, %v55
    %v3053 = vmul.f32 %v3051, %v56
    %v3054 = vmul.f32 %v3051, %v57
    %v3055 = vmul.f32 %v3051, %v58
    %v3056 = vmul.f32 %v3051, %v59
    %v3057 = vmul.f32 %v3051, %v60
    %v3058 = vmul.f32 %v3051, %v61
    %v3059 = vmul.f32 %v3051, %v62
    %v3060 = vadd.f32 %v3042, %v3052
    %v3061 = vadd.f32 %v3043, %v3053
    %v3062 = vadd.f32 %v3044, %v3054
    %v3063 = vadd.f32 %v3045, %v3055
    %v3064 = vadd.f32 %v3046, %v3056
    %v3065 = vadd.f32 %v3047, %v3057
    %v3066 = vadd.f32 %v3048, %v3058
    %v3067 = vadd.f32 %v3049, %v3059
    %s3068 = sld [smem:[#allocation3 + $0x26]]
    %v3069 = vstv %s3068
    %v3070 = vmul.f32 %v3069, %v63
    %v3071 = vmul.f32 %v3069, %v64
    %v3072 = vmul.f32 %v3069, %v65
    %v3073 = vmul.f32 %v3069, %v66
    %v3074 = vmul.f32 %v3069, %v67
    %v3075 = vmul.f32 %v3069, %v68
    %v3076 = vmul.f32 %v3069, %v69
    %v3077 = vmul.f32 %v3069, %v70
    %v3078 = vadd.f32 %v3060, %v3070
    %v3079 = vadd.f32 %v3061, %v3071
    %v3080 = vadd.f32 %v3062, %v3072
    %v3081 = vadd.f32 %v3063, %v3073
    %v3082 = vadd.f32 %v3064, %v3074
    %v3083 = vadd.f32 %v3065, %v3075
    %v3084 = vadd.f32 %v3066, %v3076
    %v3085 = vadd.f32 %v3067, %v3077
    %s3086 = sld [smem:[#allocation3 + $0x27]]
    %v3087 = vstv %s3086
    %v3088 = vmul.f32 %v3087, %v80
    %v3089 = vmul.f32 %v3087, %v81
    %v3090 = vmul.f32 %v3087, %v82
    %v3091 = vmul.f32 %v3087, %v83
    %v3092 = vmul.f32 %v3087, %v84
    %v3093 = vmul.f32 %v3087, %v85
    %v3094 = vmul.f32 %v3087, %v86
    %v3095 = vmul.f32 %v3087, %v87
    %v3096 = vadd.f32 %v3078, %v3088
    %v3097 = vadd.f32 %v3079, %v3089
    %v3098 = vadd.f32 %v3080, %v3090
    %v3099 = vadd.f32 %v3081, %v3091
    %v3100 = vadd.f32 %v3082, %v3092
    %v3101 = vadd.f32 %v3083, %v3093
    %v3102 = vadd.f32 %v3084, %v3094
    %v3103 = vadd.f32 %v3085, %v3095
    %s3104 = sld [smem:[#allocation3 + $0x28]]
    %v3105 = vstv %s3104
    %v3106 = vmul.f32 %v3105, %v89
    %v3107 = vmul.f32 %v3105, %v90
    %v3108 = vmul.f32 %v3105, %v91
    %v3109 = vmul.f32 %v3105, %v92
    %v3110 = vmul.f32 %v3105, %v93
    %v3111 = vmul.f32 %v3105, %v94
    %v3112 = vmul.f32 %v3105, %v95
    %v3113 = vmul.f32 %v3105, %v96
    %v3114 = vadd.f32 %v3096, %v3106
    %v3115 = vadd.f32 %v3097, %v3107
    %v3116 = vadd.f32 %v3098, %v3108
    %v3117 = vadd.f32 %v3099, %v3109
    %v3118 = vadd.f32 %v3100, %v3110
    %v3119 = vadd.f32 %v3101, %v3111
    %v3120 = vadd.f32 %v3102, %v3112
    %v3121 = vadd.f32 %v3103, %v3113
    %s3122 = sld [smem:[#allocation3 + $0x29]]
    %v3123 = vstv %s3122
    %v3124 = vmul.f32 %v3123, %v97
    %v3125 = vmul.f32 %v3123, %v98
    %v3126 = vmul.f32 %v3123, %v99
    %v3127 = vmul.f32 %v3123, %v100
    %v3128 = vmul.f32 %v3123, %v101
    %v3129 = vmul.f32 %v3123, %v102
    %v3130 = vmul.f32 %v3123, %v103
    %v3131 = vmul.f32 %v3123, %v104
    %v3132 = vadd.f32 %v3114, %v3124
    %v3133 = vadd.f32 %v3115, %v3125
    %v3134 = vadd.f32 %v3116, %v3126
    %v3135 = vadd.f32 %v3117, %v3127
    %v3136 = vadd.f32 %v3118, %v3128
    %v3137 = vadd.f32 %v3119, %v3129
    %v3138 = vadd.f32 %v3120, %v3130
    %v3139 = vadd.f32 %v3121, %v3131
    %s3140 = sld [smem:[#allocation3 + $0x2a]]
    %v3141 = vstv %s3140
    %v3142 = vmul.f32 %v3141, %v114
    %v3143 = vmul.f32 %v3141, %v115
    %v3144 = vmul.f32 %v3141, %v116
    %v3145 = vmul.f32 %v3141, %v117
    %v3146 = vmul.f32 %v3141, %v118
    %v3147 = vmul.f32 %v3141, %v119
    %v3148 = vmul.f32 %v3141, %v120
    %v3149 = vmul.f32 %v3141, %v121
    %v3150 = vadd.f32 %v3132, %v3142
    %v3151 = vadd.f32 %v3133, %v3143
    %v3152 = vadd.f32 %v3134, %v3144
    %v3153 = vadd.f32 %v3135, %v3145
    %v3154 = vadd.f32 %v3136, %v3146
    %v3155 = vadd.f32 %v3137, %v3147
    %v3156 = vadd.f32 %v3138, %v3148
    %v3157 = vadd.f32 %v3139, %v3149
    %s3158 = sld [smem:[#allocation3 + $0x2b]]
    %v3159 = vstv %s3158
    %v3160 = vmul.f32 %v3159, %v123
    %v3161 = vmul.f32 %v3159, %v124
    %v3162 = vmul.f32 %v3159, %v125
    %v3163 = vmul.f32 %v3159, %v126
    %v3164 = vmul.f32 %v3159, %v127
    %v3165 = vmul.f32 %v3159, %v128
    %v3166 = vmul.f32 %v3159, %v129
    %v3167 = vmul.f32 %v3159, %v130
    %v3168 = vadd.f32 %v3150, %v3160
    %v3169 = vadd.f32 %v3151, %v3161
    %v3170 = vadd.f32 %v3152, %v3162
    %v3171 = vadd.f32 %v3153, %v3163
    %v3172 = vadd.f32 %v3154, %v3164
    %v3173 = vadd.f32 %v3155, %v3165
    %v3174 = vadd.f32 %v3156, %v3166
    %v3175 = vadd.f32 %v3157, %v3167
    %s3176 = sld [smem:[#allocation3 + $0x2c]]
    %v3177 = vstv %s3176
    %v3178 = vmul.f32 %v3177, %v131
    %v3179 = vmul.f32 %v3177, %v132
    %v3180 = vmul.f32 %v3177, %v133
    %v3181 = vmul.f32 %v3177, %v134
    %v3182 = vmul.f32 %v3177, %v135
    %v3183 = vmul.f32 %v3177, %v136
    %v3184 = vmul.f32 %v3177, %v137
    %v3185 = vmul.f32 %v3177, %v138
    %v3186 = vadd.f32 %v3168, %v3178
    %v3187 = vadd.f32 %v3169, %v3179
    %v3188 = vadd.f32 %v3170, %v3180
    %v3189 = vadd.f32 %v3171, %v3181
    %v3190 = vadd.f32 %v3172, %v3182
    %v3191 = vadd.f32 %v3173, %v3183
    %v3192 = vadd.f32 %v3174, %v3184
    %v3193 = vadd.f32 %v3175, %v3185
    %s3194 = sld [smem:[#allocation5 + $0x4]]
    %v3195 = vstv %s3194
    %v3196 = vadd.f32 %v3186, %v3195
    %v3197 = vadd.f32 %v3187, %v3195
    %v3198 = vadd.f32 %v3188, %v3195
    %v3199 = vadd.f32 %v3189, %v3195
    %v3200 = vadd.f32 %v3190, %v3195
    %v3201 = vadd.f32 %v3191, %v3195
    %v3202 = vadd.f32 %v3192, %v3195
    %v3203 = vadd.f32 %v3193, %v3195
    %v3204 = vmax.f32 %v3196, 0.0
    %v3205 = vmax.f32 %v3197, 0.0
    %v3206 = vmax.f32 %v3198, 0.0
    %v3207 = vmax.f32 %v3199, 0.0
    %v3208 = vmax.f32 %v3200, 0.0
    %v3209 = vmax.f32 %v3201, 0.0
    %v3210 = vmax.f32 %v3202, 0.0
    %v3211 = vmax.f32 %v3203, 0.0
    %v3212 = vmul.f32 %v3041, %v55
    %v3213 = vmul.f32 %v3041, %v56
    %v3214 = vmul.f32 %v3041, %v57
    %v3215 = vmul.f32 %v3041, %v58
    %v3216 = vmul.f32 %v3041, %v59
    %v3217 = vmul.f32 %v3041, %v60
    %v3218 = vmul.f32 %v3041, %v61
    %v3219 = vmul.f32 %v3041, %v62
    %v3220 = vmul.f32 %v3051, %v63
    %v3221 = vmul.f32 %v3051, %v64
    %v3222 = vmul.f32 %v3051, %v65
    %v3223 = vmul.f32 %v3051, %v66
    %v3224 = vmul.f32 %v3051, %v67
    %v3225 = vmul.f32 %v3051, %v68
    %v3226 = vmul.f32 %v3051, %v69
    %v3227 = vmul.f32 %v3051, %v70
    %v3228 = vadd.f32 %v3212, %v3220
    %v3229 = vadd.f32 %v3213, %v3221
    %v3230 = vadd.f32 %v3214, %v3222
    %v3231 = vadd.f32 %v3215, %v3223
    %v3232 = vadd.f32 %v3216, %v3224
    %v3233 = vadd.f32 %v3217, %v3225
    %v3234 = vadd.f32 %v3218, %v3226
    %v3235 = vadd.f32 %v3219, %v3227
    %v3236 = vmul.f32 %v3069, %v71
    %v3237 = vmul.f32 %v3069, %v72
    %v3238 = vmul.f32 %v3069, %v73
    %v3239 = vmul.f32 %v3069, %v74
    %v3240 = vmul.f32 %v3069, %v75
    %v3241 = vmul.f32 %v3069, %v76
    %v3242 = vmul.f32 %v3069, %v77
    %v3243 = vmul.f32 %v3069, %v78
    %v3244 = vadd.f32 %v3228, %v3236
    %v3245 = vadd.f32 %v3229, %v3237
    %v3246 = vadd.f32 %v3230, %v3238
    %v3247 = vadd.f32 %v3231, %v3239
    %v3248 = vadd.f32 %v3232, %v3240
    %v3249 = vadd.f32 %v3233, %v3241
    %v3250 = vadd.f32 %v3234, %v3242
    %v3251 = vadd.f32 %v3235, %v3243
    %v3252 = vmul.f32 %v3087, %v89
    %v3253 = vmul.f32 %v3087, %v90
    %v3254 = vmul.f32 %v3087, %v91
    %v3255 = vmul.f32 %v3087, %v92
    %v3256 = vmul.f32 %v3087, %v93
    %v3257 = vmul.f32 %v3087, %v94
    %v3258 = vmul.f32 %v3087, %v95
    %v3259 = vmul.f32 %v3087, %v96
    %v3260 = vadd.f32 %v3244, %v3252
    %v3261 = vadd.f32 %v3245, %v3253
    %v3262 = vadd.f32 %v3246, %v3254
    %v3263 = vadd.f32 %v3247, %v3255
    %v3264 = vadd.f32 %v3248, %v3256
    %v3265 = vadd.f32 %v3249, %v3257
    %v3266 = vadd.f32 %v3250, %v3258
    %v3267 = vadd.f32 %v3251, %v3259
    %v3268 = vmul.f32 %v3105, %v97
    %v3269 = vmul.f32 %v3105, %v98
    %v3270 = vmul.f32 %v3105, %v99
    %v3271 = vmul.f32 %v3105, %v100
    %v3272 = vmul.f32 %v3105, %v101
    %v3273 = vmul.f32 %v3105, %v102
    %v3274 = vmul.f32 %v3105, %v103
    %v3275 = vmul.f32 %v3105, %v104
    %v3276 = vadd.f32 %v3260, %v3268
    %v3277 = vadd.f32 %v3261, %v3269
    %v3278 = vadd.f32 %v3262, %v3270
    %v3279 = vadd.f32 %v3263, %v3271
    %v3280 = vadd.f32 %v3264, %v3272
    %v3281 = vadd.f32 %v3265, %v3273
    %v3282 = vadd.f32 %v3266, %v3274
    %v3283 = vadd.f32 %v3267, %v3275
    %v3284 = vmul.f32 %v3123, %v105
    %v3285 = vmul.f32 %v3123, %v106
    %v3286 = vmul.f32 %v3123, %v107
    %v3287 = vmul.f32 %v3123, %v108
    %v3288 = vmul.f32 %v3123, %v109
    %v3289 = vmul.f32 %v3123, %v110
    %v3290 = vmul.f32 %v3123, %v111
    %v3291 = vmul.f32 %v3123, %v112
    %v3292 = vadd.f32 %v3276, %v3284
    %v3293 = vadd.f32 %v3277, %v3285
    %v3294 = vadd.f32 %v3278, %v3286
    %v3295 = vadd.f32 %v3279, %v3287
    %v3296 = vadd.f32 %v3280, %v3288
    %v3297 = vadd.f32 %v3281, %v3289
    %v3298 = vadd.f32 %v3282, %v3290
    %v3299 = vadd.f32 %v3283, %v3291
    %v3300 = vmul.f32 %v3141, %v123
    %v3301 = vmul.f32 %v3141, %v124
    %v3302 = vmul.f32 %v3141, %v125
    %v3303 = vmul.f32 %v3141, %v126
    %v3304 = vmul.f32 %v3141, %v127
    %v3305 = vmul.f32 %v3141, %v128
    %v3306 = vmul.f32 %v3141, %v129
    %v3307 = vmul.f32 %v3141, %v130
    %v3308 = vadd.f32 %v3292, %v3300
    %v3309 = vadd.f32 %v3293, %v3301
    %v3310 = vadd.f32 %v3294, %v3302
    %v3311 = vadd.f32 %v3295, %v3303
    %v3312 = vadd.f32 %v3296, %v3304
    %v3313 = vadd.f32 %v3297, %v3305
    %v3314 = vadd.f32 %v3298, %v3306
    %v3315 = vadd.f32 %v3299, %v3307
    %v3316 = vmul.f32 %v3159, %v131
    %v3317 = vmul.f32 %v3159, %v132
    %v3318 = vmul.f32 %v3159, %v133
    %v3319 = vmul.f32 %v3159, %v134
    %v3320 = vmul.f32 %v3159, %v135
    %v3321 = vmul.f32 %v3159, %v136
    %v3322 = vmul.f32 %v3159, %v137
    %v3323 = vmul.f32 %v3159, %v138
    %v3324 = vadd.f32 %v3308, %v3316
    %v3325 = vadd.f32 %v3309, %v3317
    %v3326 = vadd.f32 %v3310, %v3318
    %v3327 = vadd.f32 %v3311, %v3319
    %v3328 = vadd.f32 %v3312, %v3320
    %v3329 = vadd.f32 %v3313, %v3321
    %v3330 = vadd.f32 %v3314, %v3322
    %v3331 = vadd.f32 %v3315, %v3323
    %v3332 = vmul.f32 %v3177, %v139
    %v3333 = vmul.f32 %v3177, %v140
    %v3334 = vmul.f32 %v3177, %v141
    %v3335 = vmul.f32 %v3177, %v142
    %v3336 = vmul.f32 %v3177, %v143
    %v3337 = vmul.f32 %v3177, %v144
    %v3338 = vmul.f32 %v3177, %v145
    %v3339 = vmul.f32 %v3177, %v146
    %v3340 = vadd.f32 %v3324, %v3332
    %v3341 = vadd.f32 %v3325, %v3333
    %v3342 = vadd.f32 %v3326, %v3334
    %v3343 = vadd.f32 %v3327, %v3335
    %v3344 = vadd.f32 %v3328, %v3336
    %v3345 = vadd.f32 %v3329, %v3337
    %v3346 = vadd.f32 %v3330, %v3338
    %v3347 = vadd.f32 %v3331, %v3339
    %v3348 = vadd.f32 %v3340, %v3195
    %v3349 = vadd.f32 %v3341, %v3195
    %v3350 = vadd.f32 %v3342, %v3195
    %v3351 = vadd.f32 %v3343, %v3195
    %v3352 = vadd.f32 %v3344, %v3195
    %v3353 = vadd.f32 %v3345, %v3195
    %v3354 = vadd.f32 %v3346, %v3195
    %v3355 = vadd.f32 %v3347, %v3195
    %v3356 = vmax.f32 %v3348, 0.0
    %v3357 = vmax.f32 %v3349, 0.0
    %v3358 = vmax.f32 %v3350, 0.0
    %v3359 = vmax.f32 %v3351, 0.0
    %v3360 = vmax.f32 %v3352, 0.0
    %v3361 = vmax.f32 %v3353, 0.0
    %v3362 = vmax.f32 %v3354, 0.0
    %v3363 = vmax.f32 %v3355, 0.0
    %v3364 = vmax.f32 %v3204, %v3356
    %v3365 = vmax.f32 %v3205, %v3357
    %v3366 = vmax.f32 %v3206, %v3358
    %v3367 = vmax.f32 %v3207, %v3359
    %v3368 = vmax.f32 %v3208, %v3360
    %v3369 = vmax.f32 %v3209, %v3361
    %v3370 = vmax.f32 %v3210, %v3362
    %v3371 = vmax.f32 %v3211, %v3363
    %v3372 = vmul.f32 %v3041, %v80
    %v3373 = vmul.f32 %v3041, %v81
    %v3374 = vmul.f32 %v3041, %v82
    %v3375 = vmul.f32 %v3041, %v83
    %v3376 = vmul.f32 %v3041, %v84
    %v3377 = vmul.f32 %v3041, %v85
    %v3378 = vmul.f32 %v3041, %v86
    %v3379 = vmul.f32 %v3041, %v87
    %v3380 = vmul.f32 %v3051, %v89
    %v3381 = vmul.f32 %v3051, %v90
    %v3382 = vmul.f32 %v3051, %v91
    %v3383 = vmul.f32 %v3051, %v92
    %v3384 = vmul.f32 %v3051, %v93
    %v3385 = vmul.f32 %v3051, %v94
    %v3386 = vmul.f32 %v3051, %v95
    %v3387 = vmul.f32 %v3051, %v96
    %v3388 = vadd.f32 %v3372, %v3380
    %v3389 = vadd.f32 %v3373, %v3381
    %v3390 = vadd.f32 %v3374, %v3382
    %v3391 = vadd.f32 %v3375, %v3383
    %v3392 = vadd.f32 %v3376, %v3384
    %v3393 = vadd.f32 %v3377, %v3385
    %v3394 = vadd.f32 %v3378, %v3386
    %v3395 = vadd.f32 %v3379, %v3387
    %v3396 = vmul.f32 %v3069, %v97
    %v3397 = vmul.f32 %v3069, %v98
    %v3398 = vmul.f32 %v3069, %v99
    %v3399 = vmul.f32 %v3069, %v100
    %v3400 = vmul.f32 %v3069, %v101
    %v3401 = vmul.f32 %v3069, %v102
    %v3402 = vmul.f32 %v3069, %v103
    %v3403 = vmul.f32 %v3069, %v104
    %v3404 = vadd.f32 %v3388, %v3396
    %v3405 = vadd.f32 %v3389, %v3397
    %v3406 = vadd.f32 %v3390, %v3398
    %v3407 = vadd.f32 %v3391, %v3399
    %v3408 = vadd.f32 %v3392, %v3400
    %v3409 = vadd.f32 %v3393, %v3401
    %v3410 = vadd.f32 %v3394, %v3402
    %v3411 = vadd.f32 %v3395, %v3403
    %v3412 = vmul.f32 %v3087, %v114
    %v3413 = vmul.f32 %v3087, %v115
    %v3414 = vmul.f32 %v3087, %v116
    %v3415 = vmul.f32 %v3087, %v117
    %v3416 = vmul.f32 %v3087, %v118
    %v3417 = vmul.f32 %v3087, %v119
    %v3418 = vmul.f32 %v3087, %v120
    %v3419 = vmul.f32 %v3087, %v121
    %v3420 = vadd.f32 %v3404, %v3412
    %v3421 = vadd.f32 %v3405, %v3413
    %v3422 = vadd.f32 %v3406, %v3414
    %v3423 = vadd.f32 %v3407, %v3415
    %v3424 = vadd.f32 %v3408, %v3416
    %v3425 = vadd.f32 %v3409, %v3417
    %v3426 = vadd.f32 %v3410, %v3418
    %v3427 = vadd.f32 %v3411, %v3419
    %v3428 = vmul.f32 %v3105, %v123
    %v3429 = vmul.f32 %v3105, %v124
    %v3430 = vmul.f32 %v3105, %v125
    %v3431 = vmul.f32 %v3105, %v126
    %v3432 = vmul.f32 %v3105, %v127
    %v3433 = vmul.f32 %v3105, %v128
    %v3434 = vmul.f32 %v3105, %v129
    %v3435 = vmul.f32 %v3105, %v130
    %v3436 = vadd.f32 %v3420, %v3428
    %v3437 = vadd.f32 %v3421, %v3429
    %v3438 = vadd.f32 %v3422, %v3430
    %v3439 = vadd.f32 %v3423, %v3431
    %v3440 = vadd.f32 %v3424, %v3432
    %v3441 = vadd.f32 %v3425, %v3433
    %v3442 = vadd.f32 %v3426, %v3434
    %v3443 = vadd.f32 %v3427, %v3435
    %v3444 = vmul.f32 %v3123, %v131
    %v3445 = vmul.f32 %v3123, %v132
    %v3446 = vmul.f32 %v3123, %v133
    %v3447 = vmul.f32 %v3123, %v134
    %v3448 = vmul.f32 %v3123, %v135
    %v3449 = vmul.f32 %v3123, %v136
    %v3450 = vmul.f32 %v3123, %v137
    %v3451 = vmul.f32 %v3123, %v138
    %v3452 = vadd.f32 %v3436, %v3444
    %v3453 = vadd.f32 %v3437, %v3445
    %v3454 = vadd.f32 %v3438, %v3446
    %v3455 = vadd.f32 %v3439, %v3447
    %v3456 = vadd.f32 %v3440, %v3448
    %v3457 = vadd.f32 %v3441, %v3449
    %v3458 = vadd.f32 %v3442, %v3450
    %v3459 = vadd.f32 %v3443, %v3451
    %v3460 = vmul.f32 %v3141, %v148
    %v3461 = vmul.f32 %v3141, %v149
    %v3462 = vmul.f32 %v3141, %v150
    %v3463 = vmul.f32 %v3141, %v151
    %v3464 = vmul.f32 %v3141, %v152
    %v3465 = vmul.f32 %v3141, %v153
    %v3466 = vmul.f32 %v3141, %v154
    %v3467 = vmul.f32 %v3141, %v155
    %v3468 = vadd.f32 %v3452, %v3460
    %v3469 = vadd.f32 %v3453, %v3461
    %v3470 = vadd.f32 %v3454, %v3462
    %v3471 = vadd.f32 %v3455, %v3463
    %v3472 = vadd.f32 %v3456, %v3464
    %v3473 = vadd.f32 %v3457, %v3465
    %v3474 = vadd.f32 %v3458, %v3466
    %v3475 = vadd.f32 %v3459, %v3467
    %v3476 = vmul.f32 %v3159, %v157
    %v3477 = vmul.f32 %v3159, %v158
    %v3478 = vmul.f32 %v3159, %v159
    %v3479 = vmul.f32 %v3159, %v160
    %v3480 = vmul.f32 %v3159, %v161
    %v3481 = vmul.f32 %v3159, %v162
    %v3482 = vmul.f32 %v3159, %v163
    %v3483 = vmul.f32 %v3159, %v164
    %v3484 = vadd.f32 %v3468, %v3476
    %v3485 = vadd.f32 %v3469, %v3477
    %v3486 = vadd.f32 %v3470, %v3478
    %v3487 = vadd.f32 %v3471, %v3479
    %v3488 = vadd.f32 %v3472, %v3480
    %v3489 = vadd.f32 %v3473, %v3481
    %v3490 = vadd.f32 %v3474, %v3482
    %v3491 = vadd.f32 %v3475, %v3483
    %v3492 = vmul.f32 %v3177, %v165
    %v3493 = vmul.f32 %v3177, %v166
    %v3494 = vmul.f32 %v3177, %v167
    %v3495 = vmul.f32 %v3177, %v168
    %v3496 = vmul.f32 %v3177, %v169
    %v3497 = vmul.f32 %v3177, %v170
    %v3498 = vmul.f32 %v3177, %v171
    %v3499 = vmul.f32 %v3177, %v172
    %v3500 = vadd.f32 %v3484, %v3492
    %v3501 = vadd.f32 %v3485, %v3493
    %v3502 = vadd.f32 %v3486, %v3494
    %v3503 = vadd.f32 %v3487, %v3495
    %v3504 = vadd.f32 %v3488, %v3496
    %v3505 = vadd.f32 %v3489, %v3497
    %v3506 = vadd.f32 %v3490, %v3498
    %v3507 = vadd.f32 %v3491, %v3499
    %v3508 = vadd.f32 %v3500, %v3195
    %v3509 = vadd.f32 %v3501, %v3195
    %v3510 = vadd.f32 %v3502, %v3195
    %v3511 = vadd.f32 %v3503, %v3195
    %v3512 = vadd.f32 %v3504, %v3195
    %v3513 = vadd.f32 %v3505, %v3195
    %v3514 = vadd.f32 %v3506, %v3195
    %v3515 = vadd.f32 %v3507, %v3195
    %v3516 = vmax.f32 %v3508, 0.0
    %v3517 = vmax.f32 %v3509, 0.0
    %v3518 = vmax.f32 %v3510, 0.0
    %v3519 = vmax.f32 %v3511, 0.0
    %v3520 = vmax.f32 %v3512, 0.0
    %v3521 = vmax.f32 %v3513, 0.0
    %v3522 = vmax.f32 %v3514, 0.0
    %v3523 = vmax.f32 %v3515, 0.0
    %v3524 = vmax.f32 %v3364, %v3516
    %v3525 = vmax.f32 %v3365, %v3517
    %v3526 = vmax.f32 %v3366, %v3518
    %v3527 = vmax.f32 %v3367, %v3519
    %v3528 = vmax.f32 %v3368, %v3520
    %v3529 = vmax.f32 %v3369, %v3521
    %v3530 = vmax.f32 %v3370, %v3522
    %v3531 = vmax.f32 %v3371, %v3523
    %v3532 = vmul.f32 %v3041, %v89
    %v3533 = vmul.f32 %v3041, %v90
    %v3534 = vmul.f32 %v3041, %v91
    %v3535 = vmul.f32 %v3041, %v92
    %v3536 = vmul.f32 %v3041, %v93
    %v3537 = vmul.f32 %v3041, %v94
    %v3538 = vmul.f32 %v3041, %v95
    %v3539 = vmul.f32 %v3041, %v96
    %v3540 = vmul.f32 %v3051, %v97
    %v3541 = vmul.f32 %v3051, %v98
    %v3542 = vmul.f32 %v3051, %v99
    %v3543 = vmul.f32 %v3051, %v100
    %v3544 = vmul.f32 %v3051, %v101
    %v3545 = vmul.f32 %v3051, %v102
    %v3546 = vmul.f32 %v3051, %v103
    %v3547 = vmul.f32 %v3051, %v104
    %v3548 = vadd.f32 %v3532, %v3540
    %v3549 = vadd.f32 %v3533, %v3541
    %v3550 = vadd.f32 %v3534, %v3542
    %v3551 = vadd.f32 %v3535, %v3543
    %v3552 = vadd.f32 %v3536, %v3544
    %v3553 = vadd.f32 %v3537, %v3545
    %v3554 = vadd.f32 %v3538, %v3546
    %v3555 = vadd.f32 %v3539, %v3547
    %v3556 = vmul.f32 %v3069, %v105
    %v3557 = vmul.f32 %v3069, %v106
    %v3558 = vmul.f32 %v3069, %v107
    %v3559 = vmul.f32 %v3069, %v108
    %v3560 = vmul.f32 %v3069, %v109
    %v3561 = vmul.f32 %v3069, %v110
    %v3562 = vmul.f32 %v3069, %v111
    %v3563 = vmul.f32 %v3069, %v112
    %v3564 = vadd.f32 %v3548, %v3556
    %v3565 = vadd.f32 %v3549, %v3557
    %v3566 = vadd.f32 %v3550, %v3558
    %v3567 = vadd.f32 %v3551, %v3559
    %v3568 = vadd.f32 %v3552, %v3560
    %v3569 = vadd.f32 %v3553, %v3561
    %v3570 = vadd.f32 %v3554, %v3562
    %v3571 = vadd.f32 %v3555, %v3563
    %v3572 = vmul.f32 %v3087, %v123
    %v3573 = vmul.f32 %v3087, %v124
    %v3574 = vmul.f32 %v3087, %v125
    %v3575 = vmul.f32 %v3087, %v126
    %v3576 = vmul.f32 %v3087, %v127
    %v3577 = vmul.f32 %v3087, %v128
    %v3578 = vmul.f32 %v3087, %v129
    %v3579 = vmul.f32 %v3087, %v130
    %v3580 = vadd.f32 %v3564, %v3572
    %v3581 = vadd.f32 %v3565, %v3573
    %v3582 = vadd.f32 %v3566, %v3574
    %v3583 = vadd.f32 %v3567, %v3575
    %v3584 = vadd.f32 %v3568, %v3576
    %v3585 = vadd.f32 %v3569, %v3577
    %v3586 = vadd.f32 %v3570, %v3578
    %v3587 = vadd.f32 %v3571, %v3579
    %v3588 = vmul.f32 %v3105, %v131
    %v3589 = vmul.f32 %v3105, %v132
    %v3590 = vmul.f32 %v3105, %v133
    %v3591 = vmul.f32 %v3105, %v134
    %v3592 = vmul.f32 %v3105, %v135
    %v3593 = vmul.f32 %v3105, %v136
    %v3594 = vmul.f32 %v3105, %v137
    %v3595 = vmul.f32 %v3105, %v138
    %v3596 = vadd.f32 %v3580, %v3588
    %v3597 = vadd.f32 %v3581, %v3589
    %v3598 = vadd.f32 %v3582, %v3590
    %v3599 = vadd.f32 %v3583, %v3591
    %v3600 = vadd.f32 %v3584, %v3592
    %v3601 = vadd.f32 %v3585, %v3593
    %v3602 = vadd.f32 %v3586, %v3594
    %v3603 = vadd.f32 %v3587, %v3595
    %v3604 = vmul.f32 %v3123, %v139
    %v3605 = vmul.f32 %v3123, %v140
    %v3606 = vmul.f32 %v3123, %v141
    %v3607 = vmul.f32 %v3123, %v142
    %v3608 = vmul.f32 %v3123, %v143
    %v3609 = vmul.f32 %v3123, %v144
    %v3610 = vmul.f32 %v3123, %v145
    %v3611 = vmul.f32 %v3123, %v146
    %v3612 = vadd.f32 %v3596, %v3604
    %v3613 = vadd.f32 %v3597, %v3605
    %v3614 = vadd.f32 %v3598, %v3606
    %v3615 = vadd.f32 %v3599, %v3607
    %v3616 = vadd.f32 %v3600, %v3608
    %v3617 = vadd.f32 %v3601, %v3609
    %v3618 = vadd.f32 %v3602, %v3610
    %v3619 = vadd.f32 %v3603, %v3611
    %v3620 = vmul.f32 %v3141, %v157
    %v3621 = vmul.f32 %v3141, %v158
    %v3622 = vmul.f32 %v3141, %v159
    %v3623 = vmul.f32 %v3141, %v160
    %v3624 = vmul.f32 %v3141, %v161
    %v3625 = vmul.f32 %v3141, %v162
    %v3626 = vmul.f32 %v3141, %v163
    %v3627 = vmul.f32 %v3141, %v164
    %v3628 = vadd.f32 %v3612, %v3620
    %v3629 = vadd.f32 %v3613, %v3621
    %v3630 = vadd.f32 %v3614, %v3622
    %v3631 = vadd.f32 %v3615, %v3623
    %v3632 = vadd.f32 %v3616, %v3624
    %v3633 = vadd.f32 %v3617, %v3625
    %v3634 = vadd.f32 %v3618, %v3626
    %v3635 = vadd.f32 %v3619, %v3627
    %v3636 = vmul.f32 %v3159, %v165
    %v3637 = vmul.f32 %v3159, %v166
    %v3638 = vmul.f32 %v3159, %v167
    %v3639 = vmul.f32 %v3159, %v168
    %v3640 = vmul.f32 %v3159, %v169
    %v3641 = vmul.f32 %v3159, %v170
    %v3642 = vmul.f32 %v3159, %v171
    %v3643 = vmul.f32 %v3159, %v172
    %v3644 = vadd.f32 %v3628, %v3636
    %v3645 = vadd.f32 %v3629, %v3637
    %v3646 = vadd.f32 %v3630, %v3638
    %v3647 = vadd.f32 %v3631, %v3639
    %v3648 = vadd.f32 %v3632, %v3640
    %v3649 = vadd.f32 %v3633, %v3641
    %v3650 = vadd.f32 %v3634, %v3642
    %v3651 = vadd.f32 %v3635, %v3643
    %v3652 = vmul.f32 %v3177, %v173
    %v3653 = vmul.f32 %v3177, %v174
    %v3654 = vmul.f32 %v3177, %v175
    %v3655 = vmul.f32 %v3177, %v176
    %v3656 = vmul.f32 %v3177, %v177
    %v3657 = vmul.f32 %v3177, %v178
    %v3658 = vmul.f32 %v3177, %v179
    %v3659 = vmul.f32 %v3177, %v180
    %v3660 = vadd.f32 %v3644, %v3652
    %v3661 = vadd.f32 %v3645, %v3653
    %v3662 = vadd.f32 %v3646, %v3654
    %v3663 = vadd.f32 %v3647, %v3655
    %v3664 = vadd.f32 %v3648, %v3656
    %v3665 = vadd.f32 %v3649, %v3657
    %v3666 = vadd.f32 %v3650, %v3658
    %v3667 = vadd.f32 %v3651, %v3659
    %v3668 = vadd.f32 %v3660, %v3195
    %v3669 = vadd.f32 %v3661, %v3195
    %v3670 = vadd.f32 %v3662, %v3195
    %v3671 = vadd.f32 %v3663, %v3195
    %v3672 = vadd.f32 %v3664, %v3195
    %v3673 = vadd.f32 %v3665, %v3195
    %v3674 = vadd.f32 %v3666, %v3195
    %v3675 = vadd.f32 %v3667, %v3195
    %v3676 = vmax.f32 %v3668, 0.0
    %v3677 = vmax.f32 %v3669, 0.0
    %v3678 = vmax.f32 %v3670, 0.0
    %v3679 = vmax.f32 %v3671, 0.0
    %v3680 = vmax.f32 %v3672, 0.0
    %v3681 = vmax.f32 %v3673, 0.0
    %v3682 = vmax.f32 %v3674, 0.0
    %v3683 = vmax.f32 %v3675, 0.0
    %v3684 = vmax.f32 %v3524, %v3676
    %v3685 = vmax.f32 %v3525, %v3677
    %v3686 = vmax.f32 %v3526, %v3678
    %v3687 = vmax.f32 %v3527, %v3679
    %v3688 = vmax.f32 %v3528, %v3680
    %v3689 = vmax.f32 %v3529, %v3681
    %v3690 = vmax.f32 %v3530, %v3682
    %v3691 = vmax.f32 %v3531, %v3683
    %s3692 = scalar_lea.vmem %s1, 256
    %v3693 = vld [vmem:[%s3692] sm:$0xff]
    %v3694 = vld [vmem:[%s3692 + $0x8] sm:$0xff]
    %v3695 = vld [vmem:[%s3692 + $0x10] sm:$0xff]
    %v3696 = vld [vmem:[%s3692 + $0x18] sm:$0xff]
    %v3697 = vld [vmem:[%s3692 + $0x20] sm:$0xff]
    %v3698 = vld [vmem:[%s3692 + $0x28] sm:$0xff]
    %v3699 = vld [vmem:[%s3692 + $0x30] sm:$0xff]
    %v3700 = vld [vmem:[%s3692 + $0x38] sm:$0xff]
    %3702 = vset.pattern.permute.xlu0 0
    %3703 = vperm.xlu0 %3702, %v3693
    %v3704 = vpop.permute.xlu0 %3703
    %3707 = vset.pattern.permute.xlu0 0
    %3708 = vperm.xlu0 %3707, %v3694
    %v3709 = vpop.permute.xlu0 %3708
    %3712 = vset.pattern.permute.xlu0 0
    %3713 = vperm.xlu0 %3712, %v3695
    %v3714 = vpop.permute.xlu0 %3713
    %3717 = vset.pattern.permute.xlu0 0
    %3718 = vperm.xlu0 %3717, %v3696
    %v3719 = vpop.permute.xlu0 %3718
    %3722 = vset.pattern.permute.xlu0 0
    %3723 = vperm.xlu0 %3722, %v3697
    %v3724 = vpop.permute.xlu0 %3723
    %3727 = vset.pattern.permute.xlu0 0
    %3728 = vperm.xlu0 %3727, %v3698
    %v3729 = vpop.permute.xlu0 %3728
    %3732 = vset.pattern.permute.xlu0 0
    %3733 = vperm.xlu0 %3732, %v3699
    %v3734 = vpop.permute.xlu0 %3733
    %3737 = vset.pattern.permute.xlu0 0
    %3738 = vperm.xlu0 %3737, %v3700
    %v3739 = vpop.permute.xlu0 %3738
    %v3741 = vmul.f32 %v3684, %v3704
    %v3742 = vmul.f32 %v3685, %v3709
    %v3743 = vmul.f32 %v3686, %v3714
    %v3744 = vmul.f32 %v3687, %v3719
    %v3745 = vmul.f32 %v3688, %v3724
    %v3746 = vmul.f32 %v3689, %v3729
    %v3747 = vmul.f32 %v3690, %v3734
    %v3748 = vmul.f32 %v3691, %v3739
    %v3749 = vadd.f32 %v3032, %v3741
    %v3750 = vadd.f32 %v3033, %v3742
    %v3751 = vadd.f32 %v3034, %v3743
    %v3752 = vadd.f32 %v3035, %v3744
    %v3753 = vadd.f32 %v3036, %v3745
    %v3754 = vadd.f32 %v3037, %v3746
    %v3755 = vadd.f32 %v3038, %v3747
    %v3756 = vadd.f32 %v3039, %v3748
    %s3757 = sld [smem:[#allocation3 + $0x2d]]
    %v3758 = vstv %s3757
    %v3759 = vmul.f32 %v3758, %v46
    %v3760 = vmul.f32 %v3758, %v47
    %v3761 = vmul.f32 %v3758, %v48
    %v3762 = vmul.f32 %v3758, %v49
    %v3763 = vmul.f32 %v3758, %v50
    %v3764 = vmul.f32 %v3758, %v51
    %v3765 = vmul.f32 %v3758, %v52
    %v3766 = vmul.f32 %v3758, %v53
    %s3767 = sld [smem:[#allocation3 + $0x2e]]
    %v3768 = vstv %s3767
    %v3769 = vmul.f32 %v3768, %v55
    %v3770 = vmul.f32 %v3768, %v56
    %v3771 = vmul.f32 %v3768, %v57
    %v3772 = vmul.f32 %v3768, %v58
    %v3773 = vmul.f32 %v3768, %v59
    %v3774 = vmul.f32 %v3768, %v60
    %v3775 = vmul.f32 %v3768, %v61
    %v3776 = vmul.f32 %v3768, %v62
    %v3777 = vadd.f32 %v3759, %v3769
    %v3778 = vadd.f32 %v3760, %v3770
    %v3779 = vadd.f32 %v3761, %v3771
    %v3780 = vadd.f32 %v3762, %v3772
    %v3781 = vadd.f32 %v3763, %v3773
    %v3782 = vadd.f32 %v3764, %v3774
    %v3783 = vadd.f32 %v3765, %v3775
    %v3784 = vadd.f32 %v3766, %v3776
    %s3785 = sld [smem:[#allocation3 + $0x2f]]
    %v3786 = vstv %s3785
    %v3787 = vmul.f32 %v3786, %v63
    %v3788 = vmul.f32 %v3786, %v64
    %v3789 = vmul.f32 %v3786, %v65
    %v3790 = vmul.f32 %v3786, %v66
    %v3791 = vmul.f32 %v3786, %v67
    %v3792 = vmul.f32 %v3786, %v68
    %v3793 = vmul.f32 %v3786, %v69
    %v3794 = vmul.f32 %v3786, %v70
    %v3795 = vadd.f32 %v3777, %v3787
    %v3796 = vadd.f32 %v3778, %v3788
    %v3797 = vadd.f32 %v3779, %v3789
    %v3798 = vadd.f32 %v3780, %v3790
    %v3799 = vadd.f32 %v3781, %v3791
    %v3800 = vadd.f32 %v3782, %v3792
    %v3801 = vadd.f32 %v3783, %v3793
    %v3802 = vadd.f32 %v3784, %v3794
    %s3803 = sld [smem:[#allocation3 + $0x30]]
    %v3804 = vstv %s3803
    %v3805 = vmul.f32 %v3804, %v80
    %v3806 = vmul.f32 %v3804, %v81
    %v3807 = vmul.f32 %v3804, %v82
    %v3808 = vmul.f32 %v3804, %v83
    %v3809 = vmul.f32 %v3804, %v84
    %v3810 = vmul.f32 %v3804, %v85
    %v3811 = vmul.f32 %v3804, %v86
    %v3812 = vmul.f32 %v3804, %v87
    %v3813 = vadd.f32 %v3795, %v3805
    %v3814 = vadd.f32 %v3796, %v3806
    %v3815 = vadd.f32 %v3797, %v3807
    %v3816 = vadd.f32 %v3798, %v3808
    %v3817 = vadd.f32 %v3799, %v3809
    %v3818 = vadd.f32 %v3800, %v3810
    %v3819 = vadd.f32 %v3801, %v3811
    %v3820 = vadd.f32 %v3802, %v3812
    %s3821 = sld [smem:[#allocation3 + $0x31]]
    %v3822 = vstv %s3821
    %v3823 = vmul.f32 %v3822, %v89
    %v3824 = vmul.f32 %v3822, %v90
    %v3825 = vmul.f32 %v3822, %v91
    %v3826 = vmul.f32 %v3822, %v92
    %v3827 = vmul.f32 %v3822, %v93
    %v3828 = vmul.f32 %v3822, %v94
    %v3829 = vmul.f32 %v3822, %v95
    %v3830 = vmul.f32 %v3822, %v96
    %v3831 = vadd.f32 %v3813, %v3823
    %v3832 = vadd.f32 %v3814, %v3824
    %v3833 = vadd.f32 %v3815, %v3825
    %v3834 = vadd.f32 %v3816, %v3826
    %v3835 = vadd.f32 %v3817, %v3827
    %v3836 = vadd.f32 %v3818, %v3828
    %v3837 = vadd.f32 %v3819, %v3829
    %v3838 = vadd.f32 %v3820, %v3830
    %s3839 = sld [smem:[#allocation3 + $0x32]]
    %v3840 = vstv %s3839
    %v3841 = vmul.f32 %v3840, %v97
    %v3842 = vmul.f32 %v3840, %v98
    %v3843 = vmul.f32 %v3840, %v99
    %v3844 = vmul.f32 %v3840, %v100
    %v3845 = vmul.f32 %v3840, %v101
    %v3846 = vmul.f32 %v3840, %v102
    %v3847 = vmul.f32 %v3840, %v103
    %v3848 = vmul.f32 %v3840, %v104
    %v3849 = vadd.f32 %v3831, %v3841
    %v3850 = vadd.f32 %v3832, %v3842
    %v3851 = vadd.f32 %v3833, %v3843
    %v3852 = vadd.f32 %v3834, %v3844
    %v3853 = vadd.f32 %v3835, %v3845
    %v3854 = vadd.f32 %v3836, %v3846
    %v3855 = vadd.f32 %v3837, %v3847
    %v3856 = vadd.f32 %v3838, %v3848
    %s3857 = sld [smem:[#allocation3 + $0x33]]
    %v3858 = vstv %s3857
    %v3859 = vmul.f32 %v3858, %v114
    %v3860 = vmul.f32 %v3858, %v115
    %v3861 = vmul.f32 %v3858, %v116
    %v3862 = vmul.f32 %v3858, %v117
    %v3863 = vmul.f32 %v3858, %v118
    %v3864 = vmul.f32 %v3858, %v119
    %v3865 = vmul.f32 %v3858, %v120
    %v3866 = vmul.f32 %v3858, %v121
    %v3867 = vadd.f32 %v3849, %v3859
    %v3868 = vadd.f32 %v3850, %v3860
    %v3869 = vadd.f32 %v3851, %v3861
    %v3870 = vadd.f32 %v3852, %v3862
    %v3871 = vadd.f32 %v3853, %v3863
    %v3872 = vadd.f32 %v3854, %v3864
    %v3873 = vadd.f32 %v3855, %v3865
    %v3874 = vadd.f32 %v3856, %v3866
    %s3875 = sld [smem:[#allocation3 + $0x34]]
    %v3876 = vstv %s3875
    %v3877 = vmul.f32 %v3876, %v123
    %v3878 = vmul.f32 %v3876, %v124
    %v3879 = vmul.f32 %v3876, %v125
    %v3880 = vmul.f32 %v3876, %v126
    %v3881 = vmul.f32 %v3876, %v127
    %v3882 = vmul.f32 %v3876, %v128
    %v3883 = vmul.f32 %v3876, %v129
    %v3884 = vmul.f32 %v3876, %v130
    %v3885 = vadd.f32 %v3867, %v3877
    %v3886 = vadd.f32 %v3868, %v3878
    %v3887 = vadd.f32 %v3869, %v3879
    %v3888 = vadd.f32 %v3870, %v3880
    %v3889 = vadd.f32 %v3871, %v3881
    %v3890 = vadd.f32 %v3872, %v3882
    %v3891 = vadd.f32 %v3873, %v3883
    %v3892 = vadd.f32 %v3874, %v3884
    %s3893 = sld [smem:[#allocation3 + $0x35]]
    %v3894 = vstv %s3893
    %v3895 = vmul.f32 %v3894, %v131
    %v3896 = vmul.f32 %v3894, %v132
    %v3897 = vmul.f32 %v3894, %v133
    %v3898 = vmul.f32 %v3894, %v134
    %v3899 = vmul.f32 %v3894, %v135
    %v3900 = vmul.f32 %v3894, %v136
    %v3901 = vmul.f32 %v3894, %v137
    %v3902 = vmul.f32 %v3894, %v138
    %v3903 = vadd.f32 %v3885, %v3895
    %v3904 = vadd.f32 %v3886, %v3896
    %v3905 = vadd.f32 %v3887, %v3897
    %v3906 = vadd.f32 %v3888, %v3898
    %v3907 = vadd.f32 %v3889, %v3899
    %v3908 = vadd.f32 %v3890, %v3900
    %v3909 = vadd.f32 %v3891, %v3901
    %v3910 = vadd.f32 %v3892, %v3902
    %s3911 = sld [smem:[#allocation5 + $0x5]]
    %v3912 = vstv %s3911
    %v3913 = vadd.f32 %v3903, %v3912
    %v3914 = vadd.f32 %v3904, %v3912
    %v3915 = vadd.f32 %v3905, %v3912
    %v3916 = vadd.f32 %v3906, %v3912
    %v3917 = vadd.f32 %v3907, %v3912
    %v3918 = vadd.f32 %v3908, %v3912
    %v3919 = vadd.f32 %v3909, %v3912
    %v3920 = vadd.f32 %v3910, %v3912
    %v3921 = vmax.f32 %v3913, 0.0
    %v3922 = vmax.f32 %v3914, 0.0
    %v3923 = vmax.f32 %v3915, 0.0
    %v3924 = vmax.f32 %v3916, 0.0
    %v3925 = vmax.f32 %v3917, 0.0
    %v3926 = vmax.f32 %v3918, 0.0
    %v3927 = vmax.f32 %v3919, 0.0
    %v3928 = vmax.f32 %v3920, 0.0
    %v3929 = vmul.f32 %v3758, %v55
    %v3930 = vmul.f32 %v3758, %v56
    %v3931 = vmul.f32 %v3758, %v57
    %v3932 = vmul.f32 %v3758, %v58
    %v3933 = vmul.f32 %v3758, %v59
    %v3934 = vmul.f32 %v3758, %v60
    %v3935 = vmul.f32 %v3758, %v61
    %v3936 = vmul.f32 %v3758, %v62
    %v3937 = vmul.f32 %v3768, %v63
    %v3938 = vmul.f32 %v3768, %v64
    %v3939 = vmul.f32 %v3768, %v65
    %v3940 = vmul.f32 %v3768, %v66
    %v3941 = vmul.f32 %v3768, %v67
    %v3942 = vmul.f32 %v3768, %v68
    %v3943 = vmul.f32 %v3768, %v69
    %v3944 = vmul.f32 %v3768, %v70
    %v3945 = vadd.f32 %v3929, %v3937
    %v3946 = vadd.f32 %v3930, %v3938
    %v3947 = vadd.f32 %v3931, %v3939
    %v3948 = vadd.f32 %v3932, %v3940
    %v3949 = vadd.f32 %v3933, %v3941
    %v3950 = vadd.f32 %v3934, %v3942
    %v3951 = vadd.f32 %v3935, %v3943
    %v3952 = vadd.f32 %v3936, %v3944
    %v3953 = vmul.f32 %v3786, %v71
    %v3954 = vmul.f32 %v3786, %v72
    %v3955 = vmul.f32 %v3786, %v73
    %v3956 = vmul.f32 %v3786, %v74
    %v3957 = vmul.f32 %v3786, %v75
    %v3958 = vmul.f32 %v3786, %v76
    %v3959 = vmul.f32 %v3786, %v77
    %v3960 = vmul.f32 %v3786, %v78
    %v3961 = vadd.f32 %v3945, %v3953
    %v3962 = vadd.f32 %v3946, %v3954
    %v3963 = vadd.f32 %v3947, %v3955
    %v3964 = vadd.f32 %v3948, %v3956
    %v3965 = vadd.f32 %v3949, %v3957
    %v3966 = vadd.f32 %v3950, %v3958
    %v3967 = vadd.f32 %v3951, %v3959
    %v3968 = vadd.f32 %v3952, %v3960
    %v3969 = vmul.f32 %v3804, %v89
    %v3970 = vmul.f32 %v3804, %v90
    %v3971 = vmul.f32 %v3804, %v91
    %v3972 = vmul.f32 %v3804, %v92
    %v3973 = vmul.f32 %v3804, %v93
    %v3974 = vmul.f32 %v3804, %v94
    %v3975 = vmul.f32 %v3804, %v95
    %v3976 = vmul.f32 %v3804, %v96
    %v3977 = vadd.f32 %v3961, %v3969
    %v3978 = vadd.f32 %v3962, %v3970
    %v3979 = vadd.f32 %v3963, %v3971
    %v3980 = vadd.f32 %v3964, %v3972
    %v3981 = vadd.f32 %v3965, %v3973
    %v3982 = vadd.f32 %v3966, %v3974
    %v3983 = vadd.f32 %v3967, %v3975
    %v3984 = vadd.f32 %v3968, %v3976
    %v3985 = vmul.f32 %v3822, %v97
    %v3986 = vmul.f32 %v3822, %v98
    %v3987 = vmul.f32 %v3822, %v99
    %v3988 = vmul.f32 %v3822, %v100
    %v3989 = vmul.f32 %v3822, %v101
    %v3990 = vmul.f32 %v3822, %v102
    %v3991 = vmul.f32 %v3822, %v103
    %v3992 = vmul.f32 %v3822, %v104
    %v3993 = vadd.f32 %v3977, %v3985
    %v3994 = vadd.f32 %v3978, %v3986
    %v3995 = vadd.f32 %v3979, %v3987
    %v3996 = vadd.f32 %v3980, %v3988
    %v3997 = vadd.f32 %v3981, %v3989
    %v3998 = vadd.f32 %v3982, %v3990
    %v3999 = vadd.f32 %v3983, %v3991
    %v4000 = vadd.f32 %v3984, %v3992
    %v4001 = vmul.f32 %v3840, %v105
    %v4002 = vmul.f32 %v3840, %v106
    %v4003 = vmul.f32 %v3840, %v107
    %v4004 = vmul.f32 %v3840, %v108
    %v4005 = vmul.f32 %v3840, %v109
    %v4006 = vmul.f32 %v3840, %v110
    %v4007 = vmul.f32 %v3840, %v111
    %v4008 = vmul.f32 %v3840, %v112
    %v4009 = vadd.f32 %v3993, %v4001
    %v4010 = vadd.f32 %v3994, %v4002
    %v4011 = vadd.f32 %v3995, %v4003
    %v4012 = vadd.f32 %v3996, %v4004
    %v4013 = vadd.f32 %v3997, %v4005
    %v4014 = vadd.f32 %v3998, %v4006
    %v4015 = vadd.f32 %v3999, %v4007
    %v4016 = vadd.f32 %v4000, %v4008
    %v4017 = vmul.f32 %v3858, %v123
    %v4018 = vmul.f32 %v3858, %v124
    %v4019 = vmul.f32 %v3858, %v125
    %v4020 = vmul.f32 %v3858, %v126
    %v4021 = vmul.f32 %v3858, %v127
    %v4022 = vmul.f32 %v3858, %v128
    %v4023 = vmul.f32 %v3858, %v129
    %v4024 = vmul.f32 %v3858, %v130
    %v4025 = vadd.f32 %v4009, %v4017
    %v4026 = vadd.f32 %v4010, %v4018
    %v4027 = vadd.f32 %v4011, %v4019
    %v4028 = vadd.f32 %v4012, %v4020
    %v4029 = vadd.f32 %v4013, %v4021
    %v4030 = vadd.f32 %v4014, %v4022
    %v4031 = vadd.f32 %v4015, %v4023
    %v4032 = vadd.f32 %v4016, %v4024
    %v4033 = vmul.f32 %v3876, %v131
    %v4034 = vmul.f32 %v3876, %v132
    %v4035 = vmul.f32 %v3876, %v133
    %v4036 = vmul.f32 %v3876, %v134
    %v4037 = vmul.f32 %v3876, %v135
    %v4038 = vmul.f32 %v3876, %v136
    %v4039 = vmul.f32 %v3876, %v137
    %v4040 = vmul.f32 %v3876, %v138
    %v4041 = vadd.f32 %v4025, %v4033
    %v4042 = vadd.f32 %v4026, %v4034
    %v4043 = vadd.f32 %v4027, %v4035
    %v4044 = vadd.f32 %v4028, %v4036
    %v4045 = vadd.f32 %v4029, %v4037
    %v4046 = vadd.f32 %v4030, %v4038
    %v4047 = vadd.f32 %v4031, %v4039
    %v4048 = vadd.f32 %v4032, %v4040
    %v4049 = vmul.f32 %v3894, %v139
    %v4050 = vmul.f32 %v3894, %v140
    %v4051 = vmul.f32 %v3894, %v141
    %v4052 = vmul.f32 %v3894, %v142
    %v4053 = vmul.f32 %v3894, %v143
    %v4054 = vmul.f32 %v3894, %v144
    %v4055 = vmul.f32 %v3894, %v145
    %v4056 = vmul.f32 %v3894, %v146
    %v4057 = vadd.f32 %v4041, %v4049
    %v4058 = vadd.f32 %v4042, %v4050
    %v4059 = vadd.f32 %v4043, %v4051
    %v4060 = vadd.f32 %v4044, %v4052
    %v4061 = vadd.f32 %v4045, %v4053
    %v4062 = vadd.f32 %v4046, %v4054
    %v4063 = vadd.f32 %v4047, %v4055
    %v4064 = vadd.f32 %v4048, %v4056
    %v4065 = vadd.f32 %v4057, %v3912
    %v4066 = vadd.f32 %v4058, %v3912
    %v4067 = vadd.f32 %v4059, %v3912
    %v4068 = vadd.f32 %v4060, %v3912
    %v4069 = vadd.f32 %v4061, %v3912
    %v4070 = vadd.f32 %v4062, %v3912
    %v4071 = vadd.f32 %v4063, %v3912
    %v4072 = vadd.f32 %v4064, %v3912
    %v4073 = vmax.f32 %v4065, 0.0
    %v4074 = vmax.f32 %v4066, 0.0
    %v4075 = vmax.f32 %v4067, 0.0
    %v4076 = vmax.f32 %v4068, 0.0
    %v4077 = vmax.f32 %v4069, 0.0
    %v4078 = vmax.f32 %v4070, 0.0
    %v4079 = vmax.f32 %v4071, 0.0
    %v4080 = vmax.f32 %v4072, 0.0
    %v4081 = vmax.f32 %v3921, %v4073
    %v4082 = vmax.f32 %v3922, %v4074
    %v4083 = vmax.f32 %v3923, %v4075
    %v4084 = vmax.f32 %v3924, %v4076
    %v4085 = vmax.f32 %v3925, %v4077
    %v4086 = vmax.f32 %v3926, %v4078
    %v4087 = vmax.f32 %v3927, %v4079
    %v4088 = vmax.f32 %v3928, %v4080
    %v4089 = vmul.f32 %v3758, %v80
    %v4090 = vmul.f32 %v3758, %v81
    %v4091 = vmul.f32 %v3758, %v82
    %v4092 = vmul.f32 %v3758, %v83
    %v4093 = vmul.f32 %v3758, %v84
    %v4094 = vmul.f32 %v3758, %v85
    %v4095 = vmul.f32 %v3758, %v86
    %v4096 = vmul.f32 %v3758, %v87
    %v4097 = vmul.f32 %v3768, %v89
    %v4098 = vmul.f32 %v3768, %v90
    %v4099 = vmul.f32 %v3768, %v91
    %v4100 = vmul.f32 %v3768, %v92
    %v4101 = vmul.f32 %v3768, %v93
    %v4102 = vmul.f32 %v3768, %v94
    %v4103 = vmul.f32 %v3768, %v95
    %v4104 = vmul.f32 %v3768, %v96
    %v4105 = vadd.f32 %v4089, %v4097
    %v4106 = vadd.f32 %v4090, %v4098
    %v4107 = vadd.f32 %v4091, %v4099
    %v4108 = vadd.f32 %v4092, %v4100
    %v4109 = vadd.f32 %v4093, %v4101
    %v4110 = vadd.f32 %v4094, %v4102
    %v4111 = vadd.f32 %v4095, %v4103
    %v4112 = vadd.f32 %v4096, %v4104
    %v4113 = vmul.f32 %v3786, %v97
    %v4114 = vmul.f32 %v3786, %v98
    %v4115 = vmul.f32 %v3786, %v99
    %v4116 = vmul.f32 %v3786, %v100
    %v4117 = vmul.f32 %v3786, %v101
    %v4118 = vmul.f32 %v3786, %v102
    %v4119 = vmul.f32 %v3786, %v103
    %v4120 = vmul.f32 %v3786, %v104
    %v4121 = vadd.f32 %v4105, %v4113
    %v4122 = vadd.f32 %v4106, %v4114
    %v4123 = vadd.f32 %v4107, %v4115
    %v4124 = vadd.f32 %v4108, %v4116
    %v4125 = vadd.f32 %v4109, %v4117
    %v4126 = vadd.f32 %v4110, %v4118
    %v4127 = vadd.f32 %v4111, %v4119
    %v4128 = vadd.f32 %v4112, %v4120
    %v4129 = vmul.f32 %v3804, %v114
    %v4130 = vmul.f32 %v3804, %v115
    %v4131 = vmul.f32 %v3804, %v116
    %v4132 = vmul.f32 %v3804, %v117
    %v4133 = vmul.f32 %v3804, %v118
    %v4134 = vmul.f32 %v3804, %v119
    %v4135 = vmul.f32 %v3804, %v120
    %v4136 = vmul.f32 %v3804, %v121
    %v4137 = vadd.f32 %v4121, %v4129
    %v4138 = vadd.f32 %v4122, %v4130
    %v4139 = vadd.f32 %v4123, %v4131
    %v4140 = vadd.f32 %v4124, %v4132
    %v4141 = vadd.f32 %v4125, %v4133
    %v4142 = vadd.f32 %v4126, %v4134
    %v4143 = vadd.f32 %v4127, %v4135
    %v4144 = vadd.f32 %v4128, %v4136
    %v4145 = vmul.f32 %v3822, %v123
    %v4146 = vmul.f32 %v3822, %v124
    %v4147 = vmul.f32 %v3822, %v125
    %v4148 = vmul.f32 %v3822, %v126
    %v4149 = vmul.f32 %v3822, %v127
    %v4150 = vmul.f32 %v3822, %v128
    %v4151 = vmul.f32 %v3822, %v129
    %v4152 = vmul.f32 %v3822, %v130
    %v4153 = vadd.f32 %v4137, %v4145
    %v4154 = vadd.f32 %v4138, %v4146
    %v4155 = vadd.f32 %v4139, %v4147
    %v4156 = vadd.f32 %v4140, %v4148
    %v4157 = vadd.f32 %v4141, %v4149
    %v4158 = vadd.f32 %v4142, %v4150
    %v4159 = vadd.f32 %v4143, %v4151
    %v4160 = vadd.f32 %v4144, %v4152
    %v4161 = vmul.f32 %v3840, %v131
    %v4162 = vmul.f32 %v3840, %v132
    %v4163 = vmul.f32 %v3840, %v133
    %v4164 = vmul.f32 %v3840, %v134
    %v4165 = vmul.f32 %v3840, %v135
    %v4166 = vmul.f32 %v3840, %v136
    %v4167 = vmul.f32 %v3840, %v137
    %v4168 = vmul.f32 %v3840, %v138
    %v4169 = vadd.f32 %v4153, %v4161
    %v4170 = vadd.f32 %v4154, %v4162
    %v4171 = vadd.f32 %v4155, %v4163
    %v4172 = vadd.f32 %v4156, %v4164
    %v4173 = vadd.f32 %v4157, %v4165
    %v4174 = vadd.f32 %v4158, %v4166
    %v4175 = vadd.f32 %v4159, %v4167
    %v4176 = vadd.f32 %v4160, %v4168
    %v4177 = vmul.f32 %v3858, %v148
    %v4178 = vmul.f32 %v3858, %v149
    %v4179 = vmul.f32 %v3858, %v150
    %v4180 = vmul.f32 %v3858, %v151
    %v4181 = vmul.f32 %v3858, %v152
    %v4182 = vmul.f32 %v3858, %v153
    %v4183 = vmul.f32 %v3858, %v154
    %v4184 = vmul.f32 %v3858, %v155
    %v4185 = vadd.f32 %v4169, %v4177
    %v4186 = vadd.f32 %v4170, %v4178
    %v4187 = vadd.f32 %v4171, %v4179
    %v4188 = vadd.f32 %v4172, %v4180
    %v4189 = vadd.f32 %v4173, %v4181
    %v4190 = vadd.f32 %v4174, %v4182
    %v4191 = vadd.f32 %v4175, %v4183
    %v4192 = vadd.f32 %v4176, %v4184
    %v4193 = vmul.f32 %v3876, %v157
    %v4194 = vmul.f32 %v3876, %v158
    %v4195 = vmul.f32 %v3876, %v159
    %v4196 = vmul.f32 %v3876, %v160
    %v4197 = vmul.f32 %v3876, %v161
    %v4198 = vmul.f32 %v3876, %v162
    %v4199 = vmul.f32 %v3876, %v163
    %v4200 = vmul.f32 %v3876, %v164
    %v4201 = vadd.f32 %v4185, %v4193
    %v4202 = vadd.f32 %v4186, %v4194
    %v4203 = vadd.f32 %v4187, %v4195
    %v4204 = vadd.f32 %v4188, %v4196
    %v4205 = vadd.f32 %v4189, %v4197
    %v4206 = vadd.f32 %v4190, %v4198
    %v4207 = vadd.f32 %v4191, %v4199
    %v4208 = vadd.f32 %v4192, %v4200
    %v4209 = vmul.f32 %v3894, %v165
    %v4210 = vmul.f32 %v3894, %v166
    %v4211 = vmul.f32 %v3894, %v167
    %v4212 = vmul.f32 %v3894, %v168
    %v4213 = vmul.f32 %v3894, %v169
    %v4214 = vmul.f32 %v3894, %v170
    %v4215 = vmul.f32 %v3894, %v171
    %v4216 = vmul.f32 %v3894, %v172
    %v4217 = vadd.f32 %v4201, %v4209
    %v4218 = vadd.f32 %v4202, %v4210
    %v4219 = vadd.f32 %v4203, %v4211
    %v4220 = vadd.f32 %v4204, %v4212
    %v4221 = vadd.f32 %v4205, %v4213
    %v4222 = vadd.f32 %v4206, %v4214
    %v4223 = vadd.f32 %v4207, %v4215
    %v4224 = vadd.f32 %v4208, %v4216
    %v4225 = vadd.f32 %v4217, %v3912
    %v4226 = vadd.f32 %v4218, %v3912
    %v4227 = vadd.f32 %v4219, %v3912
    %v4228 = vadd.f32 %v4220, %v3912
    %v4229 = vadd.f32 %v4221, %v3912
    %v4230 = vadd.f32 %v4222, %v3912
    %v4231 = vadd.f32 %v4223, %v3912
    %v4232 = vadd.f32 %v4224, %v3912
    %v4233 = vmax.f32 %v4225, 0.0
    %v4234 = vmax.f32 %v4226, 0.0
    %v4235 = vmax.f32 %v4227, 0.0
    %v4236 = vmax.f32 %v4228, 0.0
    %v4237 = vmax.f32 %v4229, 0.0
    %v4238 = vmax.f32 %v4230, 0.0
    %v4239 = vmax.f32 %v4231, 0.0
    %v4240 = vmax.f32 %v4232, 0.0
    %v4241 = vmax.f32 %v4081, %v4233
    %v4242 = vmax.f32 %v4082, %v4234
    %v4243 = vmax.f32 %v4083, %v4235
    %v4244 = vmax.f32 %v4084, %v4236
    %v4245 = vmax.f32 %v4085, %v4237
    %v4246 = vmax.f32 %v4086, %v4238
    %v4247 = vmax.f32 %v4087, %v4239
    %v4248 = vmax.f32 %v4088, %v4240
    %v4249 = vmul.f32 %v3758, %v89
    %v4250 = vmul.f32 %v3758, %v90
    %v4251 = vmul.f32 %v3758, %v91
    %v4252 = vmul.f32 %v3758, %v92
    %v4253 = vmul.f32 %v3758, %v93
    %v4254 = vmul.f32 %v3758, %v94
    %v4255 = vmul.f32 %v3758, %v95
    %v4256 = vmul.f32 %v3758, %v96
    %v4257 = vmul.f32 %v3768, %v97
    %v4258 = vmul.f32 %v3768, %v98
    %v4259 = vmul.f32 %v3768, %v99
    %v4260 = vmul.f32 %v3768, %v100
    %v4261 = vmul.f32 %v3768, %v101
    %v4262 = vmul.f32 %v3768, %v102
    %v4263 = vmul.f32 %v3768, %v103
    %v4264 = vmul.f32 %v3768, %v104
    %v4265 = vadd.f32 %v4249, %v4257
    %v4266 = vadd.f32 %v4250, %v4258
    %v4267 = vadd.f32 %v4251, %v4259
    %v4268 = vadd.f32 %v4252, %v4260
    %v4269 = vadd.f32 %v4253, %v4261
    %v4270 = vadd.f32 %v4254, %v4262
    %v4271 = vadd.f32 %v4255, %v4263
    %v4272 = vadd.f32 %v4256, %v4264
    %v4273 = vmul.f32 %v3786, %v105
    %v4274 = vmul.f32 %v3786, %v106
    %v4275 = vmul.f32 %v3786, %v107
    %v4276 = vmul.f32 %v3786, %v108
    %v4277 = vmul.f32 %v3786, %v109
    %v4278 = vmul.f32 %v3786, %v110
    %v4279 = vmul.f32 %v3786, %v111
    %v4280 = vmul.f32 %v3786, %v112
    %v4281 = vadd.f32 %v4265, %v4273
    %v4282 = vadd.f32 %v4266, %v4274
    %v4283 = vadd.f32 %v4267, %v4275
    %v4284 = vadd.f32 %v4268, %v4276
    %v4285 = vadd.f32 %v4269, %v4277
    %v4286 = vadd.f32 %v4270, %v4278
    %v4287 = vadd.f32 %v4271, %v4279
    %v4288 = vadd.f32 %v4272, %v4280
    %v4289 = vmul.f32 %v3804, %v123
    %v4290 = vmul.f32 %v3804, %v124
    %v4291 = vmul.f32 %v3804, %v125
    %v4292 = vmul.f32 %v3804, %v126
    %v4293 = vmul.f32 %v3804, %v127
    %v4294 = vmul.f32 %v3804, %v128
    %v4295 = vmul.f32 %v3804, %v129
    %v4296 = vmul.f32 %v3804, %v130
    %v4297 = vadd.f32 %v4281, %v4289
    %v4298 = vadd.f32 %v4282, %v4290
    %v4299 = vadd.f32 %v4283, %v4291
    %v4300 = vadd.f32 %v4284, %v4292
    %v4301 = vadd.f32 %v4285, %v4293
    %v4302 = vadd.f32 %v4286, %v4294
    %v4303 = vadd.f32 %v4287, %v4295
    %v4304 = vadd.f32 %v4288, %v4296
    %v4305 = vmul.f32 %v3822, %v131
    %v4306 = vmul.f32 %v3822, %v132
    %v4307 = vmul.f32 %v3822, %v133
    %v4308 = vmul.f32 %v3822, %v134
    %v4309 = vmul.f32 %v3822, %v135
    %v4310 = vmul.f32 %v3822, %v136
    %v4311 = vmul.f32 %v3822, %v137
    %v4312 = vmul.f32 %v3822, %v138
    %v4313 = vadd.f32 %v4297, %v4305
    %v4314 = vadd.f32 %v4298, %v4306
    %v4315 = vadd.f32 %v4299, %v4307
    %v4316 = vadd.f32 %v4300, %v4308
    %v4317 = vadd.f32 %v4301, %v4309
    %v4318 = vadd.f32 %v4302, %v4310
    %v4319 = vadd.f32 %v4303, %v4311
    %v4320 = vadd.f32 %v4304, %v4312
    %v4321 = vmul.f32 %v3840, %v139
    %v4322 = vmul.f32 %v3840, %v140
    %v4323 = vmul.f32 %v3840, %v141
    %v4324 = vmul.f32 %v3840, %v142
    %v4325 = vmul.f32 %v3840, %v143
    %v4326 = vmul.f32 %v3840, %v144
    %v4327 = vmul.f32 %v3840, %v145
    %v4328 = vmul.f32 %v3840, %v146
    %v4329 = vadd.f32 %v4313, %v4321
    %v4330 = vadd.f32 %v4314, %v4322
    %v4331 = vadd.f32 %v4315, %v4323
    %v4332 = vadd.f32 %v4316, %v4324
    %v4333 = vadd.f32 %v4317, %v4325
    %v4334 = vadd.f32 %v4318, %v4326
    %v4335 = vadd.f32 %v4319, %v4327
    %v4336 = vadd.f32 %v4320, %v4328
    %v4337 = vmul.f32 %v3858, %v157
    %v4338 = vmul.f32 %v3858, %v158
    %v4339 = vmul.f32 %v3858, %v159
    %v4340 = vmul.f32 %v3858, %v160
    %v4341 = vmul.f32 %v3858, %v161
    %v4342 = vmul.f32 %v3858, %v162
    %v4343 = vmul.f32 %v3858, %v163
    %v4344 = vmul.f32 %v3858, %v164
    %v4345 = vadd.f32 %v4329, %v4337
    %v4346 = vadd.f32 %v4330, %v4338
    %v4347 = vadd.f32 %v4331, %v4339
    %v4348 = vadd.f32 %v4332, %v4340
    %v4349 = vadd.f32 %v4333, %v4341
    %v4350 = vadd.f32 %v4334, %v4342
    %v4351 = vadd.f32 %v4335, %v4343
    %v4352 = vadd.f32 %v4336, %v4344
    %v4353 = vmul.f32 %v3876, %v165
    %v4354 = vmul.f32 %v3876, %v166
    %v4355 = vmul.f32 %v3876, %v167
    %v4356 = vmul.f32 %v3876, %v168
    %v4357 = vmul.f32 %v3876, %v169
    %v4358 = vmul.f32 %v3876, %v170
    %v4359 = vmul.f32 %v3876, %v171
    %v4360 = vmul.f32 %v3876, %v172
    %v4361 = vadd.f32 %v4345, %v4353
    %v4362 = vadd.f32 %v4346, %v4354
    %v4363 = vadd.f32 %v4347, %v4355
    %v4364 = vadd.f32 %v4348, %v4356
    %v4365 = vadd.f32 %v4349, %v4357
    %v4366 = vadd.f32 %v4350, %v4358
    %v4367 = vadd.f32 %v4351, %v4359
    %v4368 = vadd.f32 %v4352, %v4360
    %v4369 = vmul.f32 %v3894, %v173
    %v4370 = vmul.f32 %v3894, %v174
    %v4371 = vmul.f32 %v3894, %v175
    %v4372 = vmul.f32 %v3894, %v176
    %v4373 = vmul.f32 %v3894, %v177
    %v4374 = vmul.f32 %v3894, %v178
    %v4375 = vmul.f32 %v3894, %v179
    %v4376 = vmul.f32 %v3894, %v180
    %v4377 = vadd.f32 %v4361, %v4369
    %v4378 = vadd.f32 %v4362, %v4370
    %v4379 = vadd.f32 %v4363, %v4371
    %v4380 = vadd.f32 %v4364, %v4372
    %v4381 = vadd.f32 %v4365, %v4373
    %v4382 = vadd.f32 %v4366, %v4374
    %v4383 = vadd.f32 %v4367, %v4375
    %v4384 = vadd.f32 %v4368, %v4376
    %v4385 = vadd.f32 %v4377, %v3912
    %v4386 = vadd.f32 %v4378, %v3912
    %v4387 = vadd.f32 %v4379, %v3912
    %v4388 = vadd.f32 %v4380, %v3912
    %v4389 = vadd.f32 %v4381, %v3912
    %v4390 = vadd.f32 %v4382, %v3912
    %v4391 = vadd.f32 %v4383, %v3912
    %v4392 = vadd.f32 %v4384, %v3912
    %v4393 = vmax.f32 %v4385, 0.0
    %v4394 = vmax.f32 %v4386, 0.0
    %v4395 = vmax.f32 %v4387, 0.0
    %v4396 = vmax.f32 %v4388, 0.0
    %v4397 = vmax.f32 %v4389, 0.0
    %v4398 = vmax.f32 %v4390, 0.0
    %v4399 = vmax.f32 %v4391, 0.0
    %v4400 = vmax.f32 %v4392, 0.0
    %v4401 = vmax.f32 %v4241, %v4393
    %v4402 = vmax.f32 %v4242, %v4394
    %v4403 = vmax.f32 %v4243, %v4395
    %v4404 = vmax.f32 %v4244, %v4396
    %v4405 = vmax.f32 %v4245, %v4397
    %v4406 = vmax.f32 %v4246, %v4398
    %v4407 = vmax.f32 %v4247, %v4399
    %v4408 = vmax.f32 %v4248, %v4400
    %s4409 = scalar_lea.vmem %s1, 320
    %v4410 = vld [vmem:[%s4409] sm:$0xff]
    %v4411 = vld [vmem:[%s4409 + $0x8] sm:$0xff]
    %v4412 = vld [vmem:[%s4409 + $0x10] sm:$0xff]
    %v4413 = vld [vmem:[%s4409 + $0x18] sm:$0xff]
    %v4414 = vld [vmem:[%s4409 + $0x20] sm:$0xff]
    %v4415 = vld [vmem:[%s4409 + $0x28] sm:$0xff]
    %v4416 = vld [vmem:[%s4409 + $0x30] sm:$0xff]
    %v4417 = vld [vmem:[%s4409 + $0x38] sm:$0xff]
    %4419 = vset.pattern.permute.xlu0 0
    %4420 = vperm.xlu0 %4419, %v4410
    %v4421 = vpop.permute.xlu0 %4420
    %4424 = vset.pattern.permute.xlu0 0
    %4425 = vperm.xlu0 %4424, %v4411
    %v4426 = vpop.permute.xlu0 %4425
    %4429 = vset.pattern.permute.xlu0 0
    %4430 = vperm.xlu0 %4429, %v4412
    %v4431 = vpop.permute.xlu0 %4430
    %4434 = vset.pattern.permute.xlu0 0
    %4435 = vperm.xlu0 %4434, %v4413
    %v4436 = vpop.permute.xlu0 %4435
    %4439 = vset.pattern.permute.xlu0 0
    %4440 = vperm.xlu0 %4439, %v4414
    %v4441 = vpop.permute.xlu0 %4440
    %4444 = vset.pattern.permute.xlu0 0
    %4445 = vperm.xlu0 %4444, %v4415
    %v4446 = vpop.permute.xlu0 %4445
    %4449 = vset.pattern.permute.xlu0 0
    %4450 = vperm.xlu0 %4449, %v4416
    %v4451 = vpop.permute.xlu0 %4450
    %4454 = vset.pattern.permute.xlu0 0
    %4455 = vperm.xlu0 %4454, %v4417
    %v4456 = vpop.permute.xlu0 %4455
    %v4458 = vmul.f32 %v4401, %v4421
    %v4459 = vmul.f32 %v4402, %v4426
    %v4460 = vmul.f32 %v4403, %v4431
    %v4461 = vmul.f32 %v4404, %v4436
    %v4462 = vmul.f32 %v4405, %v4441
    %v4463 = vmul.f32 %v4406, %v4446
    %v4464 = vmul.f32 %v4407, %v4451
    %v4465 = vmul.f32 %v4408, %v4456
    %v4466 = vadd.f32 %v3749, %v4458
    %v4467 = vadd.f32 %v3750, %v4459
    %v4468 = vadd.f32 %v3751, %v4460
    %v4469 = vadd.f32 %v3752, %v4461
    %v4470 = vadd.f32 %v3753, %v4462
    %v4471 = vadd.f32 %v3754, %v4463
    %v4472 = vadd.f32 %v3755, %v4464
    %v4473 = vadd.f32 %v3756, %v4465
    %s4474 = sld [smem:[#allocation3 + $0x36]]
    %v4475 = vstv %s4474
    %v4476 = vmul.f32 %v4475, %v46
    %v4477 = vmul.f32 %v4475, %v47
    %v4478 = vmul.f32 %v4475, %v48
    %v4479 = vmul.f32 %v4475, %v49
    %v4480 = vmul.f32 %v4475, %v50
    %v4481 = vmul.f32 %v4475, %v51
    %v4482 = vmul.f32 %v4475, %v52
    %v4483 = vmul.f32 %v4475, %v53
    %s4484 = sld [smem:[#allocation3 + $0x37]]
    %v4485 = vstv %s4484
    %v4486 = vmul.f32 %v4485, %v55
    %v4487 = vmul.f32 %v4485, %v56
    %v4488 = vmul.f32 %v4485, %v57
    %v4489 = vmul.f32 %v4485, %v58
    %v4490 = vmul.f32 %v4485, %v59
    %v4491 = vmul.f32 %v4485, %v60
    %v4492 = vmul.f32 %v4485, %v61
    %v4493 = vmul.f32 %v4485, %v62
    %v4494 = vadd.f32 %v4476, %v4486
    %v4495 = vadd.f32 %v4477, %v4487
    %v4496 = vadd.f32 %v4478, %v4488
    %v4497 = vadd.f32 %v4479, %v4489
    %v4498 = vadd.f32 %v4480, %v4490
    %v4499 = vadd.f32 %v4481, %v4491
    %v4500 = vadd.f32 %v4482, %v4492
    %v4501 = vadd.f32 %v4483, %v4493
    %s4502 = sld [smem:[#allocation3 + $0x38]]
    %v4503 = vstv %s4502
    %v4504 = vmul.f32 %v4503, %v63
    %v4505 = vmul.f32 %v4503, %v64
    %v4506 = vmul.f32 %v4503, %v65
    %v4507 = vmul.f32 %v4503, %v66
    %v4508 = vmul.f32 %v4503, %v67
    %v4509 = vmul.f32 %v4503, %v68
    %v4510 = vmul.f32 %v4503, %v69
    %v4511 = vmul.f32 %v4503, %v70
    %v4512 = vadd.f32 %v4494, %v4504
    %v4513 = vadd.f32 %v4495, %v4505
    %v4514 = vadd.f32 %v4496, %v4506
    %v4515 = vadd.f32 %v4497, %v4507
    %v4516 = vadd.f32 %v4498, %v4508
    %v4517 = vadd.f32 %v4499, %v4509
    %v4518 = vadd.f32 %v4500, %v4510
    %v4519 = vadd.f32 %v4501, %v4511
    %s4520 = sld [smem:[#allocation3 + $0x39]]
    %v4521 = vstv %s4520
    %v4522 = vmul.f32 %v4521, %v80
    %v4523 = vmul.f32 %v4521, %v81
    %v4524 = vmul.f32 %v4521, %v82
    %v4525 = vmul.f32 %v4521, %v83
    %v4526 = vmul.f32 %v4521, %v84
    %v4527 = vmul.f32 %v4521, %v85
    %v4528 = vmul.f32 %v4521, %v86
    %v4529 = vmul.f32 %v4521, %v87
    %v4530 = vadd.f32 %v4512, %v4522
    %v4531 = vadd.f32 %v4513, %v4523
    %v4532 = vadd.f32 %v4514, %v4524
    %v4533 = vadd.f32 %v4515, %v4525
    %v4534 = vadd.f32 %v4516, %v4526
    %v4535 = vadd.f32 %v4517, %v4527
    %v4536 = vadd.f32 %v4518, %v4528
    %v4537 = vadd.f32 %v4519, %v4529
    %s4538 = sld [smem:[#allocation3 + $0x3a]]
    %v4539 = vstv %s4538
    %v4540 = vmul.f32 %v4539, %v89
    %v4541 = vmul.f32 %v4539, %v90
    %v4542 = vmul.f32 %v4539, %v91
    %v4543 = vmul.f32 %v4539, %v92
    %v4544 = vmul.f32 %v4539, %v93
    %v4545 = vmul.f32 %v4539, %v94
    %v4546 = vmul.f32 %v4539, %v95
    %v4547 = vmul.f32 %v4539, %v96
    %v4548 = vadd.f32 %v4530, %v4540
    %v4549 = vadd.f32 %v4531, %v4541
    %v4550 = vadd.f32 %v4532, %v4542
    %v4551 = vadd.f32 %v4533, %v4543
    %v4552 = vadd.f32 %v4534, %v4544
    %v4553 = vadd.f32 %v4535, %v4545
    %v4554 = vadd.f32 %v4536, %v4546
    %v4555 = vadd.f32 %v4537, %v4547
    %s4556 = sld [smem:[#allocation3 + $0x3b]]
    %v4557 = vstv %s4556
    %v4558 = vmul.f32 %v4557, %v97
    %v4559 = vmul.f32 %v4557, %v98
    %v4560 = vmul.f32 %v4557, %v99
    %v4561 = vmul.f32 %v4557, %v100
    %v4562 = vmul.f32 %v4557, %v101
    %v4563 = vmul.f32 %v4557, %v102
    %v4564 = vmul.f32 %v4557, %v103
    %v4565 = vmul.f32 %v4557, %v104
    %v4566 = vadd.f32 %v4548, %v4558
    %v4567 = vadd.f32 %v4549, %v4559
    %v4568 = vadd.f32 %v4550, %v4560
    %v4569 = vadd.f32 %v4551, %v4561
    %v4570 = vadd.f32 %v4552, %v4562
    %v4571 = vadd.f32 %v4553, %v4563
    %v4572 = vadd.f32 %v4554, %v4564
    %v4573 = vadd.f32 %v4555, %v4565
    %s4574 = sld [smem:[#allocation3 + $0x3c]]
    %v4575 = vstv %s4574
    %v4576 = vmul.f32 %v4575, %v114
    %v4577 = vmul.f32 %v4575, %v115
    %v4578 = vmul.f32 %v4575, %v116
    %v4579 = vmul.f32 %v4575, %v117
    %v4580 = vmul.f32 %v4575, %v118
    %v4581 = vmul.f32 %v4575, %v119
    %v4582 = vmul.f32 %v4575, %v120
    %v4583 = vmul.f32 %v4575, %v121
    %v4584 = vadd.f32 %v4566, %v4576
    %v4585 = vadd.f32 %v4567, %v4577
    %v4586 = vadd.f32 %v4568, %v4578
    %v4587 = vadd.f32 %v4569, %v4579
    %v4588 = vadd.f32 %v4570, %v4580
    %v4589 = vadd.f32 %v4571, %v4581
    %v4590 = vadd.f32 %v4572, %v4582
    %v4591 = vadd.f32 %v4573, %v4583
    %s4592 = sld [smem:[#allocation3 + $0x3d]]
    %v4593 = vstv %s4592
    %v4594 = vmul.f32 %v4593, %v123
    %v4595 = vmul.f32 %v4593, %v124
    %v4596 = vmul.f32 %v4593, %v125
    %v4597 = vmul.f32 %v4593, %v126
    %v4598 = vmul.f32 %v4593, %v127
    %v4599 = vmul.f32 %v4593, %v128
    %v4600 = vmul.f32 %v4593, %v129
    %v4601 = vmul.f32 %v4593, %v130
    %v4602 = vadd.f32 %v4584, %v4594
    %v4603 = vadd.f32 %v4585, %v4595
    %v4604 = vadd.f32 %v4586, %v4596
    %v4605 = vadd.f32 %v4587, %v4597
    %v4606 = vadd.f32 %v4588, %v4598
    %v4607 = vadd.f32 %v4589, %v4599
    %v4608 = vadd.f32 %v4590, %v4600
    %v4609 = vadd.f32 %v4591, %v4601
    %s4610 = sld [smem:[#allocation3 + $0x3e]]
    %v4611 = vstv %s4610
    %v4612 = vmul.f32 %v4611, %v131
    %v4613 = vmul.f32 %v4611, %v132
    %v4614 = vmul.f32 %v4611, %v133
    %v4615 = vmul.f32 %v4611, %v134
    %v4616 = vmul.f32 %v4611, %v135
    %v4617 = vmul.f32 %v4611, %v136
    %v4618 = vmul.f32 %v4611, %v137
    %v4619 = vmul.f32 %v4611, %v138
    %v4620 = vadd.f32 %v4602, %v4612
    %v4621 = vadd.f32 %v4603, %v4613
    %v4622 = vadd.f32 %v4604, %v4614
    %v4623 = vadd.f32 %v4605, %v4615
    %v4624 = vadd.f32 %v4606, %v4616
    %v4625 = vadd.f32 %v4607, %v4617
    %v4626 = vadd.f32 %v4608, %v4618
    %v4627 = vadd.f32 %v4609, %v4619
    %s4628 = sld [smem:[#allocation5 + $0x6]]
    %v4629 = vstv %s4628
    %v4630 = vadd.f32 %v4620, %v4629
    %v4631 = vadd.f32 %v4621, %v4629
    %v4632 = vadd.f32 %v4622, %v4629
    %v4633 = vadd.f32 %v4623, %v4629
    %v4634 = vadd.f32 %v4624, %v4629
    %v4635 = vadd.f32 %v4625, %v4629
    %v4636 = vadd.f32 %v4626, %v4629
    %v4637 = vadd.f32 %v4627, %v4629
    %v4638 = vmax.f32 %v4630, 0.0
    %v4639 = vmax.f32 %v4631, 0.0
    %v4640 = vmax.f32 %v4632, 0.0
    %v4641 = vmax.f32 %v4633, 0.0
    %v4642 = vmax.f32 %v4634, 0.0
    %v4643 = vmax.f32 %v4635, 0.0
    %v4644 = vmax.f32 %v4636, 0.0
    %v4645 = vmax.f32 %v4637, 0.0
    %v4646 = vmul.f32 %v4475, %v55
    %v4647 = vmul.f32 %v4475, %v56
    %v4648 = vmul.f32 %v4475, %v57
    %v4649 = vmul.f32 %v4475, %v58
    %v4650 = vmul.f32 %v4475, %v59
    %v4651 = vmul.f32 %v4475, %v60
    %v4652 = vmul.f32 %v4475, %v61
    %v4653 = vmul.f32 %v4475, %v62
    %v4654 = vmul.f32 %v4485, %v63
    %v4655 = vmul.f32 %v4485, %v64
    %v4656 = vmul.f32 %v4485, %v65
    %v4657 = vmul.f32 %v4485, %v66
    %v4658 = vmul.f32 %v4485, %v67
    %v4659 = vmul.f32 %v4485, %v68
    %v4660 = vmul.f32 %v4485, %v69
    %v4661 = vmul.f32 %v4485, %v70
    %v4662 = vadd.f32 %v4646, %v4654
    %v4663 = vadd.f32 %v4647, %v4655
    %v4664 = vadd.f32 %v4648, %v4656
    %v4665 = vadd.f32 %v4649, %v4657
    %v4666 = vadd.f32 %v4650, %v4658
    %v4667 = vadd.f32 %v4651, %v4659
    %v4668 = vadd.f32 %v4652, %v4660
    %v4669 = vadd.f32 %v4653, %v4661
    %v4670 = vmul.f32 %v4503, %v71
    %v4671 = vmul.f32 %v4503, %v72
    %v4672 = vmul.f32 %v4503, %v73
    %v4673 = vmul.f32 %v4503, %v74
    %v4674 = vmul.f32 %v4503, %v75
    %v4675 = vmul.f32 %v4503, %v76
    %v4676 = vmul.f32 %v4503, %v77
    %v4677 = vmul.f32 %v4503, %v78
    %v4678 = vadd.f32 %v4662, %v4670
    %v4679 = vadd.f32 %v4663, %v4671
    %v4680 = vadd.f32 %v4664, %v4672
    %v4681 = vadd.f32 %v4665, %v4673
    %v4682 = vadd.f32 %v4666, %v4674
    %v4683 = vadd.f32 %v4667, %v4675
    %v4684 = vadd.f32 %v4668, %v4676
    %v4685 = vadd.f32 %v4669, %v4677
    %v4686 = vmul.f32 %v4521, %v89
    %v4687 = vmul.f32 %v4521, %v90
    %v4688 = vmul.f32 %v4521, %v91
    %v4689 = vmul.f32 %v4521, %v92
    %v4690 = vmul.f32 %v4521, %v93
    %v4691 = vmul.f32 %v4521, %v94
    %v4692 = vmul.f32 %v4521, %v95
    %v4693 = vmul.f32 %v4521, %v96
    %v4694 = vadd.f32 %v4678, %v4686
    %v4695 = vadd.f32 %v4679, %v4687
    %v4696 = vadd.f32 %v4680, %v4688
    %v4697 = vadd.f32 %v4681, %v4689
    %v4698 = vadd.f32 %v4682, %v4690
    %v4699 = vadd.f32 %v4683, %v4691
    %v4700 = vadd.f32 %v4684, %v4692
    %v4701 = vadd.f32 %v4685, %v4693
    %v4702 = vmul.f32 %v4539, %v97
    %v4703 = vmul.f32 %v4539, %v98
    %v4704 = vmul.f32 %v4539, %v99
    %v4705 = vmul.f32 %v4539, %v100
    %v4706 = vmul.f32 %v4539, %v101
    %v4707 = vmul.f32 %v4539, %v102
    %v4708 = vmul.f32 %v4539, %v103
    %v4709 = vmul.f32 %v4539, %v104
    %v4710 = vadd.f32 %v4694, %v4702
    %v4711 = vadd.f32 %v4695, %v4703
    %v4712 = vadd.f32 %v4696, %v4704
    %v4713 = vadd.f32 %v4697, %v4705
    %v4714 = vadd.f32 %v4698, %v4706
    %v4715 = vadd.f32 %v4699, %v4707
    %v4716 = vadd.f32 %v4700, %v4708
    %v4717 = vadd.f32 %v4701, %v4709
    %v4718 = vmul.f32 %v4557, %v105
    %v4719 = vmul.f32 %v4557, %v106
    %v4720 = vmul.f32 %v4557, %v107
    %v4721 = vmul.f32 %v4557, %v108
    %v4722 = vmul.f32 %v4557, %v109
    %v4723 = vmul.f32 %v4557, %v110
    %v4724 = vmul.f32 %v4557, %v111
    %v4725 = vmul.f32 %v4557, %v112
    %v4726 = vadd.f32 %v4710, %v4718
    %v4727 = vadd.f32 %v4711, %v4719
    %v4728 = vadd.f32 %v4712, %v4720
    %v4729 = vadd.f32 %v4713, %v4721
    %v4730 = vadd.f32 %v4714, %v4722
    %v4731 = vadd.f32 %v4715, %v4723
    %v4732 = vadd.f32 %v4716, %v4724
    %v4733 = vadd.f32 %v4717, %v4725
    %v4734 = vmul.f32 %v4575, %v123
    %v4735 = vmul.f32 %v4575, %v124
    %v4736 = vmul.f32 %v4575, %v125
    %v4737 = vmul.f32 %v4575, %v126
    %v4738 = vmul.f32 %v4575, %v127
    %v4739 = vmul.f32 %v4575, %v128
    %v4740 = vmul.f32 %v4575, %v129
    %v4741 = vmul.f32 %v4575, %v130
    %v4742 = vadd.f32 %v4726, %v4734
    %v4743 = vadd.f32 %v4727, %v4735
    %v4744 = vadd.f32 %v4728, %v4736
    %v4745 = vadd.f32 %v4729, %v4737
    %v4746 = vadd.f32 %v4730, %v4738
    %v4747 = vadd.f32 %v4731, %v4739
    %v4748 = vadd.f32 %v4732, %v4740
    %v4749 = vadd.f32 %v4733, %v4741
    %v4750 = vmul.f32 %v4593, %v131
    %v4751 = vmul.f32 %v4593, %v132
    %v4752 = vmul.f32 %v4593, %v133
    %v4753 = vmul.f32 %v4593, %v134
    %v4754 = vmul.f32 %v4593, %v135
    %v4755 = vmul.f32 %v4593, %v136
    %v4756 = vmul.f32 %v4593, %v137
    %v4757 = vmul.f32 %v4593, %v138
    %v4758 = vadd.f32 %v4742, %v4750
    %v4759 = vadd.f32 %v4743, %v4751
    %v4760 = vadd.f32 %v4744, %v4752
    %v4761 = vadd.f32 %v4745, %v4753
    %v4762 = vadd.f32 %v4746, %v4754
    %v4763 = vadd.f32 %v4747, %v4755
    %v4764 = vadd.f32 %v4748, %v4756
    %v4765 = vadd.f32 %v4749, %v4757
    %v4766 = vmul.f32 %v4611, %v139
    %v4767 = vmul.f32 %v4611, %v140
    %v4768 = vmul.f32 %v4611, %v141
    %v4769 = vmul.f32 %v4611, %v142
    %v4770 = vmul.f32 %v4611, %v143
    %v4771 = vmul.f32 %v4611, %v144
    %v4772 = vmul.f32 %v4611, %v145
    %v4773 = vmul.f32 %v4611, %v146
    %v4774 = vadd.f32 %v4758, %v4766
    %v4775 = vadd.f32 %v4759, %v4767
    %v4776 = vadd.f32 %v4760, %v4768
    %v4777 = vadd.f32 %v4761, %v4769
    %v4778 = vadd.f32 %v4762, %v4770
    %v4779 = vadd.f32 %v4763, %v4771
    %v4780 = vadd.f32 %v4764, %v4772
    %v4781 = vadd.f32 %v4765, %v4773
    %v4782 = vadd.f32 %v4774, %v4629
    %v4783 = vadd.f32 %v4775, %v4629
    %v4784 = vadd.f32 %v4776, %v4629
    %v4785 = vadd.f32 %v4777, %v4629
    %v4786 = vadd.f32 %v4778, %v4629
    %v4787 = vadd.f32 %v4779, %v4629
    %v4788 = vadd.f32 %v4780, %v4629
    %v4789 = vadd.f32 %v4781, %v4629
    %v4790 = vmax.f32 %v4782, 0.0
    %v4791 = vmax.f32 %v4783, 0.0
    %v4792 = vmax.f32 %v4784, 0.0
    %v4793 = vmax.f32 %v4785, 0.0
    %v4794 = vmax.f32 %v4786, 0.0
    %v4795 = vmax.f32 %v4787, 0.0
    %v4796 = vmax.f32 %v4788, 0.0
    %v4797 = vmax.f32 %v4789, 0.0
    %v4798 = vmax.f32 %v4638, %v4790
    %v4799 = vmax.f32 %v4639, %v4791
    %v4800 = vmax.f32 %v4640, %v4792
    %v4801 = vmax.f32 %v4641, %v4793
    %v4802 = vmax.f32 %v4642, %v4794
    %v4803 = vmax.f32 %v4643, %v4795
    %v4804 = vmax.f32 %v4644, %v4796
    %v4805 = vmax.f32 %v4645, %v4797
    %v4806 = vmul.f32 %v4475, %v80
    %v4807 = vmul.f32 %v4475, %v81
    %v4808 = vmul.f32 %v4475, %v82
    %v4809 = vmul.f32 %v4475, %v83
    %v4810 = vmul.f32 %v4475, %v84
    %v4811 = vmul.f32 %v4475, %v85
    %v4812 = vmul.f32 %v4475, %v86
    %v4813 = vmul.f32 %v4475, %v87
    %v4814 = vmul.f32 %v4485, %v89
    %v4815 = vmul.f32 %v4485, %v90
    %v4816 = vmul.f32 %v4485, %v91
    %v4817 = vmul.f32 %v4485, %v92
    %v4818 = vmul.f32 %v4485, %v93
    %v4819 = vmul.f32 %v4485, %v94
    %v4820 = vmul.f32 %v4485, %v95
    %v4821 = vmul.f32 %v4485, %v96
    %v4822 = vadd.f32 %v4806, %v4814
    %v4823 = vadd.f32 %v4807, %v4815
    %v4824 = vadd.f32 %v4808, %v4816
    %v4825 = vadd.f32 %v4809, %v4817
    %v4826 = vadd.f32 %v4810, %v4818
    %v4827 = vadd.f32 %v4811, %v4819
    %v4828 = vadd.f32 %v4812, %v4820
    %v4829 = vadd.f32 %v4813, %v4821
    %v4830 = vmul.f32 %v4503, %v97
    %v4831 = vmul.f32 %v4503, %v98
    %v4832 = vmul.f32 %v4503, %v99
    %v4833 = vmul.f32 %v4503, %v100
    %v4834 = vmul.f32 %v4503, %v101
    %v4835 = vmul.f32 %v4503, %v102
    %v4836 = vmul.f32 %v4503, %v103
    %v4837 = vmul.f32 %v4503, %v104
    %v4838 = vadd.f32 %v4822, %v4830
    %v4839 = vadd.f32 %v4823, %v4831
    %v4840 = vadd.f32 %v4824, %v4832
    %v4841 = vadd.f32 %v4825, %v4833
    %v4842 = vadd.f32 %v4826, %v4834
    %v4843 = vadd.f32 %v4827, %v4835
    %v4844 = vadd.f32 %v4828, %v4836
    %v4845 = vadd.f32 %v4829, %v4837
    %v4846 = vmul.f32 %v4521, %v114
    %v4847 = vmul.f32 %v4521, %v115
    %v4848 = vmul.f32 %v4521, %v116
    %v4849 = vmul.f32 %v4521, %v117
    %v4850 = vmul.f32 %v4521, %v118
    %v4851 = vmul.f32 %v4521, %v119
    %v4852 = vmul.f32 %v4521, %v120
    %v4853 = vmul.f32 %v4521, %v121
    %v4854 = vadd.f32 %v4838, %v4846
    %v4855 = vadd.f32 %v4839, %v4847
    %v4856 = vadd.f32 %v4840, %v4848
    %v4857 = vadd.f32 %v4841, %v4849
    %v4858 = vadd.f32 %v4842, %v4850
    %v4859 = vadd.f32 %v4843, %v4851
    %v4860 = vadd.f32 %v4844, %v4852
    %v4861 = vadd.f32 %v4845, %v4853
    %v4862 = vmul.f32 %v4539, %v123
    %v4863 = vmul.f32 %v4539, %v124
    %v4864 = vmul.f32 %v4539, %v125
    %v4865 = vmul.f32 %v4539, %v126
    %v4866 = vmul.f32 %v4539, %v127
    %v4867 = vmul.f32 %v4539, %v128
    %v4868 = vmul.f32 %v4539, %v129
    %v4869 = vmul.f32 %v4539, %v130
    %v4870 = vadd.f32 %v4854, %v4862
    %v4871 = vadd.f32 %v4855, %v4863
    %v4872 = vadd.f32 %v4856, %v4864
    %v4873 = vadd.f32 %v4857, %v4865
    %v4874 = vadd.f32 %v4858, %v4866
    %v4875 = vadd.f32 %v4859, %v4867
    %v4876 = vadd.f32 %v4860, %v4868
    %v4877 = vadd.f32 %v4861, %v4869
    %v4878 = vmul.f32 %v4557, %v131
    %v4879 = vmul.f32 %v4557, %v132
    %v4880 = vmul.f32 %v4557, %v133
    %v4881 = vmul.f32 %v4557, %v134
    %v4882 = vmul.f32 %v4557, %v135
    %v4883 = vmul.f32 %v4557, %v136
    %v4884 = vmul.f32 %v4557, %v137
    %v4885 = vmul.f32 %v4557, %v138
    %v4886 = vadd.f32 %v4870, %v4878
    %v4887 = vadd.f32 %v4871, %v4879
    %v4888 = vadd.f32 %v4872, %v4880
    %v4889 = vadd.f32 %v4873, %v4881
    %v4890 = vadd.f32 %v4874, %v4882
    %v4891 = vadd.f32 %v4875, %v4883
    %v4892 = vadd.f32 %v4876, %v4884
    %v4893 = vadd.f32 %v4877, %v4885
    %v4894 = vmul.f32 %v4575, %v148
    %v4895 = vmul.f32 %v4575, %v149
    %v4896 = vmul.f32 %v4575, %v150
    %v4897 = vmul.f32 %v4575, %v151
    %v4898 = vmul.f32 %v4575, %v152
    %v4899 = vmul.f32 %v4575, %v153
    %v4900 = vmul.f32 %v4575, %v154
    %v4901 = vmul.f32 %v4575, %v155
    %v4902 = vadd.f32 %v4886, %v4894
    %v4903 = vadd.f32 %v4887, %v4895
    %v4904 = vadd.f32 %v4888, %v4896
    %v4905 = vadd.f32 %v4889, %v4897
    %v4906 = vadd.f32 %v4890, %v4898
    %v4907 = vadd.f32 %v4891, %v4899
    %v4908 = vadd.f32 %v4892, %v4900
    %v4909 = vadd.f32 %v4893, %v4901
    %v4910 = vmul.f32 %v4593, %v157
    %v4911 = vmul.f32 %v4593, %v158
    %v4912 = vmul.f32 %v4593, %v159
    %v4913 = vmul.f32 %v4593, %v160
    %v4914 = vmul.f32 %v4593, %v161
    %v4915 = vmul.f32 %v4593, %v162
    %v4916 = vmul.f32 %v4593, %v163
    %v4917 = vmul.f32 %v4593, %v164
    %v4918 = vadd.f32 %v4902, %v4910
    %v4919 = vadd.f32 %v4903, %v4911
    %v4920 = vadd.f32 %v4904, %v4912
    %v4921 = vadd.f32 %v4905, %v4913
    %v4922 = vadd.f32 %v4906, %v4914
    %v4923 = vadd.f32 %v4907, %v4915
    %v4924 = vadd.f32 %v4908, %v4916
    %v4925 = vadd.f32 %v4909, %v4917
    %v4926 = vmul.f32 %v4611, %v165
    %v4927 = vmul.f32 %v4611, %v166
    %v4928 = vmul.f32 %v4611, %v167
    %v4929 = vmul.f32 %v4611, %v168
    %v4930 = vmul.f32 %v4611, %v169
    %v4931 = vmul.f32 %v4611, %v170
    %v4932 = vmul.f32 %v4611, %v171
    %v4933 = vmul.f32 %v4611, %v172
    %v4934 = vadd.f32 %v4918, %v4926
    %v4935 = vadd.f32 %v4919, %v4927
    %v4936 = vadd.f32 %v4920, %v4928
    %v4937 = vadd.f32 %v4921, %v4929
    %v4938 = vadd.f32 %v4922, %v4930
    %v4939 = vadd.f32 %v4923, %v4931
    %v4940 = vadd.f32 %v4924, %v4932
    %v4941 = vadd.f32 %v4925, %v4933
    %v4942 = vadd.f32 %v4934, %v4629
    %v4943 = vadd.f32 %v4935, %v4629
    %v4944 = vadd.f32 %v4936, %v4629
    %v4945 = vadd.f32 %v4937, %v4629
    %v4946 = vadd.f32 %v4938, %v4629
    %v4947 = vadd.f32 %v4939, %v4629
    %v4948 = vadd.f32 %v4940, %v4629
    %v4949 = vadd.f32 %v4941, %v4629
    %v4950 = vmax.f32 %v4942, 0.0
    %v4951 = vmax.f32 %v4943, 0.0
    %v4952 = vmax.f32 %v4944, 0.0
    %v4953 = vmax.f32 %v4945, 0.0
    %v4954 = vmax.f32 %v4946, 0.0
    %v4955 = vmax.f32 %v4947, 0.0
    %v4956 = vmax.f32 %v4948, 0.0
    %v4957 = vmax.f32 %v4949, 0.0
    %v4958 = vmax.f32 %v4798, %v4950
    %v4959 = vmax.f32 %v4799, %v4951
    %v4960 = vmax.f32 %v4800, %v4952
    %v4961 = vmax.f32 %v4801, %v4953
    %v4962 = vmax.f32 %v4802, %v4954
    %v4963 = vmax.f32 %v4803, %v4955
    %v4964 = vmax.f32 %v4804, %v4956
    %v4965 = vmax.f32 %v4805, %v4957
    %v4966 = vmul.f32 %v4475, %v89
    %v4967 = vmul.f32 %v4475, %v90
    %v4968 = vmul.f32 %v4475, %v91
    %v4969 = vmul.f32 %v4475, %v92
    %v4970 = vmul.f32 %v4475, %v93
    %v4971 = vmul.f32 %v4475, %v94
    %v4972 = vmul.f32 %v4475, %v95
    %v4973 = vmul.f32 %v4475, %v96
    %v4974 = vmul.f32 %v4485, %v97
    %v4975 = vmul.f32 %v4485, %v98
    %v4976 = vmul.f32 %v4485, %v99
    %v4977 = vmul.f32 %v4485, %v100
    %v4978 = vmul.f32 %v4485, %v101
    %v4979 = vmul.f32 %v4485, %v102
    %v4980 = vmul.f32 %v4485, %v103
    %v4981 = vmul.f32 %v4485, %v104
    %v4982 = vadd.f32 %v4966, %v4974
    %v4983 = vadd.f32 %v4967, %v4975
    %v4984 = vadd.f32 %v4968, %v4976
    %v4985 = vadd.f32 %v4969, %v4977
    %v4986 = vadd.f32 %v4970, %v4978
    %v4987 = vadd.f32 %v4971, %v4979
    %v4988 = vadd.f32 %v4972, %v4980
    %v4989 = vadd.f32 %v4973, %v4981
    %v4990 = vmul.f32 %v4503, %v105
    %v4991 = vmul.f32 %v4503, %v106
    %v4992 = vmul.f32 %v4503, %v107
    %v4993 = vmul.f32 %v4503, %v108
    %v4994 = vmul.f32 %v4503, %v109
    %v4995 = vmul.f32 %v4503, %v110
    %v4996 = vmul.f32 %v4503, %v111
    %v4997 = vmul.f32 %v4503, %v112
    %v4998 = vadd.f32 %v4982, %v4990
    %v4999 = vadd.f32 %v4983, %v4991
    %v5000 = vadd.f32 %v4984, %v4992
    %v5001 = vadd.f32 %v4985, %v4993
    %v5002 = vadd.f32 %v4986, %v4994
    %v5003 = vadd.f32 %v4987, %v4995
    %v5004 = vadd.f32 %v4988, %v4996
    %v5005 = vadd.f32 %v4989, %v4997
    %v5006 = vmul.f32 %v4521, %v123
    %v5007 = vmul.f32 %v4521, %v124
    %v5008 = vmul.f32 %v4521, %v125
    %v5009 = vmul.f32 %v4521, %v126
    %v5010 = vmul.f32 %v4521, %v127
    %v5011 = vmul.f32 %v4521, %v128
    %v5012 = vmul.f32 %v4521, %v129
    %v5013 = vmul.f32 %v4521, %v130
    %v5014 = vadd.f32 %v4998, %v5006
    %v5015 = vadd.f32 %v4999, %v5007
    %v5016 = vadd.f32 %v5000, %v5008
    %v5017 = vadd.f32 %v5001, %v5009
    %v5018 = vadd.f32 %v5002, %v5010
    %v5019 = vadd.f32 %v5003, %v5011
    %v5020 = vadd.f32 %v5004, %v5012
    %v5021 = vadd.f32 %v5005, %v5013
    %v5022 = vmul.f32 %v4539, %v131
    %v5023 = vmul.f32 %v4539, %v132
    %v5024 = vmul.f32 %v4539, %v133
    %v5025 = vmul.f32 %v4539, %v134
    %v5026 = vmul.f32 %v4539, %v135
    %v5027 = vmul.f32 %v4539, %v136
    %v5028 = vmul.f32 %v4539, %v137
    %v5029 = vmul.f32 %v4539, %v138
    %v5030 = vadd.f32 %v5014, %v5022
    %v5031 = vadd.f32 %v5015, %v5023
    %v5032 = vadd.f32 %v5016, %v5024
    %v5033 = vadd.f32 %v5017, %v5025
    %v5034 = vadd.f32 %v5018, %v5026
    %v5035 = vadd.f32 %v5019, %v5027
    %v5036 = vadd.f32 %v5020, %v5028
    %v5037 = vadd.f32 %v5021, %v5029
    %v5038 = vmul.f32 %v4557, %v139
    %v5039 = vmul.f32 %v4557, %v140
    %v5040 = vmul.f32 %v4557, %v141
    %v5041 = vmul.f32 %v4557, %v142
    %v5042 = vmul.f32 %v4557, %v143
    %v5043 = vmul.f32 %v4557, %v144
    %v5044 = vmul.f32 %v4557, %v145
    %v5045 = vmul.f32 %v4557, %v146
    %v5046 = vadd.f32 %v5030, %v5038
    %v5047 = vadd.f32 %v5031, %v5039
    %v5048 = vadd.f32 %v5032, %v5040
    %v5049 = vadd.f32 %v5033, %v5041
    %v5050 = vadd.f32 %v5034, %v5042
    %v5051 = vadd.f32 %v5035, %v5043
    %v5052 = vadd.f32 %v5036, %v5044
    %v5053 = vadd.f32 %v5037, %v5045
    %v5054 = vmul.f32 %v4575, %v157
    %v5055 = vmul.f32 %v4575, %v158
    %v5056 = vmul.f32 %v4575, %v159
    %v5057 = vmul.f32 %v4575, %v160
    %v5058 = vmul.f32 %v4575, %v161
    %v5059 = vmul.f32 %v4575, %v162
    %v5060 = vmul.f32 %v4575, %v163
    %v5061 = vmul.f32 %v4575, %v164
    %v5062 = vadd.f32 %v5046, %v5054
    %v5063 = vadd.f32 %v5047, %v5055
    %v5064 = vadd.f32 %v5048, %v5056
    %v5065 = vadd.f32 %v5049, %v5057
    %v5066 = vadd.f32 %v5050, %v5058
    %v5067 = vadd.f32 %v5051, %v5059
    %v5068 = vadd.f32 %v5052, %v5060
    %v5069 = vadd.f32 %v5053, %v5061
    %v5070 = vmul.f32 %v4593, %v165
    %v5071 = vmul.f32 %v4593, %v166
    %v5072 = vmul.f32 %v4593, %v167
    %v5073 = vmul.f32 %v4593, %v168
    %v5074 = vmul.f32 %v4593, %v169
    %v5075 = vmul.f32 %v4593, %v170
    %v5076 = vmul.f32 %v4593, %v171
    %v5077 = vmul.f32 %v4593, %v172
    %v5078 = vadd.f32 %v5062, %v5070
    %v5079 = vadd.f32 %v5063, %v5071
    %v5080 = vadd.f32 %v5064, %v5072
    %v5081 = vadd.f32 %v5065, %v5073
    %v5082 = vadd.f32 %v5066, %v5074
    %v5083 = vadd.f32 %v5067, %v5075
    %v5084 = vadd.f32 %v5068, %v5076
    %v5085 = vadd.f32 %v5069, %v5077
    %v5086 = vmul.f32 %v4611, %v173
    %v5087 = vmul.f32 %v4611, %v174
    %v5088 = vmul.f32 %v4611, %v175
    %v5089 = vmul.f32 %v4611, %v176
    %v5090 = vmul.f32 %v4611, %v177
    %v5091 = vmul.f32 %v4611, %v178
    %v5092 = vmul.f32 %v4611, %v179
    %v5093 = vmul.f32 %v4611, %v180
    %v5094 = vadd.f32 %v5078, %v5086
    %v5095 = vadd.f32 %v5079, %v5087
    %v5096 = vadd.f32 %v5080, %v5088
    %v5097 = vadd.f32 %v5081, %v5089
    %v5098 = vadd.f32 %v5082, %v5090
    %v5099 = vadd.f32 %v5083, %v5091
    %v5100 = vadd.f32 %v5084, %v5092
    %v5101 = vadd.f32 %v5085, %v5093
    %v5102 = vadd.f32 %v5094, %v4629
    %v5103 = vadd.f32 %v5095, %v4629
    %v5104 = vadd.f32 %v5096, %v4629
    %v5105 = vadd.f32 %v5097, %v4629
    %v5106 = vadd.f32 %v5098, %v4629
    %v5107 = vadd.f32 %v5099, %v4629
    %v5108 = vadd.f32 %v5100, %v4629
    %v5109 = vadd.f32 %v5101, %v4629
    %v5110 = vmax.f32 %v5102, 0.0
    %v5111 = vmax.f32 %v5103, 0.0
    %v5112 = vmax.f32 %v5104, 0.0
    %v5113 = vmax.f32 %v5105, 0.0
    %v5114 = vmax.f32 %v5106, 0.0
    %v5115 = vmax.f32 %v5107, 0.0
    %v5116 = vmax.f32 %v5108, 0.0
    %v5117 = vmax.f32 %v5109, 0.0
    %v5118 = vmax.f32 %v4958, %v5110
    %v5119 = vmax.f32 %v4959, %v5111
    %v5120 = vmax.f32 %v4960, %v5112
    %v5121 = vmax.f32 %v4961, %v5113
    %v5122 = vmax.f32 %v4962, %v5114
    %v5123 = vmax.f32 %v4963, %v5115
    %v5124 = vmax.f32 %v4964, %v5116
    %v5125 = vmax.f32 %v4965, %v5117
    %s5126 = scalar_lea.vmem %s1, 384
    %v5127 = vld [vmem:[%s5126] sm:$0xff]
    %v5128 = vld [vmem:[%s5126 + $0x8] sm:$0xff]
    %v5129 = vld [vmem:[%s5126 + $0x10] sm:$0xff]
    %v5130 = vld [vmem:[%s5126 + $0x18] sm:$0xff]
    %v5131 = vld [vmem:[%s5126 + $0x20] sm:$0xff]
    %v5132 = vld [vmem:[%s5126 + $0x28] sm:$0xff]
    %v5133 = vld [vmem:[%s5126 + $0x30] sm:$0xff]
    %v5134 = vld [vmem:[%s5126 + $0x38] sm:$0xff]
    %5136 = vset.pattern.permute.xlu0 0
    %5137 = vperm.xlu0 %5136, %v5127
    %v5138 = vpop.permute.xlu0 %5137
    %5141 = vset.pattern.permute.xlu0 0
    %5142 = vperm.xlu0 %5141, %v5128
    %v5143 = vpop.permute.xlu0 %5142
    %5146 = vset.pattern.permute.xlu0 0
    %5147 = vperm.xlu0 %5146, %v5129
    %v5148 = vpop.permute.xlu0 %5147
    %5151 = vset.pattern.permute.xlu0 0
    %5152 = vperm.xlu0 %5151, %v5130
    %v5153 = vpop.permute.xlu0 %5152
    %5156 = vset.pattern.permute.xlu0 0
    %5157 = vperm.xlu0 %5156, %v5131
    %v5158 = vpop.permute.xlu0 %5157
    %5161 = vset.pattern.permute.xlu0 0
    %5162 = vperm.xlu0 %5161, %v5132
    %v5163 = vpop.permute.xlu0 %5162
    %5166 = vset.pattern.permute.xlu0 0
    %5167 = vperm.xlu0 %5166, %v5133
    %v5168 = vpop.permute.xlu0 %5167
    %5171 = vset.pattern.permute.xlu0 0
    %5172 = vperm.xlu0 %5171, %v5134
    %v5173 = vpop.permute.xlu0 %5172
    %v5175 = vmul.f32 %v5118, %v5138
    %v5176 = vmul.f32 %v5119, %v5143
    %v5177 = vmul.f32 %v5120, %v5148
    %v5178 = vmul.f32 %v5121, %v5153
    %v5179 = vmul.f32 %v5122, %v5158
    %v5180 = vmul.f32 %v5123, %v5163
    %v5181 = vmul.f32 %v5124, %v5168
    %v5182 = vmul.f32 %v5125, %v5173
    %v5183 = vadd.f32 %v4466, %v5175
    %v5184 = vadd.f32 %v4467, %v5176
    %v5185 = vadd.f32 %v4468, %v5177
    %v5186 = vadd.f32 %v4469, %v5178
    %v5187 = vadd.f32 %v4470, %v5179
    %v5188 = vadd.f32 %v4471, %v5180
    %v5189 = vadd.f32 %v4472, %v5181
    %v5190 = vadd.f32 %v4473, %v5182
    %s5191 = sld [smem:[#allocation3 + $0x3f]]
    %v5192 = vstv %s5191
    %v5193 = vmul.f32 %v5192, %v46
    %v5194 = vmul.f32 %v5192, %v47
    %v5195 = vmul.f32 %v5192, %v48
    %v5196 = vmul.f32 %v5192, %v49
    %v5197 = vmul.f32 %v5192, %v50
    %v5198 = vmul.f32 %v5192, %v51
    %v5199 = vmul.f32 %v5192, %v52
    %v5200 = vmul.f32 %v5192, %v53
    %s5201 = sld [smem:[#allocation3 + $0x40]]
    %v5202 = vstv %s5201
    %v5203 = vmul.f32 %v5202, %v55
    %v5204 = vmul.f32 %v5202, %v56
    %v5205 = vmul.f32 %v5202, %v57
    %v5206 = vmul.f32 %v5202, %v58
    %v5207 = vmul.f32 %v5202, %v59
    %v5208 = vmul.f32 %v5202, %v60
    %v5209 = vmul.f32 %v5202, %v61
    %v5210 = vmul.f32 %v5202, %v62
    %v5211 = vadd.f32 %v5193, %v5203
    %v5212 = vadd.f32 %v5194, %v5204
    %v5213 = vadd.f32 %v5195, %v5205
    %v5214 = vadd.f32 %v5196, %v5206
    %v5215 = vadd.f32 %v5197, %v5207
    %v5216 = vadd.f32 %v5198, %v5208
    %v5217 = vadd.f32 %v5199, %v5209
    %v5218 = vadd.f32 %v5200, %v5210
    %s5219 = sld [smem:[#allocation3 + $0x41]]
    %v5220 = vstv %s5219
    %v5221 = vmul.f32 %v5220, %v63
    %v5222 = vmul.f32 %v5220, %v64
    %v5223 = vmul.f32 %v5220, %v65
    %v5224 = vmul.f32 %v5220, %v66
    %v5225 = vmul.f32 %v5220, %v67
    %v5226 = vmul.f32 %v5220, %v68
    %v5227 = vmul.f32 %v5220, %v69
    %v5228 = vmul.f32 %v5220, %v70
    %v5229 = vadd.f32 %v5211, %v5221
    %v5230 = vadd.f32 %v5212, %v5222
    %v5231 = vadd.f32 %v5213, %v5223
    %v5232 = vadd.f32 %v5214, %v5224
    %v5233 = vadd.f32 %v5215, %v5225
    %v5234 = vadd.f32 %v5216, %v5226
    %v5235 = vadd.f32 %v5217, %v5227
    %v5236 = vadd.f32 %v5218, %v5228
    %s5237 = sld [smem:[#allocation3 + $0x42]]
    %v5238 = vstv %s5237
    %v5239 = vmul.f32 %v5238, %v80
    %v5240 = vmul.f32 %v5238, %v81
    %v5241 = vmul.f32 %v5238, %v82
    %v5242 = vmul.f32 %v5238, %v83
    %v5243 = vmul.f32 %v5238, %v84
    %v5244 = vmul.f32 %v5238, %v85
    %v5245 = vmul.f32 %v5238, %v86
    %v5246 = vmul.f32 %v5238, %v87
    %v5247 = vadd.f32 %v5229, %v5239
    %v5248 = vadd.f32 %v5230, %v5240
    %v5249 = vadd.f32 %v5231, %v5241
    %v5250 = vadd.f32 %v5232, %v5242
    %v5251 = vadd.f32 %v5233, %v5243
    %v5252 = vadd.f32 %v5234, %v5244
    %v5253 = vadd.f32 %v5235, %v5245
    %v5254 = vadd.f32 %v5236, %v5246
    %s5255 = sld [smem:[#allocation3 + $0x43]]
    %v5256 = vstv %s5255
    %v5257 = vmul.f32 %v5256, %v89
    %v5258 = vmul.f32 %v5256, %v90
    %v5259 = vmul.f32 %v5256, %v91
    %v5260 = vmul.f32 %v5256, %v92
    %v5261 = vmul.f32 %v5256, %v93
    %v5262 = vmul.f32 %v5256, %v94
    %v5263 = vmul.f32 %v5256, %v95
    %v5264 = vmul.f32 %v5256, %v96
    %v5265 = vadd.f32 %v5247, %v5257
    %v5266 = vadd.f32 %v5248, %v5258
    %v5267 = vadd.f32 %v5249, %v5259
    %v5268 = vadd.f32 %v5250, %v5260
    %v5269 = vadd.f32 %v5251, %v5261
    %v5270 = vadd.f32 %v5252, %v5262
    %v5271 = vadd.f32 %v5253, %v5263
    %v5272 = vadd.f32 %v5254, %v5264
    %s5273 = sld [smem:[#allocation3 + $0x44]]
    %v5274 = vstv %s5273
    %v5275 = vmul.f32 %v5274, %v97
    %v5276 = vmul.f32 %v5274, %v98
    %v5277 = vmul.f32 %v5274, %v99
    %v5278 = vmul.f32 %v5274, %v100
    %v5279 = vmul.f32 %v5274, %v101
    %v5280 = vmul.f32 %v5274, %v102
    %v5281 = vmul.f32 %v5274, %v103
    %v5282 = vmul.f32 %v5274, %v104
    %v5283 = vadd.f32 %v5265, %v5275
    %v5284 = vadd.f32 %v5266, %v5276
    %v5285 = vadd.f32 %v5267, %v5277
    %v5286 = vadd.f32 %v5268, %v5278
    %v5287 = vadd.f32 %v5269, %v5279
    %v5288 = vadd.f32 %v5270, %v5280
    %v5289 = vadd.f32 %v5271, %v5281
    %v5290 = vadd.f32 %v5272, %v5282
    %s5291 = sld [smem:[#allocation3 + $0x45]]
    %v5292 = vstv %s5291
    %v5293 = vmul.f32 %v5292, %v114
    %v5294 = vmul.f32 %v5292, %v115
    %v5295 = vmul.f32 %v5292, %v116
    %v5296 = vmul.f32 %v5292, %v117
    %v5297 = vmul.f32 %v5292, %v118
    %v5298 = vmul.f32 %v5292, %v119
    %v5299 = vmul.f32 %v5292, %v120
    %v5300 = vmul.f32 %v5292, %v121
    %v5301 = vadd.f32 %v5283, %v5293
    %v5302 = vadd.f32 %v5284, %v5294
    %v5303 = vadd.f32 %v5285, %v5295
    %v5304 = vadd.f32 %v5286, %v5296
    %v5305 = vadd.f32 %v5287, %v5297
    %v5306 = vadd.f32 %v5288, %v5298
    %v5307 = vadd.f32 %v5289, %v5299
    %v5308 = vadd.f32 %v5290, %v5300
    %s5309 = sld [smem:[#allocation3 + $0x46]]
    %v5310 = vstv %s5309
    %v5311 = vmul.f32 %v5310, %v123
    %v5312 = vmul.f32 %v5310, %v124
    %v5313 = vmul.f32 %v5310, %v125
    %v5314 = vmul.f32 %v5310, %v126
    %v5315 = vmul.f32 %v5310, %v127
    %v5316 = vmul.f32 %v5310, %v128
    %v5317 = vmul.f32 %v5310, %v129
    %v5318 = vmul.f32 %v5310, %v130
    %v5319 = vadd.f32 %v5301, %v5311
    %v5320 = vadd.f32 %v5302, %v5312
    %v5321 = vadd.f32 %v5303, %v5313
    %v5322 = vadd.f32 %v5304, %v5314
    %v5323 = vadd.f32 %v5305, %v5315
    %v5324 = vadd.f32 %v5306, %v5316
    %v5325 = vadd.f32 %v5307, %v5317
    %v5326 = vadd.f32 %v5308, %v5318
    %s5327 = sld [smem:[#allocation3 + $0x47]]
    %v5328 = vstv %s5327
    %v5329 = vmul.f32 %v5328, %v131
    %v5330 = vmul.f32 %v5328, %v132
    %v5331 = vmul.f32 %v5328, %v133
    %v5332 = vmul.f32 %v5328, %v134
    %v5333 = vmul.f32 %v5328, %v135
    %v5334 = vmul.f32 %v5328, %v136
    %v5335 = vmul.f32 %v5328, %v137
    %v5336 = vmul.f32 %v5328, %v138
    %v5337 = vadd.f32 %v5319, %v5329
    %v5338 = vadd.f32 %v5320, %v5330
    %v5339 = vadd.f32 %v5321, %v5331
    %v5340 = vadd.f32 %v5322, %v5332
    %v5341 = vadd.f32 %v5323, %v5333
    %v5342 = vadd.f32 %v5324, %v5334
    %v5343 = vadd.f32 %v5325, %v5335
    %v5344 = vadd.f32 %v5326, %v5336
    %s5345 = sld [smem:[#allocation5 + $0x7]]
    %v5346 = vstv %s5345
    %v5347 = vadd.f32 %v5337, %v5346
    %v5348 = vadd.f32 %v5338, %v5346
    %v5349 = vadd.f32 %v5339, %v5346
    %v5350 = vadd.f32 %v5340, %v5346
    %v5351 = vadd.f32 %v5341, %v5346
    %v5352 = vadd.f32 %v5342, %v5346
    %v5353 = vadd.f32 %v5343, %v5346
    %v5354 = vadd.f32 %v5344, %v5346
    %v5355 = vmax.f32 %v5347, 0.0
    %v5356 = vmax.f32 %v5348, 0.0
    %v5357 = vmax.f32 %v5349, 0.0
    %v5358 = vmax.f32 %v5350, 0.0
    %v5359 = vmax.f32 %v5351, 0.0
    %v5360 = vmax.f32 %v5352, 0.0
    %v5361 = vmax.f32 %v5353, 0.0
    %v5362 = vmax.f32 %v5354, 0.0
    %v5363 = vmul.f32 %v5192, %v55
    %v5364 = vmul.f32 %v5192, %v56
    %v5365 = vmul.f32 %v5192, %v57
    %v5366 = vmul.f32 %v5192, %v58
    %v5367 = vmul.f32 %v5192, %v59
    %v5368 = vmul.f32 %v5192, %v60
    %v5369 = vmul.f32 %v5192, %v61
    %v5370 = vmul.f32 %v5192, %v62
    %v5371 = vmul.f32 %v5202, %v63
    %v5372 = vmul.f32 %v5202, %v64
    %v5373 = vmul.f32 %v5202, %v65
    %v5374 = vmul.f32 %v5202, %v66
    %v5375 = vmul.f32 %v5202, %v67
    %v5376 = vmul.f32 %v5202, %v68
    %v5377 = vmul.f32 %v5202, %v69
    %v5378 = vmul.f32 %v5202, %v70
    %v5379 = vadd.f32 %v5363, %v5371
    %v5380 = vadd.f32 %v5364, %v5372
    %v5381 = vadd.f32 %v5365, %v5373
    %v5382 = vadd.f32 %v5366, %v5374
    %v5383 = vadd.f32 %v5367, %v5375
    %v5384 = vadd.f32 %v5368, %v5376
    %v5385 = vadd.f32 %v5369, %v5377
    %v5386 = vadd.f32 %v5370, %v5378
    %v5387 = vmul.f32 %v5220, %v71
    %v5388 = vmul.f32 %v5220, %v72
    %v5389 = vmul.f32 %v5220, %v73
    %v5390 = vmul.f32 %v5220, %v74
    %v5391 = vmul.f32 %v5220, %v75
    %v5392 = vmul.f32 %v5220, %v76
    %v5393 = vmul.f32 %v5220, %v77
    %v5394 = vmul.f32 %v5220, %v78
    %v5395 = vadd.f32 %v5379, %v5387
    %v5396 = vadd.f32 %v5380, %v5388
    %v5397 = vadd.f32 %v5381, %v5389
    %v5398 = vadd.f32 %v5382, %v5390
    %v5399 = vadd.f32 %v5383, %v5391
    %v5400 = vadd.f32 %v5384, %v5392
    %v5401 = vadd.f32 %v5385, %v5393
    %v5402 = vadd.f32 %v5386, %v5394
    %v5403 = vmul.f32 %v5238, %v89
    %v5404 = vmul.f32 %v5238, %v90
    %v5405 = vmul.f32 %v5238, %v91
    %v5406 = vmul.f32 %v5238, %v92
    %v5407 = vmul.f32 %v5238, %v93
    %v5408 = vmul.f32 %v5238, %v94
    %v5409 = vmul.f32 %v5238, %v95
    %v5410 = vmul.f32 %v5238, %v96
    %v5411 = vadd.f32 %v5395, %v5403
    %v5412 = vadd.f32 %v5396, %v5404
    %v5413 = vadd.f32 %v5397, %v5405
    %v5414 = vadd.f32 %v5398, %v5406
    %v5415 = vadd.f32 %v5399, %v5407
    %v5416 = vadd.f32 %v5400, %v5408
    %v5417 = vadd.f32 %v5401, %v5409
    %v5418 = vadd.f32 %v5402, %v5410
    %v5419 = vmul.f32 %v5256, %v97
    %v5420 = vmul.f32 %v5256, %v98
    %v5421 = vmul.f32 %v5256, %v99
    %v5422 = vmul.f32 %v5256, %v100
    %v5423 = vmul.f32 %v5256, %v101
    %v5424 = vmul.f32 %v5256, %v102
    %v5425 = vmul.f32 %v5256, %v103
    %v5426 = vmul.f32 %v5256, %v104
    %v5427 = vadd.f32 %v5411, %v5419
    %v5428 = vadd.f32 %v5412, %v5420
    %v5429 = vadd.f32 %v5413, %v5421
    %v5430 = vadd.f32 %v5414, %v5422
    %v5431 = vadd.f32 %v5415, %v5423
    %v5432 = vadd.f32 %v5416, %v5424
    %v5433 = vadd.f32 %v5417, %v5425
    %v5434 = vadd.f32 %v5418, %v5426
    %v5435 = vmul.f32 %v5274, %v105
    %v5436 = vmul.f32 %v5274, %v106
    %v5437 = vmul.f32 %v5274, %v107
    %v5438 = vmul.f32 %v5274, %v108
    %v5439 = vmul.f32 %v5274, %v109
    %v5440 = vmul.f32 %v5274, %v110
    %v5441 = vmul.f32 %v5274, %v111
    %v5442 = vmul.f32 %v5274, %v112
    %v5443 = vadd.f32 %v5427, %v5435
    %v5444 = vadd.f32 %v5428, %v5436
    %v5445 = vadd.f32 %v5429, %v5437
    %v5446 = vadd.f32 %v5430, %v5438
    %v5447 = vadd.f32 %v5431, %v5439
    %v5448 = vadd.f32 %v5432, %v5440
    %v5449 = vadd.f32 %v5433, %v5441
    %v5450 = vadd.f32 %v5434, %v5442
    %v5451 = vmul.f32 %v5292, %v123
    %v5452 = vmul.f32 %v5292, %v124
    %v5453 = vmul.f32 %v5292, %v125
    %v5454 = vmul.f32 %v5292, %v126
    %v5455 = vmul.f32 %v5292, %v127
    %v5456 = vmul.f32 %v5292, %v128
    %v5457 = vmul.f32 %v5292, %v129
    %v5458 = vmul.f32 %v5292, %v130
    %v5459 = vadd.f32 %v5443, %v5451
    %v5460 = vadd.f32 %v5444, %v5452
    %v5461 = vadd.f32 %v5445, %v5453
    %v5462 = vadd.f32 %v5446, %v5454
    %v5463 = vadd.f32 %v5447, %v5455
    %v5464 = vadd.f32 %v5448, %v5456
    %v5465 = vadd.f32 %v5449, %v5457
    %v5466 = vadd.f32 %v5450, %v5458
    %v5467 = vmul.f32 %v5310, %v131
    %v5468 = vmul.f32 %v5310, %v132
    %v5469 = vmul.f32 %v5310, %v133
    %v5470 = vmul.f32 %v5310, %v134
    %v5471 = vmul.f32 %v5310, %v135
    %v5472 = vmul.f32 %v5310, %v136
    %v5473 = vmul.f32 %v5310, %v137
    %v5474 = vmul.f32 %v5310, %v138
    %v5475 = vadd.f32 %v5459, %v5467
    %v5476 = vadd.f32 %v5460, %v5468
    %v5477 = vadd.f32 %v5461, %v5469
    %v5478 = vadd.f32 %v5462, %v5470
    %v5479 = vadd.f32 %v5463, %v5471
    %v5480 = vadd.f32 %v5464, %v5472
    %v5481 = vadd.f32 %v5465, %v5473
    %v5482 = vadd.f32 %v5466, %v5474
    %v5483 = vmul.f32 %v5328, %v139
    %v5484 = vmul.f32 %v5328, %v140
    %v5485 = vmul.f32 %v5328, %v141
    %v5486 = vmul.f32 %v5328, %v142
    %v5487 = vmul.f32 %v5328, %v143
    %v5488 = vmul.f32 %v5328, %v144
    %v5489 = vmul.f32 %v5328, %v145
    %v5490 = vmul.f32 %v5328, %v146
    %v5491 = vadd.f32 %v5475, %v5483
    %v5492 = vadd.f32 %v5476, %v5484
    %v5493 = vadd.f32 %v5477, %v5485
    %v5494 = vadd.f32 %v5478, %v5486
    %v5495 = vadd.f32 %v5479, %v5487
    %v5496 = vadd.f32 %v5480, %v5488
    %v5497 = vadd.f32 %v5481, %v5489
    %v5498 = vadd.f32 %v5482, %v5490
    %v5499 = vadd.f32 %v5491, %v5346
    %v5500 = vadd.f32 %v5492, %v5346
    %v5501 = vadd.f32 %v5493, %v5346
    %v5502 = vadd.f32 %v5494, %v5346
    %v5503 = vadd.f32 %v5495, %v5346
    %v5504 = vadd.f32 %v5496, %v5346
    %v5505 = vadd.f32 %v5497, %v5346
    %v5506 = vadd.f32 %v5498, %v5346
    %v5507 = vmax.f32 %v5499, 0.0
    %v5508 = vmax.f32 %v5500, 0.0
    %v5509 = vmax.f32 %v5501, 0.0
    %v5510 = vmax.f32 %v5502, 0.0
    %v5511 = vmax.f32 %v5503, 0.0
    %v5512 = vmax.f32 %v5504, 0.0
    %v5513 = vmax.f32 %v5505, 0.0
    %v5514 = vmax.f32 %v5506, 0.0
    %v5515 = vmax.f32 %v5355, %v5507
    %v5516 = vmax.f32 %v5356, %v5508
    %v5517 = vmax.f32 %v5357, %v5509
    %v5518 = vmax.f32 %v5358, %v5510
    %v5519 = vmax.f32 %v5359, %v5511
    %v5520 = vmax.f32 %v5360, %v5512
    %v5521 = vmax.f32 %v5361, %v5513
    %v5522 = vmax.f32 %v5362, %v5514
    %v5523 = vmul.f32 %v5192, %v80
    %v5524 = vmul.f32 %v5192, %v81
    %v5525 = vmul.f32 %v5192, %v82
    %v5526 = vmul.f32 %v5192, %v83
    %v5527 = vmul.f32 %v5192, %v84
    %v5528 = vmul.f32 %v5192, %v85
    %v5529 = vmul.f32 %v5192, %v86
    %v5530 = vmul.f32 %v5192, %v87
    %v5531 = vmul.f32 %v5202, %v89
    %v5532 = vmul.f32 %v5202, %v90
    %v5533 = vmul.f32 %v5202, %v91
    %v5534 = vmul.f32 %v5202, %v92
    %v5535 = vmul.f32 %v5202, %v93
    %v5536 = vmul.f32 %v5202, %v94
    %v5537 = vmul.f32 %v5202, %v95
    %v5538 = vmul.f32 %v5202, %v96
    %v5539 = vadd.f32 %v5523, %v5531
    %v5540 = vadd.f32 %v5524, %v5532
    %v5541 = vadd.f32 %v5525, %v5533
    %v5542 = vadd.f32 %v5526, %v5534
    %v5543 = vadd.f32 %v5527, %v5535
    %v5544 = vadd.f32 %v5528, %v5536
    %v5545 = vadd.f32 %v5529, %v5537
    %v5546 = vadd.f32 %v5530, %v5538
    %v5547 = vmul.f32 %v5220, %v97
    %v5548 = vmul.f32 %v5220, %v98
    %v5549 = vmul.f32 %v5220, %v99
    %v5550 = vmul.f32 %v5220, %v100
    %v5551 = vmul.f32 %v5220, %v101
    %v5552 = vmul.f32 %v5220, %v102
    %v5553 = vmul.f32 %v5220, %v103
    %v5554 = vmul.f32 %v5220, %v104
    %v5555 = vadd.f32 %v5539, %v5547
    %v5556 = vadd.f32 %v5540, %v5548
    %v5557 = vadd.f32 %v5541, %v5549
    %v5558 = vadd.f32 %v5542, %v5550
    %v5559 = vadd.f32 %v5543, %v5551
    %v5560 = vadd.f32 %v5544, %v5552
    %v5561 = vadd.f32 %v5545, %v5553
    %v5562 = vadd.f32 %v5546, %v5554
    %v5563 = vmul.f32 %v5238, %v114
    %v5564 = vmul.f32 %v5238, %v115
    %v5565 = vmul.f32 %v5238, %v116
    %v5566 = vmul.f32 %v5238, %v117
    %v5567 = vmul.f32 %v5238, %v118
    %v5568 = vmul.f32 %v5238, %v119
    %v5569 = vmul.f32 %v5238, %v120
    %v5570 = vmul.f32 %v5238, %v121
    %v5571 = vadd.f32 %v5555, %v5563
    %v5572 = vadd.f32 %v5556, %v5564
    %v5573 = vadd.f32 %v5557, %v5565
    %v5574 = vadd.f32 %v5558, %v5566
    %v5575 = vadd.f32 %v5559, %v5567
    %v5576 = vadd.f32 %v5560, %v5568
    %v5577 = vadd.f32 %v5561, %v5569
    %v5578 = vadd.f32 %v5562, %v5570
    %v5579 = vmul.f32 %v5256, %v123
    %v5580 = vmul.f32 %v5256, %v124
    %v5581 = vmul.f32 %v5256, %v125
    %v5582 = vmul.f32 %v5256, %v126
    %v5583 = vmul.f32 %v5256, %v127
    %v5584 = vmul.f32 %v5256, %v128
    %v5585 = vmul.f32 %v5256, %v129
    %v5586 = vmul.f32 %v5256, %v130
    %v5587 = vadd.f32 %v5571, %v5579
    %v5588 = vadd.f32 %v5572, %v5580
    %v5589 = vadd.f32 %v5573, %v5581
    %v5590 = vadd.f32 %v5574, %v5582
    %v5591 = vadd.f32 %v5575, %v5583
    %v5592 = vadd.f32 %v5576, %v5584
    %v5593 = vadd.f32 %v5577, %v5585
    %v5594 = vadd.f32 %v5578, %v5586
    %v5595 = vmul.f32 %v5274, %v131
    %v5596 = vmul.f32 %v5274, %v132
    %v5597 = vmul.f32 %v5274, %v133
    %v5598 = vmul.f32 %v5274, %v134
    %v5599 = vmul.f32 %v5274, %v135
    %v5600 = vmul.f32 %v5274, %v136
    %v5601 = vmul.f32 %v5274, %v137
    %v5602 = vmul.f32 %v5274, %v138
    %v5603 = vadd.f32 %v5587, %v5595
    %v5604 = vadd.f32 %v5588, %v5596
    %v5605 = vadd.f32 %v5589, %v5597
    %v5606 = vadd.f32 %v5590, %v5598
    %v5607 = vadd.f32 %v5591, %v5599
    %v5608 = vadd.f32 %v5592, %v5600
    %v5609 = vadd.f32 %v5593, %v5601
    %v5610 = vadd.f32 %v5594, %v5602
    %v5611 = vmul.f32 %v5292, %v148
    %v5612 = vmul.f32 %v5292, %v149
    %v5613 = vmul.f32 %v5292, %v150
    %v5614 = vmul.f32 %v5292, %v151
    %v5615 = vmul.f32 %v5292, %v152
    %v5616 = vmul.f32 %v5292, %v153
    %v5617 = vmul.f32 %v5292, %v154
    %v5618 = vmul.f32 %v5292, %v155
    %v5619 = vadd.f32 %v5603, %v5611
    %v5620 = vadd.f32 %v5604, %v5612
    %v5621 = vadd.f32 %v5605, %v5613
    %v5622 = vadd.f32 %v5606, %v5614
    %v5623 = vadd.f32 %v5607, %v5615
    %v5624 = vadd.f32 %v5608, %v5616
    %v5625 = vadd.f32 %v5609, %v5617
    %v5626 = vadd.f32 %v5610, %v5618
    %v5627 = vmul.f32 %v5310, %v157
    %v5628 = vmul.f32 %v5310, %v158
    %v5629 = vmul.f32 %v5310, %v159
    %v5630 = vmul.f32 %v5310, %v160
    %v5631 = vmul.f32 %v5310, %v161
    %v5632 = vmul.f32 %v5310, %v162
    %v5633 = vmul.f32 %v5310, %v163
    %v5634 = vmul.f32 %v5310, %v164
    %v5635 = vadd.f32 %v5619, %v5627
    %v5636 = vadd.f32 %v5620, %v5628
    %v5637 = vadd.f32 %v5621, %v5629
    %v5638 = vadd.f32 %v5622, %v5630
    %v5639 = vadd.f32 %v5623, %v5631
    %v5640 = vadd.f32 %v5624, %v5632
    %v5641 = vadd.f32 %v5625, %v5633
    %v5642 = vadd.f32 %v5626, %v5634
    %v5643 = vmul.f32 %v5328, %v165
    %v5644 = vmul.f32 %v5328, %v166
    %v5645 = vmul.f32 %v5328, %v167
    %v5646 = vmul.f32 %v5328, %v168
    %v5647 = vmul.f32 %v5328, %v169
    %v5648 = vmul.f32 %v5328, %v170
    %v5649 = vmul.f32 %v5328, %v171
    %v5650 = vmul.f32 %v5328, %v172
    %v5651 = vadd.f32 %v5635, %v5643
    %v5652 = vadd.f32 %v5636, %v5644
    %v5653 = vadd.f32 %v5637, %v5645
    %v5654 = vadd.f32 %v5638, %v5646
    %v5655 = vadd.f32 %v5639, %v5647
    %v5656 = vadd.f32 %v5640, %v5648
    %v5657 = vadd.f32 %v5641, %v5649
    %v5658 = vadd.f32 %v5642, %v5650
    %v5659 = vadd.f32 %v5651, %v5346
    %v5660 = vadd.f32 %v5652, %v5346
    %v5661 = vadd.f32 %v5653, %v5346
    %v5662 = vadd.f32 %v5654, %v5346
    %v5663 = vadd.f32 %v5655, %v5346
    %v5664 = vadd.f32 %v5656, %v5346
    %v5665 = vadd.f32 %v5657, %v5346
    %v5666 = vadd.f32 %v5658, %v5346
    %v5667 = vmax.f32 %v5659, 0.0
    %v5668 = vmax.f32 %v5660, 0.0
    %v5669 = vmax.f32 %v5661, 0.0
    %v5670 = vmax.f32 %v5662, 0.0
    %v5671 = vmax.f32 %v5663, 0.0
    %v5672 = vmax.f32 %v5664, 0.0
    %v5673 = vmax.f32 %v5665, 0.0
    %v5674 = vmax.f32 %v5666, 0.0
    %v5675 = vmax.f32 %v5515, %v5667
    %v5676 = vmax.f32 %v5516, %v5668
    %v5677 = vmax.f32 %v5517, %v5669
    %v5678 = vmax.f32 %v5518, %v5670
    %v5679 = vmax.f32 %v5519, %v5671
    %v5680 = vmax.f32 %v5520, %v5672
    %v5681 = vmax.f32 %v5521, %v5673
    %v5682 = vmax.f32 %v5522, %v5674
    %v5683 = vmul.f32 %v5192, %v89
    %v5684 = vmul.f32 %v5192, %v90
    %v5685 = vmul.f32 %v5192, %v91
    %v5686 = vmul.f32 %v5192, %v92
    %v5687 = vmul.f32 %v5192, %v93
    %v5688 = vmul.f32 %v5192, %v94
    %v5689 = vmul.f32 %v5192, %v95
    %v5690 = vmul.f32 %v5192, %v96
    %v5691 = vmul.f32 %v5202, %v97
    %v5692 = vmul.f32 %v5202, %v98
    %v5693 = vmul.f32 %v5202, %v99
    %v5694 = vmul.f32 %v5202, %v100
    %v5695 = vmul.f32 %v5202, %v101
    %v5696 = vmul.f32 %v5202, %v102
    %v5697 = vmul.f32 %v5202, %v103
    %v5698 = vmul.f32 %v5202, %v104
    %v5699 = vadd.f32 %v5683, %v5691
    %v5700 = vadd.f32 %v5684, %v5692
    %v5701 = vadd.f32 %v5685, %v5693
    %v5702 = vadd.f32 %v5686, %v5694
    %v5703 = vadd.f32 %v5687, %v5695
    %v5704 = vadd.f32 %v5688, %v5696
    %v5705 = vadd.f32 %v5689, %v5697
    %v5706 = vadd.f32 %v5690, %v5698
    %v5707 = vmul.f32 %v5220, %v105
    %v5708 = vmul.f32 %v5220, %v106
    %v5709 = vmul.f32 %v5220, %v107
    %v5710 = vmul.f32 %v5220, %v108
    %v5711 = vmul.f32 %v5220, %v109
    %v5712 = vmul.f32 %v5220, %v110
    %v5713 = vmul.f32 %v5220, %v111
    %v5714 = vmul.f32 %v5220, %v112
    %v5715 = vadd.f32 %v5699, %v5707
    %v5716 = vadd.f32 %v5700, %v5708
    %v5717 = vadd.f32 %v5701, %v5709
    %v5718 = vadd.f32 %v5702, %v5710
    %v5719 = vadd.f32 %v5703, %v5711
    %v5720 = vadd.f32 %v5704, %v5712
    %v5721 = vadd.f32 %v5705, %v5713
    %v5722 = vadd.f32 %v5706, %v5714
    %v5723 = vmul.f32 %v5238, %v123
    %v5724 = vmul.f32 %v5238, %v124
    %v5725 = vmul.f32 %v5238, %v125
    %v5726 = vmul.f32 %v5238, %v126
    %v5727 = vmul.f32 %v5238, %v127
    %v5728 = vmul.f32 %v5238, %v128
    %v5729 = vmul.f32 %v5238, %v129
    %v5730 = vmul.f32 %v5238, %v130
    %v5731 = vadd.f32 %v5715, %v5723
    %v5732 = vadd.f32 %v5716, %v5724
    %v5733 = vadd.f32 %v5717, %v5725
    %v5734 = vadd.f32 %v5718, %v5726
    %v5735 = vadd.f32 %v5719, %v5727
    %v5736 = vadd.f32 %v5720, %v5728
    %v5737 = vadd.f32 %v5721, %v5729
    %v5738 = vadd.f32 %v5722, %v5730
    %v5739 = vmul.f32 %v5256, %v131
    %v5740 = vmul.f32 %v5256, %v132
    %v5741 = vmul.f32 %v5256, %v133
    %v5742 = vmul.f32 %v5256, %v134
    %v5743 = vmul.f32 %v5256, %v135
    %v5744 = vmul.f32 %v5256, %v136
    %v5745 = vmul.f32 %v5256, %v137
    %v5746 = vmul.f32 %v5256, %v138
    %v5747 = vadd.f32 %v5731, %v5739
    %v5748 = vadd.f32 %v5732, %v5740
    %v5749 = vadd.f32 %v5733, %v5741
    %v5750 = vadd.f32 %v5734, %v5742
    %v5751 = vadd.f32 %v5735, %v5743
    %v5752 = vadd.f32 %v5736, %v5744
    %v5753 = vadd.f32 %v5737, %v5745
    %v5754 = vadd.f32 %v5738, %v5746
    %v5755 = vmul.f32 %v5274, %v139
    %v5756 = vmul.f32 %v5274, %v140
    %v5757 = vmul.f32 %v5274, %v141
    %v5758 = vmul.f32 %v5274, %v142
    %v5759 = vmul.f32 %v5274, %v143
    %v5760 = vmul.f32 %v5274, %v144
    %v5761 = vmul.f32 %v5274, %v145
    %v5762 = vmul.f32 %v5274, %v146
    %v5763 = vadd.f32 %v5747, %v5755
    %v5764 = vadd.f32 %v5748, %v5756
    %v5765 = vadd.f32 %v5749, %v5757
    %v5766 = vadd.f32 %v5750, %v5758
    %v5767 = vadd.f32 %v5751, %v5759
    %v5768 = vadd.f32 %v5752, %v5760
    %v5769 = vadd.f32 %v5753, %v5761
    %v5770 = vadd.f32 %v5754, %v5762
    %v5771 = vmul.f32 %v5292, %v157
    %v5772 = vmul.f32 %v5292, %v158
    %v5773 = vmul.f32 %v5292, %v159
    %v5774 = vmul.f32 %v5292, %v160
    %v5775 = vmul.f32 %v5292, %v161
    %v5776 = vmul.f32 %v5292, %v162
    %v5777 = vmul.f32 %v5292, %v163
    %v5778 = vmul.f32 %v5292, %v164
    %v5779 = vadd.f32 %v5763, %v5771
    %v5780 = vadd.f32 %v5764, %v5772
    %v5781 = vadd.f32 %v5765, %v5773
    %v5782 = vadd.f32 %v5766, %v5774
    %v5783 = vadd.f32 %v5767, %v5775
    %v5784 = vadd.f32 %v5768, %v5776
    %v5785 = vadd.f32 %v5769, %v5777
    %v5786 = vadd.f32 %v5770, %v5778
    %v5787 = vmul.f32 %v5310, %v165
    %v5788 = vmul.f32 %v5310, %v166
    %v5789 = vmul.f32 %v5310, %v167
    %v5790 = vmul.f32 %v5310, %v168
    %v5791 = vmul.f32 %v5310, %v169
    %v5792 = vmul.f32 %v5310, %v170
    %v5793 = vmul.f32 %v5310, %v171
    %v5794 = vmul.f32 %v5310, %v172
    %v5795 = vadd.f32 %v5779, %v5787
    %v5796 = vadd.f32 %v5780, %v5788
    %v5797 = vadd.f32 %v5781, %v5789
    %v5798 = vadd.f32 %v5782, %v5790
    %v5799 = vadd.f32 %v5783, %v5791
    %v5800 = vadd.f32 %v5784, %v5792
    %v5801 = vadd.f32 %v5785, %v5793
    %v5802 = vadd.f32 %v5786, %v5794
    %v5803 = vmul.f32 %v5328, %v173
    %v5804 = vmul.f32 %v5328, %v174
    %v5805 = vmul.f32 %v5328, %v175
    %v5806 = vmul.f32 %v5328, %v176
    %v5807 = vmul.f32 %v5328, %v177
    %v5808 = vmul.f32 %v5328, %v178
    %v5809 = vmul.f32 %v5328, %v179
    %v5810 = vmul.f32 %v5328, %v180
    %v5811 = vadd.f32 %v5795, %v5803
    %v5812 = vadd.f32 %v5796, %v5804
    %v5813 = vadd.f32 %v5797, %v5805
    %v5814 = vadd.f32 %v5798, %v5806
    %v5815 = vadd.f32 %v5799, %v5807
    %v5816 = vadd.f32 %v5800, %v5808
    %v5817 = vadd.f32 %v5801, %v5809
    %v5818 = vadd.f32 %v5802, %v5810
    %v5819 = vadd.f32 %v5811, %v5346
    %v5820 = vadd.f32 %v5812, %v5346
    %v5821 = vadd.f32 %v5813, %v5346
    %v5822 = vadd.f32 %v5814, %v5346
    %v5823 = vadd.f32 %v5815, %v5346
    %v5824 = vadd.f32 %v5816, %v5346
    %v5825 = vadd.f32 %v5817, %v5346
    %v5826 = vadd.f32 %v5818, %v5346
    %v5827 = vmax.f32 %v5819, 0.0
    %v5828 = vmax.f32 %v5820, 0.0
    %v5829 = vmax.f32 %v5821, 0.0
    %v5830 = vmax.f32 %v5822, 0.0
    %v5831 = vmax.f32 %v5823, 0.0
    %v5832 = vmax.f32 %v5824, 0.0
    %v5833 = vmax.f32 %v5825, 0.0
    %v5834 = vmax.f32 %v5826, 0.0
    %v5835 = vmax.f32 %v5675, %v5827
    %v5836 = vmax.f32 %v5676, %v5828
    %v5837 = vmax.f32 %v5677, %v5829
    %v5838 = vmax.f32 %v5678, %v5830
    %v5839 = vmax.f32 %v5679, %v5831
    %v5840 = vmax.f32 %v5680, %v5832
    %v5841 = vmax.f32 %v5681, %v5833
    %v5842 = vmax.f32 %v5682, %v5834
    %s5843 = scalar_lea.vmem %s1, 448
    %v5844 = vld [vmem:[%s5843] sm:$0xff]
    %v5845 = vld [vmem:[%s5843 + $0x8] sm:$0xff]
    %v5846 = vld [vmem:[%s5843 + $0x10] sm:$0xff]
    %v5847 = vld [vmem:[%s5843 + $0x18] sm:$0xff]
    %v5848 = vld [vmem:[%s5843 + $0x20] sm:$0xff]
    %v5849 = vld [vmem:[%s5843 + $0x28] sm:$0xff]
    %v5850 = vld [vmem:[%s5843 + $0x30] sm:$0xff]
    %v5851 = vld [vmem:[%s5843 + $0x38] sm:$0xff]
    %5853 = vset.pattern.permute.xlu0 0
    %5854 = vperm.xlu0 %5853, %v5844
    %v5855 = vpop.permute.xlu0 %5854
    %5858 = vset.pattern.permute.xlu0 0
    %5859 = vperm.xlu0 %5858, %v5845
    %v5860 = vpop.permute.xlu0 %5859
    %5863 = vset.pattern.permute.xlu0 0
    %5864 = vperm.xlu0 %5863, %v5846
    %v5865 = vpop.permute.xlu0 %5864
    %5868 = vset.pattern.permute.xlu0 0
    %5869 = vperm.xlu0 %5868, %v5847
    %v5870 = vpop.permute.xlu0 %5869
    %5873 = vset.pattern.permute.xlu0 0
    %5874 = vperm.xlu0 %5873, %v5848
    %v5875 = vpop.permute.xlu0 %5874
    %5878 = vset.pattern.permute.xlu0 0
    %5879 = vperm.xlu0 %5878, %v5849
    %v5880 = vpop.permute.xlu0 %5879
    %5883 = vset.pattern.permute.xlu0 0
    %5884 = vperm.xlu0 %5883, %v5850
    %v5885 = vpop.permute.xlu0 %5884
    %5888 = vset.pattern.permute.xlu0 0
    %5889 = vperm.xlu0 %5888, %v5851
    %v5890 = vpop.permute.xlu0 %5889
    %v5892 = vmul.f32 %v5835, %v5855
    %v5893 = vmul.f32 %v5836, %v5860
    %v5894 = vmul.f32 %v5837, %v5865
    %v5895 = vmul.f32 %v5838, %v5870
    %v5896 = vmul.f32 %v5839, %v5875
    %v5897 = vmul.f32 %v5840, %v5880
    %v5898 = vmul.f32 %v5841, %v5885
    %v5899 = vmul.f32 %v5842, %v5890
    %v5900 = vadd.f32 %v5183, %v5892
    %v5901 = vadd.f32 %v5184, %v5893
    %v5902 = vadd.f32 %v5185, %v5894
    %v5903 = vadd.f32 %v5186, %v5895
    %v5904 = vadd.f32 %v5187, %v5896
    %v5905 = vadd.f32 %v5188, %v5897
    %v5906 = vadd.f32 %v5189, %v5898
    %v5907 = vadd.f32 %v5190, %v5899
    %v5908 = vadd.f32 %v5900, %v5901
    %v5909 = vadd.f32 %v5908, %v5902
    %v5910 = vadd.f32 %v5909, %v5903
    %v5911 = vadd.f32 %v5910, %v5904
    %v5912 = vadd.f32 %v5911, %v5905
    %v5913 = vadd.f32 %v5912, %v5906
    %v5914 = vadd.f32 %v5913, %v5907
    %v5915 = vrot.slane %v5914, 4
    %v5916 = vadd.f32 %v5914, %v5915
    %v5917 = vrot.slane %v5916, 2
    %v5918 = vadd.f32 %v5916, %v5917
    %v5919 = vrot.slane %v5918, 1
    %v5920 = vadd.f32 %v5918, %v5919
    %s5921 = sld [smem:[#allocation2]]
    %v5922 = vstv %s5921
    %v5923 = vadd.f32 %v5920, %v5922
    %v5924 = vsub.f32 0.0, %v5923
    %v5925 = vmul.f32 %v5924, 1.442695
    %v5926 = vpow.pop %v5925
    %v5927 = vadd.f32 %v5926, 1.0
    %v5928 = vrcp.pop %v5927
    %v5929 = vmul.f32 1.0, %v5928
    %5930 = vst [vmem:[%s5] sm:$0x1] %v5929
    // Predicated region
    $region30: #{cnn_forward_pallas.1} parent=1 // pred_check
      _
    $region31: #{cnn_forward_pallas.1} parent=1 // pred_check_branch
      %5932 = sbr.rel (0) target = $region33
    $region32: #{cnn_forward_pallas.1} parent=1 // pred_region
      _
    $region33: #{cnn_forward_pallas.1} parent=1 // pred_fallthru
      _
    // Predicated region
    $region34: #{cnn_forward_pallas.1} parent=1 // pred_check
      _
    $region35: #{cnn_forward_pallas.1} parent=1 // pred_check_branch
      %5934 = sbr.rel (0) target = $region37
    $region36: #{cnn_forward_pallas.1} parent=1 // pred_region
      _
    $region37: #{cnn_forward_pallas.1} parent=1 // pred_fallthru
      _
    %5935 = vsyncpa [#allocation4], 1
    %5936 = vsyncpa [#allocation6], 1

</llo_original>
